<compile_context>
chip_gen: v7x
topology: tpu7x:2x2x1
jax: 0.10.0
libtpu: 0.0.40
codegen_flags: <defaults>
</compile_context>

<pallas_src>
import functools

import jax
import jax.numpy as jnp
from jax.experimental import pallas as pl
from jax.experimental.pallas import tpu as pltpu

BN_EPS = 1e-5


def mlp_kernel(x_ref, w1t_ref, gamma_ref, beta_ref, w2t_ref, b2_ref,
               o_ref, acc_ref, *, tile_h):
    # x:     (B, D_in)       bf16, resident (single buffer)
    # w1t:   (D_in, tile_H)  bf16, streamed per H-tile
    # gamma: (1, hidden)     f32, resident; sliced per H-tile
    # beta:  (1, hidden)     f32, resident; sliced per H-tile
    # w2t:   (tile_H, D_out) bf16, streamed per H-tile
    # b2:    (1, D_out)      f32, resident
    # o:     (B, D_out)      f32, resident (written once at the last H-tile)
    # acc:   (B, D_out)      f32 VMEM scratch accumulator
    ht = pl.program_id(0)

    @pl.when(ht == 0)
    def _init():
        acc_ref[...] = jnp.zeros_like(acc_ref)

    # Linear 1 (no bias): bf16 operands, f32 accumulation on the MXU.
    h = jnp.dot(x_ref[...], w1t_ref[...],
                preferred_element_type=jnp.float32)            # (B, tile_H) f32

    # BatchNorm1d (training mode) over the full resident batch, exact two-pass
    # statistics in f32: mean, then variance of the centered values.
    inv_b = 1.0 / h.shape[0]
    mean = jnp.sum(h, axis=0, keepdims=True) * inv_b           # (1, tile_H)
    centered = h - mean
    var = jnp.sum(centered * centered, axis=0, keepdims=True) * inv_b

    # Slice the resident gamma/beta row for this H-tile (aligned dynamic slice).
    h_start = pl.multiple_of(ht * tile_h, tile_h)
    gamma = gamma_ref[:, pl.ds(h_start, tile_h)]               # (1, tile_H)
    beta = beta_ref[:, pl.ds(h_start, tile_h)]                 # (1, tile_H)

    scale = gamma * jax.lax.rsqrt(var + BN_EPS)                # EUP rsqrt
    h_act = jnp.maximum(centered * scale + beta, 0.0)          # fused BN + ReLU

    # Linear 2 partial product for this H-tile, accumulated in f32.
    acc_ref[...] += jnp.dot(h_act.astype(jnp.bfloat16), w2t_ref[...],
                            preferred_element_type=jnp.float32)

    @pl.when(ht == pl.num_programs(0) - 1)
    def _finalize():
        o_ref[...] = (acc_ref[...] + b2_ref[...]).astype(o_ref.dtype)


def _vmem_limit_bytes():
    """Scoped-VMEM limit per generation: physical capacity minus ~24 MiB of
    headroom for Mosaic internal scratch (v7x: 64 MiB, v5e/v6e: 128 MiB)."""
    try:
        cap = int(pltpu.get_tpu_info().vmem_capacity_bytes)
    except Exception:  # e.g. interpret mode
        cap = 64 * 1024 * 1024
    return max(32 * 1024 * 1024, cap - 24 * 1024 * 1024)


@functools.partial(jax.jit, static_argnames=("tile_h",))
def mlp_forward(x, w1t, gamma, beta, w2t, b2, *, tile_h=1024):
    batch, d_in = x.shape
    d_in_w, hidden = w1t.shape
    hidden_w, d_out = w2t.shape
    assert d_in == d_in_w and hidden == hidden_w

    tile_h = min(tile_h, hidden)
    assert hidden % tile_h == 0, "hidden must be divisible by tile_h"
    n_h_tiles = hidden // tile_h

    # One-time cast: the kernel streams/holds x in bf16 (half DMA, half VMEM).
    x_bf16 = x.astype(jnp.bfloat16)

    flops = 2 * batch * (d_in * hidden + hidden * d_out)
    bytes_accessed = (
        batch * d_in * 2                 # x (bf16)
        + d_in * hidden * 2              # w1 (bf16)
        + hidden * d_out * 2             # w2 (bf16)
        + 2 * hidden * 4                 # gamma, beta
        + d_out * 4                      # bias
        + batch * d_out * 4              # output
    )

    grid_spec = pltpu.PrefetchScalarGridSpec(
        num_scalar_prefetch=0,
        grid=(n_h_tiles,),
        in_specs=[
            # Resident operands: single buffer (constant block index).
            pl.BlockSpec((batch, d_in), lambda h: (0, 0),
                         pipeline_mode=pl.Buffered(1)),            # x
            # Streamed weights: default double-buffering.
            # (If the pipeline ever shows exposed DMA at large tile_h, bump
            #  these to pipeline_mode=pl.Buffered(3).)
            pl.BlockSpec((d_in, tile_h), lambda h: (0, h)),         # w1t
            pl.BlockSpec((1, hidden), lambda h: (0, 0),
                         pipeline_mode=pl.Buffered(1)),             # gamma (resident)
            pl.BlockSpec((1, hidden), lambda h: (0, 0),
                         pipeline_mode=pl.Buffered(1)),             # beta (resident)
            pl.BlockSpec((tile_h, d_out), lambda h: (h, 0)),        # w2t
            pl.BlockSpec((1, d_out), lambda h: (0, 0),
                         pipeline_mode=pl.Buffered(1)),             # b2 (resident)
        ],
        out_specs=pl.BlockSpec((batch, d_out), lambda h: (0, 0)),   # resident output
        scratch_shapes=[pltpu.VMEM((batch, d_out), jnp.float32)],
    )

    return pl.pallas_call(
        functools.partial(mlp_kernel, tile_h=tile_h),
        out_shape=jax.ShapeDtypeStruct((batch, d_out), jnp.float32),
        grid_spec=grid_spec,
        compiler_params=pltpu.CompilerParams(
            # Single grid axis is the hidden/accumulation (reduction) axis.
            dimension_semantics=("arbitrary",),
            vmem_limit_bytes=_vmem_limit_bytes(),
        ),
        cost_estimate=pl.CostEstimate(
            flops=flops, transcendentals=hidden, bytes_accessed=bytes_accessed
        ),
    )(x_bf16, w1t, gamma, beta, w2t, b2)


def init_params(key, input_dim, hidden_size, output_dim):
    """Deterministic init mimicking PyTorch defaults; weights stored in bf16
    pre-transposed to (in, out) so the kernel streams half the DMA bytes."""
    k1, k2, k3 = jax.random.split(key, 3)
    bound1 = 1.0 / (input_dim ** 0.5)
    w1 = jax.random.uniform(k1, (hidden_size, input_dim), jnp.float32,
                            minval=-bound1, maxval=bound1)     # torch layout (out, in)
    bound2 = 1.0 / (hidden_size ** 0.5)
    w2 = jax.random.uniform(k2, (output_dim, hidden_size), jnp.float32,
                            minval=-bound2, maxval=bound2)
    b2 = jax.random.uniform(k3, (output_dim,), jnp.float32,
                            minval=-bound2, maxval=bound2)
    gamma = jnp.ones((hidden_size,), jnp.float32)              # BatchNorm1d defaults
    beta = jnp.zeros((hidden_size,), jnp.float32)
    return (w1.T.astype(jnp.bfloat16),
            gamma.reshape(1, -1),
            beta.reshape(1, -1),
            w2.T.astype(jnp.bfloat16),
            b2.reshape(1, -1))


def reference_forward(x, w1t, gamma, beta, w2t, b2):
    """Full-f32 reference with exact BatchNorm1d training-mode semantics."""
    h = x.astype(jnp.float32) @ w1t.astype(jnp.float32)
    mean = jnp.mean(h, axis=0, keepdims=True)
    var = jnp.mean((h - mean) ** 2, axis=0, keepdims=True)
    h = (h - mean) / jnp.sqrt(var + BN_EPS) * gamma + beta
    h = jnp.maximum(h, 0.0)
    return h @ w2t.astype(jnp.float32) + b2


if __name__ == "__main__":
    # Small shapes consistent with the module (512 -> 4096 -> 256, scaled down).
    # BATCH=256 fills the 256-wide v6e/v7x MXU; TILE_H=1024 gives 2 fat H-tiles
    # to exercise the accumulation pipeline with low per-step overhead.
    BATCH, INPUT_DIM, HIDDEN, OUTPUT_DIM = 256, 512, 2048, 256
    TILE_H = 1024

    key = jax.random.PRNGKey(0)
    kx, kp = jax.random.split(key)
    x = jax.random.normal(kx, (BATCH, INPUT_DIM), jnp.float32)
    w1t, gamma, beta, w2t, b2 = init_params(kp, INPUT_DIM, HIDDEN, OUTPUT_DIM)

    out = mlp_forward(x, w1t, gamma, beta, w2t, b2, tile_h=TILE_H)
    out = jax.block_until_ready(out)

    ref = reference_forward(x, w1t, gamma, beta, w2t, b2)
    assert out.shape == (BATCH, OUTPUT_DIM), out.shape
    # bf16 MXU operands vs f32 reference -> tolerance sized for bf16 rounding.
    assert jnp.allclose(out, ref, atol=2e-2, rtol=2e-2), "mismatch vs JAX reference"

    print("KERNEL_OK")
</pallas_src>

<mosaic_0001>
module attributes {stable_mosaic.version = 11 : i64} {
  func.func @mlp_kernel(%arg0: i32, %arg1: memref<256x512xbf16, #tpu.memory_space<vmem>>, %arg2: memref<512x1024xbf16, #tpu.memory_space<vmem>>, %arg3: memref<1x2048xf32, #tpu.memory_space<vmem>>, %arg4: memref<1x2048xf32, #tpu.memory_space<vmem>>, %arg5: memref<1024x256xbf16, #tpu.memory_space<vmem>>, %arg6: memref<1x256xf32, #tpu.memory_space<vmem>>, %arg7: memref<256x256xf32, #tpu.memory_space<vmem>>, %arg8: memref<256x256xf32, #tpu.memory_space<vmem>>) attributes {dimension_semantics = [#tpu.dimension_semantics<arbitrary>], iteration_bounds = array<i64: 2>, scalar_prefetch = 0 : i64, scratch_operands = 1 : i64, tpu.core_type = #tpu.core_type<tc>, window_params = [{pipeline_mode = #tpu.pipeline_mode<synchronous>, transform_indices = @transform_0, window_bounds = array<i64: 256, 512>}, {transform_indices = @transform_1, window_bounds = array<i64: 512, 1024>}, {pipeline_mode = #tpu.pipeline_mode<synchronous>, transform_indices = @transform_2, window_bounds = array<i64: 1, 2048>}, {pipeline_mode = #tpu.pipeline_mode<synchronous>, transform_indices = @transform_3, window_bounds = array<i64: 1, 2048>}, {transform_indices = @transform_4, window_bounds = array<i64: 1024, 256>}, {pipeline_mode = #tpu.pipeline_mode<synchronous>, transform_indices = @transform_5, window_bounds = array<i64: 1, 256>}, {pipeline_mode = #tpu.pipeline_mode<synchronous>, transform_indices = @transform_6, window_bounds = array<i64: 256, 256>}]} {
    %c0_i32 = arith.constant 0 : i32
    %0 = arith.cmpi eq, %arg0, %c0_i32 : i32
    %1 = arith.extui %0 : i1 to i32
    %c0_i32_0 = arith.constant 0 : i32
    %2 = arith.cmpi ne, %1, %c0_i32_0 : i32
    scf.if %2 {
      %cst_20 = arith.constant 0.000000e+00 : f32
      %42 = vector.broadcast %cst_20 : f32 to vector<256x256xf32>
      %c0_21 = arith.constant 0 : index
      %c0_22 = arith.constant 0 : index
      %43 = vector.load %arg8[%c0_21, %c0_22] : memref<256x256xf32, #tpu.memory_space<vmem>>, vector<256x256xf32>
      tpu.vector_store %arg8[%c0_21, %c0_22], %42 {strides = array<i32>} : memref<256x256xf32, #tpu.memory_space<vmem>>, vector<256x256xf32>,
    } else {
    }
    %c0 = arith.constant 0 : index
    %c0_1 = arith.constant 0 : index
    %3 = vector.load %arg1[%c0, %c0_1] : memref<256x512xbf16, #tpu.memory_space<vmem>>, vector<256x512xbf16>
    %c0_2 = arith.constant 0 : index
    %c0_3 = arith.constant 0 : index
    %4 = vector.load %arg2[%c0_2, %c0_3] : memref<512x1024xbf16, #tpu.memory_space<vmem>>, vector<512x1024xbf16>
    %cst = arith.constant dense<0.000000e+00> : vector<256x1024xf32>
    %5 = tpu.matmul %3, %4, %cst {dimension_numbers = #tpu.dot_dimension_numbers<[1], [0], [0], [1], [0, 0, 1, 1], [], []>} : vector<256x512xbf16>, vector<512x1024xbf16>, vector<256x1024xf32> -> vector<256x1024xf32>
    %cst_4 = arith.constant dense<0.000000e+00> : vector<1024xf32>
    %6 = vector.multi_reduction <add>, %5, %cst_4 [0] : vector<256x1024xf32> to vector<1024xf32>
    %7 = vector.shape_cast %6 : vector<1024xf32> to vector<1x1024xf32>
    %cst_5 = arith.constant 3.906250e-03 : f32
    %8 = vector.broadcast %cst_5 : f32 to vector<1x1024xf32>
    %9 = arith.mulf %7, %8 : vector<1x1024xf32>
    %10 = vector.broadcast %9 : vector<1x1024xf32> to vector<256x1024xf32>
    %11 = arith.subf %5, %10 : vector<256x1024xf32>
    %12 = arith.mulf %11, %11 : vector<256x1024xf32>
    %cst_6 = arith.constant dense<0.000000e+00> : vector<1024xf32>
    %13 = vector.multi_reduction <add>, %12, %cst_6 [0] : vector<256x1024xf32> to vector<1024xf32>
    %14 = vector.shape_cast %13 : vector<1024xf32> to vector<1x1024xf32>
    %cst_7 = arith.constant 3.906250e-03 : f32
    %15 = vector.broadcast %cst_7 : f32 to vector<1x1024xf32>
    %16 = arith.mulf %14, %15 : vector<1x1024xf32>
    %c1024_i32 = arith.constant 1024 : i32
    %17 = arith.muli %arg0, %c1024_i32 : i32
    %18 = tpu.assume_multiple %17, 1024 : i32
    %c0_8 = arith.constant 0 : index
    %19 = arith.index_cast %18 : i32 to index
    %20 = vector.load %arg3[%c0_8, %19] : memref<1x2048xf32, #tpu.memory_space<vmem>>, vector<1x1024xf32>
    %c0_9 = arith.constant 0 : index
    %21 = arith.index_cast %18 : i32 to index
    %22 = vector.load %arg4[%c0_9, %21] : memref<1x2048xf32, #tpu.memory_space<vmem>>, vector<1x1024xf32>
    %cst_10 = arith.constant 9.99999974E-6 : f32
    %23 = vector.broadcast %cst_10 : f32 to vector<1x1024xf32>
    %24 = arith.addf %16, %23 : vector<1x1024xf32>
    %25 = math.rsqrt %24 : vector<1x1024xf32>
    %26 = arith.mulf %20, %25 : vector<1x1024xf32>
    %27 = vector.broadcast %26 : vector<1x1024xf32> to vector<256x1024xf32>
    %28 = arith.mulf %11, %27 : vector<256x1024xf32>
    %29 = vector.broadcast %22 : vector<1x1024xf32> to vector<256x1024xf32>
    %30 = arith.addf %28, %29 : vector<256x1024xf32>
    %cst_11 = arith.constant 0.000000e+00 : f32
    %31 = vector.broadcast %cst_11 : f32 to vector<256x1024xf32>
    %32 = arith.maximumf %30, %31 : vector<256x1024xf32>
    %c0_12 = arith.constant 0 : index
    %c0_13 = arith.constant 0 : index
    %33 = vector.load %arg8[%c0_12, %c0_13] : memref<256x256xf32, #tpu.memory_space<vmem>>, vector<256x256xf32>
    %34 = arith.truncf %32 : vector<256x1024xf32> to vector<256x1024xbf16>
    %c0_14 = arith.constant 0 : index
    %c0_15 = arith.constant 0 : index
    %35 = vector.load %arg5[%c0_14, %c0_15] : memref<1024x256xbf16, #tpu.memory_space<vmem>>, vector<1024x256xbf16>
    %cst_16 = arith.constant dense<0.000000e+00> : vector<256x256xf32>
    %36 = tpu.matmul %34, %35, %cst_16 {dimension_numbers = #tpu.dot_dimension_numbers<[1], [0], [0], [1], [0, 0, 1, 1], [], []>} : vector<256x1024xbf16>, vector<1024x256xbf16>, vector<256x256xf32> -> vector<256x256xf32>
    %37 = arith.addf %33, %36 : vector<256x256xf32>
    %c0_17 = arith.constant 0 : index
    %c0_18 = arith.constant 0 : index
    %38 = vector.load %arg8[%c0_17, %c0_18] : memref<256x256xf32, #tpu.memory_space<vmem>>, vector<256x256xf32>
    tpu.vector_store %arg8[%c0_17, %c0_18], %37 {strides = array<i32>} : memref<256x256xf32, #tpu.memory_space<vmem>>, vector<256x256xf32>,
    %c1_i32 = arith.constant 1 : i32
    %39 = arith.cmpi eq, %arg0, %c1_i32 : i32
    %40 = arith.extui %39 : i1 to i32
    %c0_i32_19 = arith.constant 0 : i32
    %41 = arith.cmpi ne, %40, %c0_i32_19 : i32
    scf.if %41 {
      %c0_20 = arith.constant 0 : index
      %c0_21 = arith.constant 0 : index
      %42 = vector.load %arg8[%c0_20, %c0_21] : memref<256x256xf32, #tpu.memory_space<vmem>>, vector<256x256xf32>
      %c0_22 = arith.constant 0 : index
      %c0_23 = arith.constant 0 : index
      %43 = vector.load %arg6[%c0_22, %c0_23] : memref<1x256xf32, #tpu.memory_space<vmem>>, vector<1x256xf32>
      %44 = vector.broadcast %43 : vector<1x256xf32> to vector<256x256xf32>
      %45 = arith.addf %42, %44 : vector<256x256xf32>
      %c0_24 = arith.constant 0 : index
      %c0_25 = arith.constant 0 : index
      %46 = vector.load %arg7[%c0_24, %c0_25] : memref<256x256xf32, #tpu.memory_space<vmem>>, vector<256x256xf32>
      tpu.vector_store %arg7[%c0_24, %c0_25], %45 {strides = array<i32>} : memref<256x256xf32, #tpu.memory_space<vmem>>, vector<256x256xf32>,
    } else {
    }
    return
  }
  func.func @transform_0(%arg0: i32) -> (i32, i32) {
    %c0_i32 = arith.constant 0 : i32
    %c0_i32_0 = arith.constant 0 : i32
    %c0_i32_1 = arith.constant 0 : i32
    return %c0_i32, %c0_i32_0 : i32, i32
  }
  func.func @transform_1(%arg0: i32) -> (i32, i32) {
    %c0_i32 = arith.constant 0 : i32
    %c0_i32_0 = arith.constant 0 : i32
    return %c0_i32, %arg0 : i32, i32
  }
  func.func @transform_2(%arg0: i32) -> (i32, i32) {
    %c0_i32 = arith.constant 0 : i32
    %c0_i32_0 = arith.constant 0 : i32
    %c0_i32_1 = arith.constant 0 : i32
    return %c0_i32, %c0_i32_0 : i32, i32
  }
  func.func @transform_3(%arg0: i32) -> (i32, i32) {
    %c0_i32 = arith.constant 0 : i32
    %c0_i32_0 = arith.constant 0 : i32
    %c0_i32_1 = arith.constant 0 : i32
    return %c0_i32, %c0_i32_0 : i32, i32
  }
  func.func @transform_4(%arg0: i32) -> (i32, i32) {
    %c0_i32 = arith.constant 0 : i32
    %c0_i32_0 = arith.constant 0 : i32
    return %arg0, %c0_i32 : i32, i32
  }
  func.func @transform_5(%arg0: i32) -> (i32, i32) {
    %c0_i32 = arith.constant 0 : i32
    %c0_i32_0 = arith.constant 0 : i32
    %c0_i32_1 = arith.constant 0 : i32
    return %c0_i32, %c0_i32_0 : i32, i32
  }
  func.func @transform_6(%arg0: i32) -> (i32, i32) {
    %c0_i32 = arith.constant 0 : i32
    %c0_i32_0 = arith.constant 0 : i32
    %c0_i32_1 = arith.constant 0 : i32
    return %c0_i32, %c0_i32_0 : i32, i32
  }
}

</mosaic_0001>

<llo_original>
// kernel: mlp_forward.1
$region0: #{mlp_forward.1}
  #allocation0 [shape = 'u32[]', space=smem, size = 0x4, offset = 0x4, fixed_abs, tag = 'smem constant byte address 0x4 - core index']
  #allocation1 [shape = 'u32[144,128]{1,0:T(1,128)}', space=vmem, size = 0x12000, scoped, tag = 'internal scratch']
  #allocation2 [shape = 'f32[256,256]{1,0:T(8,128)}', space=vmem, size = 0x40000, scoped, tag = 'scratch operand']
  %s0 = inlined_call_operand.vmem [shape: bf16[256,512], index: 0, kind: input, shape index: {}]
  %s1 = inlined_call_operand.hbm [shape: bf16[512,2048], index: 1, kind: input, shape index: {}]
  %s2 = inlined_call_operand.hbm [shape: f32[1,2048], index: 2, kind: input, shape index: {}]
  %s3 = inlined_call_operand.hbm [shape: f32[1,2048], index: 3, kind: input, shape index: {}]
  %s4 = inlined_call_operand.hbm [shape: bf16[2048,256], index: 4, kind: input, shape index: {}]
  %s5 = inlined_call_operand.hbm [shape: f32[1,256], index: 5, kind: input, shape index: {}]
  %s6 = inlined_call_operand.hbm [shape: f32[256,256], index: 6, kind: output, shape index: {}]
  %s7 = sld [smem:[#allocation0]]
  $region85: #{mlp_forward.1} parent=0
    _
  %s9 = ssub.s32 1, %s7
  %s10 = scalar_select 0, %s9, %s7
  $region1: #{mlp_forward.1} parent=0
    #allocation3 [shape = 'u8[2097152]{0}', space=vmem, size = 0x200000, scoped, tag = 'input window, operand 1']
    #allocation4 [shape = 's32[2]{0}', space=sflag, size = 0x8, scoped, tag = 'scoped memory for mlp_forward.1']
    #allocation5 [shape = 's32[2]{0}', space=sflag, size = 0x8, scoped, tag = 'scoped memory for mlp_forward.1']
    #allocation6 [shape = 'u8[8192]{0}', space=vmem, size = 0x2000, scoped, tag = 'input window, operand 2, single buffered']
    #allocation7 [shape = 's32[1]{0}', space=sflag, size = 0x4, scoped, tag = 'scoped memory for mlp_forward.1']
    #allocation8 [shape = 'u8[8192]{0}', space=vmem, size = 0x2000, scoped, tag = 'input window, operand 3, single buffered']
    #allocation9 [shape = 'u8[1048576]{0}', space=vmem, size = 0x100000, scoped, tag = 'input window, operand 4']
    #allocation10 [shape = 's32[2]{0}', space=sflag, size = 0x8, scoped, tag = 'scoped memory for mlp_forward.1']
    #allocation11 [shape = 'u8[1024]{0}', space=vmem, size = 0x400, scoped, tag = 'input window, operand 5, single buffered']
    #allocation12 [shape = 'u8[262144]{0}', space=vmem, size = 0x40000, scoped, tag = 'output window, operand 0, single buffered']
    %11 = vsyncpa [#allocation4], 0
    %s12 = scalar_lea.sflag [#allocation4], 1
    %13 = vsyncpa %s12, 0
    %14 = vsyncpa [#allocation7], 0
    %15 = vsyncpa [#allocation10], 0
    %s16 = scalar_lea.sflag [#allocation10], 1
    %17 = vsyncpa %s16, 0
    %18 = vsyncpa [#allocation5], 0
    loop: start=0, step=1, limit=4
    $region2: #{mlp_forward.1} parent=1 // loop_pre_header
      _
    $region3: #{mlp_forward.1} parent=1 // loop_header
      %s20 = sphi 0, %s24
      %p21 = scmp.ge.s32.totalorder %s20, 4
      %s28 = sphi 0, %s28
      %s30 = sphi 0, %s28
      %s31 = sphi 0, %s30
      %s45 = sphi 0, %s31
      %s51 = sphi 0, %s53
      %s54 = sphi 0, %s51
      %s55 = sphi 0, %s54
      %s71 = sphi 0, %s55
      %s75 = sphi 0, %s75
      %s77 = sphi 0, %s75
      %s78 = sphi 0, %s77
      %s92 = sphi 0, %s78
      %s96 = sphi 0, %s96
      %s98 = sphi 0, %s96
      %s99 = sphi 0, %s98
      %s113 = sphi 0, %s99
      %s119 = sphi 0, %s121
      %s122 = sphi 0, %s119
      %s123 = sphi 0, %s122
      %s139 = sphi 0, %s123
      %s143 = sphi 0, %s143
      %s145 = sphi 0, %s143
      %s146 = sphi 0, %s145
      %s160 = sphi 0, %s146
      %s164 = sphi 0, %s164
      %s166 = sphi 0, %s164
      %s167 = sphi 0, %s166
      %s181 = sphi 0, %s167
    $region4: #{mlp_forward.1} parent=1 // loop_header_branch
      %23 = sbr.rel (%p21) target = $region8
    $region5: #{mlp_forward.1} parent=1 // loop_body
      %s25 = ssub.s32 %s20, 1
      %s26 = ssub.s32 %s20, 2
      %s27 = sadd.s32 %s20, 1
      %s29 = sadd.s32 %s28, 1
      %p32 = scmp.eq.s32.totalorder %s20, 1
      %p33 = scmp.ne.s32.totalorder %s28, %s30
      %p34 = scmp.eq.s32.totalorder %s20, 0
      %p35 = por %p33, %p34
      %p36 = scmp.ne.s32.totalorder %s28, %s30
      %p37 = scmp.eq.s32.totalorder %s25, 1
      %p38 = por %p36, %p37
      %p39 = scmp.ne.s32.totalorder %s30, %s31
      %p40 = scmp.eq.s32.totalorder %s25, 0
      %p41 = por %p39, %p40
      %p42 = scmp.ne.s32.totalorder %s30, %s31
      %p43 = scmp.eq.s32.totalorder %s26, 1
      %p44 = por %p42, %p43
      %p46 = scmp.ne.s32.totalorder %s31, %s45
      %p47 = scmp.eq.s32.totalorder %s26, 0
      %p48 = por %p46, %p47
      %s49 = ssub.s32 %s20, %s27
      %p50 = scmp.eq.s32.totalorder %s49, 0
      %s52 = sadd.s32 %s51, 1
      %s53 = scalar_select %p50, %s51, %s52
      %p56 = pneg %p50
      %p57 = scmp.eq.s32.totalorder %s20, 1
      %p58 = por %p56, %p57
      %p59 = scmp.ne.s32.totalorder %s51, %s54
      %p60 = scmp.eq.s32.totalorder %s20, 0
      %p61 = por %p59, %p60
      %p62 = scmp.ne.s32.totalorder %s51, %s54
      %p63 = scmp.eq.s32.totalorder %s25, 1
      %p64 = por %p62, %p63
      %p65 = scmp.ne.s32.totalorder %s54, %s55
      %p66 = scmp.eq.s32.totalorder %s25, 0
      %p67 = por %p65, %p66
      %p68 = scmp.ne.s32.totalorder %s54, %s55
      %p69 = scmp.eq.s32.totalorder %s26, 1
      %p70 = por %p68, %p69
      %p72 = scmp.ne.s32.totalorder %s55, %s71
      %p73 = scmp.eq.s32.totalorder %s26, 0
      %p74 = por %p72, %p73
      %s76 = sadd.s32 %s75, 1
      %p79 = scmp.eq.s32.totalorder %s20, 1
      %p80 = scmp.ne.s32.totalorder %s75, %s77
      %p81 = scmp.eq.s32.totalorder %s20, 0
      %p82 = por %p80, %p81
      %p83 = scmp.ne.s32.totalorder %s75, %s77
      %p84 = scmp.eq.s32.totalorder %s25, 1
      %p85 = por %p83, %p84
      %p86 = scmp.ne.s32.totalorder %s77, %s78
      %p87 = scmp.eq.s32.totalorder %s25, 0
      %p88 = por %p86, %p87
      %p89 = scmp.ne.s32.totalorder %s77, %s78
      %p90 = scmp.eq.s32.totalorder %s26, 1
      %p91 = por %p89, %p90
      %p93 = scmp.ne.s32.totalorder %s78, %s92
      %p94 = scmp.eq.s32.totalorder %s26, 0
      %p95 = por %p93, %p94
      %s97 = sadd.s32 %s96, 1
      %p100 = scmp.eq.s32.totalorder %s20, 1
      %p101 = scmp.ne.s32.totalorder %s96, %s98
      %p102 = scmp.eq.s32.totalorder %s20, 0
      %p103 = por %p101, %p102
      %p104 = scmp.ne.s32.totalorder %s96, %s98
      %p105 = scmp.eq.s32.totalorder %s25, 1
      %p106 = por %p104, %p105
      %p107 = scmp.ne.s32.totalorder %s98, %s99
      %p108 = scmp.eq.s32.totalorder %s25, 0
      %p109 = por %p107, %p108
      %p110 = scmp.ne.s32.totalorder %s98, %s99
      %p111 = scmp.eq.s32.totalorder %s26, 1
      %p112 = por %p110, %p111
      %p114 = scmp.ne.s32.totalorder %s99, %s113
      %p115 = scmp.eq.s32.totalorder %s26, 0
      %p116 = por %p114, %p115
      %s117 = ssub.s32 %s20, %s27
      %p118 = scmp.eq.s32.totalorder %s117, 0
      %s120 = sadd.s32 %s119, 1
      %s121 = scalar_select %p118, %s119, %s120
      %p124 = pneg %p118
      %p125 = scmp.eq.s32.totalorder %s20, 1
      %p126 = por %p124, %p125
      %p127 = scmp.ne.s32.totalorder %s119, %s122
      %p128 = scmp.eq.s32.totalorder %s20, 0
      %p129 = por %p127, %p128
      %p130 = scmp.ne.s32.totalorder %s119, %s122
      %p131 = scmp.eq.s32.totalorder %s25, 1
      %p132 = por %p130, %p131
      %p133 = scmp.ne.s32.totalorder %s122, %s123
      %p134 = scmp.eq.s32.totalorder %s25, 0
      %p135 = por %p133, %p134
      %p136 = scmp.ne.s32.totalorder %s122, %s123
      %p137 = scmp.eq.s32.totalorder %s26, 1
      %p138 = por %p136, %p137
      %p140 = scmp.ne.s32.totalorder %s123, %s139
      %p141 = scmp.eq.s32.totalorder %s26, 0
      %p142 = por %p140, %p141
      %s144 = sadd.s32 %s143, 1
      %p147 = scmp.eq.s32.totalorder %s20, 1
      %p148 = scmp.ne.s32.totalorder %s143, %s145
      %p149 = scmp.eq.s32.totalorder %s20, 0
      %p150 = por %p148, %p149
      %p151 = scmp.ne.s32.totalorder %s143, %s145
      %p152 = scmp.eq.s32.totalorder %s25, 1
      %p153 = por %p151, %p152
      %p154 = scmp.ne.s32.totalorder %s145, %s146
      %p155 = scmp.eq.s32.totalorder %s25, 0
      %p156 = por %p154, %p155
      %p157 = scmp.ne.s32.totalorder %s145, %s146
      %p158 = scmp.eq.s32.totalorder %s26, 1
      %p159 = por %p157, %p158
      %p161 = scmp.ne.s32.totalorder %s146, %s160
      %p162 = scmp.eq.s32.totalorder %s26, 0
      %p163 = por %p161, %p162
      %s165 = sadd.s32 %s164, 1
      %p168 = scmp.eq.s32.totalorder %s20, 1
      %p169 = scmp.ne.s32.totalorder %s164, %s166
      %p170 = scmp.eq.s32.totalorder %s20, 0
      %p171 = por %p169, %p170
      %p172 = scmp.ne.s32.totalorder %s164, %s166
      %p173 = scmp.eq.s32.totalorder %s25, 1
      %p174 = por %p172, %p173
      %p175 = scmp.ne.s32.totalorder %s166, %s167
      %p176 = scmp.eq.s32.totalorder %s25, 0
      %p177 = por %p175, %p176
      %p178 = scmp.ne.s32.totalorder %s166, %s167
      %p179 = scmp.eq.s32.totalorder %s26, 1
      %p180 = por %p178, %p179
      %p182 = scmp.ne.s32.totalorder %s167, %s181
      %p183 = scmp.eq.s32.totalorder %s26, 0
      %p184 = por %p182, %p183
      %p185 = scmp.le.s32.totalorder 1, %s20
      %p186 = scmp.lt.s32.totalorder %s20, 3
      %p187 = pnand %p185, %p186
      %p188 = pneg %p187
      // Predicated region
      $region9: #{mlp_forward.1} parent=5 // pred_check
        _
      $region10: #{mlp_forward.1} parent=5 // pred_check_branch
        %190 = sbr.rel (%p187) target = $region12
      $region11: #{mlp_forward.1} parent=5 // pred_region
        %s191 = ssub.s32 %s20, 1
        // Predicated region
        $region13: #{mlp_forward.1} parent=11 // pred_check
          %p192 = pneg %p41
        $region14: #{mlp_forward.1} parent=11 // pred_check_branch
          %194 = sbr.rel (%p192) target = $region16
        $region15: #{mlp_forward.1} parent=11 // pred_region
          _
        $region16: #{mlp_forward.1} parent=11 // pred_fallthru
          _
        // Predicated region
        $region17: #{mlp_forward.1} parent=11 // pred_check
          %p195 = pneg %p88
        $region18: #{mlp_forward.1} parent=11 // pred_check_branch
          %197 = sbr.rel (%p195) target = $region20
        $region19: #{mlp_forward.1} parent=11 // pred_region
          %s199 = ssub.s32 256, 256
          %200 = vsyncadd [#allocation7], %s199
          %s202 = sshll.u32 [#allocation6], 4
          %s203 = int_to_ptr.vmem [resolvable:$true] %s202
          %205 = dma.hbm_to_vmem [thread:$0]  %s2, 256, %s203, [#allocation7]
        $region20: #{mlp_forward.1} parent=11 // pred_fallthru
          _
        // Predicated region
        $region21: #{mlp_forward.1} parent=11 // pred_check
          %p206 = pneg %p109
        $region22: #{mlp_forward.1} parent=11 // pred_check_branch
          %208 = sbr.rel (%p206) target = $region24
        $region23: #{mlp_forward.1} parent=11 // pred_region
          %s210 = ssub.s32 256, 256
          %211 = vsyncadd [#allocation7], %s210
          %s213 = sshll.u32 [#allocation8], 4
          %s214 = int_to_ptr.vmem [resolvable:$true] %s213
          %216 = dma.hbm_to_vmem [thread:$0]  %s3, 256, %s214, [#allocation7]
        $region24: #{mlp_forward.1} parent=11 // pred_fallthru
          _
        // Predicated region
        $region25: #{mlp_forward.1} parent=11 // pred_check
          %p217 = pneg %p156
        $region26: #{mlp_forward.1} parent=11 // pred_check_branch
          %219 = sbr.rel (%p217) target = $region28
        $region27: #{mlp_forward.1} parent=11 // pred_region
          %s221 = ssub.s32 32, 32
          %222 = vsyncadd [#allocation10], %s221
          %s224 = sshll.u32 [#allocation11], 4
          %s225 = int_to_ptr.vmem [resolvable:$true] %s224
          %227 = dma.hbm_to_vmem [thread:$0]  %s5, 32, %s225, [#allocation10]
        $region28: #{mlp_forward.1} parent=11 // pred_fallthru
          _
      $region12: #{mlp_forward.1} parent=5 // pred_fallthru
        _
      %p228 = scmp.lt.s32.totalorder %s20, 2
      // Predicated region
      $region29: #{mlp_forward.1} parent=5 // pred_check
        %p229 = pneg %p228
      $region30: #{mlp_forward.1} parent=5 // pred_check_branch
        %231 = sbr.rel (%p229) target = $region32
      $region31: #{mlp_forward.1} parent=5 // pred_region
        // Predicated region
        $region33: #{mlp_forward.1} parent=31 // pred_check
          %p232 = pneg %p61
        $region34: #{mlp_forward.1} parent=31 // pred_check_branch
          %234 = sbr.rel (%p232) target = $region36
        $region35: #{mlp_forward.1} parent=31 // pred_region
          %s235 = sand.u32 %s51, 1
          %s236 = scalar_lea.sflag [#allocation4], %s235
          %s237 = sand.u32 %s51, 1
          %s238 = smul.addr %s237, 2048
          %s239 = scalar_lea.vmem [#allocation3], %s238
          %s240 = smul.u32 8, %s20
          %s242 = ssub.s32 32768, 32768
          %243 = vsyncadd %s236, %s242
          %s244 = smul.addr %s240, 64
          %s245 = scalar_lea.hbm %s1, %s244
          %s246 = sshll.u32 %s239, 4
          %s247 = int_to_ptr.vmem [resolvable:$true] %s246
          %252 = dma.hbm_to_vmem [thread:$0]  %s245, 32768, %s247, %s236, 1024, 512, 32
        $region36: #{mlp_forward.1} parent=31 // pred_fallthru
          _
        // Predicated region
        $region37: #{mlp_forward.1} parent=31 // pred_check
          %p253 = pneg %p129
        $region38: #{mlp_forward.1} parent=31 // pred_check_branch
          %255 = sbr.rel (%p253) target = $region40
        $region39: #{mlp_forward.1} parent=31 // pred_region
          %s256 = sand.u32 %s20, 1
          %s257 = scalar_lea.sflag [#allocation10], %s256
          %s258 = sand.u32 %s119, 1
          %s259 = smul.addr %s258, 1024
          %s260 = scalar_lea.vmem [#allocation9], %s259
          %s261 = smul.u32 128, %s20
          %s263 = ssub.s32 16384, 16384
          %264 = vsyncadd %s257, %s263
          %s265 = smul.addr %s261, 2
          %s266 = smul.addr %s265, 64
          %s267 = scalar_lea.hbm %s4, %s266
          %s268 = sshll.u32 %s260, 4
          %s269 = int_to_ptr.vmem [resolvable:$true] %s268
          %274 = dma.hbm_to_vmem [thread:$0]  %s267, 16384, %s269, %s257, 128, 128, 8
        $region40: #{mlp_forward.1} parent=31 // pred_fallthru
          _
      $region32: #{mlp_forward.1} parent=5 // pred_fallthru
        _
      %p275 = scmp.le.s32.totalorder 1, %s20
      %p276 = scmp.lt.s32.totalorder %s20, 3
      %p277 = pnand %p275, %p276
      %p278 = pneg %p277
      // Predicated region
      $region41: #{mlp_forward.1} parent=5 // pred_check
        _
      $region42: #{mlp_forward.1} parent=5 // pred_check_branch
        %280 = sbr.rel (%p277) target = $region44
      $region43: #{mlp_forward.1} parent=5 // pred_region
        %s281 = ssub.s32 %s20, 1
        %s282 = sand.u32 %s54, 1
        %s283 = scalar_lea.sflag [#allocation4], %s282
        %s284 = sand.u32 %s54, 1
        %s285 = smul.addr %s284, 2048
        %s286 = scalar_lea.vmem [#allocation3], %s285
        // Predicated region
        $region45: #{mlp_forward.1} parent=43 // pred_check
          %p287 = pneg %p67
        $region46: #{mlp_forward.1} parent=43 // pred_check_branch
          %289 = sbr.rel (%p287) target = $region48
        $region47: #{mlp_forward.1} parent=43 // pred_region
          %290 = dma.done %s283, 32768
        $region48: #{mlp_forward.1} parent=43 // pred_fallthru
          _
        // Predicated region
        $region49: #{mlp_forward.1} parent=43 // pred_check
          %p291 = pneg %p88
        $region50: #{mlp_forward.1} parent=43 // pred_check_branch
          %293 = sbr.rel (%p291) target = $region52
        $region51: #{mlp_forward.1} parent=43 // pred_region
          %294 = dma.done [#allocation7], 256
        $region52: #{mlp_forward.1} parent=43 // pred_fallthru
          _
        // Predicated region
        $region53: #{mlp_forward.1} parent=43 // pred_check
          %p295 = pneg %p109
        $region54: #{mlp_forward.1} parent=43 // pred_check_branch
          %297 = sbr.rel (%p295) target = $region56
        $region55: #{mlp_forward.1} parent=43 // pred_region
          %298 = dma.done [#allocation7], 256
        $region56: #{mlp_forward.1} parent=43 // pred_fallthru
          _
        %s299 = sand.u32 %s25, 1
        %s300 = scalar_lea.sflag [#allocation10], %s299
        %s301 = sand.u32 %s122, 1
        %s302 = smul.addr %s301, 1024
        %s303 = scalar_lea.vmem [#allocation9], %s302
        // Predicated region
        $region57: #{mlp_forward.1} parent=43 // pred_check
          %p304 = pneg %p135
        $region58: #{mlp_forward.1} parent=43 // pred_check_branch
          %306 = sbr.rel (%p304) target = $region60
        $region59: #{mlp_forward.1} parent=43 // pred_region
          %307 = dma.done %s300, 16384
        $region60: #{mlp_forward.1} parent=43 // pred_fallthru
          _
        // Predicated region
        $region61: #{mlp_forward.1} parent=43 // pred_check
          %p308 = pneg %p156
        $region62: #{mlp_forward.1} parent=43 // pred_check_branch
          %310 = sbr.rel (%p308) target = $region64
        $region63: #{mlp_forward.1} parent=43 // pred_region
          %311 = dma.done [#allocation10], 32
        $region64: #{mlp_forward.1} parent=43 // pred_fallthru
          _
        %p312 = pneg %p41
        %p313 = pneg %p38
        %s314 = sand.u32 %s54, 1
        %s315 = scalar_lea.sflag [#allocation4], %s314
        %s316 = sand.u32 %s54, 1
        %s317 = smul.addr %s316, 2048
        %s318 = scalar_lea.vmem [#allocation3], %s317
        %p319 = pneg %p67
        %p320 = pneg %p64
        %p321 = pneg %p88
        %p322 = pneg %p85
        %p323 = pneg %p109
        %p324 = pneg %p106
        %s325 = sand.u32 %s25, 1
        %s326 = scalar_lea.sflag [#allocation10], %s325
        %s327 = sand.u32 %s122, 1
        %s328 = smul.addr %s327, 1024
        %s329 = scalar_lea.vmem [#allocation9], %s328
        %p330 = pneg %p135
        %p331 = pneg %p132
        %p332 = pneg %p156
        %p333 = pneg %p153
        %p334 = pneg %p177
        %p335 = pneg %p174
        %s336 = smul.u32 8, %s25
        %s337 = smul.u32 128, %s25
        %p338 = scmp.eq.s32.totalorder %s25, 0
        // Predicated region
        $region65: #{mlp_forward.1} parent=43 // pred_check
          %p339 = pneg %p338
        $region66: #{mlp_forward.1} parent=43 // pred_check_branch
          %341 = sbr.rel (%p339) target = $region68
        $region67: #{mlp_forward.1} parent=43 // pred_region
          %342 = vst [vmem:[#allocation2] sm:$0xff] 0.0
          %343 = vst [vmem:[#allocation2 + $0x8] sm:$0xff] 0.0
          %344 = vst [vmem:[#allocation2 + $0x10] sm:$0xff] 0.0
          %345 = vst [vmem:[#allocation2 + $0x18] sm:$0xff] 0.0
          %346 = vst [vmem:[#allocation2 + $0x20] sm:$0xff] 0.0
          %347 = vst [vmem:[#allocation2 + $0x28] sm:$0xff] 0.0
          %348 = vst [vmem:[#allocation2 + $0x30] sm:$0xff] 0.0
          %349 = vst [vmem:[#allocation2 + $0x38] sm:$0xff] 0.0
          %350 = vst [vmem:[#allocation2 + $0x40] sm:$0xff] 0.0
          %351 = vst [vmem:[#allocation2 + $0x48] sm:$0xff] 0.0
          %352 = vst [vmem:[#allocation2 + $0x50] sm:$0xff] 0.0
          %353 = vst [vmem:[#allocation2 + $0x58] sm:$0xff] 0.0
          %354 = vst [vmem:[#allocation2 + $0x60] sm:$0xff] 0.0
          %355 = vst [vmem:[#allocation2 + $0x68] sm:$0xff] 0.0
          %356 = vst [vmem:[#allocation2 + $0x70] sm:$0xff] 0.0
          %357 = vst [vmem:[#allocation2 + $0x78] sm:$0xff] 0.0
          %358 = vst [vmem:[#allocation2 + $0x80] sm:$0xff] 0.0
          %359 = vst [vmem:[#allocation2 + $0x88] sm:$0xff] 0.0
          %360 = vst [vmem:[#allocation2 + $0x90] sm:$0xff] 0.0
          %361 = vst [vmem:[#allocation2 + $0x98] sm:$0xff] 0.0
          %362 = vst [vmem:[#allocation2 + $0xa0] sm:$0xff] 0.0
          %363 = vst [vmem:[#allocation2 + $0xa8] sm:$0xff] 0.0
          %364 = vst [vmem:[#allocation2 + $0xb0] sm:$0xff] 0.0
          %365 = vst [vmem:[#allocation2 + $0xb8] sm:$0xff] 0.0
          %366 = vst [vmem:[#allocation2 + $0xc0] sm:$0xff] 0.0
          %367 = vst [vmem:[#allocation2 + $0xc8] sm:$0xff] 0.0
          %368 = vst [vmem:[#allocation2 + $0xd0] sm:$0xff] 0.0
          %369 = vst [vmem:[#allocation2 + $0xd8] sm:$0xff] 0.0
          %370 = vst [vmem:[#allocation2 + $0xe0] sm:$0xff] 0.0
          %371 = vst [vmem:[#allocation2 + $0xe8] sm:$0xff] 0.0
          %372 = vst [vmem:[#allocation2 + $0xf0] sm:$0xff] 0.0
          %373 = vst [vmem:[#allocation2 + $0xf8] sm:$0xff] 0.0
          %374 = vst [vmem:[#allocation2 + $0x100] sm:$0xff] 0.0
          %375 = vst [vmem:[#allocation2 + $0x108] sm:$0xff] 0.0
          %376 = vst [vmem:[#allocation2 + $0x110] sm:$0xff] 0.0
          %377 = vst [vmem:[#allocation2 + $0x118] sm:$0xff] 0.0
          %378 = vst [vmem:[#allocation2 + $0x120] sm:$0xff] 0.0
          %379 = vst [vmem:[#allocation2 + $0x128] sm:$0xff] 0.0
          %380 = vst [vmem:[#allocation2 + $0x130] sm:$0xff] 0.0
          %381 = vst [vmem:[#allocation2 + $0x138] sm:$0xff] 0.0
          %382 = vst [vmem:[#allocation2 + $0x140] sm:$0xff] 0.0
          %383 = vst [vmem:[#allocation2 + $0x148] sm:$0xff] 0.0
          %384 = vst [vmem:[#allocation2 + $0x150] sm:$0xff] 0.0
          %385 = vst [vmem:[#allocation2 + $0x158] sm:$0xff] 0.0
          %386 = vst [vmem:[#allocation2 + $0x160] sm:$0xff] 0.0
          %387 = vst [vmem:[#allocation2 + $0x168] sm:$0xff] 0.0
          %388 = vst [vmem:[#allocation2 + $0x170] sm:$0xff] 0.0
          %389 = vst [vmem:[#allocation2 + $0x178] sm:$0xff] 0.0
          %390 = vst [vmem:[#allocation2 + $0x180] sm:$0xff] 0.0
          %391 = vst [vmem:[#allocation2 + $0x188] sm:$0xff] 0.0
          %392 = vst [vmem:[#allocation2 + $0x190] sm:$0xff] 0.0
          %393 = vst [vmem:[#allocation2 + $0x198] sm:$0xff] 0.0
          %394 = vst [vmem:[#allocation2 + $0x1a0] sm:$0xff] 0.0
          %395 = vst [vmem:[#allocation2 + $0x1a8] sm:$0xff] 0.0
          %396 = vst [vmem:[#allocation2 + $0x1b0] sm:$0xff] 0.0
          %397 = vst [vmem:[#allocation2 + $0x1b8] sm:$0xff] 0.0
          %398 = vst [vmem:[#allocation2 + $0x1c0] sm:$0xff] 0.0
          %399 = vst [vmem:[#allocation2 + $0x1c8] sm:$0xff] 0.0
          %400 = vst [vmem:[#allocation2 + $0x1d0] sm:$0xff] 0.0
          %401 = vst [vmem:[#allocation2 + $0x1d8] sm:$0xff] 0.0
          %402 = vst [vmem:[#allocation2 + $0x1e0] sm:$0xff] 0.0
          %403 = vst [vmem:[#allocation2 + $0x1e8] sm:$0xff] 0.0
          %404 = vst [vmem:[#allocation2 + $0x1f0] sm:$0xff] 0.0
          %405 = vst [vmem:[#allocation2 + $0x1f8] sm:$0xff] 0.0
        $region68: #{mlp_forward.1} parent=43 // pred_fallthru
          _
        %v406 = vld [vmem:[%s0] sm:$0xff]
        %v407 = vld [vmem:[%s0 + $0x8] sm:$0xff]
        %v408 = vld [vmem:[%s0 + $0x10] sm:$0xff]
        %v409 = vld [vmem:[%s0 + $0x18] sm:$0xff]
        %v410 = vld [vmem:[%s0 + $0x20] sm:$0xff]
        %v411 = vld [vmem:[%s0 + $0x28] sm:$0xff]
        %v412 = vld [vmem:[%s0 + $0x30] sm:$0xff]
        %v413 = vld [vmem:[%s0 + $0x38] sm:$0xff]
        %v414 = vld [vmem:[%s0 + $0x40] sm:$0xff]
        %v415 = vld [vmem:[%s0 + $0x48] sm:$0xff]
        %v416 = vld [vmem:[%s0 + $0x50] sm:$0xff]
        %v417 = vld [vmem:[%s0 + $0x58] sm:$0xff]
        %v418 = vld [vmem:[%s0 + $0x60] sm:$0xff]
        %v419 = vld [vmem:[%s0 + $0x68] sm:$0xff]
        %v420 = vld [vmem:[%s0 + $0x70] sm:$0xff]
        %v421 = vld [vmem:[%s0 + $0x78] sm:$0xff]
        %v422 = vld [vmem:[%s0 + $0x80] sm:$0xff]
        %v423 = vld [vmem:[%s0 + $0x88] sm:$0xff]
        %v424 = vld [vmem:[%s0 + $0x90] sm:$0xff]
        %v425 = vld [vmem:[%s0 + $0x98] sm:$0xff]
        %v426 = vld [vmem:[%s0 + $0xa0] sm:$0xff]
        %v427 = vld [vmem:[%s0 + $0xa8] sm:$0xff]
        %v428 = vld [vmem:[%s0 + $0xb0] sm:$0xff]
        %v429 = vld [vmem:[%s0 + $0xb8] sm:$0xff]
        %v430 = vld [vmem:[%s0 + $0xc0] sm:$0xff]
        %v431 = vld [vmem:[%s0 + $0xc8] sm:$0xff]
        %v432 = vld [vmem:[%s0 + $0xd0] sm:$0xff]
        %v433 = vld [vmem:[%s0 + $0xd8] sm:$0xff]
        %v434 = vld [vmem:[%s0 + $0xe0] sm:$0xff]
        %v435 = vld [vmem:[%s0 + $0xe8] sm:$0xff]
        %v436 = vld [vmem:[%s0 + $0xf0] sm:$0xff]
        %v437 = vld [vmem:[%s0 + $0xf8] sm:$0xff]
        %v438 = vld [vmem:[%s0 + $0x100] sm:$0xff]
        %v439 = vld [vmem:[%s0 + $0x108] sm:$0xff]
        %v440 = vld [vmem:[%s0 + $0x110] sm:$0xff]
        %v441 = vld [vmem:[%s0 + $0x118] sm:$0xff]
        %v442 = vld [vmem:[%s0 + $0x120] sm:$0xff]
        %v443 = vld [vmem:[%s0 + $0x128] sm:$0xff]
        %v444 = vld [vmem:[%s0 + $0x130] sm:$0xff]
        %v445 = vld [vmem:[%s0 + $0x138] sm:$0xff]
        %v446 = vld [vmem:[%s0 + $0x140] sm:$0xff]
        %v447 = vld [vmem:[%s0 + $0x148] sm:$0xff]
        %v448 = vld [vmem:[%s0 + $0x150] sm:$0xff]
        %v449 = vld [vmem:[%s0 + $0x158] sm:$0xff]
        %v450 = vld [vmem:[%s0 + $0x160] sm:$0xff]
        %v451 = vld [vmem:[%s0 + $0x168] sm:$0xff]
        %v452 = vld [vmem:[%s0 + $0x170] sm:$0xff]
        %v453 = vld [vmem:[%s0 + $0x178] sm:$0xff]
        %v454 = vld [vmem:[%s0 + $0x180] sm:$0xff]
        %v455 = vld [vmem:[%s0 + $0x188] sm:$0xff]
        %v456 = vld [vmem:[%s0 + $0x190] sm:$0xff]
        %v457 = vld [vmem:[%s0 + $0x198] sm:$0xff]
        %v458 = vld [vmem:[%s0 + $0x1a0] sm:$0xff]
        %v459 = vld [vmem:[%s0 + $0x1a8] sm:$0xff]
        %v460 = vld [vmem:[%s0 + $0x1b0] sm:$0xff]
        %v461 = vld [vmem:[%s0 + $0x1b8] sm:$0xff]
        %v462 = vld [vmem:[%s0 + $0x1c0] sm:$0xff]
        %v463 = vld [vmem:[%s0 + $0x1c8] sm:$0xff]
        %v464 = vld [vmem:[%s0 + $0x1d0] sm:$0xff]
        %v465 = vld [vmem:[%s0 + $0x1d8] sm:$0xff]
        %v466 = vld [vmem:[%s0 + $0x1e0] sm:$0xff]
        %v467 = vld [vmem:[%s0 + $0x1e8] sm:$0xff]
        %v468 = vld [vmem:[%s0 + $0x1f0] sm:$0xff]
        %v469 = vld [vmem:[%s0 + $0x1f8] sm:$0xff]
        %v470 = vld [vmem:[%s286] sm:$0xff]
        %v471 = vld [vmem:[%s286 + $0x8] sm:$0xff]
        %v472 = vld [vmem:[%s286 + $0x10] sm:$0xff]
        %v473 = vld [vmem:[%s286 + $0x18] sm:$0xff]
        %v474 = vld [vmem:[%s286 + $0x20] sm:$0xff]
        %v475 = vld [vmem:[%s286 + $0x28] sm:$0xff]
        %v476 = vld [vmem:[%s286 + $0x30] sm:$0xff]
        %v477 = vld [vmem:[%s286 + $0x38] sm:$0xff]
        %v478 = vld [vmem:[%s286 + $0x40] sm:$0xff]
        %v479 = vld [vmem:[%s286 + $0x48] sm:$0xff]
        %v480 = vld [vmem:[%s286 + $0x50] sm:$0xff]
        %v481 = vld [vmem:[%s286 + $0x58] sm:$0xff]
        %v482 = vld [vmem:[%s286 + $0x60] sm:$0xff]
        %v483 = vld [vmem:[%s286 + $0x68] sm:$0xff]
        %v484 = vld [vmem:[%s286 + $0x70] sm:$0xff]
        %v485 = vld [vmem:[%s286 + $0x78] sm:$0xff]
        %v486 = vld [vmem:[%s286 + $0x80] sm:$0xff]
        %v487 = vld [vmem:[%s286 + $0x88] sm:$0xff]
        %v488 = vld [vmem:[%s286 + $0x90] sm:$0xff]
        %v489 = vld [vmem:[%s286 + $0x98] sm:$0xff]
        %v490 = vld [vmem:[%s286 + $0xa0] sm:$0xff]
        %v491 = vld [vmem:[%s286 + $0xa8] sm:$0xff]
        %v492 = vld [vmem:[%s286 + $0xb0] sm:$0xff]
        %v493 = vld [vmem:[%s286 + $0xb8] sm:$0xff]
        %v494 = vld [vmem:[%s286 + $0xc0] sm:$0xff]
        %v495 = vld [vmem:[%s286 + $0xc8] sm:$0xff]
        %v496 = vld [vmem:[%s286 + $0xd0] sm:$0xff]
        %v497 = vld [vmem:[%s286 + $0xd8] sm:$0xff]
        %v498 = vld [vmem:[%s286 + $0xe0] sm:$0xff]
        %v499 = vld [vmem:[%s286 + $0xe8] sm:$0xff]
        %v500 = vld [vmem:[%s286 + $0xf0] sm:$0xff]
        %v501 = vld [vmem:[%s286 + $0xf8] sm:$0xff]
        %v502 = vld [vmem:[%s286 + $0x100] sm:$0xff]
        %v503 = vld [vmem:[%s286 + $0x108] sm:$0xff]
        %v504 = vld [vmem:[%s286 + $0x110] sm:$0xff]
        %v505 = vld [vmem:[%s286 + $0x118] sm:$0xff]
        %v506 = vld [vmem:[%s286 + $0x120] sm:$0xff]
        %v507 = vld [vmem:[%s286 + $0x128] sm:$0xff]
        %v508 = vld [vmem:[%s286 + $0x130] sm:$0xff]
        %v509 = vld [vmem:[%s286 + $0x138] sm:$0xff]
        %v510 = vld [vmem:[%s286 + $0x140] sm:$0xff]
        %v511 = vld [vmem:[%s286 + $0x148] sm:$0xff]
        %v512 = vld [vmem:[%s286 + $0x150] sm:$0xff]
        %v513 = vld [vmem:[%s286 + $0x158] sm:$0xff]
        %v514 = vld [vmem:[%s286 + $0x160] sm:$0xff]
        %v515 = vld [vmem:[%s286 + $0x168] sm:$0xff]
        %v516 = vld [vmem:[%s286 + $0x170] sm:$0xff]
        %v517 = vld [vmem:[%s286 + $0x178] sm:$0xff]
        %v518 = vld [vmem:[%s286 + $0x180] sm:$0xff]
        %v519 = vld [vmem:[%s286 + $0x188] sm:$0xff]
        %v520 = vld [vmem:[%s286 + $0x190] sm:$0xff]
        %v521 = vld [vmem:[%s286 + $0x198] sm:$0xff]
        %v522 = vld [vmem:[%s286 + $0x1a0] sm:$0xff]
        %v523 = vld [vmem:[%s286 + $0x1a8] sm:$0xff]
        %v524 = vld [vmem:[%s286 + $0x1b0] sm:$0xff]
        %v525 = vld [vmem:[%s286 + $0x1b8] sm:$0xff]
        %v526 = vld [vmem:[%s286 + $0x1c0] sm:$0xff]
        %v527 = vld [vmem:[%s286 + $0x1c8] sm:$0xff]
        %v528 = vld [vmem:[%s286 + $0x1d0] sm:$0xff]
        %v529 = vld [vmem:[%s286 + $0x1d8] sm:$0xff]
        %v530 = vld [vmem:[%s286 + $0x1e0] sm:$0xff]
        %v531 = vld [vmem:[%s286 + $0x1e8] sm:$0xff]
        %v532 = vld [vmem:[%s286 + $0x1f0] sm:$0xff]
        %v533 = vld [vmem:[%s286 + $0x1f8] sm:$0xff]
        %v534 = vld [vmem:[%s286 + $0x200] sm:$0xff]
        %v535 = vld [vmem:[%s286 + $0x208] sm:$0xff]
        %v536 = vld [vmem:[%s286 + $0x210] sm:$0xff]
        %v537 = vld [vmem:[%s286 + $0x218] sm:$0xff]
        %v538 = vld [vmem:[%s286 + $0x220] sm:$0xff]
        %v539 = vld [vmem:[%s286 + $0x228] sm:$0xff]
        %v540 = vld [vmem:[%s286 + $0x230] sm:$0xff]
        %v541 = vld [vmem:[%s286 + $0x238] sm:$0xff]
        %v542 = vld [vmem:[%s286 + $0x240] sm:$0xff]
        %v543 = vld [vmem:[%s286 + $0x248] sm:$0xff]
        %v544 = vld [vmem:[%s286 + $0x250] sm:$0xff]
        %v545 = vld [vmem:[%s286 + $0x258] sm:$0xff]
        %v546 = vld [vmem:[%s286 + $0x260] sm:$0xff]
        %v547 = vld [vmem:[%s286 + $0x268] sm:$0xff]
        %v548 = vld [vmem:[%s286 + $0x270] sm:$0xff]
        %v549 = vld [vmem:[%s286 + $0x278] sm:$0xff]
        %v550 = vld [vmem:[%s286 + $0x280] sm:$0xff]
        %v551 = vld [vmem:[%s286 + $0x288] sm:$0xff]
        %v552 = vld [vmem:[%s286 + $0x290] sm:$0xff]
        %v553 = vld [vmem:[%s286 + $0x298] sm:$0xff]
        %v554 = vld [vmem:[%s286 + $0x2a0] sm:$0xff]
        %v555 = vld [vmem:[%s286 + $0x2a8] sm:$0xff]
        %v556 = vld [vmem:[%s286 + $0x2b0] sm:$0xff]
        %v557 = vld [vmem:[%s286 + $0x2b8] sm:$0xff]
        %v558 = vld [vmem:[%s286 + $0x2c0] sm:$0xff]
        %v559 = vld [vmem:[%s286 + $0x2c8] sm:$0xff]
        %v560 = vld [vmem:[%s286 + $0x2d0] sm:$0xff]
        %v561 = vld [vmem:[%s286 + $0x2d8] sm:$0xff]
        %v562 = vld [vmem:[%s286 + $0x2e0] sm:$0xff]
        %v563 = vld [vmem:[%s286 + $0x2e8] sm:$0xff]
        %v564 = vld [vmem:[%s286 + $0x2f0] sm:$0xff]
        %v565 = vld [vmem:[%s286 + $0x2f8] sm:$0xff]
        %v566 = vld [vmem:[%s286 + $0x300] sm:$0xff]
        %v567 = vld [vmem:[%s286 + $0x308] sm:$0xff]
        %v568 = vld [vmem:[%s286 + $0x310] sm:$0xff]
        %v569 = vld [vmem:[%s286 + $0x318] sm:$0xff]
        %v570 = vld [vmem:[%s286 + $0x320] sm:$0xff]
        %v571 = vld [vmem:[%s286 + $0x328] sm:$0xff]
        %v572 = vld [vmem:[%s286 + $0x330] sm:$0xff]
        %v573 = vld [vmem:[%s286 + $0x338] sm:$0xff]
        %v574 = vld [vmem:[%s286 + $0x340] sm:$0xff]
        %v575 = vld [vmem:[%s286 + $0x348] sm:$0xff]
        %v576 = vld [vmem:[%s286 + $0x350] sm:$0xff]
        %v577 = vld [vmem:[%s286 + $0x358] sm:$0xff]
        %v578 = vld [vmem:[%s286 + $0x360] sm:$0xff]
        %v579 = vld [vmem:[%s286 + $0x368] sm:$0xff]
        %v580 = vld [vmem:[%s286 + $0x370] sm:$0xff]
        %v581 = vld [vmem:[%s286 + $0x378] sm:$0xff]
        %v582 = vld [vmem:[%s286 + $0x380] sm:$0xff]
        %v583 = vld [vmem:[%s286 + $0x388] sm:$0xff]
        %v584 = vld [vmem:[%s286 + $0x390] sm:$0xff]
        %v585 = vld [vmem:[%s286 + $0x398] sm:$0xff]
        %v586 = vld [vmem:[%s286 + $0x3a0] sm:$0xff]
        %v587 = vld [vmem:[%s286 + $0x3a8] sm:$0xff]
        %v588 = vld [vmem:[%s286 + $0x3b0] sm:$0xff]
        %v589 = vld [vmem:[%s286 + $0x3b8] sm:$0xff]
        %v590 = vld [vmem:[%s286 + $0x3c0] sm:$0xff]
        %v591 = vld [vmem:[%s286 + $0x3c8] sm:$0xff]
        %v592 = vld [vmem:[%s286 + $0x3d0] sm:$0xff]
        %v593 = vld [vmem:[%s286 + $0x3d8] sm:$0xff]
        %v594 = vld [vmem:[%s286 + $0x3e0] sm:$0xff]
        %v595 = vld [vmem:[%s286 + $0x3e8] sm:$0xff]
        %v596 = vld [vmem:[%s286 + $0x3f0] sm:$0xff]
        %v597 = vld [vmem:[%s286 + $0x3f8] sm:$0xff]
        %v598 = vld [vmem:[%s286 + $0x400] sm:$0xff]
        %v599 = vld [vmem:[%s286 + $0x408] sm:$0xff]
        %v600 = vld [vmem:[%s286 + $0x410] sm:$0xff]
        %v601 = vld [vmem:[%s286 + $0x418] sm:$0xff]
        %v602 = vld [vmem:[%s286 + $0x420] sm:$0xff]
        %v603 = vld [vmem:[%s286 + $0x428] sm:$0xff]
        %v604 = vld [vmem:[%s286 + $0x430] sm:$0xff]
        %v605 = vld [vmem:[%s286 + $0x438] sm:$0xff]
        %v606 = vld [vmem:[%s286 + $0x440] sm:$0xff]
        %v607 = vld [vmem:[%s286 + $0x448] sm:$0xff]
        %v608 = vld [vmem:[%s286 + $0x450] sm:$0xff]
        %v609 = vld [vmem:[%s286 + $0x458] sm:$0xff]
        %v610 = vld [vmem:[%s286 + $0x460] sm:$0xff]
        %v611 = vld [vmem:[%s286 + $0x468] sm:$0xff]
        %v612 = vld [vmem:[%s286 + $0x470] sm:$0xff]
        %v613 = vld [vmem:[%s286 + $0x478] sm:$0xff]
        %v614 = vld [vmem:[%s286 + $0x480] sm:$0xff]
        %v615 = vld [vmem:[%s286 + $0x488] sm:$0xff]
        %v616 = vld [vmem:[%s286 + $0x490] sm:$0xff]
        %v617 = vld [vmem:[%s286 + $0x498] sm:$0xff]
        %v618 = vld [vmem:[%s286 + $0x4a0] sm:$0xff]
        %v619 = vld [vmem:[%s286 + $0x4a8] sm:$0xff]
        %v620 = vld [vmem:[%s286 + $0x4b0] sm:$0xff]
        %v621 = vld [vmem:[%s286 + $0x4b8] sm:$0xff]
        %v622 = vld [vmem:[%s286 + $0x4c0] sm:$0xff]
        %v623 = vld [vmem:[%s286 + $0x4c8] sm:$0xff]
        %v624 = vld [vmem:[%s286 + $0x4d0] sm:$0xff]
        %v625 = vld [vmem:[%s286 + $0x4d8] sm:$0xff]
        %v626 = vld [vmem:[%s286 + $0x4e0] sm:$0xff]
        %v627 = vld [vmem:[%s286 + $0x4e8] sm:$0xff]
        %v628 = vld [vmem:[%s286 + $0x4f0] sm:$0xff]
        %v629 = vld [vmem:[%s286 + $0x4f8] sm:$0xff]
        %v630 = vld [vmem:[%s286 + $0x500] sm:$0xff]
        %v631 = vld [vmem:[%s286 + $0x508] sm:$0xff]
        %v632 = vld [vmem:[%s286 + $0x510] sm:$0xff]
        %v633 = vld [vmem:[%s286 + $0x518] sm:$0xff]
        %v634 = vld [vmem:[%s286 + $0x520] sm:$0xff]
        %v635 = vld [vmem:[%s286 + $0x528] sm:$0xff]
        %v636 = vld [vmem:[%s286 + $0x530] sm:$0xff]
        %v637 = vld [vmem:[%s286 + $0x538] sm:$0xff]
        %v638 = vld [vmem:[%s286 + $0x540] sm:$0xff]
        %v639 = vld [vmem:[%s286 + $0x548] sm:$0xff]
        %v640 = vld [vmem:[%s286 + $0x550] sm:$0xff]
        %v641 = vld [vmem:[%s286 + $0x558] sm:$0xff]
        %v642 = vld [vmem:[%s286 + $0x560] sm:$0xff]
        %v643 = vld [vmem:[%s286 + $0x568] sm:$0xff]
        %v644 = vld [vmem:[%s286 + $0x570] sm:$0xff]
        %v645 = vld [vmem:[%s286 + $0x578] sm:$0xff]
        %v646 = vld [vmem:[%s286 + $0x580] sm:$0xff]
        %v647 = vld [vmem:[%s286 + $0x588] sm:$0xff]
        %v648 = vld [vmem:[%s286 + $0x590] sm:$0xff]
        %v649 = vld [vmem:[%s286 + $0x598] sm:$0xff]
        %v650 = vld [vmem:[%s286 + $0x5a0] sm:$0xff]
        %v651 = vld [vmem:[%s286 + $0x5a8] sm:$0xff]
        %v652 = vld [vmem:[%s286 + $0x5b0] sm:$0xff]
        %v653 = vld [vmem:[%s286 + $0x5b8] sm:$0xff]
        %v654 = vld [vmem:[%s286 + $0x5c0] sm:$0xff]
        %v655 = vld [vmem:[%s286 + $0x5c8] sm:$0xff]
        %v656 = vld [vmem:[%s286 + $0x5d0] sm:$0xff]
        %v657 = vld [vmem:[%s286 + $0x5d8] sm:$0xff]
        %v658 = vld [vmem:[%s286 + $0x5e0] sm:$0xff]
        %v659 = vld [vmem:[%s286 + $0x5e8] sm:$0xff]
        %v660 = vld [vmem:[%s286 + $0x5f0] sm:$0xff]
        %v661 = vld [vmem:[%s286 + $0x5f8] sm:$0xff]
        %v662 = vld [vmem:[%s286 + $0x600] sm:$0xff]
        %v663 = vld [vmem:[%s286 + $0x608] sm:$0xff]
        %v664 = vld [vmem:[%s286 + $0x610] sm:$0xff]
        %v665 = vld [vmem:[%s286 + $0x618] sm:$0xff]
        %v666 = vld [vmem:[%s286 + $0x620] sm:$0xff]
        %v667 = vld [vmem:[%s286 + $0x628] sm:$0xff]
        %v668 = vld [vmem:[%s286 + $0x630] sm:$0xff]
        %v669 = vld [vmem:[%s286 + $0x638] sm:$0xff]
        %v670 = vld [vmem:[%s286 + $0x640] sm:$0xff]
        %v671 = vld [vmem:[%s286 + $0x648] sm:$0xff]
        %v672 = vld [vmem:[%s286 + $0x650] sm:$0xff]
        %v673 = vld [vmem:[%s286 + $0x658] sm:$0xff]
        %v674 = vld [vmem:[%s286 + $0x660] sm:$0xff]
        %v675 = vld [vmem:[%s286 + $0x668] sm:$0xff]
        %v676 = vld [vmem:[%s286 + $0x670] sm:$0xff]
        %v677 = vld [vmem:[%s286 + $0x678] sm:$0xff]
        %v678 = vld [vmem:[%s286 + $0x680] sm:$0xff]
        %v679 = vld [vmem:[%s286 + $0x688] sm:$0xff]
        %v680 = vld [vmem:[%s286 + $0x690] sm:$0xff]
        %v681 = vld [vmem:[%s286 + $0x698] sm:$0xff]
        %v682 = vld [vmem:[%s286 + $0x6a0] sm:$0xff]
        %v683 = vld [vmem:[%s286 + $0x6a8] sm:$0xff]
        %v684 = vld [vmem:[%s286 + $0x6b0] sm:$0xff]
        %v685 = vld [vmem:[%s286 + $0x6b8] sm:$0xff]
        %v686 = vld [vmem:[%s286 + $0x6c0] sm:$0xff]
        %v687 = vld [vmem:[%s286 + $0x6c8] sm:$0xff]
        %v688 = vld [vmem:[%s286 + $0x6d0] sm:$0xff]
        %v689 = vld [vmem:[%s286 + $0x6d8] sm:$0xff]
        %v690 = vld [vmem:[%s286 + $0x6e0] sm:$0xff]
        %v691 = vld [vmem:[%s286 + $0x6e8] sm:$0xff]
        %v692 = vld [vmem:[%s286 + $0x6f0] sm:$0xff]
        %v693 = vld [vmem:[%s286 + $0x6f8] sm:$0xff]
        %v694 = vld [vmem:[%s286 + $0x700] sm:$0xff]
        %v695 = vld [vmem:[%s286 + $0x708] sm:$0xff]
        %v696 = vld [vmem:[%s286 + $0x710] sm:$0xff]
        %v697 = vld [vmem:[%s286 + $0x718] sm:$0xff]
        %v698 = vld [vmem:[%s286 + $0x720] sm:$0xff]
        %v699 = vld [vmem:[%s286 + $0x728] sm:$0xff]
        %v700 = vld [vmem:[%s286 + $0x730] sm:$0xff]
        %v701 = vld [vmem:[%s286 + $0x738] sm:$0xff]
        %v702 = vld [vmem:[%s286 + $0x740] sm:$0xff]
        %v703 = vld [vmem:[%s286 + $0x748] sm:$0xff]
        %v704 = vld [vmem:[%s286 + $0x750] sm:$0xff]
        %v705 = vld [vmem:[%s286 + $0x758] sm:$0xff]
        %v706 = vld [vmem:[%s286 + $0x760] sm:$0xff]
        %v707 = vld [vmem:[%s286 + $0x768] sm:$0xff]
        %v708 = vld [vmem:[%s286 + $0x770] sm:$0xff]
        %v709 = vld [vmem:[%s286 + $0x778] sm:$0xff]
        %v710 = vld [vmem:[%s286 + $0x780] sm:$0xff]
        %v711 = vld [vmem:[%s286 + $0x788] sm:$0xff]
        %v712 = vld [vmem:[%s286 + $0x790] sm:$0xff]
        %v713 = vld [vmem:[%s286 + $0x798] sm:$0xff]
        %v714 = vld [vmem:[%s286 + $0x7a0] sm:$0xff]
        %v715 = vld [vmem:[%s286 + $0x7a8] sm:$0xff]
        %v716 = vld [vmem:[%s286 + $0x7b0] sm:$0xff]
        %v717 = vld [vmem:[%s286 + $0x7b8] sm:$0xff]
        %v718 = vld [vmem:[%s286 + $0x7c0] sm:$0xff]
        %v719 = vld [vmem:[%s286 + $0x7c8] sm:$0xff]
        %v720 = vld [vmem:[%s286 + $0x7d0] sm:$0xff]
        %v721 = vld [vmem:[%s286 + $0x7d8] sm:$0xff]
        %v722 = vld [vmem:[%s286 + $0x7e0] sm:$0xff]
        %v723 = vld [vmem:[%s286 + $0x7e8] sm:$0xff]
        %v724 = vld [vmem:[%s286 + $0x7f0] sm:$0xff]
        %v725 = vld [vmem:[%s286 + $0x7f8] sm:$0xff]
        %v790 = vunpack.c.l.b16 %v406
        %v791 = vunpack.c.h.b16 %v406
        %v792 = vunpack.c.l.b16 %v407
        %v793 = vunpack.c.h.b16 %v407
        %v794 = vunpack.c.l.b16 %v408
        %v795 = vunpack.c.h.b16 %v408
        %v796 = vunpack.c.l.b16 %v409
        %v797 = vunpack.c.h.b16 %v409
        %v798 = vunpack.c.l.b16 %v410
        %v799 = vunpack.c.h.b16 %v410
        %v800 = vunpack.c.l.b16 %v411
        %v801 = vunpack.c.h.b16 %v411
        %v802 = vunpack.c.l.b16 %v412
        %v803 = vunpack.c.h.b16 %v412
        %v804 = vunpack.c.l.b16 %v413
        %v805 = vunpack.c.h.b16 %v413
        %v806 = vunpack.c.l.b16 %v414
        %v807 = vunpack.c.h.b16 %v414
        %v808 = vunpack.c.l.b16 %v415
        %v809 = vunpack.c.h.b16 %v415
        %v810 = vunpack.c.l.b16 %v416
        %v811 = vunpack.c.h.b16 %v416
        %v812 = vunpack.c.l.b16 %v417
        %v813 = vunpack.c.h.b16 %v417
        %v814 = vunpack.c.l.b16 %v418
        %v815 = vunpack.c.h.b16 %v418
        %v816 = vunpack.c.l.b16 %v419
        %v817 = vunpack.c.h.b16 %v419
        %v818 = vunpack.c.l.b16 %v420
        %v819 = vunpack.c.h.b16 %v420
        %v820 = vunpack.c.l.b16 %v421
        %v821 = vunpack.c.h.b16 %v421
        %v822 = vunpack.c.l.b16 %v422
        %v823 = vunpack.c.h.b16 %v422
        %v824 = vunpack.c.l.b16 %v423
        %v825 = vunpack.c.h.b16 %v423
        %v826 = vunpack.c.l.b16 %v424
        %v827 = vunpack.c.h.b16 %v424
        %v828 = vunpack.c.l.b16 %v425
        %v829 = vunpack.c.h.b16 %v425
        %v830 = vunpack.c.l.b16 %v426
        %v831 = vunpack.c.h.b16 %v426
        %v832 = vunpack.c.l.b16 %v427
        %v833 = vunpack.c.h.b16 %v427
        %v834 = vunpack.c.l.b16 %v428
        %v835 = vunpack.c.h.b16 %v428
        %v836 = vunpack.c.l.b16 %v429
        %v837 = vunpack.c.h.b16 %v429
        %v838 = vunpack.c.l.b16 %v430
        %v839 = vunpack.c.h.b16 %v430
        %v840 = vunpack.c.l.b16 %v431
        %v841 = vunpack.c.h.b16 %v431
        %v842 = vunpack.c.l.b16 %v432
        %v843 = vunpack.c.h.b16 %v432
        %v844 = vunpack.c.l.b16 %v433
        %v845 = vunpack.c.h.b16 %v433
        %v846 = vunpack.c.l.b16 %v434
        %v847 = vunpack.c.h.b16 %v434
        %v848 = vunpack.c.l.b16 %v435
        %v849 = vunpack.c.h.b16 %v435
        %v850 = vunpack.c.l.b16 %v436
        %v851 = vunpack.c.h.b16 %v436
        %v852 = vunpack.c.l.b16 %v437
        %v853 = vunpack.c.h.b16 %v437
        %v854 = vunpack.c.l.b16 %v438
        %v855 = vunpack.c.h.b16 %v438
        %v856 = vunpack.c.l.b16 %v439
        %v857 = vunpack.c.h.b16 %v439
        %v858 = vunpack.c.l.b16 %v440
        %v859 = vunpack.c.h.b16 %v440
        %v860 = vunpack.c.l.b16 %v441
        %v861 = vunpack.c.h.b16 %v441
        %v862 = vunpack.c.l.b16 %v442
        %v863 = vunpack.c.h.b16 %v442
        %v864 = vunpack.c.l.b16 %v443
        %v865 = vunpack.c.h.b16 %v443
        %v866 = vunpack.c.l.b16 %v444
        %v867 = vunpack.c.h.b16 %v444
        %v868 = vunpack.c.l.b16 %v445
        %v869 = vunpack.c.h.b16 %v445
        %v870 = vunpack.c.l.b16 %v446
        %v871 = vunpack.c.h.b16 %v446
        %v872 = vunpack.c.l.b16 %v447
        %v873 = vunpack.c.h.b16 %v447
        %v874 = vunpack.c.l.b16 %v448
        %v875 = vunpack.c.h.b16 %v448
        %v876 = vunpack.c.l.b16 %v449
        %v877 = vunpack.c.h.b16 %v449
        %v878 = vunpack.c.l.b16 %v450
        %v879 = vunpack.c.h.b16 %v450
        %v880 = vunpack.c.l.b16 %v451
        %v881 = vunpack.c.h.b16 %v451
        %v882 = vunpack.c.l.b16 %v452
        %v883 = vunpack.c.h.b16 %v452
        %v884 = vunpack.c.l.b16 %v453
        %v885 = vunpack.c.h.b16 %v453
        %v886 = vunpack.c.l.b16 %v454
        %v887 = vunpack.c.h.b16 %v454
        %v888 = vunpack.c.l.b16 %v455
        %v889 = vunpack.c.h.b16 %v455
        %v890 = vunpack.c.l.b16 %v456
        %v891 = vunpack.c.h.b16 %v456
        %v892 = vunpack.c.l.b16 %v457
        %v893 = vunpack.c.h.b16 %v457
        %v894 = vunpack.c.l.b16 %v458
        %v895 = vunpack.c.h.b16 %v458
        %v896 = vunpack.c.l.b16 %v459
        %v897 = vunpack.c.h.b16 %v459
        %v898 = vunpack.c.l.b16 %v460
        %v899 = vunpack.c.h.b16 %v460
        %v900 = vunpack.c.l.b16 %v461
        %v901 = vunpack.c.h.b16 %v461
        %v902 = vunpack.c.l.b16 %v462
        %v903 = vunpack.c.h.b16 %v462
        %v904 = vunpack.c.l.b16 %v463
        %v905 = vunpack.c.h.b16 %v463
        %v906 = vunpack.c.l.b16 %v464
        %v907 = vunpack.c.h.b16 %v464
        %v908 = vunpack.c.l.b16 %v465
        %v909 = vunpack.c.h.b16 %v465
        %v910 = vunpack.c.l.b16 %v466
        %v911 = vunpack.c.h.b16 %v466
        %v912 = vunpack.c.l.b16 %v467
        %v913 = vunpack.c.h.b16 %v467
        %v914 = vunpack.c.l.b16 %v468
        %v915 = vunpack.c.h.b16 %v468
        %v916 = vunpack.c.l.b16 %v469
        %v917 = vunpack.c.h.b16 %v469
        %v918 = vpack.c.b16 %v794, %v790
        %v919 = vpack.c.b16 %v795, %v791
        %v920 = vpack.c.b16 %v796, %v792
        %v921 = vpack.c.b16 %v797, %v793
        %v922 = vpack.c.b16 %v802, %v798
        %v923 = vpack.c.b16 %v803, %v799
        %v924 = vpack.c.b16 %v804, %v800
        %v925 = vpack.c.b16 %v805, %v801
        %v926 = vpack.c.b16 %v810, %v806
        %v927 = vpack.c.b16 %v811, %v807
        %v928 = vpack.c.b16 %v812, %v808
        %v929 = vpack.c.b16 %v813, %v809
        %v930 = vpack.c.b16 %v818, %v814
        %v931 = vpack.c.b16 %v819, %v815
        %v932 = vpack.c.b16 %v820, %v816
        %v933 = vpack.c.b16 %v821, %v817
        %v934 = vpack.c.b16 %v826, %v822
        %v935 = vpack.c.b16 %v827, %v823
        %v936 = vpack.c.b16 %v828, %v824
        %v937 = vpack.c.b16 %v829, %v825
        %v938 = vpack.c.b16 %v834, %v830
        %v939 = vpack.c.b16 %v835, %v831
        %v940 = vpack.c.b16 %v836, %v832
        %v941 = vpack.c.b16 %v837, %v833
        %v942 = vpack.c.b16 %v842, %v838
        %v943 = vpack.c.b16 %v843, %v839
        %v944 = vpack.c.b16 %v844, %v840
        %v945 = vpack.c.b16 %v845, %v841
        %v946 = vpack.c.b16 %v850, %v846
        %v947 = vpack.c.b16 %v851, %v847
        %v948 = vpack.c.b16 %v852, %v848
        %v949 = vpack.c.b16 %v853, %v849
        %v950 = vpack.c.b16 %v858, %v854
        %v951 = vpack.c.b16 %v859, %v855
        %v952 = vpack.c.b16 %v860, %v856
        %v953 = vpack.c.b16 %v861, %v857
        %v954 = vpack.c.b16 %v866, %v862
        %v955 = vpack.c.b16 %v867, %v863
        %v956 = vpack.c.b16 %v868, %v864
        %v957 = vpack.c.b16 %v869, %v865
        %v958 = vpack.c.b16 %v874, %v870
        %v959 = vpack.c.b16 %v875, %v871
        %v960 = vpack.c.b16 %v876, %v872
        %v961 = vpack.c.b16 %v877, %v873
        %v962 = vpack.c.b16 %v882, %v878
        %v963 = vpack.c.b16 %v883, %v879
        %v964 = vpack.c.b16 %v884, %v880
        %v965 = vpack.c.b16 %v885, %v881
        %v966 = vpack.c.b16 %v890, %v886
        %v967 = vpack.c.b16 %v891, %v887
        %v968 = vpack.c.b16 %v892, %v888
        %v969 = vpack.c.b16 %v893, %v889
        %v970 = vpack.c.b16 %v898, %v894
        %v971 = vpack.c.b16 %v899, %v895
        %v972 = vpack.c.b16 %v900, %v896
        %v973 = vpack.c.b16 %v901, %v897
        %v974 = vpack.c.b16 %v906, %v902
        %v975 = vpack.c.b16 %v907, %v903
        %v976 = vpack.c.b16 %v908, %v904
        %v977 = vpack.c.b16 %v909, %v905
        %v978 = vpack.c.b16 %v914, %v910
        %v979 = vpack.c.b16 %v915, %v911
        %v980 = vpack.c.b16 %v916, %v912
        %v981 = vpack.c.b16 %v917, %v913
        %v1302 = vunpack.c.l.b16 %v470
        %v1303 = vunpack.c.h.b16 %v470
        %v1304 = vunpack.c.l.b16 %v471
        %v1305 = vunpack.c.h.b16 %v471
        %v1306 = vunpack.c.l.b16 %v472
        %v1307 = vunpack.c.h.b16 %v472
        %v1308 = vunpack.c.l.b16 %v473
        %v1309 = vunpack.c.h.b16 %v473
        %v1310 = vunpack.c.l.b16 %v474
        %v1311 = vunpack.c.h.b16 %v474
        %v1312 = vunpack.c.l.b16 %v475
        %v1313 = vunpack.c.h.b16 %v475
        %v1314 = vunpack.c.l.b16 %v476
        %v1315 = vunpack.c.h.b16 %v476
        %v1316 = vunpack.c.l.b16 %v477
        %v1317 = vunpack.c.h.b16 %v477
        %v1318 = vunpack.c.l.b16 %v478
        %v1319 = vunpack.c.h.b16 %v478
        %v1320 = vunpack.c.l.b16 %v479
        %v1321 = vunpack.c.h.b16 %v479
        %v1322 = vunpack.c.l.b16 %v480
        %v1323 = vunpack.c.h.b16 %v480
        %v1324 = vunpack.c.l.b16 %v481
        %v1325 = vunpack.c.h.b16 %v481
        %v1326 = vunpack.c.l.b16 %v482
        %v1327 = vunpack.c.h.b16 %v482
        %v1328 = vunpack.c.l.b16 %v483
        %v1329 = vunpack.c.h.b16 %v483
        %v1330 = vunpack.c.l.b16 %v484
        %v1331 = vunpack.c.h.b16 %v484
        %v1332 = vunpack.c.l.b16 %v485
        %v1333 = vunpack.c.h.b16 %v485
        %v1334 = vunpack.c.l.b16 %v486
        %v1335 = vunpack.c.h.b16 %v486
        %v1336 = vunpack.c.l.b16 %v487
        %v1337 = vunpack.c.h.b16 %v487
        %v1338 = vunpack.c.l.b16 %v488
        %v1339 = vunpack.c.h.b16 %v488
        %v1340 = vunpack.c.l.b16 %v489
        %v1341 = vunpack.c.h.b16 %v489
        %v1342 = vunpack.c.l.b16 %v490
        %v1343 = vunpack.c.h.b16 %v490
        %v1344 = vunpack.c.l.b16 %v491
        %v1345 = vunpack.c.h.b16 %v491
        %v1346 = vunpack.c.l.b16 %v492
        %v1347 = vunpack.c.h.b16 %v492
        %v1348 = vunpack.c.l.b16 %v493
        %v1349 = vunpack.c.h.b16 %v493
        %v1350 = vunpack.c.l.b16 %v494
        %v1351 = vunpack.c.h.b16 %v494
        %v1352 = vunpack.c.l.b16 %v495
        %v1353 = vunpack.c.h.b16 %v495
        %v1354 = vunpack.c.l.b16 %v496
        %v1355 = vunpack.c.h.b16 %v496
        %v1356 = vunpack.c.l.b16 %v497
        %v1357 = vunpack.c.h.b16 %v497
        %v1358 = vunpack.c.l.b16 %v498
        %v1359 = vunpack.c.h.b16 %v498
        %v1360 = vunpack.c.l.b16 %v499
        %v1361 = vunpack.c.h.b16 %v499
        %v1362 = vunpack.c.l.b16 %v500
        %v1363 = vunpack.c.h.b16 %v500
        %v1364 = vunpack.c.l.b16 %v501
        %v1365 = vunpack.c.h.b16 %v501
        %v1366 = vunpack.c.l.b16 %v502
        %v1367 = vunpack.c.h.b16 %v502
        %v1368 = vunpack.c.l.b16 %v503
        %v1369 = vunpack.c.h.b16 %v503
        %v1370 = vunpack.c.l.b16 %v504
        %v1371 = vunpack.c.h.b16 %v504
        %v1372 = vunpack.c.l.b16 %v505
        %v1373 = vunpack.c.h.b16 %v505
        %v1374 = vunpack.c.l.b16 %v506
        %v1375 = vunpack.c.h.b16 %v506
        %v1376 = vunpack.c.l.b16 %v507
        %v1377 = vunpack.c.h.b16 %v507
        %v1378 = vunpack.c.l.b16 %v508
        %v1379 = vunpack.c.h.b16 %v508
        %v1380 = vunpack.c.l.b16 %v509
        %v1381 = vunpack.c.h.b16 %v509
        %v1382 = vunpack.c.l.b16 %v510
        %v1383 = vunpack.c.h.b16 %v510
        %v1384 = vunpack.c.l.b16 %v511
        %v1385 = vunpack.c.h.b16 %v511
        %v1386 = vunpack.c.l.b16 %v512
        %v1387 = vunpack.c.h.b16 %v512
        %v1388 = vunpack.c.l.b16 %v513
        %v1389 = vunpack.c.h.b16 %v513
        %v1390 = vunpack.c.l.b16 %v514
        %v1391 = vunpack.c.h.b16 %v514
        %v1392 = vunpack.c.l.b16 %v515
        %v1393 = vunpack.c.h.b16 %v515
        %v1394 = vunpack.c.l.b16 %v516
        %v1395 = vunpack.c.h.b16 %v516
        %v1396 = vunpack.c.l.b16 %v517
        %v1397 = vunpack.c.h.b16 %v517
        %v1398 = vunpack.c.l.b16 %v518
        %v1399 = vunpack.c.h.b16 %v518
        %v1400 = vunpack.c.l.b16 %v519
        %v1401 = vunpack.c.h.b16 %v519
        %v1402 = vunpack.c.l.b16 %v520
        %v1403 = vunpack.c.h.b16 %v520
        %v1404 = vunpack.c.l.b16 %v521
        %v1405 = vunpack.c.h.b16 %v521
        %v1406 = vunpack.c.l.b16 %v522
        %v1407 = vunpack.c.h.b16 %v522
        %v1408 = vunpack.c.l.b16 %v523
        %v1409 = vunpack.c.h.b16 %v523
        %v1410 = vunpack.c.l.b16 %v524
        %v1411 = vunpack.c.h.b16 %v524
        %v1412 = vunpack.c.l.b16 %v525
        %v1413 = vunpack.c.h.b16 %v525
        %v1414 = vunpack.c.l.b16 %v526
        %v1415 = vunpack.c.h.b16 %v526
        %v1416 = vunpack.c.l.b16 %v527
        %v1417 = vunpack.c.h.b16 %v527
        %v1418 = vunpack.c.l.b16 %v528
        %v1419 = vunpack.c.h.b16 %v528
        %v1420 = vunpack.c.l.b16 %v529
        %v1421 = vunpack.c.h.b16 %v529
        %v1422 = vunpack.c.l.b16 %v530
        %v1423 = vunpack.c.h.b16 %v530
        %v1424 = vunpack.c.l.b16 %v531
        %v1425 = vunpack.c.h.b16 %v531
        %v1426 = vunpack.c.l.b16 %v532
        %v1427 = vunpack.c.h.b16 %v532
        %v1428 = vunpack.c.l.b16 %v533
        %v1429 = vunpack.c.h.b16 %v533
        %v1430 = vunpack.c.l.b16 %v534
        %v1431 = vunpack.c.h.b16 %v534
        %v1432 = vunpack.c.l.b16 %v535
        %v1433 = vunpack.c.h.b16 %v535
        %v1434 = vunpack.c.l.b16 %v536
        %v1435 = vunpack.c.h.b16 %v536
        %v1436 = vunpack.c.l.b16 %v537
        %v1437 = vunpack.c.h.b16 %v537
        %v1438 = vunpack.c.l.b16 %v538
        %v1439 = vunpack.c.h.b16 %v538
        %v1440 = vunpack.c.l.b16 %v539
        %v1441 = vunpack.c.h.b16 %v539
        %v1442 = vunpack.c.l.b16 %v540
        %v1443 = vunpack.c.h.b16 %v540
        %v1444 = vunpack.c.l.b16 %v541
        %v1445 = vunpack.c.h.b16 %v541
        %v1446 = vunpack.c.l.b16 %v542
        %v1447 = vunpack.c.h.b16 %v542
        %v1448 = vunpack.c.l.b16 %v543
        %v1449 = vunpack.c.h.b16 %v543
        %v1450 = vunpack.c.l.b16 %v544
        %v1451 = vunpack.c.h.b16 %v544
        %v1452 = vunpack.c.l.b16 %v545
        %v1453 = vunpack.c.h.b16 %v545
        %v1454 = vunpack.c.l.b16 %v546
        %v1455 = vunpack.c.h.b16 %v546
        %v1456 = vunpack.c.l.b16 %v547
        %v1457 = vunpack.c.h.b16 %v547
        %v1458 = vunpack.c.l.b16 %v548
        %v1459 = vunpack.c.h.b16 %v548
        %v1460 = vunpack.c.l.b16 %v549
        %v1461 = vunpack.c.h.b16 %v549
        %v1462 = vunpack.c.l.b16 %v550
        %v1463 = vunpack.c.h.b16 %v550
        %v1464 = vunpack.c.l.b16 %v551
        %v1465 = vunpack.c.h.b16 %v551
        %v1466 = vunpack.c.l.b16 %v552
        %v1467 = vunpack.c.h.b16 %v552
        %v1468 = vunpack.c.l.b16 %v553
        %v1469 = vunpack.c.h.b16 %v553
        %v1470 = vunpack.c.l.b16 %v554
        %v1471 = vunpack.c.h.b16 %v554
        %v1472 = vunpack.c.l.b16 %v555
        %v1473 = vunpack.c.h.b16 %v555
        %v1474 = vunpack.c.l.b16 %v556
        %v1475 = vunpack.c.h.b16 %v556
        %v1476 = vunpack.c.l.b16 %v557
        %v1477 = vunpack.c.h.b16 %v557
        %v1478 = vunpack.c.l.b16 %v558
        %v1479 = vunpack.c.h.b16 %v558
        %v1480 = vunpack.c.l.b16 %v559
        %v1481 = vunpack.c.h.b16 %v559
        %v1482 = vunpack.c.l.b16 %v560
        %v1483 = vunpack.c.h.b16 %v560
        %v1484 = vunpack.c.l.b16 %v561
        %v1485 = vunpack.c.h.b16 %v561
        %v1486 = vunpack.c.l.b16 %v562
        %v1487 = vunpack.c.h.b16 %v562
        %v1488 = vunpack.c.l.b16 %v563
        %v1489 = vunpack.c.h.b16 %v563
        %v1490 = vunpack.c.l.b16 %v564
        %v1491 = vunpack.c.h.b16 %v564
        %v1492 = vunpack.c.l.b16 %v565
        %v1493 = vunpack.c.h.b16 %v565
        %v1494 = vunpack.c.l.b16 %v566
        %v1495 = vunpack.c.h.b16 %v566
        %v1496 = vunpack.c.l.b16 %v567
        %v1497 = vunpack.c.h.b16 %v567
        %v1498 = vunpack.c.l.b16 %v568
        %v1499 = vunpack.c.h.b16 %v568
        %v1500 = vunpack.c.l.b16 %v569
        %v1501 = vunpack.c.h.b16 %v569
        %v1502 = vunpack.c.l.b16 %v570
        %v1503 = vunpack.c.h.b16 %v570
        %v1504 = vunpack.c.l.b16 %v571
        %v1505 = vunpack.c.h.b16 %v571
        %v1506 = vunpack.c.l.b16 %v572
        %v1507 = vunpack.c.h.b16 %v572
        %v1508 = vunpack.c.l.b16 %v573
        %v1509 = vunpack.c.h.b16 %v573
        %v1510 = vunpack.c.l.b16 %v574
        %v1511 = vunpack.c.h.b16 %v574
        %v1512 = vunpack.c.l.b16 %v575
        %v1513 = vunpack.c.h.b16 %v575
        %v1514 = vunpack.c.l.b16 %v576
        %v1515 = vunpack.c.h.b16 %v576
        %v1516 = vunpack.c.l.b16 %v577
        %v1517 = vunpack.c.h.b16 %v577
        %v1518 = vunpack.c.l.b16 %v578
        %v1519 = vunpack.c.h.b16 %v578
        %v1520 = vunpack.c.l.b16 %v579
        %v1521 = vunpack.c.h.b16 %v579
        %v1522 = vunpack.c.l.b16 %v580
        %v1523 = vunpack.c.h.b16 %v580
        %v1524 = vunpack.c.l.b16 %v581
        %v1525 = vunpack.c.h.b16 %v581
        %v1526 = vunpack.c.l.b16 %v582
        %v1527 = vunpack.c.h.b16 %v582
        %v1528 = vunpack.c.l.b16 %v583
        %v1529 = vunpack.c.h.b16 %v583
        %v1530 = vunpack.c.l.b16 %v584
        %v1531 = vunpack.c.h.b16 %v584
        %v1532 = vunpack.c.l.b16 %v585
        %v1533 = vunpack.c.h.b16 %v585
        %v1534 = vunpack.c.l.b16 %v586
        %v1535 = vunpack.c.h.b16 %v586
        %v1536 = vunpack.c.l.b16 %v587
        %v1537 = vunpack.c.h.b16 %v587
        %v1538 = vunpack.c.l.b16 %v588
        %v1539 = vunpack.c.h.b16 %v588
        %v1540 = vunpack.c.l.b16 %v589
        %v1541 = vunpack.c.h.b16 %v589
        %v1542 = vunpack.c.l.b16 %v590
        %v1543 = vunpack.c.h.b16 %v590
        %v1544 = vunpack.c.l.b16 %v591
        %v1545 = vunpack.c.h.b16 %v591
        %v1546 = vunpack.c.l.b16 %v592
        %v1547 = vunpack.c.h.b16 %v592
        %v1548 = vunpack.c.l.b16 %v593
        %v1549 = vunpack.c.h.b16 %v593
        %v1550 = vunpack.c.l.b16 %v594
        %v1551 = vunpack.c.h.b16 %v594
        %v1552 = vunpack.c.l.b16 %v595
        %v1553 = vunpack.c.h.b16 %v595
        %v1554 = vunpack.c.l.b16 %v596
        %v1555 = vunpack.c.h.b16 %v596
        %v1556 = vunpack.c.l.b16 %v597
        %v1557 = vunpack.c.h.b16 %v597
        %v1558 = vunpack.c.l.b16 %v598
        %v1559 = vunpack.c.h.b16 %v598
        %v1560 = vunpack.c.l.b16 %v599
        %v1561 = vunpack.c.h.b16 %v599
        %v1562 = vunpack.c.l.b16 %v600
        %v1563 = vunpack.c.h.b16 %v600
        %v1564 = vunpack.c.l.b16 %v601
        %v1565 = vunpack.c.h.b16 %v601
        %v1566 = vunpack.c.l.b16 %v602
        %v1567 = vunpack.c.h.b16 %v602
        %v1568 = vunpack.c.l.b16 %v603
        %v1569 = vunpack.c.h.b16 %v603
        %v1570 = vunpack.c.l.b16 %v604
        %v1571 = vunpack.c.h.b16 %v604
        %v1572 = vunpack.c.l.b16 %v605
        %v1573 = vunpack.c.h.b16 %v605
        %v1574 = vunpack.c.l.b16 %v606
        %v1575 = vunpack.c.h.b16 %v606
        %v1576 = vunpack.c.l.b16 %v607
        %v1577 = vunpack.c.h.b16 %v607
        %v1578 = vunpack.c.l.b16 %v608
        %v1579 = vunpack.c.h.b16 %v608
        %v1580 = vunpack.c.l.b16 %v609
        %v1581 = vunpack.c.h.b16 %v609
        %v1582 = vunpack.c.l.b16 %v610
        %v1583 = vunpack.c.h.b16 %v610
        %v1584 = vunpack.c.l.b16 %v611
        %v1585 = vunpack.c.h.b16 %v611
        %v1586 = vunpack.c.l.b16 %v612
        %v1587 = vunpack.c.h.b16 %v612
        %v1588 = vunpack.c.l.b16 %v613
        %v1589 = vunpack.c.h.b16 %v613
        %v1590 = vunpack.c.l.b16 %v614
        %v1591 = vunpack.c.h.b16 %v614
        %v1592 = vunpack.c.l.b16 %v615
        %v1593 = vunpack.c.h.b16 %v615
        %v1594 = vunpack.c.l.b16 %v616
        %v1595 = vunpack.c.h.b16 %v616
        %v1596 = vunpack.c.l.b16 %v617
        %v1597 = vunpack.c.h.b16 %v617
        %v1598 = vunpack.c.l.b16 %v618
        %v1599 = vunpack.c.h.b16 %v618
        %v1600 = vunpack.c.l.b16 %v619
        %v1601 = vunpack.c.h.b16 %v619
        %v1602 = vunpack.c.l.b16 %v620
        %v1603 = vunpack.c.h.b16 %v620
        %v1604 = vunpack.c.l.b16 %v621
        %v1605 = vunpack.c.h.b16 %v621
        %v1606 = vunpack.c.l.b16 %v622
        %v1607 = vunpack.c.h.b16 %v622
        %v1608 = vunpack.c.l.b16 %v623
        %v1609 = vunpack.c.h.b16 %v623
        %v1610 = vunpack.c.l.b16 %v624
        %v1611 = vunpack.c.h.b16 %v624
        %v1612 = vunpack.c.l.b16 %v625
        %v1613 = vunpack.c.h.b16 %v625
        %v1614 = vunpack.c.l.b16 %v626
        %v1615 = vunpack.c.h.b16 %v626
        %v1616 = vunpack.c.l.b16 %v627
        %v1617 = vunpack.c.h.b16 %v627
        %v1618 = vunpack.c.l.b16 %v628
        %v1619 = vunpack.c.h.b16 %v628
        %v1620 = vunpack.c.l.b16 %v629
        %v1621 = vunpack.c.h.b16 %v629
        %v1622 = vunpack.c.l.b16 %v630
        %v1623 = vunpack.c.h.b16 %v630
        %v1624 = vunpack.c.l.b16 %v631
        %v1625 = vunpack.c.h.b16 %v631
        %v1626 = vunpack.c.l.b16 %v632
        %v1627 = vunpack.c.h.b16 %v632
        %v1628 = vunpack.c.l.b16 %v633
        %v1629 = vunpack.c.h.b16 %v633
        %v1630 = vunpack.c.l.b16 %v634
        %v1631 = vunpack.c.h.b16 %v634
        %v1632 = vunpack.c.l.b16 %v635
        %v1633 = vunpack.c.h.b16 %v635
        %v1634 = vunpack.c.l.b16 %v636
        %v1635 = vunpack.c.h.b16 %v636
        %v1636 = vunpack.c.l.b16 %v637
        %v1637 = vunpack.c.h.b16 %v637
        %v1638 = vunpack.c.l.b16 %v638
        %v1639 = vunpack.c.h.b16 %v638
        %v1640 = vunpack.c.l.b16 %v639
        %v1641 = vunpack.c.h.b16 %v639
        %v1642 = vunpack.c.l.b16 %v640
        %v1643 = vunpack.c.h.b16 %v640
        %v1644 = vunpack.c.l.b16 %v641
        %v1645 = vunpack.c.h.b16 %v641
        %v1646 = vunpack.c.l.b16 %v642
        %v1647 = vunpack.c.h.b16 %v642
        %v1648 = vunpack.c.l.b16 %v643
        %v1649 = vunpack.c.h.b16 %v643
        %v1650 = vunpack.c.l.b16 %v644
        %v1651 = vunpack.c.h.b16 %v644
        %v1652 = vunpack.c.l.b16 %v645
        %v1653 = vunpack.c.h.b16 %v645
        %v1654 = vunpack.c.l.b16 %v646
        %v1655 = vunpack.c.h.b16 %v646
        %v1656 = vunpack.c.l.b16 %v647
        %v1657 = vunpack.c.h.b16 %v647
        %v1658 = vunpack.c.l.b16 %v648
        %v1659 = vunpack.c.h.b16 %v648
        %v1660 = vunpack.c.l.b16 %v649
        %v1661 = vunpack.c.h.b16 %v649
        %v1662 = vunpack.c.l.b16 %v650
        %v1663 = vunpack.c.h.b16 %v650
        %v1664 = vunpack.c.l.b16 %v651
        %v1665 = vunpack.c.h.b16 %v651
        %v1666 = vunpack.c.l.b16 %v652
        %v1667 = vunpack.c.h.b16 %v652
        %v1668 = vunpack.c.l.b16 %v653
        %v1669 = vunpack.c.h.b16 %v653
        %v1670 = vunpack.c.l.b16 %v654
        %v1671 = vunpack.c.h.b16 %v654
        %v1672 = vunpack.c.l.b16 %v655
        %v1673 = vunpack.c.h.b16 %v655
        %v1674 = vunpack.c.l.b16 %v656
        %v1675 = vunpack.c.h.b16 %v656
        %v1676 = vunpack.c.l.b16 %v657
        %v1677 = vunpack.c.h.b16 %v657
        %v1678 = vunpack.c.l.b16 %v658
        %v1679 = vunpack.c.h.b16 %v658
        %v1680 = vunpack.c.l.b16 %v659
        %v1681 = vunpack.c.h.b16 %v659
        %v1682 = vunpack.c.l.b16 %v660
        %v1683 = vunpack.c.h.b16 %v660
        %v1684 = vunpack.c.l.b16 %v661
        %v1685 = vunpack.c.h.b16 %v661
        %v1686 = vunpack.c.l.b16 %v662
        %v1687 = vunpack.c.h.b16 %v662
        %v1688 = vunpack.c.l.b16 %v663
        %v1689 = vunpack.c.h.b16 %v663
        %v1690 = vunpack.c.l.b16 %v664
        %v1691 = vunpack.c.h.b16 %v664
        %v1692 = vunpack.c.l.b16 %v665
        %v1693 = vunpack.c.h.b16 %v665
        %v1694 = vunpack.c.l.b16 %v666
        %v1695 = vunpack.c.h.b16 %v666
        %v1696 = vunpack.c.l.b16 %v667
        %v1697 = vunpack.c.h.b16 %v667
        %v1698 = vunpack.c.l.b16 %v668
        %v1699 = vunpack.c.h.b16 %v668
        %v1700 = vunpack.c.l.b16 %v669
        %v1701 = vunpack.c.h.b16 %v669
        %v1702 = vunpack.c.l.b16 %v670
        %v1703 = vunpack.c.h.b16 %v670
        %v1704 = vunpack.c.l.b16 %v671
        %v1705 = vunpack.c.h.b16 %v671
        %v1706 = vunpack.c.l.b16 %v672
        %v1707 = vunpack.c.h.b16 %v672
        %v1708 = vunpack.c.l.b16 %v673
        %v1709 = vunpack.c.h.b16 %v673
        %v1710 = vunpack.c.l.b16 %v674
        %v1711 = vunpack.c.h.b16 %v674
        %v1712 = vunpack.c.l.b16 %v675
        %v1713 = vunpack.c.h.b16 %v675
        %v1714 = vunpack.c.l.b16 %v676
        %v1715 = vunpack.c.h.b16 %v676
        %v1716 = vunpack.c.l.b16 %v677
        %v1717 = vunpack.c.h.b16 %v677
        %v1718 = vunpack.c.l.b16 %v678
        %v1719 = vunpack.c.h.b16 %v678
        %v1720 = vunpack.c.l.b16 %v679
        %v1721 = vunpack.c.h.b16 %v679
        %v1722 = vunpack.c.l.b16 %v680
        %v1723 = vunpack.c.h.b16 %v680
        %v1724 = vunpack.c.l.b16 %v681
        %v1725 = vunpack.c.h.b16 %v681
        %v1726 = vunpack.c.l.b16 %v682
        %v1727 = vunpack.c.h.b16 %v682
        %v1728 = vunpack.c.l.b16 %v683
        %v1729 = vunpack.c.h.b16 %v683
        %v1730 = vunpack.c.l.b16 %v684
        %v1731 = vunpack.c.h.b16 %v684
        %v1732 = vunpack.c.l.b16 %v685
        %v1733 = vunpack.c.h.b16 %v685
        %v1734 = vunpack.c.l.b16 %v686
        %v1735 = vunpack.c.h.b16 %v686
        %v1736 = vunpack.c.l.b16 %v687
        %v1737 = vunpack.c.h.b16 %v687
        %v1738 = vunpack.c.l.b16 %v688
        %v1739 = vunpack.c.h.b16 %v688
        %v1740 = vunpack.c.l.b16 %v689
        %v1741 = vunpack.c.h.b16 %v689
        %v1742 = vunpack.c.l.b16 %v690
        %v1743 = vunpack.c.h.b16 %v690
        %v1744 = vunpack.c.l.b16 %v691
        %v1745 = vunpack.c.h.b16 %v691
        %v1746 = vunpack.c.l.b16 %v692
        %v1747 = vunpack.c.h.b16 %v692
        %v1748 = vunpack.c.l.b16 %v693
        %v1749 = vunpack.c.h.b16 %v693
        %v1750 = vunpack.c.l.b16 %v694
        %v1751 = vunpack.c.h.b16 %v694
        %v1752 = vunpack.c.l.b16 %v695
        %v1753 = vunpack.c.h.b16 %v695
        %v1754 = vunpack.c.l.b16 %v696
        %v1755 = vunpack.c.h.b16 %v696
        %v1756 = vunpack.c.l.b16 %v697
        %v1757 = vunpack.c.h.b16 %v697
        %v1758 = vunpack.c.l.b16 %v698
        %v1759 = vunpack.c.h.b16 %v698
        %v1760 = vunpack.c.l.b16 %v699
        %v1761 = vunpack.c.h.b16 %v699
        %v1762 = vunpack.c.l.b16 %v700
        %v1763 = vunpack.c.h.b16 %v700
        %v1764 = vunpack.c.l.b16 %v701
        %v1765 = vunpack.c.h.b16 %v701
        %v1766 = vunpack.c.l.b16 %v702
        %v1767 = vunpack.c.h.b16 %v702
        %v1768 = vunpack.c.l.b16 %v703
        %v1769 = vunpack.c.h.b16 %v703
        %v1770 = vunpack.c.l.b16 %v704
        %v1771 = vunpack.c.h.b16 %v704
        %v1772 = vunpack.c.l.b16 %v705
        %v1773 = vunpack.c.h.b16 %v705
        %v1774 = vunpack.c.l.b16 %v706
        %v1775 = vunpack.c.h.b16 %v706
        %v1776 = vunpack.c.l.b16 %v707
        %v1777 = vunpack.c.h.b16 %v707
        %v1778 = vunpack.c.l.b16 %v708
        %v1779 = vunpack.c.h.b16 %v708
        %v1780 = vunpack.c.l.b16 %v709
        %v1781 = vunpack.c.h.b16 %v709
        %v1782 = vunpack.c.l.b16 %v710
        %v1783 = vunpack.c.h.b16 %v710
        %v1784 = vunpack.c.l.b16 %v711
        %v1785 = vunpack.c.h.b16 %v711
        %v1786 = vunpack.c.l.b16 %v712
        %v1787 = vunpack.c.h.b16 %v712
        %v1788 = vunpack.c.l.b16 %v713
        %v1789 = vunpack.c.h.b16 %v713
        %v1790 = vunpack.c.l.b16 %v714
        %v1791 = vunpack.c.h.b16 %v714
        %v1792 = vunpack.c.l.b16 %v715
        %v1793 = vunpack.c.h.b16 %v715
        %v1794 = vunpack.c.l.b16 %v716
        %v1795 = vunpack.c.h.b16 %v716
        %v1796 = vunpack.c.l.b16 %v717
        %v1797 = vunpack.c.h.b16 %v717
        %v1798 = vunpack.c.l.b16 %v718
        %v1799 = vunpack.c.h.b16 %v718
        %v1800 = vunpack.c.l.b16 %v719
        %v1801 = vunpack.c.h.b16 %v719
        %v1802 = vunpack.c.l.b16 %v720
        %v1803 = vunpack.c.h.b16 %v720
        %v1804 = vunpack.c.l.b16 %v721
        %v1805 = vunpack.c.h.b16 %v721
        %v1806 = vunpack.c.l.b16 %v722
        %v1807 = vunpack.c.h.b16 %v722
        %v1808 = vunpack.c.l.b16 %v723
        %v1809 = vunpack.c.h.b16 %v723
        %v1810 = vunpack.c.l.b16 %v724
        %v1811 = vunpack.c.h.b16 %v724
        %v1812 = vunpack.c.l.b16 %v725
        %v1813 = vunpack.c.h.b16 %v725
        %v1814 = vpack.c.b16 %v1310, %v1302
        %v1815 = vpack.c.b16 %v1311, %v1303
        %v1816 = vpack.c.b16 %v1312, %v1304
        %v1817 = vpack.c.b16 %v1313, %v1305
        %v1818 = vpack.c.b16 %v1314, %v1306
        %v1819 = vpack.c.b16 %v1315, %v1307
        %v1820 = vpack.c.b16 %v1316, %v1308
        %v1821 = vpack.c.b16 %v1317, %v1309
        %v1822 = vpack.c.b16 %v1326, %v1318
        %v1823 = vpack.c.b16 %v1327, %v1319
        %v1824 = vpack.c.b16 %v1328, %v1320
        %v1825 = vpack.c.b16 %v1329, %v1321
        %v1826 = vpack.c.b16 %v1330, %v1322
        %v1827 = vpack.c.b16 %v1331, %v1323
        %v1828 = vpack.c.b16 %v1332, %v1324
        %v1829 = vpack.c.b16 %v1333, %v1325
        %v1830 = vpack.c.b16 %v1342, %v1334
        %v1831 = vpack.c.b16 %v1343, %v1335
        %v1832 = vpack.c.b16 %v1344, %v1336
        %v1833 = vpack.c.b16 %v1345, %v1337
        %v1834 = vpack.c.b16 %v1346, %v1338
        %v1835 = vpack.c.b16 %v1347, %v1339
        %v1836 = vpack.c.b16 %v1348, %v1340
        %v1837 = vpack.c.b16 %v1349, %v1341
        %v1838 = vpack.c.b16 %v1358, %v1350
        %v1839 = vpack.c.b16 %v1359, %v1351
        %v1840 = vpack.c.b16 %v1360, %v1352
        %v1841 = vpack.c.b16 %v1361, %v1353
        %v1842 = vpack.c.b16 %v1362, %v1354
        %v1843 = vpack.c.b16 %v1363, %v1355
        %v1844 = vpack.c.b16 %v1364, %v1356
        %v1845 = vpack.c.b16 %v1365, %v1357
        %v1846 = vpack.c.b16 %v1374, %v1366
        %v1847 = vpack.c.b16 %v1375, %v1367
        %v1848 = vpack.c.b16 %v1376, %v1368
        %v1849 = vpack.c.b16 %v1377, %v1369
        %v1850 = vpack.c.b16 %v1378, %v1370
        %v1851 = vpack.c.b16 %v1379, %v1371
        %v1852 = vpack.c.b16 %v1380, %v1372
        %v1853 = vpack.c.b16 %v1381, %v1373
        %v1854 = vpack.c.b16 %v1390, %v1382
        %v1855 = vpack.c.b16 %v1391, %v1383
        %v1856 = vpack.c.b16 %v1392, %v1384
        %v1857 = vpack.c.b16 %v1393, %v1385
        %v1858 = vpack.c.b16 %v1394, %v1386
        %v1859 = vpack.c.b16 %v1395, %v1387
        %v1860 = vpack.c.b16 %v1396, %v1388
        %v1861 = vpack.c.b16 %v1397, %v1389
        %v1862 = vpack.c.b16 %v1406, %v1398
        %v1863 = vpack.c.b16 %v1407, %v1399
        %v1864 = vpack.c.b16 %v1408, %v1400
        %v1865 = vpack.c.b16 %v1409, %v1401
        %v1866 = vpack.c.b16 %v1410, %v1402
        %v1867 = vpack.c.b16 %v1411, %v1403
        %v1868 = vpack.c.b16 %v1412, %v1404
        %v1869 = vpack.c.b16 %v1413, %v1405
        %v1870 = vpack.c.b16 %v1422, %v1414
        %v1871 = vpack.c.b16 %v1423, %v1415
        %v1872 = vpack.c.b16 %v1424, %v1416
        %v1873 = vpack.c.b16 %v1425, %v1417
        %v1874 = vpack.c.b16 %v1426, %v1418
        %v1875 = vpack.c.b16 %v1427, %v1419
        %v1876 = vpack.c.b16 %v1428, %v1420
        %v1877 = vpack.c.b16 %v1429, %v1421
        %v1878 = vpack.c.b16 %v1438, %v1430
        %v1879 = vpack.c.b16 %v1439, %v1431
        %v1880 = vpack.c.b16 %v1440, %v1432
        %v1881 = vpack.c.b16 %v1441, %v1433
        %v1882 = vpack.c.b16 %v1442, %v1434
        %v1883 = vpack.c.b16 %v1443, %v1435
        %v1884 = vpack.c.b16 %v1444, %v1436
        %v1885 = vpack.c.b16 %v1445, %v1437
        %v1886 = vpack.c.b16 %v1454, %v1446
        %v1887 = vpack.c.b16 %v1455, %v1447
        %v1888 = vpack.c.b16 %v1456, %v1448
        %v1889 = vpack.c.b16 %v1457, %v1449
        %v1890 = vpack.c.b16 %v1458, %v1450
        %v1891 = vpack.c.b16 %v1459, %v1451
        %v1892 = vpack.c.b16 %v1460, %v1452
        %v1893 = vpack.c.b16 %v1461, %v1453
        %v1894 = vpack.c.b16 %v1470, %v1462
        %v1895 = vpack.c.b16 %v1471, %v1463
        %v1896 = vpack.c.b16 %v1472, %v1464
        %v1897 = vpack.c.b16 %v1473, %v1465
        %v1898 = vpack.c.b16 %v1474, %v1466
        %v1899 = vpack.c.b16 %v1475, %v1467
        %v1900 = vpack.c.b16 %v1476, %v1468
        %v1901 = vpack.c.b16 %v1477, %v1469
        %v1902 = vpack.c.b16 %v1486, %v1478
        %v1903 = vpack.c.b16 %v1487, %v1479
        %v1904 = vpack.c.b16 %v1488, %v1480
        %v1905 = vpack.c.b16 %v1489, %v1481
        %v1906 = vpack.c.b16 %v1490, %v1482
        %v1907 = vpack.c.b16 %v1491, %v1483
        %v1908 = vpack.c.b16 %v1492, %v1484
        %v1909 = vpack.c.b16 %v1493, %v1485
        %v1910 = vpack.c.b16 %v1502, %v1494
        %v1911 = vpack.c.b16 %v1503, %v1495
        %v1912 = vpack.c.b16 %v1504, %v1496
        %v1913 = vpack.c.b16 %v1505, %v1497
        %v1914 = vpack.c.b16 %v1506, %v1498
        %v1915 = vpack.c.b16 %v1507, %v1499
        %v1916 = vpack.c.b16 %v1508, %v1500
        %v1917 = vpack.c.b16 %v1509, %v1501
        %v1918 = vpack.c.b16 %v1518, %v1510
        %v1919 = vpack.c.b16 %v1519, %v1511
        %v1920 = vpack.c.b16 %v1520, %v1512
        %v1921 = vpack.c.b16 %v1521, %v1513
        %v1922 = vpack.c.b16 %v1522, %v1514
        %v1923 = vpack.c.b16 %v1523, %v1515
        %v1924 = vpack.c.b16 %v1524, %v1516
        %v1925 = vpack.c.b16 %v1525, %v1517
        %v1926 = vpack.c.b16 %v1534, %v1526
        %v1927 = vpack.c.b16 %v1535, %v1527
        %v1928 = vpack.c.b16 %v1536, %v1528
        %v1929 = vpack.c.b16 %v1537, %v1529
        %v1930 = vpack.c.b16 %v1538, %v1530
        %v1931 = vpack.c.b16 %v1539, %v1531
        %v1932 = vpack.c.b16 %v1540, %v1532
        %v1933 = vpack.c.b16 %v1541, %v1533
        %v1934 = vpack.c.b16 %v1550, %v1542
        %v1935 = vpack.c.b16 %v1551, %v1543
        %v1936 = vpack.c.b16 %v1552, %v1544
        %v1937 = vpack.c.b16 %v1553, %v1545
        %v1938 = vpack.c.b16 %v1554, %v1546
        %v1939 = vpack.c.b16 %v1555, %v1547
        %v1940 = vpack.c.b16 %v1556, %v1548
        %v1941 = vpack.c.b16 %v1557, %v1549
        %v1942 = vpack.c.b16 %v1566, %v1558
        %v1943 = vpack.c.b16 %v1567, %v1559
        %v1944 = vpack.c.b16 %v1568, %v1560
        %v1945 = vpack.c.b16 %v1569, %v1561
        %v1946 = vpack.c.b16 %v1570, %v1562
        %v1947 = vpack.c.b16 %v1571, %v1563
        %v1948 = vpack.c.b16 %v1572, %v1564
        %v1949 = vpack.c.b16 %v1573, %v1565
        %v1950 = vpack.c.b16 %v1582, %v1574
        %v1951 = vpack.c.b16 %v1583, %v1575
        %v1952 = vpack.c.b16 %v1584, %v1576
        %v1953 = vpack.c.b16 %v1585, %v1577
        %v1954 = vpack.c.b16 %v1586, %v1578
        %v1955 = vpack.c.b16 %v1587, %v1579
        %v1956 = vpack.c.b16 %v1588, %v1580
        %v1957 = vpack.c.b16 %v1589, %v1581
        %v1958 = vpack.c.b16 %v1598, %v1590
        %v1959 = vpack.c.b16 %v1599, %v1591
        %v1960 = vpack.c.b16 %v1600, %v1592
        %v1961 = vpack.c.b16 %v1601, %v1593
        %v1962 = vpack.c.b16 %v1602, %v1594
        %v1963 = vpack.c.b16 %v1603, %v1595
        %v1964 = vpack.c.b16 %v1604, %v1596
        %v1965 = vpack.c.b16 %v1605, %v1597
        %v1966 = vpack.c.b16 %v1614, %v1606
        %v1967 = vpack.c.b16 %v1615, %v1607
        %v1968 = vpack.c.b16 %v1616, %v1608
        %v1969 = vpack.c.b16 %v1617, %v1609
        %v1970 = vpack.c.b16 %v1618, %v1610
        %v1971 = vpack.c.b16 %v1619, %v1611
        %v1972 = vpack.c.b16 %v1620, %v1612
        %v1973 = vpack.c.b16 %v1621, %v1613
        %v1974 = vpack.c.b16 %v1630, %v1622
        %v1975 = vpack.c.b16 %v1631, %v1623
        %v1976 = vpack.c.b16 %v1632, %v1624
        %v1977 = vpack.c.b16 %v1633, %v1625
        %v1978 = vpack.c.b16 %v1634, %v1626
        %v1979 = vpack.c.b16 %v1635, %v1627
        %v1980 = vpack.c.b16 %v1636, %v1628
        %v1981 = vpack.c.b16 %v1637, %v1629
        %v1982 = vpack.c.b16 %v1646, %v1638
        %v1983 = vpack.c.b16 %v1647, %v1639
        %v1984 = vpack.c.b16 %v1648, %v1640
        %v1985 = vpack.c.b16 %v1649, %v1641
        %v1986 = vpack.c.b16 %v1650, %v1642
        %v1987 = vpack.c.b16 %v1651, %v1643
        %v1988 = vpack.c.b16 %v1652, %v1644
        %v1989 = vpack.c.b16 %v1653, %v1645
        %v1990 = vpack.c.b16 %v1662, %v1654
        %v1991 = vpack.c.b16 %v1663, %v1655
        %v1992 = vpack.c.b16 %v1664, %v1656
        %v1993 = vpack.c.b16 %v1665, %v1657
        %v1994 = vpack.c.b16 %v1666, %v1658
        %v1995 = vpack.c.b16 %v1667, %v1659
        %v1996 = vpack.c.b16 %v1668, %v1660
        %v1997 = vpack.c.b16 %v1669, %v1661
        %v1998 = vpack.c.b16 %v1678, %v1670
        %v1999 = vpack.c.b16 %v1679, %v1671
        %v2000 = vpack.c.b16 %v1680, %v1672
        %v2001 = vpack.c.b16 %v1681, %v1673
        %v2002 = vpack.c.b16 %v1682, %v1674
        %v2003 = vpack.c.b16 %v1683, %v1675
        %v2004 = vpack.c.b16 %v1684, %v1676
        %v2005 = vpack.c.b16 %v1685, %v1677
        %v2006 = vpack.c.b16 %v1694, %v1686
        %v2007 = vpack.c.b16 %v1695, %v1687
        %v2008 = vpack.c.b16 %v1696, %v1688
        %v2009 = vpack.c.b16 %v1697, %v1689
        %v2010 = vpack.c.b16 %v1698, %v1690
        %v2011 = vpack.c.b16 %v1699, %v1691
        %v2012 = vpack.c.b16 %v1700, %v1692
        %v2013 = vpack.c.b16 %v1701, %v1693
        %v2014 = vpack.c.b16 %v1710, %v1702
        %v2015 = vpack.c.b16 %v1711, %v1703
        %v2016 = vpack.c.b16 %v1712, %v1704
        %v2017 = vpack.c.b16 %v1713, %v1705
        %v2018 = vpack.c.b16 %v1714, %v1706
        %v2019 = vpack.c.b16 %v1715, %v1707
        %v2020 = vpack.c.b16 %v1716, %v1708
        %v2021 = vpack.c.b16 %v1717, %v1709
        %v2022 = vpack.c.b16 %v1726, %v1718
        %v2023 = vpack.c.b16 %v1727, %v1719
        %v2024 = vpack.c.b16 %v1728, %v1720
        %v2025 = vpack.c.b16 %v1729, %v1721
        %v2026 = vpack.c.b16 %v1730, %v1722
        %v2027 = vpack.c.b16 %v1731, %v1723
        %v2028 = vpack.c.b16 %v1732, %v1724
        %v2029 = vpack.c.b16 %v1733, %v1725
        %v2030 = vpack.c.b16 %v1742, %v1734
        %v2031 = vpack.c.b16 %v1743, %v1735
        %v2032 = vpack.c.b16 %v1744, %v1736
        %v2033 = vpack.c.b16 %v1745, %v1737
        %v2034 = vpack.c.b16 %v1746, %v1738
        %v2035 = vpack.c.b16 %v1747, %v1739
        %v2036 = vpack.c.b16 %v1748, %v1740
        %v2037 = vpack.c.b16 %v1749, %v1741
        %v2038 = vpack.c.b16 %v1758, %v1750
        %v2039 = vpack.c.b16 %v1759, %v1751
        %v2040 = vpack.c.b16 %v1760, %v1752
        %v2041 = vpack.c.b16 %v1761, %v1753
        %v2042 = vpack.c.b16 %v1762, %v1754
        %v2043 = vpack.c.b16 %v1763, %v1755
        %v2044 = vpack.c.b16 %v1764, %v1756
        %v2045 = vpack.c.b16 %v1765, %v1757
        %v2046 = vpack.c.b16 %v1774, %v1766
        %v2047 = vpack.c.b16 %v1775, %v1767
        %v2048 = vpack.c.b16 %v1776, %v1768
        %v2049 = vpack.c.b16 %v1777, %v1769
        %v2050 = vpack.c.b16 %v1778, %v1770
        %v2051 = vpack.c.b16 %v1779, %v1771
        %v2052 = vpack.c.b16 %v1780, %v1772
        %v2053 = vpack.c.b16 %v1781, %v1773
        %v2054 = vpack.c.b16 %v1790, %v1782
        %v2055 = vpack.c.b16 %v1791, %v1783
        %v2056 = vpack.c.b16 %v1792, %v1784
        %v2057 = vpack.c.b16 %v1793, %v1785
        %v2058 = vpack.c.b16 %v1794, %v1786
        %v2059 = vpack.c.b16 %v1795, %v1787
        %v2060 = vpack.c.b16 %v1796, %v1788
        %v2061 = vpack.c.b16 %v1797, %v1789
        %v2062 = vpack.c.b16 %v1806, %v1798
        %v2063 = vpack.c.b16 %v1807, %v1799
        %v2064 = vpack.c.b16 %v1808, %v1800
        %v2065 = vpack.c.b16 %v1809, %v1801
        %v2066 = vpack.c.b16 %v1810, %v1802
        %v2067 = vpack.c.b16 %v1811, %v1803
        %v2068 = vpack.c.b16 %v1812, %v1804
        %v2069 = vpack.c.b16 %v1813, %v1805
        %2326 = vmatprep.subr.bf16.mxu0 %v1815
        %2327 = vmatpush1.bf16.msra.mxu0 %v1814
        %2328 = vmatprep.subr.bf16.mxu0 %v1823
        %2329 = vmatpush1.bf16.msra.mxu0 %v1822
        %2330 = vmatprep.subr.bf16.mxu0 %v1831
        %2331 = vmatpush1.bf16.msra.mxu0 %v1830
        %2332 = vmatprep.subr.bf16.mxu0 %v1839
        %2333 = vmatpush1.bf16.msra.mxu0 %v1838
        %2334 = vmatprep.subr.bf16.mxu0 %v1847
        %2335 = vmatpush1.bf16.msra.mxu0 %v1846
        %2336 = vmatprep.subr.bf16.mxu0 %v1855
        %2337 = vmatpush1.bf16.msra.mxu0 %v1854
        %2338 = vmatprep.subr.bf16.mxu0 %v1863
        %2339 = vmatpush1.bf16.msra.mxu0 %v1862
        %2340 = vmatprep.subr.bf16.mxu0 %v1871
        %2341 = vmatpush1.bf16.msra.mxu0 %v1870
        %2342 = vmatprep.subr.bf16.mxu0 %v1879
        %2343 = vmatpush1.bf16.msra.mxu0 %v1878
        %2344 = vmatprep.subr.bf16.mxu0 %v1887
        %2345 = vmatpush1.bf16.msra.mxu0 %v1886
        %2346 = vmatprep.subr.bf16.mxu0 %v1895
        %2347 = vmatpush1.bf16.msra.mxu0 %v1894
        %2348 = vmatprep.subr.bf16.mxu0 %v1903
        %2349 = vmatpush1.bf16.msra.mxu0 %v1902
        %2350 = vmatprep.subr.bf16.mxu0 %v1911
        %2351 = vmatpush1.bf16.msra.mxu0 %v1910
        %2352 = vmatprep.subr.bf16.mxu0 %v1919
        %2353 = vmatpush1.bf16.msra.mxu0 %v1918
        %2354 = vmatprep.subr.bf16.mxu0 %v1927
        %2355 = vmatpush1.bf16.msra.mxu0 %v1926
        %2356 = vmatprep.subr.bf16.mxu0 %v1935
        %2357 = vmatpush1.bf16.msra.mxu0 %v1934
        %2358 = vmatprep.mubr.bf16.mxu0 %v919
        %2359 = vmatmul.mubr.bf16.gmra.mrb[0].mxu0 %v918
        %v2360 = vpop.f32.mrb[0].mxu0
        %v2361 = vadd.f32 0.0, %v2360
        %v2362 = vpop.f32.mrb[0].mxu0
        %v2363 = vadd.f32 0.0, %v2362
        %v2364 = vpop.f32.mrb[0].mxu0
        %v2365 = vadd.f32 0.0, %v2364
        %v2366 = vpop.f32.mrb[0].mxu0
        %v2367 = vadd.f32 0.0, %v2366
        %2368 = vmatprep.mubr.bf16.mxu0 %v923
        %2369 = vmatmul.mubr.bf16.gmra.mrb[0].mxu0 %v922
        %v2370 = vpop.f32.mrb[0].mxu0
        %v2371 = vadd.f32 0.0, %v2370
        %v2372 = vpop.f32.mrb[0].mxu0
        %v2373 = vadd.f32 0.0, %v2372
        %v2374 = vpop.f32.mrb[0].mxu0
        %v2375 = vadd.f32 0.0, %v2374
        %v2376 = vpop.f32.mrb[0].mxu0
        %v2377 = vadd.f32 0.0, %v2376
        %2378 = vmatprep.mubr.bf16.mxu0 %v927
        %2379 = vmatmul.mubr.bf16.gmra.mrb[0].mxu0 %v926
        %v2380 = vpop.f32.mrb[0].mxu0
        %v2381 = vadd.f32 0.0, %v2380
        %v2382 = vpop.f32.mrb[0].mxu0
        %v2383 = vadd.f32 0.0, %v2382
        %v2384 = vpop.f32.mrb[0].mxu0
        %v2385 = vadd.f32 0.0, %v2384
        %v2386 = vpop.f32.mrb[0].mxu0
        %v2387 = vadd.f32 0.0, %v2386
        %2388 = vmatprep.mubr.bf16.mxu0 %v931
        %2389 = vmatmul.mubr.bf16.gmra.mrb[0].mxu0 %v930
        %v2390 = vpop.f32.mrb[0].mxu0
        %v2391 = vadd.f32 0.0, %v2390
        %v2392 = vpop.f32.mrb[0].mxu0
        %v2393 = vadd.f32 0.0, %v2392
        %v2394 = vpop.f32.mrb[0].mxu0
        %v2395 = vadd.f32 0.0, %v2394
        %v2396 = vpop.f32.mrb[0].mxu0
        %v2397 = vadd.f32 0.0, %v2396
        %2398 = vmatprep.mubr.bf16.mxu0 %v935
        %2399 = vmatmul.mubr.bf16.gmra.mrb[0].mxu0 %v934
        %v2400 = vpop.f32.mrb[0].mxu0
        %v2401 = vadd.f32 0.0, %v2400
        %v2402 = vpop.f32.mrb[0].mxu0
        %v2403 = vadd.f32 0.0, %v2402
        %v2404 = vpop.f32.mrb[0].mxu0
        %v2405 = vadd.f32 0.0, %v2404
        %v2406 = vpop.f32.mrb[0].mxu0
        %v2407 = vadd.f32 0.0, %v2406
        %2408 = vmatprep.mubr.bf16.mxu0 %v939
        %2409 = vmatmul.mubr.bf16.gmra.mrb[0].mxu0 %v938
        %v2410 = vpop.f32.mrb[0].mxu0
        %v2411 = vadd.f32 0.0, %v2410
        %v2412 = vpop.f32.mrb[0].mxu0
        %v2413 = vadd.f32 0.0, %v2412
        %v2414 = vpop.f32.mrb[0].mxu0
        %v2415 = vadd.f32 0.0, %v2414
        %v2416 = vpop.f32.mrb[0].mxu0
        %v2417 = vadd.f32 0.0, %v2416
        %2418 = vmatprep.mubr.bf16.mxu0 %v943
        %2419 = vmatmul.mubr.bf16.gmra.mrb[0].mxu0 %v942
        %v2420 = vpop.f32.mrb[0].mxu0
        %v2421 = vadd.f32 0.0, %v2420
        %v2422 = vpop.f32.mrb[0].mxu0
        %v2423 = vadd.f32 0.0, %v2422
        %v2424 = vpop.f32.mrb[0].mxu0
        %v2425 = vadd.f32 0.0, %v2424
        %v2426 = vpop.f32.mrb[0].mxu0
        %v2427 = vadd.f32 0.0, %v2426
        %2428 = vmatprep.mubr.bf16.mxu0 %v947
        %2429 = vmatmul.mubr.bf16.gmra.mrb[0].mxu0 %v946
        %v2430 = vpop.f32.mrb[0].mxu0
        %v2431 = vadd.f32 0.0, %v2430
        %v2432 = vpop.f32.mrb[0].mxu0
        %v2433 = vadd.f32 0.0, %v2432
        %v2434 = vpop.f32.mrb[0].mxu0
        %v2435 = vadd.f32 0.0, %v2434
        %v2436 = vpop.f32.mrb[0].mxu0
        %v2437 = vadd.f32 0.0, %v2436
        %2438 = vmatprep.mubr.bf16.mxu0 %v951
        %2439 = vmatmul.mubr.bf16.gmra.mrb[0].mxu0 %v950
        %v2440 = vpop.f32.mrb[0].mxu0
        %v2441 = vadd.f32 0.0, %v2440
        %v2442 = vpop.f32.mrb[0].mxu0
        %v2443 = vadd.f32 0.0, %v2442
        %v2444 = vpop.f32.mrb[0].mxu0
        %v2445 = vadd.f32 0.0, %v2444
        %v2446 = vpop.f32.mrb[0].mxu0
        %v2447 = vadd.f32 0.0, %v2446
        %2448 = vmatprep.mubr.bf16.mxu0 %v955
        %2449 = vmatmul.mubr.bf16.gmra.mrb[0].mxu0 %v954
        %v2450 = vpop.f32.mrb[0].mxu0
        %v2451 = vadd.f32 0.0, %v2450
        %v2452 = vpop.f32.mrb[0].mxu0
        %v2453 = vadd.f32 0.0, %v2452
        %v2454 = vpop.f32.mrb[0].mxu0
        %v2455 = vadd.f32 0.0, %v2454
        %v2456 = vpop.f32.mrb[0].mxu0
        %v2457 = vadd.f32 0.0, %v2456
        %2458 = vmatprep.mubr.bf16.mxu0 %v959
        %2459 = vmatmul.mubr.bf16.gmra.mrb[0].mxu0 %v958
        %v2460 = vpop.f32.mrb[0].mxu0
        %v2461 = vadd.f32 0.0, %v2460
        %v2462 = vpop.f32.mrb[0].mxu0
        %v2463 = vadd.f32 0.0, %v2462
        %v2464 = vpop.f32.mrb[0].mxu0
        %v2465 = vadd.f32 0.0, %v2464
        %v2466 = vpop.f32.mrb[0].mxu0
        %v2467 = vadd.f32 0.0, %v2466
        %2468 = vmatprep.mubr.bf16.mxu0 %v963
        %2469 = vmatmul.mubr.bf16.gmra.mrb[0].mxu0 %v962
        %v2470 = vpop.f32.mrb[0].mxu0
        %v2471 = vadd.f32 0.0, %v2470
        %v2472 = vpop.f32.mrb[0].mxu0
        %v2473 = vadd.f32 0.0, %v2472
        %v2474 = vpop.f32.mrb[0].mxu0
        %v2475 = vadd.f32 0.0, %v2474
        %v2476 = vpop.f32.mrb[0].mxu0
        %v2477 = vadd.f32 0.0, %v2476
        %2478 = vmatprep.mubr.bf16.mxu0 %v967
        %2479 = vmatmul.mubr.bf16.gmra.mrb[0].mxu0 %v966
        %v2480 = vpop.f32.mrb[0].mxu0
        %v2481 = vadd.f32 0.0, %v2480
        %v2482 = vpop.f32.mrb[0].mxu0
        %v2483 = vadd.f32 0.0, %v2482
        %v2484 = vpop.f32.mrb[0].mxu0
        %v2485 = vadd.f32 0.0, %v2484
        %v2486 = vpop.f32.mrb[0].mxu0
        %v2487 = vadd.f32 0.0, %v2486
        %2488 = vmatprep.mubr.bf16.mxu0 %v971
        %2489 = vmatmul.mubr.bf16.gmra.mrb[0].mxu0 %v970
        %v2490 = vpop.f32.mrb[0].mxu0
        %v2491 = vadd.f32 0.0, %v2490
        %v2492 = vpop.f32.mrb[0].mxu0
        %v2493 = vadd.f32 0.0, %v2492
        %v2494 = vpop.f32.mrb[0].mxu0
        %v2495 = vadd.f32 0.0, %v2494
        %v2496 = vpop.f32.mrb[0].mxu0
        %v2497 = vadd.f32 0.0, %v2496
        %2498 = vmatprep.mubr.bf16.mxu0 %v975
        %2499 = vmatmul.mubr.bf16.gmra.mrb[0].mxu0 %v974
        %v2500 = vpop.f32.mrb[0].mxu0
        %v2501 = vadd.f32 0.0, %v2500
        %v2502 = vpop.f32.mrb[0].mxu0
        %v2503 = vadd.f32 0.0, %v2502
        %v2504 = vpop.f32.mrb[0].mxu0
        %v2505 = vadd.f32 0.0, %v2504
        %v2506 = vpop.f32.mrb[0].mxu0
        %v2507 = vadd.f32 0.0, %v2506
        %2508 = vmatprep.mubr.bf16.mxu0 %v979
        %2509 = vmatmul.mubr.bf16.gmra.mrb[0].mxu0 %v978
        %v2510 = vpop.f32.mrb[0].mxu0
        %v2511 = vadd.f32 0.0, %v2510
        %v2512 = vpop.f32.mrb[0].mxu0
        %v2513 = vadd.f32 0.0, %v2512
        %v2514 = vpop.f32.mrb[0].mxu0
        %v2515 = vadd.f32 0.0, %v2514
        %v2516 = vpop.f32.mrb[0].mxu0
        %v2517 = vadd.f32 0.0, %v2516
        %2518 = vdwg.mxu0
        %2519 = vmatprep.subr.bf16.mxu0 %v1943
        %2520 = vmatpush1.bf16.msra.mxu0 %v1942
        %2521 = vmatprep.subr.bf16.mxu0 %v1951
        %2522 = vmatpush1.bf16.msra.mxu0 %v1950
        %2523 = vmatprep.subr.bf16.mxu0 %v1959
        %2524 = vmatpush1.bf16.msra.mxu0 %v1958
        %2525 = vmatprep.subr.bf16.mxu0 %v1967
        %2526 = vmatpush1.bf16.msra.mxu0 %v1966
        %2527 = vmatprep.subr.bf16.mxu0 %v1975
        %2528 = vmatpush1.bf16.msra.mxu0 %v1974
        %2529 = vmatprep.subr.bf16.mxu0 %v1983
        %2530 = vmatpush1.bf16.msra.mxu0 %v1982
        %2531 = vmatprep.subr.bf16.mxu0 %v1991
        %2532 = vmatpush1.bf16.msra.mxu0 %v1990
        %2533 = vmatprep.subr.bf16.mxu0 %v1999
        %2534 = vmatpush1.bf16.msra.mxu0 %v1998
        %2535 = vmatprep.subr.bf16.mxu0 %v2007
        %2536 = vmatpush1.bf16.msra.mxu0 %v2006
        %2537 = vmatprep.subr.bf16.mxu0 %v2015
        %2538 = vmatpush1.bf16.msra.mxu0 %v2014
        %2539 = vmatprep.subr.bf16.mxu0 %v2023
        %2540 = vmatpush1.bf16.msra.mxu0 %v2022
        %2541 = vmatprep.subr.bf16.mxu0 %v2031
        %2542 = vmatpush1.bf16.msra.mxu0 %v2030
        %2543 = vmatprep.subr.bf16.mxu0 %v2039
        %2544 = vmatpush1.bf16.msra.mxu0 %v2038
        %2545 = vmatprep.subr.bf16.mxu0 %v2047
        %2546 = vmatpush1.bf16.msra.mxu0 %v2046
        %2547 = vmatprep.subr.bf16.mxu0 %v2055
        %2548 = vmatpush1.bf16.msra.mxu0 %v2054
        %2549 = vmatprep.subr.bf16.mxu0 %v2063
        %2550 = vmatpush1.bf16.msra.mxu0 %v2062
        %2551 = vmatprep.mubr.bf16.mxu0 %v921
        %2552 = vmatmul.mubr.bf16.gmra.mrb[0].mxu0 %v920
        %v2553 = vpop.f32.mrb[0].mxu0
        %v2554 = vadd.f32 %v2361, %v2553
        %v2555 = vpop.f32.mrb[0].mxu0
        %v2556 = vadd.f32 %v2363, %v2555
        %v2557 = vpop.f32.mrb[0].mxu0
        %v2558 = vadd.f32 %v2365, %v2557
        %v2559 = vpop.f32.mrb[0].mxu0
        %v2560 = vadd.f32 %v2367, %v2559
        %2561 = vmatprep.mubr.bf16.mxu0 %v925
        %2562 = vmatmul.mubr.bf16.gmra.mrb[0].mxu0 %v924
        %v2563 = vpop.f32.mrb[0].mxu0
        %v2564 = vadd.f32 %v2371, %v2563
        %v2565 = vpop.f32.mrb[0].mxu0
        %v2566 = vadd.f32 %v2373, %v2565
        %v2567 = vpop.f32.mrb[0].mxu0
        %v2568 = vadd.f32 %v2375, %v2567
        %v2569 = vpop.f32.mrb[0].mxu0
        %v2570 = vadd.f32 %v2377, %v2569
        %2571 = vmatprep.mubr.bf16.mxu0 %v929
        %2572 = vmatmul.mubr.bf16.gmra.mrb[0].mxu0 %v928
        %v2573 = vpop.f32.mrb[0].mxu0
        %v2574 = vadd.f32 %v2381, %v2573
        %v2575 = vpop.f32.mrb[0].mxu0
        %v2576 = vadd.f32 %v2383, %v2575
        %v2577 = vpop.f32.mrb[0].mxu0
        %v2578 = vadd.f32 %v2385, %v2577
        %v2579 = vpop.f32.mrb[0].mxu0
        %v2580 = vadd.f32 %v2387, %v2579
        %2581 = vmatprep.mubr.bf16.mxu0 %v933
        %2582 = vmatmul.mubr.bf16.gmra.mrb[0].mxu0 %v932
        %v2583 = vpop.f32.mrb[0].mxu0
        %v2584 = vadd.f32 %v2391, %v2583
        %v2585 = vpop.f32.mrb[0].mxu0
        %v2586 = vadd.f32 %v2393, %v2585
        %v2587 = vpop.f32.mrb[0].mxu0
        %v2588 = vadd.f32 %v2395, %v2587
        %v2589 = vpop.f32.mrb[0].mxu0
        %v2590 = vadd.f32 %v2397, %v2589
        %2591 = vmatprep.mubr.bf16.mxu0 %v937
        %2592 = vmatmul.mubr.bf16.gmra.mrb[0].mxu0 %v936
        %v2593 = vpop.f32.mrb[0].mxu0
        %v2594 = vadd.f32 %v2401, %v2593
        %v2595 = vpop.f32.mrb[0].mxu0
        %v2596 = vadd.f32 %v2403, %v2595
        %v2597 = vpop.f32.mrb[0].mxu0
        %v2598 = vadd.f32 %v2405, %v2597
        %v2599 = vpop.f32.mrb[0].mxu0
        %v2600 = vadd.f32 %v2407, %v2599
        %2601 = vmatprep.mubr.bf16.mxu0 %v941
        %2602 = vmatmul.mubr.bf16.gmra.mrb[0].mxu0 %v940
        %v2603 = vpop.f32.mrb[0].mxu0
        %v2604 = vadd.f32 %v2411, %v2603
        %v2605 = vpop.f32.mrb[0].mxu0
        %v2606 = vadd.f32 %v2413, %v2605
        %v2607 = vpop.f32.mrb[0].mxu0
        %v2608 = vadd.f32 %v2415, %v2607
        %v2609 = vpop.f32.mrb[0].mxu0
        %v2610 = vadd.f32 %v2417, %v2609
        %2611 = vmatprep.mubr.bf16.mxu0 %v945
        %2612 = vmatmul.mubr.bf16.gmra.mrb[0].mxu0 %v944
        %v2613 = vpop.f32.mrb[0].mxu0
        %v2614 = vadd.f32 %v2421, %v2613
        %v2615 = vpop.f32.mrb[0].mxu0
        %v2616 = vadd.f32 %v2423, %v2615
        %v2617 = vpop.f32.mrb[0].mxu0
        %v2618 = vadd.f32 %v2425, %v2617
        %v2619 = vpop.f32.mrb[0].mxu0
        %v2620 = vadd.f32 %v2427, %v2619
        %2621 = vmatprep.mubr.bf16.mxu0 %v949
        %2622 = vmatmul.mubr.bf16.gmra.mrb[0].mxu0 %v948
        %v2623 = vpop.f32.mrb[0].mxu0
        %v2624 = vadd.f32 %v2431, %v2623
        %v2625 = vpop.f32.mrb[0].mxu0
        %v2626 = vadd.f32 %v2433, %v2625
        %v2627 = vpop.f32.mrb[0].mxu0
        %v2628 = vadd.f32 %v2435, %v2627
        %v2629 = vpop.f32.mrb[0].mxu0
        %v2630 = vadd.f32 %v2437, %v2629
        %2631 = vmatprep.mubr.bf16.mxu0 %v953
        %2632 = vmatmul.mubr.bf16.gmra.mrb[0].mxu0 %v952
        %v2633 = vpop.f32.mrb[0].mxu0
        %v2634 = vadd.f32 %v2441, %v2633
        %v2635 = vpop.f32.mrb[0].mxu0
        %v2636 = vadd.f32 %v2443, %v2635
        %v2637 = vpop.f32.mrb[0].mxu0
        %v2638 = vadd.f32 %v2445, %v2637
        %v2639 = vpop.f32.mrb[0].mxu0
        %v2640 = vadd.f32 %v2447, %v2639
        %2641 = vmatprep.mubr.bf16.mxu0 %v957
        %2642 = vmatmul.mubr.bf16.gmra.mrb[0].mxu0 %v956
        %v2643 = vpop.f32.mrb[0].mxu0
        %v2644 = vadd.f32 %v2451, %v2643
        %v2645 = vpop.f32.mrb[0].mxu0
        %v2646 = vadd.f32 %v2453, %v2645
        %v2647 = vpop.f32.mrb[0].mxu0
        %v2648 = vadd.f32 %v2455, %v2647
        %v2649 = vpop.f32.mrb[0].mxu0
        %v2650 = vadd.f32 %v2457, %v2649
        %2651 = vmatprep.mubr.bf16.mxu0 %v961
        %2652 = vmatmul.mubr.bf16.gmra.mrb[0].mxu0 %v960
        %v2653 = vpop.f32.mrb[0].mxu0
        %v2654 = vadd.f32 %v2461, %v2653
        %v2655 = vpop.f32.mrb[0].mxu0
        %v2656 = vadd.f32 %v2463, %v2655
        %v2657 = vpop.f32.mrb[0].mxu0
        %v2658 = vadd.f32 %v2465, %v2657
        %v2659 = vpop.f32.mrb[0].mxu0
        %v2660 = vadd.f32 %v2467, %v2659
        %2661 = vmatprep.mubr.bf16.mxu0 %v965
        %2662 = vmatmul.mubr.bf16.gmra.mrb[0].mxu0 %v964
        %v2663 = vpop.f32.mrb[0].mxu0
        %v2664 = vadd.f32 %v2471, %v2663
        %v2665 = vpop.f32.mrb[0].mxu0
        %v2666 = vadd.f32 %v2473, %v2665
        %v2667 = vpop.f32.mrb[0].mxu0
        %v2668 = vadd.f32 %v2475, %v2667
        %v2669 = vpop.f32.mrb[0].mxu0
        %v2670 = vadd.f32 %v2477, %v2669
        %2671 = vmatprep.mubr.bf16.mxu0 %v969
        %2672 = vmatmul.mubr.bf16.gmra.mrb[0].mxu0 %v968
        %v2673 = vpop.f32.mrb[0].mxu0
        %v2674 = vadd.f32 %v2481, %v2673
        %v2675 = vpop.f32.mrb[0].mxu0
        %v2676 = vadd.f32 %v2483, %v2675
        %v2677 = vpop.f32.mrb[0].mxu0
        %v2678 = vadd.f32 %v2485, %v2677
        %v2679 = vpop.f32.mrb[0].mxu0
        %v2680 = vadd.f32 %v2487, %v2679
        %2681 = vmatprep.mubr.bf16.mxu0 %v973
        %2682 = vmatmul.mubr.bf16.gmra.mrb[0].mxu0 %v972
        %v2683 = vpop.f32.mrb[0].mxu0
        %v2684 = vadd.f32 %v2491, %v2683
        %v2685 = vpop.f32.mrb[0].mxu0
        %v2686 = vadd.f32 %v2493, %v2685
        %v2687 = vpop.f32.mrb[0].mxu0
        %v2688 = vadd.f32 %v2495, %v2687
        %v2689 = vpop.f32.mrb[0].mxu0
        %v2690 = vadd.f32 %v2497, %v2689
        %2691 = vmatprep.mubr.bf16.mxu0 %v977
        %2692 = vmatmul.mubr.bf16.gmra.mrb[0].mxu0 %v976
        %v2693 = vpop.f32.mrb[0].mxu0
        %v2694 = vadd.f32 %v2501, %v2693
        %v2695 = vpop.f32.mrb[0].mxu0
        %v2696 = vadd.f32 %v2503, %v2695
        %v2697 = vpop.f32.mrb[0].mxu0
        %v2698 = vadd.f32 %v2505, %v2697
        %v2699 = vpop.f32.mrb[0].mxu0
        %v2700 = vadd.f32 %v2507, %v2699
        %2701 = vmatprep.mubr.bf16.mxu0 %v981
        %2702 = vmatmul.mubr.bf16.gmra.mrb[0].mxu0 %v980
        %v2703 = vpop.f32.mrb[0].mxu0
        %v2704 = vadd.f32 %v2511, %v2703
        %v2705 = vpop.f32.mrb[0].mxu0
        %v2706 = vadd.f32 %v2513, %v2705
        %v2707 = vpop.f32.mrb[0].mxu0
        %v2708 = vadd.f32 %v2515, %v2707
        %v2709 = vpop.f32.mrb[0].mxu0
        %v2710 = vadd.f32 %v2517, %v2709
        %2711 = vdwg.mxu0
        %2712 = vmatprep.subr.bf16.mxu0 %v1817
        %2713 = vmatpush1.bf16.msra.mxu0 %v1816
        %2714 = vmatprep.subr.bf16.mxu0 %v1825
        %2715 = vmatpush1.bf16.msra.mxu0 %v1824
        %2716 = vmatprep.subr.bf16.mxu0 %v1833
        %2717 = vmatpush1.bf16.msra.mxu0 %v1832
        %2718 = vmatprep.subr.bf16.mxu0 %v1841
        %2719 = vmatpush1.bf16.msra.mxu0 %v1840
        %2720 = vmatprep.subr.bf16.mxu0 %v1849
        %2721 = vmatpush1.bf16.msra.mxu0 %v1848
        %2722 = vmatprep.subr.bf16.mxu0 %v1857
        %2723 = vmatpush1.bf16.msra.mxu0 %v1856
        %2724 = vmatprep.subr.bf16.mxu0 %v1865
        %2725 = vmatpush1.bf16.msra.mxu0 %v1864
        %2726 = vmatprep.subr.bf16.mxu0 %v1873
        %2727 = vmatpush1.bf16.msra.mxu0 %v1872
        %2728 = vmatprep.subr.bf16.mxu0 %v1881
        %2729 = vmatpush1.bf16.msra.mxu0 %v1880
        %2730 = vmatprep.subr.bf16.mxu0 %v1889
        %2731 = vmatpush1.bf16.msra.mxu0 %v1888
        %2732 = vmatprep.subr.bf16.mxu0 %v1897
        %2733 = vmatpush1.bf16.msra.mxu0 %v1896
        %2734 = vmatprep.subr.bf16.mxu0 %v1905
        %2735 = vmatpush1.bf16.msra.mxu0 %v1904
        %2736 = vmatprep.subr.bf16.mxu0 %v1913
        %2737 = vmatpush1.bf16.msra.mxu0 %v1912
        %2738 = vmatprep.subr.bf16.mxu0 %v1921
        %2739 = vmatpush1.bf16.msra.mxu0 %v1920
        %2740 = vmatprep.subr.bf16.mxu0 %v1929
        %2741 = vmatpush1.bf16.msra.mxu0 %v1928
        %2742 = vmatprep.subr.bf16.mxu0 %v1937
        %2743 = vmatpush1.bf16.msra.mxu0 %v1936
        %2744 = vmatprep.mubr.bf16.mxu0 %v919
        %2745 = vmatmul.mubr.bf16.gmra.mrb[0].mxu0 %v918
        %v2746 = vpop.f32.mrb[0].mxu0
        %v2747 = vadd.f32 0.0, %v2746
        %v2748 = vpop.f32.mrb[0].mxu0
        %v2749 = vadd.f32 0.0, %v2748
        %v2750 = vpop.f32.mrb[0].mxu0
        %v2751 = vadd.f32 0.0, %v2750
        %v2752 = vpop.f32.mrb[0].mxu0
        %v2753 = vadd.f32 0.0, %v2752
        %2754 = vmatprep.mubr.bf16.mxu0 %v923
        %2755 = vmatmul.mubr.bf16.gmra.mrb[0].mxu0 %v922
        %v2756 = vpop.f32.mrb[0].mxu0
        %v2757 = vadd.f32 0.0, %v2756
        %v2758 = vpop.f32.mrb[0].mxu0
        %v2759 = vadd.f32 0.0, %v2758
        %v2760 = vpop.f32.mrb[0].mxu0
        %v2761 = vadd.f32 0.0, %v2760
        %v2762 = vpop.f32.mrb[0].mxu0
        %v2763 = vadd.f32 0.0, %v2762
        %2764 = vmatprep.mubr.bf16.mxu0 %v927
        %2765 = vmatmul.mubr.bf16.gmra.mrb[0].mxu0 %v926
        %v2766 = vpop.f32.mrb[0].mxu0
        %v2767 = vadd.f32 0.0, %v2766
        %v2768 = vpop.f32.mrb[0].mxu0
        %v2769 = vadd.f32 0.0, %v2768
        %v2770 = vpop.f32.mrb[0].mxu0
        %v2771 = vadd.f32 0.0, %v2770
        %v2772 = vpop.f32.mrb[0].mxu0
        %v2773 = vadd.f32 0.0, %v2772
        %2774 = vmatprep.mubr.bf16.mxu0 %v931
        %2775 = vmatmul.mubr.bf16.gmra.mrb[0].mxu0 %v930
        %v2776 = vpop.f32.mrb[0].mxu0
        %v2777 = vadd.f32 0.0, %v2776
        %v2778 = vpop.f32.mrb[0].mxu0
        %v2779 = vadd.f32 0.0, %v2778
        %v2780 = vpop.f32.mrb[0].mxu0
        %v2781 = vadd.f32 0.0, %v2780
        %v2782 = vpop.f32.mrb[0].mxu0
        %v2783 = vadd.f32 0.0, %v2782
        %2784 = vmatprep.mubr.bf16.mxu0 %v935
        %2785 = vmatmul.mubr.bf16.gmra.mrb[0].mxu0 %v934
        %v2786 = vpop.f32.mrb[0].mxu0
        %v2787 = vadd.f32 0.0, %v2786
        %v2788 = vpop.f32.mrb[0].mxu0
        %v2789 = vadd.f32 0.0, %v2788
        %v2790 = vpop.f32.mrb[0].mxu0
        %v2791 = vadd.f32 0.0, %v2790
        %v2792 = vpop.f32.mrb[0].mxu0
        %v2793 = vadd.f32 0.0, %v2792
        %2794 = vmatprep.mubr.bf16.mxu0 %v939
        %2795 = vmatmul.mubr.bf16.gmra.mrb[0].mxu0 %v938
        %v2796 = vpop.f32.mrb[0].mxu0
        %v2797 = vadd.f32 0.0, %v2796
        %v2798 = vpop.f32.mrb[0].mxu0
        %v2799 = vadd.f32 0.0, %v2798
        %v2800 = vpop.f32.mrb[0].mxu0
        %v2801 = vadd.f32 0.0, %v2800
        %v2802 = vpop.f32.mrb[0].mxu0
        %v2803 = vadd.f32 0.0, %v2802
        %2804 = vmatprep.mubr.bf16.mxu0 %v943
        %2805 = vmatmul.mubr.bf16.gmra.mrb[0].mxu0 %v942
        %v2806 = vpop.f32.mrb[0].mxu0
        %v2807 = vadd.f32 0.0, %v2806
        %v2808 = vpop.f32.mrb[0].mxu0
        %v2809 = vadd.f32 0.0, %v2808
        %v2810 = vpop.f32.mrb[0].mxu0
        %v2811 = vadd.f32 0.0, %v2810
        %v2812 = vpop.f32.mrb[0].mxu0
        %v2813 = vadd.f32 0.0, %v2812
        %2814 = vmatprep.mubr.bf16.mxu0 %v947
        %2815 = vmatmul.mubr.bf16.gmra.mrb[0].mxu0 %v946
        %v2816 = vpop.f32.mrb[0].mxu0
        %v2817 = vadd.f32 0.0, %v2816
        %v2818 = vpop.f32.mrb[0].mxu0
        %v2819 = vadd.f32 0.0, %v2818
        %v2820 = vpop.f32.mrb[0].mxu0
        %v2821 = vadd.f32 0.0, %v2820
        %v2822 = vpop.f32.mrb[0].mxu0
        %v2823 = vadd.f32 0.0, %v2822
        %2824 = vmatprep.mubr.bf16.mxu0 %v951
        %2825 = vmatmul.mubr.bf16.gmra.mrb[0].mxu0 %v950
        %v2826 = vpop.f32.mrb[0].mxu0
        %v2827 = vadd.f32 0.0, %v2826
        %v2828 = vpop.f32.mrb[0].mxu0
        %v2829 = vadd.f32 0.0, %v2828
        %v2830 = vpop.f32.mrb[0].mxu0
        %v2831 = vadd.f32 0.0, %v2830
        %v2832 = vpop.f32.mrb[0].mxu0
        %v2833 = vadd.f32 0.0, %v2832
        %2834 = vmatprep.mubr.bf16.mxu0 %v955
        %2835 = vmatmul.mubr.bf16.gmra.mrb[0].mxu0 %v954
        %v2836 = vpop.f32.mrb[0].mxu0
        %v2837 = vadd.f32 0.0, %v2836
        %v2838 = vpop.f32.mrb[0].mxu0
        %v2839 = vadd.f32 0.0, %v2838
        %v2840 = vpop.f32.mrb[0].mxu0
        %v2841 = vadd.f32 0.0, %v2840
        %v2842 = vpop.f32.mrb[0].mxu0
        %v2843 = vadd.f32 0.0, %v2842
        %2844 = vmatprep.mubr.bf16.mxu0 %v959
        %2845 = vmatmul.mubr.bf16.gmra.mrb[0].mxu0 %v958
        %v2846 = vpop.f32.mrb[0].mxu0
        %v2847 = vadd.f32 0.0, %v2846
        %v2848 = vpop.f32.mrb[0].mxu0
        %v2849 = vadd.f32 0.0, %v2848
        %v2850 = vpop.f32.mrb[0].mxu0
        %v2851 = vadd.f32 0.0, %v2850
        %v2852 = vpop.f32.mrb[0].mxu0
        %v2853 = vadd.f32 0.0, %v2852
        %2854 = vmatprep.mubr.bf16.mxu0 %v963
        %2855 = vmatmul.mubr.bf16.gmra.mrb[0].mxu0 %v962
        %v2856 = vpop.f32.mrb[0].mxu0
        %v2857 = vadd.f32 0.0, %v2856
        %v2858 = vpop.f32.mrb[0].mxu0
        %v2859 = vadd.f32 0.0, %v2858
        %v2860 = vpop.f32.mrb[0].mxu0
        %v2861 = vadd.f32 0.0, %v2860
        %v2862 = vpop.f32.mrb[0].mxu0
        %v2863 = vadd.f32 0.0, %v2862
        %2864 = vmatprep.mubr.bf16.mxu0 %v967
        %2865 = vmatmul.mubr.bf16.gmra.mrb[0].mxu0 %v966
        %v2866 = vpop.f32.mrb[0].mxu0
        %v2867 = vadd.f32 0.0, %v2866
        %v2868 = vpop.f32.mrb[0].mxu0
        %v2869 = vadd.f32 0.0, %v2868
        %v2870 = vpop.f32.mrb[0].mxu0
        %v2871 = vadd.f32 0.0, %v2870
        %v2872 = vpop.f32.mrb[0].mxu0
        %v2873 = vadd.f32 0.0, %v2872
        %2874 = vmatprep.mubr.bf16.mxu0 %v971
        %2875 = vmatmul.mubr.bf16.gmra.mrb[0].mxu0 %v970
        %v2876 = vpop.f32.mrb[0].mxu0
        %v2877 = vadd.f32 0.0, %v2876
        %v2878 = vpop.f32.mrb[0].mxu0
        %v2879 = vadd.f32 0.0, %v2878
        %v2880 = vpop.f32.mrb[0].mxu0
        %v2881 = vadd.f32 0.0, %v2880
        %v2882 = vpop.f32.mrb[0].mxu0
        %v2883 = vadd.f32 0.0, %v2882
        %2884 = vmatprep.mubr.bf16.mxu0 %v975
        %2885 = vmatmul.mubr.bf16.gmra.mrb[0].mxu0 %v974
        %v2886 = vpop.f32.mrb[0].mxu0
        %v2887 = vadd.f32 0.0, %v2886
        %v2888 = vpop.f32.mrb[0].mxu0
        %v2889 = vadd.f32 0.0, %v2888
        %v2890 = vpop.f32.mrb[0].mxu0
        %v2891 = vadd.f32 0.0, %v2890
        %v2892 = vpop.f32.mrb[0].mxu0
        %v2893 = vadd.f32 0.0, %v2892
        %2894 = vmatprep.mubr.bf16.mxu0 %v979
        %2895 = vmatmul.mubr.bf16.gmra.mrb[0].mxu0 %v978
        %v2896 = vpop.f32.mrb[0].mxu0
        %v2897 = vadd.f32 0.0, %v2896
        %v2898 = vpop.f32.mrb[0].mxu0
        %v2899 = vadd.f32 0.0, %v2898
        %v2900 = vpop.f32.mrb[0].mxu0
        %v2901 = vadd.f32 0.0, %v2900
        %v2902 = vpop.f32.mrb[0].mxu0
        %v2903 = vadd.f32 0.0, %v2902
        %2904 = vdwg.mxu0
        %2905 = vmatprep.subr.bf16.mxu0 %v1945
        %2906 = vmatpush1.bf16.msra.mxu0 %v1944
        %2907 = vmatprep.subr.bf16.mxu0 %v1953
        %2908 = vmatpush1.bf16.msra.mxu0 %v1952
        %2909 = vmatprep.subr.bf16.mxu0 %v1961
        %2910 = vmatpush1.bf16.msra.mxu0 %v1960
        %2911 = vmatprep.subr.bf16.mxu0 %v1969
        %2912 = vmatpush1.bf16.msra.mxu0 %v1968
        %2913 = vmatprep.subr.bf16.mxu0 %v1977
        %2914 = vmatpush1.bf16.msra.mxu0 %v1976
        %2915 = vmatprep.subr.bf16.mxu0 %v1985
        %2916 = vmatpush1.bf16.msra.mxu0 %v1984
        %2917 = vmatprep.subr.bf16.mxu0 %v1993
        %2918 = vmatpush1.bf16.msra.mxu0 %v1992
        %2919 = vmatprep.subr.bf16.mxu0 %v2001
        %2920 = vmatpush1.bf16.msra.mxu0 %v2000
        %2921 = vmatprep.subr.bf16.mxu0 %v2009
        %2922 = vmatpush1.bf16.msra.mxu0 %v2008
        %2923 = vmatprep.subr.bf16.mxu0 %v2017
        %2924 = vmatpush1.bf16.msra.mxu0 %v2016
        %2925 = vmatprep.subr.bf16.mxu0 %v2025
        %2926 = vmatpush1.bf16.msra.mxu0 %v2024
        %2927 = vmatprep.subr.bf16.mxu0 %v2033
        %2928 = vmatpush1.bf16.msra.mxu0 %v2032
        %2929 = vmatprep.subr.bf16.mxu0 %v2041
        %2930 = vmatpush1.bf16.msra.mxu0 %v2040
        %2931 = vmatprep.subr.bf16.mxu0 %v2049
        %2932 = vmatpush1.bf16.msra.mxu0 %v2048
        %2933 = vmatprep.subr.bf16.mxu0 %v2057
        %2934 = vmatpush1.bf16.msra.mxu0 %v2056
        %2935 = vmatprep.subr.bf16.mxu0 %v2065
        %2936 = vmatpush1.bf16.msra.mxu0 %v2064
        %2937 = vmatprep.mubr.bf16.mxu0 %v921
        %2938 = vmatmul.mubr.bf16.gmra.mrb[0].mxu0 %v920
        %v2939 = vpop.f32.mrb[0].mxu0
        %v2940 = vadd.f32 %v2747, %v2939
        %v2941 = vpop.f32.mrb[0].mxu0
        %v2942 = vadd.f32 %v2749, %v2941
        %v2943 = vpop.f32.mrb[0].mxu0
        %v2944 = vadd.f32 %v2751, %v2943
        %v2945 = vpop.f32.mrb[0].mxu0
        %v2946 = vadd.f32 %v2753, %v2945
        %2947 = vmatprep.mubr.bf16.mxu0 %v925
        %2948 = vmatmul.mubr.bf16.gmra.mrb[0].mxu0 %v924
        %v2949 = vpop.f32.mrb[0].mxu0
        %v2950 = vadd.f32 %v2757, %v2949
        %v2951 = vpop.f32.mrb[0].mxu0
        %v2952 = vadd.f32 %v2759, %v2951
        %v2953 = vpop.f32.mrb[0].mxu0
        %v2954 = vadd.f32 %v2761, %v2953
        %v2955 = vpop.f32.mrb[0].mxu0
        %v2956 = vadd.f32 %v2763, %v2955
        %2957 = vmatprep.mubr.bf16.mxu0 %v929
        %2958 = vmatmul.mubr.bf16.gmra.mrb[0].mxu0 %v928
        %v2959 = vpop.f32.mrb[0].mxu0
        %v2960 = vadd.f32 %v2767, %v2959
        %v2961 = vpop.f32.mrb[0].mxu0
        %v2962 = vadd.f32 %v2769, %v2961
        %v2963 = vpop.f32.mrb[0].mxu0
        %v2964 = vadd.f32 %v2771, %v2963
        %v2965 = vpop.f32.mrb[0].mxu0
        %v2966 = vadd.f32 %v2773, %v2965
        %2967 = vmatprep.mubr.bf16.mxu0 %v933
        %2968 = vmatmul.mubr.bf16.gmra.mrb[0].mxu0 %v932
        %v2969 = vpop.f32.mrb[0].mxu0
        %v2970 = vadd.f32 %v2777, %v2969
        %v2971 = vpop.f32.mrb[0].mxu0
        %v2972 = vadd.f32 %v2779, %v2971
        %v2973 = vpop.f32.mrb[0].mxu0
        %v2974 = vadd.f32 %v2781, %v2973
        %v2975 = vpop.f32.mrb[0].mxu0
        %v2976 = vadd.f32 %v2783, %v2975
        %2977 = vmatprep.mubr.bf16.mxu0 %v937
        %2978 = vmatmul.mubr.bf16.gmra.mrb[0].mxu0 %v936
        %v2979 = vpop.f32.mrb[0].mxu0
        %v2980 = vadd.f32 %v2787, %v2979
        %v2981 = vpop.f32.mrb[0].mxu0
        %v2982 = vadd.f32 %v2789, %v2981
        %v2983 = vpop.f32.mrb[0].mxu0
        %v2984 = vadd.f32 %v2791, %v2983
        %v2985 = vpop.f32.mrb[0].mxu0
        %v2986 = vadd.f32 %v2793, %v2985
        %2987 = vmatprep.mubr.bf16.mxu0 %v941
        %2988 = vmatmul.mubr.bf16.gmra.mrb[0].mxu0 %v940
        %v2989 = vpop.f32.mrb[0].mxu0
        %v2990 = vadd.f32 %v2797, %v2989
        %v2991 = vpop.f32.mrb[0].mxu0
        %v2992 = vadd.f32 %v2799, %v2991
        %v2993 = vpop.f32.mrb[0].mxu0
        %v2994 = vadd.f32 %v2801, %v2993
        %v2995 = vpop.f32.mrb[0].mxu0
        %v2996 = vadd.f32 %v2803, %v2995
        %2997 = vmatprep.mubr.bf16.mxu0 %v945
        %2998 = vmatmul.mubr.bf16.gmra.mrb[0].mxu0 %v944
        %v2999 = vpop.f32.mrb[0].mxu0
        %v3000 = vadd.f32 %v2807, %v2999
        %v3001 = vpop.f32.mrb[0].mxu0
        %v3002 = vadd.f32 %v2809, %v3001
        %v3003 = vpop.f32.mrb[0].mxu0
        %v3004 = vadd.f32 %v2811, %v3003
        %v3005 = vpop.f32.mrb[0].mxu0
        %v3006 = vadd.f32 %v2813, %v3005
        %3007 = vmatprep.mubr.bf16.mxu0 %v949
        %3008 = vmatmul.mubr.bf16.gmra.mrb[0].mxu0 %v948
        %v3009 = vpop.f32.mrb[0].mxu0
        %v3010 = vadd.f32 %v2817, %v3009
        %v3011 = vpop.f32.mrb[0].mxu0
        %v3012 = vadd.f32 %v2819, %v3011
        %v3013 = vpop.f32.mrb[0].mxu0
        %v3014 = vadd.f32 %v2821, %v3013
        %v3015 = vpop.f32.mrb[0].mxu0
        %v3016 = vadd.f32 %v2823, %v3015
        %3017 = vmatprep.mubr.bf16.mxu0 %v953
        %3018 = vmatmul.mubr.bf16.gmra.mrb[0].mxu0 %v952
        %v3019 = vpop.f32.mrb[0].mxu0
        %v3020 = vadd.f32 %v2827, %v3019
        %v3021 = vpop.f32.mrb[0].mxu0
        %v3022 = vadd.f32 %v2829, %v3021
        %v3023 = vpop.f32.mrb[0].mxu0
        %v3024 = vadd.f32 %v2831, %v3023
        %v3025 = vpop.f32.mrb[0].mxu0
        %v3026 = vadd.f32 %v2833, %v3025
        %3027 = vmatprep.mubr.bf16.mxu0 %v957
        %3028 = vmatmul.mubr.bf16.gmra.mrb[0].mxu0 %v956
        %v3029 = vpop.f32.mrb[0].mxu0
        %v3030 = vadd.f32 %v2837, %v3029
        %v3031 = vpop.f32.mrb[0].mxu0
        %v3032 = vadd.f32 %v2839, %v3031
        %v3033 = vpop.f32.mrb[0].mxu0
        %v3034 = vadd.f32 %v2841, %v3033
        %v3035 = vpop.f32.mrb[0].mxu0
        %v3036 = vadd.f32 %v2843, %v3035
        %3037 = vmatprep.mubr.bf16.mxu0 %v961
        %3038 = vmatmul.mubr.bf16.gmra.mrb[0].mxu0 %v960
        %v3039 = vpop.f32.mrb[0].mxu0
        %v3040 = vadd.f32 %v2847, %v3039
        %v3041 = vpop.f32.mrb[0].mxu0
        %v3042 = vadd.f32 %v2849, %v3041
        %v3043 = vpop.f32.mrb[0].mxu0
        %v3044 = vadd.f32 %v2851, %v3043
        %v3045 = vpop.f32.mrb[0].mxu0
        %v3046 = vadd.f32 %v2853, %v3045
        %3047 = vmatprep.mubr.bf16.mxu0 %v965
        %3048 = vmatmul.mubr.bf16.gmra.mrb[0].mxu0 %v964
        %v3049 = vpop.f32.mrb[0].mxu0
        %v3050 = vadd.f32 %v2857, %v3049
        %v3051 = vpop.f32.mrb[0].mxu0
        %v3052 = vadd.f32 %v2859, %v3051
        %v3053 = vpop.f32.mrb[0].mxu0
        %v3054 = vadd.f32 %v2861, %v3053
        %v3055 = vpop.f32.mrb[0].mxu0
        %v3056 = vadd.f32 %v2863, %v3055
        %3057 = vmatprep.mubr.bf16.mxu0 %v969
        %3058 = vmatmul.mubr.bf16.gmra.mrb[0].mxu0 %v968
        %v3059 = vpop.f32.mrb[0].mxu0
        %v3060 = vadd.f32 %v2867, %v3059
        %v3061 = vpop.f32.mrb[0].mxu0
        %v3062 = vadd.f32 %v2869, %v3061
        %v3063 = vpop.f32.mrb[0].mxu0
        %v3064 = vadd.f32 %v2871, %v3063
        %v3065 = vpop.f32.mrb[0].mxu0
        %v3066 = vadd.f32 %v2873, %v3065
        %3067 = vmatprep.mubr.bf16.mxu0 %v973
        %3068 = vmatmul.mubr.bf16.gmra.mrb[0].mxu0 %v972
        %v3069 = vpop.f32.mrb[0].mxu0
        %v3070 = vadd.f32 %v2877, %v3069
        %v3071 = vpop.f32.mrb[0].mxu0
        %v3072 = vadd.f32 %v2879, %v3071
        %v3073 = vpop.f32.mrb[0].mxu0
        %v3074 = vadd.f32 %v2881, %v3073
        %v3075 = vpop.f32.mrb[0].mxu0
        %v3076 = vadd.f32 %v2883, %v3075
        %3077 = vmatprep.mubr.bf16.mxu0 %v977
        %3078 = vmatmul.mubr.bf16.gmra.mrb[0].mxu0 %v976
        %v3079 = vpop.f32.mrb[0].mxu0
        %v3080 = vadd.f32 %v2887, %v3079
        %v3081 = vpop.f32.mrb[0].mxu0
        %v3082 = vadd.f32 %v2889, %v3081
        %v3083 = vpop.f32.mrb[0].mxu0
        %v3084 = vadd.f32 %v2891, %v3083
        %v3085 = vpop.f32.mrb[0].mxu0
        %v3086 = vadd.f32 %v2893, %v3085
        %3087 = vmatprep.mubr.bf16.mxu0 %v981
        %3088 = vmatmul.mubr.bf16.gmra.mrb[0].mxu0 %v980
        %v3089 = vpop.f32.mrb[0].mxu0
        %v3090 = vadd.f32 %v2897, %v3089
        %v3091 = vpop.f32.mrb[0].mxu0
        %v3092 = vadd.f32 %v2899, %v3091
        %v3093 = vpop.f32.mrb[0].mxu0
        %v3094 = vadd.f32 %v2901, %v3093
        %v3095 = vpop.f32.mrb[0].mxu0
        %v3096 = vadd.f32 %v2903, %v3095
        %3097 = vdwg.mxu0
        %3098 = vmatprep.subr.bf16.mxu0 %v1819
        %3099 = vmatpush1.bf16.msra.mxu0 %v1818
        %3100 = vmatprep.subr.bf16.mxu0 %v1827
        %3101 = vmatpush1.bf16.msra.mxu0 %v1826
        %3102 = vmatprep.subr.bf16.mxu0 %v1835
        %3103 = vmatpush1.bf16.msra.mxu0 %v1834
        %3104 = vmatprep.subr.bf16.mxu0 %v1843
        %3105 = vmatpush1.bf16.msra.mxu0 %v1842
        %3106 = vmatprep.subr.bf16.mxu0 %v1851
        %3107 = vmatpush1.bf16.msra.mxu0 %v1850
        %3108 = vmatprep.subr.bf16.mxu0 %v1859
        %3109 = vmatpush1.bf16.msra.mxu0 %v1858
        %3110 = vmatprep.subr.bf16.mxu0 %v1867
        %3111 = vmatpush1.bf16.msra.mxu0 %v1866
        %3112 = vmatprep.subr.bf16.mxu0 %v1875
        %3113 = vmatpush1.bf16.msra.mxu0 %v1874
        %3114 = vmatprep.subr.bf16.mxu0 %v1883
        %3115 = vmatpush1.bf16.msra.mxu0 %v1882
        %3116 = vmatprep.subr.bf16.mxu0 %v1891
        %3117 = vmatpush1.bf16.msra.mxu0 %v1890
        %3118 = vmatprep.subr.bf16.mxu0 %v1899
        %3119 = vmatpush1.bf16.msra.mxu0 %v1898
        %3120 = vmatprep.subr.bf16.mxu0 %v1907
        %3121 = vmatpush1.bf16.msra.mxu0 %v1906
        %3122 = vmatprep.subr.bf16.mxu0 %v1915
        %3123 = vmatpush1.bf16.msra.mxu0 %v1914
        %3124 = vmatprep.subr.bf16.mxu0 %v1923
        %3125 = vmatpush1.bf16.msra.mxu0 %v1922
        %3126 = vmatprep.subr.bf16.mxu0 %v1931
        %3127 = vmatpush1.bf16.msra.mxu0 %v1930
        %3128 = vmatprep.subr.bf16.mxu0 %v1939
        %3129 = vmatpush1.bf16.msra.mxu0 %v1938
        %3130 = vmatprep.mubr.bf16.mxu0 %v919
        %3131 = vmatmul.mubr.bf16.gmra.mrb[0].mxu0 %v918
        %v3132 = vpop.f32.mrb[0].mxu0
        %v3133 = vadd.f32 0.0, %v3132
        %v3134 = vpop.f32.mrb[0].mxu0
        %v3135 = vadd.f32 0.0, %v3134
        %v3136 = vpop.f32.mrb[0].mxu0
        %v3137 = vadd.f32 0.0, %v3136
        %v3138 = vpop.f32.mrb[0].mxu0
        %v3139 = vadd.f32 0.0, %v3138
        %3140 = vmatprep.mubr.bf16.mxu0 %v923
        %3141 = vmatmul.mubr.bf16.gmra.mrb[0].mxu0 %v922
        %v3142 = vpop.f32.mrb[0].mxu0
        %v3143 = vadd.f32 0.0, %v3142
        %v3144 = vpop.f32.mrb[0].mxu0
        %v3145 = vadd.f32 0.0, %v3144
        %v3146 = vpop.f32.mrb[0].mxu0
        %v3147 = vadd.f32 0.0, %v3146
        %v3148 = vpop.f32.mrb[0].mxu0
        %v3149 = vadd.f32 0.0, %v3148
        %3150 = vmatprep.mubr.bf16.mxu0 %v927
        %3151 = vmatmul.mubr.bf16.gmra.mrb[0].mxu0 %v926
        %v3152 = vpop.f32.mrb[0].mxu0
        %v3153 = vadd.f32 0.0, %v3152
        %v3154 = vpop.f32.mrb[0].mxu0
        %v3155 = vadd.f32 0.0, %v3154
        %v3156 = vpop.f32.mrb[0].mxu0
        %v3157 = vadd.f32 0.0, %v3156
        %v3158 = vpop.f32.mrb[0].mxu0
        %v3159 = vadd.f32 0.0, %v3158
        %3160 = vmatprep.mubr.bf16.mxu0 %v931
        %3161 = vmatmul.mubr.bf16.gmra.mrb[0].mxu0 %v930
        %v3162 = vpop.f32.mrb[0].mxu0
        %v3163 = vadd.f32 0.0, %v3162
        %v3164 = vpop.f32.mrb[0].mxu0
        %v3165 = vadd.f32 0.0, %v3164
        %v3166 = vpop.f32.mrb[0].mxu0
        %v3167 = vadd.f32 0.0, %v3166
        %v3168 = vpop.f32.mrb[0].mxu0
        %v3169 = vadd.f32 0.0, %v3168
        %3170 = vmatprep.mubr.bf16.mxu0 %v935
        %3171 = vmatmul.mubr.bf16.gmra.mrb[0].mxu0 %v934
        %v3172 = vpop.f32.mrb[0].mxu0
        %v3173 = vadd.f32 0.0, %v3172
        %v3174 = vpop.f32.mrb[0].mxu0
        %v3175 = vadd.f32 0.0, %v3174
        %v3176 = vpop.f32.mrb[0].mxu0
        %v3177 = vadd.f32 0.0, %v3176
        %v3178 = vpop.f32.mrb[0].mxu0
        %v3179 = vadd.f32 0.0, %v3178
        %3180 = vmatprep.mubr.bf16.mxu0 %v939
        %3181 = vmatmul.mubr.bf16.gmra.mrb[0].mxu0 %v938
        %v3182 = vpop.f32.mrb[0].mxu0
        %v3183 = vadd.f32 0.0, %v3182
        %v3184 = vpop.f32.mrb[0].mxu0
        %v3185 = vadd.f32 0.0, %v3184
        %v3186 = vpop.f32.mrb[0].mxu0
        %v3187 = vadd.f32 0.0, %v3186
        %v3188 = vpop.f32.mrb[0].mxu0
        %v3189 = vadd.f32 0.0, %v3188
        %3190 = vmatprep.mubr.bf16.mxu0 %v943
        %3191 = vmatmul.mubr.bf16.gmra.mrb[0].mxu0 %v942
        %v3192 = vpop.f32.mrb[0].mxu0
        %v3193 = vadd.f32 0.0, %v3192
        %v3194 = vpop.f32.mrb[0].mxu0
        %v3195 = vadd.f32 0.0, %v3194
        %v3196 = vpop.f32.mrb[0].mxu0
        %v3197 = vadd.f32 0.0, %v3196
        %v3198 = vpop.f32.mrb[0].mxu0
        %v3199 = vadd.f32 0.0, %v3198
        %3200 = vmatprep.mubr.bf16.mxu0 %v947
        %3201 = vmatmul.mubr.bf16.gmra.mrb[0].mxu0 %v946
        %v3202 = vpop.f32.mrb[0].mxu0
        %v3203 = vadd.f32 0.0, %v3202
        %v3204 = vpop.f32.mrb[0].mxu0
        %v3205 = vadd.f32 0.0, %v3204
        %v3206 = vpop.f32.mrb[0].mxu0
        %v3207 = vadd.f32 0.0, %v3206
        %v3208 = vpop.f32.mrb[0].mxu0
        %v3209 = vadd.f32 0.0, %v3208
        %3210 = vmatprep.mubr.bf16.mxu0 %v951
        %3211 = vmatmul.mubr.bf16.gmra.mrb[0].mxu0 %v950
        %v3212 = vpop.f32.mrb[0].mxu0
        %v3213 = vadd.f32 0.0, %v3212
        %v3214 = vpop.f32.mrb[0].mxu0
        %v3215 = vadd.f32 0.0, %v3214
        %v3216 = vpop.f32.mrb[0].mxu0
        %v3217 = vadd.f32 0.0, %v3216
        %v3218 = vpop.f32.mrb[0].mxu0
        %v3219 = vadd.f32 0.0, %v3218
        %3220 = vmatprep.mubr.bf16.mxu0 %v955
        %3221 = vmatmul.mubr.bf16.gmra.mrb[0].mxu0 %v954
        %v3222 = vpop.f32.mrb[0].mxu0
        %v3223 = vadd.f32 0.0, %v3222
        %v3224 = vpop.f32.mrb[0].mxu0
        %v3225 = vadd.f32 0.0, %v3224
        %v3226 = vpop.f32.mrb[0].mxu0
        %v3227 = vadd.f32 0.0, %v3226
        %v3228 = vpop.f32.mrb[0].mxu0
        %v3229 = vadd.f32 0.0, %v3228
        %3230 = vmatprep.mubr.bf16.mxu0 %v959
        %3231 = vmatmul.mubr.bf16.gmra.mrb[0].mxu0 %v958
        %v3232 = vpop.f32.mrb[0].mxu0
        %v3233 = vadd.f32 0.0, %v3232
        %v3234 = vpop.f32.mrb[0].mxu0
        %v3235 = vadd.f32 0.0, %v3234
        %v3236 = vpop.f32.mrb[0].mxu0
        %v3237 = vadd.f32 0.0, %v3236
        %v3238 = vpop.f32.mrb[0].mxu0
        %v3239 = vadd.f32 0.0, %v3238
        %3240 = vmatprep.mubr.bf16.mxu0 %v963
        %3241 = vmatmul.mubr.bf16.gmra.mrb[0].mxu0 %v962
        %v3242 = vpop.f32.mrb[0].mxu0
        %v3243 = vadd.f32 0.0, %v3242
        %v3244 = vpop.f32.mrb[0].mxu0
        %v3245 = vadd.f32 0.0, %v3244
        %v3246 = vpop.f32.mrb[0].mxu0
        %v3247 = vadd.f32 0.0, %v3246
        %v3248 = vpop.f32.mrb[0].mxu0
        %v3249 = vadd.f32 0.0, %v3248
        %3250 = vmatprep.mubr.bf16.mxu0 %v967
        %3251 = vmatmul.mubr.bf16.gmra.mrb[0].mxu0 %v966
        %v3252 = vpop.f32.mrb[0].mxu0
        %v3253 = vadd.f32 0.0, %v3252
        %v3254 = vpop.f32.mrb[0].mxu0
        %v3255 = vadd.f32 0.0, %v3254
        %v3256 = vpop.f32.mrb[0].mxu0
        %v3257 = vadd.f32 0.0, %v3256
        %v3258 = vpop.f32.mrb[0].mxu0
        %v3259 = vadd.f32 0.0, %v3258
        %3260 = vmatprep.mubr.bf16.mxu0 %v971
        %3261 = vmatmul.mubr.bf16.gmra.mrb[0].mxu0 %v970
        %v3262 = vpop.f32.mrb[0].mxu0
        %v3263 = vadd.f32 0.0, %v3262
        %v3264 = vpop.f32.mrb[0].mxu0
        %v3265 = vadd.f32 0.0, %v3264
        %v3266 = vpop.f32.mrb[0].mxu0
        %v3267 = vadd.f32 0.0, %v3266
        %v3268 = vpop.f32.mrb[0].mxu0
        %v3269 = vadd.f32 0.0, %v3268
        %3270 = vmatprep.mubr.bf16.mxu0 %v975
        %3271 = vmatmul.mubr.bf16.gmra.mrb[0].mxu0 %v974
        %v3272 = vpop.f32.mrb[0].mxu0
        %v3273 = vadd.f32 0.0, %v3272
        %v3274 = vpop.f32.mrb[0].mxu0
        %v3275 = vadd.f32 0.0, %v3274
        %v3276 = vpop.f32.mrb[0].mxu0
        %v3277 = vadd.f32 0.0, %v3276
        %v3278 = vpop.f32.mrb[0].mxu0
        %v3279 = vadd.f32 0.0, %v3278
        %3280 = vmatprep.mubr.bf16.mxu0 %v979
        %3281 = vmatmul.mubr.bf16.gmra.mrb[0].mxu0 %v978
        %v3282 = vpop.f32.mrb[0].mxu0
        %v3283 = vadd.f32 0.0, %v3282
        %v3284 = vpop.f32.mrb[0].mxu0
        %v3285 = vadd.f32 0.0, %v3284
        %v3286 = vpop.f32.mrb[0].mxu0
        %v3287 = vadd.f32 0.0, %v3286
        %v3288 = vpop.f32.mrb[0].mxu0
        %v3289 = vadd.f32 0.0, %v3288
        %3290 = vdwg.mxu0
        %3291 = vmatprep.subr.bf16.mxu0 %v1947
        %3292 = vmatpush1.bf16.msra.mxu0 %v1946
        %3293 = vmatprep.subr.bf16.mxu0 %v1955
        %3294 = vmatpush1.bf16.msra.mxu0 %v1954
        %3295 = vmatprep.subr.bf16.mxu0 %v1963
        %3296 = vmatpush1.bf16.msra.mxu0 %v1962
        %3297 = vmatprep.subr.bf16.mxu0 %v1971
        %3298 = vmatpush1.bf16.msra.mxu0 %v1970
        %3299 = vmatprep.subr.bf16.mxu0 %v1979
        %3300 = vmatpush1.bf16.msra.mxu0 %v1978
        %3301 = vmatprep.subr.bf16.mxu0 %v1987
        %3302 = vmatpush1.bf16.msra.mxu0 %v1986
        %3303 = vmatprep.subr.bf16.mxu0 %v1995
        %3304 = vmatpush1.bf16.msra.mxu0 %v1994
        %3305 = vmatprep.subr.bf16.mxu0 %v2003
        %3306 = vmatpush1.bf16.msra.mxu0 %v2002
        %3307 = vmatprep.subr.bf16.mxu0 %v2011
        %3308 = vmatpush1.bf16.msra.mxu0 %v2010
        %3309 = vmatprep.subr.bf16.mxu0 %v2019
        %3310 = vmatpush1.bf16.msra.mxu0 %v2018
        %3311 = vmatprep.subr.bf16.mxu0 %v2027
        %3312 = vmatpush1.bf16.msra.mxu0 %v2026
        %3313 = vmatprep.subr.bf16.mxu0 %v2035
        %3314 = vmatpush1.bf16.msra.mxu0 %v2034
        %3315 = vmatprep.subr.bf16.mxu0 %v2043
        %3316 = vmatpush1.bf16.msra.mxu0 %v2042
        %3317 = vmatprep.subr.bf16.mxu0 %v2051
        %3318 = vmatpush1.bf16.msra.mxu0 %v2050
        %3319 = vmatprep.subr.bf16.mxu0 %v2059
        %3320 = vmatpush1.bf16.msra.mxu0 %v2058
        %3321 = vmatprep.subr.bf16.mxu0 %v2067
        %3322 = vmatpush1.bf16.msra.mxu0 %v2066
        %3323 = vmatprep.mubr.bf16.mxu0 %v921
        %3324 = vmatmul.mubr.bf16.gmra.mrb[0].mxu0 %v920
        %v3325 = vpop.f32.mrb[0].mxu0
        %v3326 = vadd.f32 %v3133, %v3325
        %v3327 = vpop.f32.mrb[0].mxu0
        %v3328 = vadd.f32 %v3135, %v3327
        %v3329 = vpop.f32.mrb[0].mxu0
        %v3330 = vadd.f32 %v3137, %v3329
        %v3331 = vpop.f32.mrb[0].mxu0
        %v3332 = vadd.f32 %v3139, %v3331
        %3333 = vmatprep.mubr.bf16.mxu0 %v925
        %3334 = vmatmul.mubr.bf16.gmra.mrb[0].mxu0 %v924
        %v3335 = vpop.f32.mrb[0].mxu0
        %v3336 = vadd.f32 %v3143, %v3335
        %v3337 = vpop.f32.mrb[0].mxu0
        %v3338 = vadd.f32 %v3145, %v3337
        %v3339 = vpop.f32.mrb[0].mxu0
        %v3340 = vadd.f32 %v3147, %v3339
        %v3341 = vpop.f32.mrb[0].mxu0
        %v3342 = vadd.f32 %v3149, %v3341
        %3343 = vmatprep.mubr.bf16.mxu0 %v929
        %3344 = vmatmul.mubr.bf16.gmra.mrb[0].mxu0 %v928
        %v3345 = vpop.f32.mrb[0].mxu0
        %v3346 = vadd.f32 %v3153, %v3345
        %v3347 = vpop.f32.mrb[0].mxu0
        %v3348 = vadd.f32 %v3155, %v3347
        %v3349 = vpop.f32.mrb[0].mxu0
        %v3350 = vadd.f32 %v3157, %v3349
        %v3351 = vpop.f32.mrb[0].mxu0
        %v3352 = vadd.f32 %v3159, %v3351
        %3353 = vmatprep.mubr.bf16.mxu0 %v933
        %3354 = vmatmul.mubr.bf16.gmra.mrb[0].mxu0 %v932
        %v3355 = vpop.f32.mrb[0].mxu0
        %v3356 = vadd.f32 %v3163, %v3355
        %v3357 = vpop.f32.mrb[0].mxu0
        %v3358 = vadd.f32 %v3165, %v3357
        %v3359 = vpop.f32.mrb[0].mxu0
        %v3360 = vadd.f32 %v3167, %v3359
        %v3361 = vpop.f32.mrb[0].mxu0
        %v3362 = vadd.f32 %v3169, %v3361
        %3363 = vmatprep.mubr.bf16.mxu0 %v937
        %3364 = vmatmul.mubr.bf16.gmra.mrb[0].mxu0 %v936
        %v3365 = vpop.f32.mrb[0].mxu0
        %v3366 = vadd.f32 %v3173, %v3365
        %v3367 = vpop.f32.mrb[0].mxu0
        %v3368 = vadd.f32 %v3175, %v3367
        %v3369 = vpop.f32.mrb[0].mxu0
        %v3370 = vadd.f32 %v3177, %v3369
        %v3371 = vpop.f32.mrb[0].mxu0
        %v3372 = vadd.f32 %v3179, %v3371
        %3373 = vmatprep.mubr.bf16.mxu0 %v941
        %3374 = vmatmul.mubr.bf16.gmra.mrb[0].mxu0 %v940
        %v3375 = vpop.f32.mrb[0].mxu0
        %v3376 = vadd.f32 %v3183, %v3375
        %v3377 = vpop.f32.mrb[0].mxu0
        %v3378 = vadd.f32 %v3185, %v3377
        %v3379 = vpop.f32.mrb[0].mxu0
        %v3380 = vadd.f32 %v3187, %v3379
        %v3381 = vpop.f32.mrb[0].mxu0
        %v3382 = vadd.f32 %v3189, %v3381
        %3383 = vmatprep.mubr.bf16.mxu0 %v945
        %3384 = vmatmul.mubr.bf16.gmra.mrb[0].mxu0 %v944
        %v3385 = vpop.f32.mrb[0].mxu0
        %v3386 = vadd.f32 %v3193, %v3385
        %v3387 = vpop.f32.mrb[0].mxu0
        %v3388 = vadd.f32 %v3195, %v3387
        %v3389 = vpop.f32.mrb[0].mxu0
        %v3390 = vadd.f32 %v3197, %v3389
        %v3391 = vpop.f32.mrb[0].mxu0
        %v3392 = vadd.f32 %v3199, %v3391
        %3393 = vmatprep.mubr.bf16.mxu0 %v949
        %3394 = vmatmul.mubr.bf16.gmra.mrb[0].mxu0 %v948
        %v3395 = vpop.f32.mrb[0].mxu0
        %v3396 = vadd.f32 %v3203, %v3395
        %v3397 = vpop.f32.mrb[0].mxu0
        %v3398 = vadd.f32 %v3205, %v3397
        %v3399 = vpop.f32.mrb[0].mxu0
        %v3400 = vadd.f32 %v3207, %v3399
        %v3401 = vpop.f32.mrb[0].mxu0
        %v3402 = vadd.f32 %v3209, %v3401
        %3403 = vmatprep.mubr.bf16.mxu0 %v953
        %3404 = vmatmul.mubr.bf16.gmra.mrb[0].mxu0 %v952
        %v3405 = vpop.f32.mrb[0].mxu0
        %v3406 = vadd.f32 %v3213, %v3405
        %v3407 = vpop.f32.mrb[0].mxu0
        %v3408 = vadd.f32 %v3215, %v3407
        %v3409 = vpop.f32.mrb[0].mxu0
        %v3410 = vadd.f32 %v3217, %v3409
        %v3411 = vpop.f32.mrb[0].mxu0
        %v3412 = vadd.f32 %v3219, %v3411
        %3413 = vmatprep.mubr.bf16.mxu0 %v957
        %3414 = vmatmul.mubr.bf16.gmra.mrb[0].mxu0 %v956
        %v3415 = vpop.f32.mrb[0].mxu0
        %v3416 = vadd.f32 %v3223, %v3415
        %v3417 = vpop.f32.mrb[0].mxu0
        %v3418 = vadd.f32 %v3225, %v3417
        %v3419 = vpop.f32.mrb[0].mxu0
        %v3420 = vadd.f32 %v3227, %v3419
        %v3421 = vpop.f32.mrb[0].mxu0
        %v3422 = vadd.f32 %v3229, %v3421
        %3423 = vmatprep.mubr.bf16.mxu0 %v961
        %3424 = vmatmul.mubr.bf16.gmra.mrb[0].mxu0 %v960
        %v3425 = vpop.f32.mrb[0].mxu0
        %v3426 = vadd.f32 %v3233, %v3425
        %v3427 = vpop.f32.mrb[0].mxu0
        %v3428 = vadd.f32 %v3235, %v3427
        %v3429 = vpop.f32.mrb[0].mxu0
        %v3430 = vadd.f32 %v3237, %v3429
        %v3431 = vpop.f32.mrb[0].mxu0
        %v3432 = vadd.f32 %v3239, %v3431
        %3433 = vmatprep.mubr.bf16.mxu0 %v965
        %3434 = vmatmul.mubr.bf16.gmra.mrb[0].mxu0 %v964
        %v3435 = vpop.f32.mrb[0].mxu0
        %v3436 = vadd.f32 %v3243, %v3435
        %v3437 = vpop.f32.mrb[0].mxu0
        %v3438 = vadd.f32 %v3245, %v3437
        %v3439 = vpop.f32.mrb[0].mxu0
        %v3440 = vadd.f32 %v3247, %v3439
        %v3441 = vpop.f32.mrb[0].mxu0
        %v3442 = vadd.f32 %v3249, %v3441
        %3443 = vmatprep.mubr.bf16.mxu0 %v969
        %3444 = vmatmul.mubr.bf16.gmra.mrb[0].mxu0 %v968
        %v3445 = vpop.f32.mrb[0].mxu0
        %v3446 = vadd.f32 %v3253, %v3445
        %v3447 = vpop.f32.mrb[0].mxu0
        %v3448 = vadd.f32 %v3255, %v3447
        %v3449 = vpop.f32.mrb[0].mxu0
        %v3450 = vadd.f32 %v3257, %v3449
        %v3451 = vpop.f32.mrb[0].mxu0
        %v3452 = vadd.f32 %v3259, %v3451
        %3453 = vmatprep.mubr.bf16.mxu0 %v973
        %3454 = vmatmul.mubr.bf16.gmra.mrb[0].mxu0 %v972
        %v3455 = vpop.f32.mrb[0].mxu0
        %v3456 = vadd.f32 %v3263, %v3455
        %v3457 = vpop.f32.mrb[0].mxu0
        %v3458 = vadd.f32 %v3265, %v3457
        %v3459 = vpop.f32.mrb[0].mxu0
        %v3460 = vadd.f32 %v3267, %v3459
        %v3461 = vpop.f32.mrb[0].mxu0
        %v3462 = vadd.f32 %v3269, %v3461
        %3463 = vmatprep.mubr.bf16.mxu0 %v977
        %3464 = vmatmul.mubr.bf16.gmra.mrb[0].mxu0 %v976
        %v3465 = vpop.f32.mrb[0].mxu0
        %v3466 = vadd.f32 %v3273, %v3465
        %v3467 = vpop.f32.mrb[0].mxu0
        %v3468 = vadd.f32 %v3275, %v3467
        %v3469 = vpop.f32.mrb[0].mxu0
        %v3470 = vadd.f32 %v3277, %v3469
        %v3471 = vpop.f32.mrb[0].mxu0
        %v3472 = vadd.f32 %v3279, %v3471
        %3473 = vmatprep.mubr.bf16.mxu0 %v981
        %3474 = vmatmul.mubr.bf16.gmra.mrb[0].mxu0 %v980
        %v3475 = vpop.f32.mrb[0].mxu0
        %v3476 = vadd.f32 %v3283, %v3475
        %v3477 = vpop.f32.mrb[0].mxu0
        %v3478 = vadd.f32 %v3285, %v3477
        %v3479 = vpop.f32.mrb[0].mxu0
        %v3480 = vadd.f32 %v3287, %v3479
        %v3481 = vpop.f32.mrb[0].mxu0
        %v3482 = vadd.f32 %v3289, %v3481
        %3483 = vdwg.mxu0
        %3484 = vmatprep.subr.bf16.mxu0 %v1821
        %3485 = vmatpush1.bf16.msra.mxu0 %v1820
        %3486 = vmatprep.subr.bf16.mxu0 %v1829
        %3487 = vmatpush1.bf16.msra.mxu0 %v1828
        %3488 = vmatprep.subr.bf16.mxu0 %v1837
        %3489 = vmatpush1.bf16.msra.mxu0 %v1836
        %3490 = vmatprep.subr.bf16.mxu0 %v1845
        %3491 = vmatpush1.bf16.msra.mxu0 %v1844
        %3492 = vmatprep.subr.bf16.mxu0 %v1853
        %3493 = vmatpush1.bf16.msra.mxu0 %v1852
        %3494 = vmatprep.subr.bf16.mxu0 %v1861
        %3495 = vmatpush1.bf16.msra.mxu0 %v1860
        %3496 = vmatprep.subr.bf16.mxu0 %v1869
        %3497 = vmatpush1.bf16.msra.mxu0 %v1868
        %3498 = vmatprep.subr.bf16.mxu0 %v1877
        %3499 = vmatpush1.bf16.msra.mxu0 %v1876
        %3500 = vmatprep.subr.bf16.mxu0 %v1885
        %3501 = vmatpush1.bf16.msra.mxu0 %v1884
        %3502 = vmatprep.subr.bf16.mxu0 %v1893
        %3503 = vmatpush1.bf16.msra.mxu0 %v1892
        %3504 = vmatprep.subr.bf16.mxu0 %v1901
        %3505 = vmatpush1.bf16.msra.mxu0 %v1900
        %3506 = vmatprep.subr.bf16.mxu0 %v1909
        %3507 = vmatpush1.bf16.msra.mxu0 %v1908
        %3508 = vmatprep.subr.bf16.mxu0 %v1917
        %3509 = vmatpush1.bf16.msra.mxu0 %v1916
        %3510 = vmatprep.subr.bf16.mxu0 %v1925
        %3511 = vmatpush1.bf16.msra.mxu0 %v1924
        %3512 = vmatprep.subr.bf16.mxu0 %v1933
        %3513 = vmatpush1.bf16.msra.mxu0 %v1932
        %3514 = vmatprep.subr.bf16.mxu0 %v1941
        %3515 = vmatpush1.bf16.msra.mxu0 %v1940
        %3516 = vmatprep.mubr.bf16.mxu0 %v919
        %3517 = vmatmul.mubr.bf16.gmra.mrb[0].mxu0 %v918
        %v3518 = vpop.f32.mrb[0].mxu0
        %v3519 = vadd.f32 0.0, %v3518
        %v3520 = vpop.f32.mrb[0].mxu0
        %v3521 = vadd.f32 0.0, %v3520
        %v3522 = vpop.f32.mrb[0].mxu0
        %v3523 = vadd.f32 0.0, %v3522
        %v3524 = vpop.f32.mrb[0].mxu0
        %v3525 = vadd.f32 0.0, %v3524
        %3526 = vmatprep.mubr.bf16.mxu0 %v923
        %3527 = vmatmul.mubr.bf16.gmra.mrb[0].mxu0 %v922
        %v3528 = vpop.f32.mrb[0].mxu0
        %v3529 = vadd.f32 0.0, %v3528
        %v3530 = vpop.f32.mrb[0].mxu0
        %v3531 = vadd.f32 0.0, %v3530
        %v3532 = vpop.f32.mrb[0].mxu0
        %v3533 = vadd.f32 0.0, %v3532
        %v3534 = vpop.f32.mrb[0].mxu0
        %v3535 = vadd.f32 0.0, %v3534
        %3536 = vmatprep.mubr.bf16.mxu0 %v927
        %3537 = vmatmul.mubr.bf16.gmra.mrb[0].mxu0 %v926
        %v3538 = vpop.f32.mrb[0].mxu0
        %v3539 = vadd.f32 0.0, %v3538
        %v3540 = vpop.f32.mrb[0].mxu0
        %v3541 = vadd.f32 0.0, %v3540
        %v3542 = vpop.f32.mrb[0].mxu0
        %v3543 = vadd.f32 0.0, %v3542
        %v3544 = vpop.f32.mrb[0].mxu0
        %v3545 = vadd.f32 0.0, %v3544
        %3546 = vmatprep.mubr.bf16.mxu0 %v931
        %3547 = vmatmul.mubr.bf16.gmra.mrb[0].mxu0 %v930
        %v3548 = vpop.f32.mrb[0].mxu0
        %v3549 = vadd.f32 0.0, %v3548
        %v3550 = vpop.f32.mrb[0].mxu0
        %v3551 = vadd.f32 0.0, %v3550
        %v3552 = vpop.f32.mrb[0].mxu0
        %v3553 = vadd.f32 0.0, %v3552
        %v3554 = vpop.f32.mrb[0].mxu0
        %v3555 = vadd.f32 0.0, %v3554
        %3556 = vmatprep.mubr.bf16.mxu0 %v935
        %3557 = vmatmul.mubr.bf16.gmra.mrb[0].mxu0 %v934
        %v3558 = vpop.f32.mrb[0].mxu0
        %v3559 = vadd.f32 0.0, %v3558
        %v3560 = vpop.f32.mrb[0].mxu0
        %v3561 = vadd.f32 0.0, %v3560
        %v3562 = vpop.f32.mrb[0].mxu0
        %v3563 = vadd.f32 0.0, %v3562
        %v3564 = vpop.f32.mrb[0].mxu0
        %v3565 = vadd.f32 0.0, %v3564
        %3566 = vmatprep.mubr.bf16.mxu0 %v939
        %3567 = vmatmul.mubr.bf16.gmra.mrb[0].mxu0 %v938
        %v3568 = vpop.f32.mrb[0].mxu0
        %v3569 = vadd.f32 0.0, %v3568
        %v3570 = vpop.f32.mrb[0].mxu0
        %v3571 = vadd.f32 0.0, %v3570
        %v3572 = vpop.f32.mrb[0].mxu0
        %v3573 = vadd.f32 0.0, %v3572
        %v3574 = vpop.f32.mrb[0].mxu0
        %v3575 = vadd.f32 0.0, %v3574
        %3576 = vmatprep.mubr.bf16.mxu0 %v943
        %3577 = vmatmul.mubr.bf16.gmra.mrb[0].mxu0 %v942
        %v3578 = vpop.f32.mrb[0].mxu0
        %v3579 = vadd.f32 0.0, %v3578
        %v3580 = vpop.f32.mrb[0].mxu0
        %v3581 = vadd.f32 0.0, %v3580
        %v3582 = vpop.f32.mrb[0].mxu0
        %v3583 = vadd.f32 0.0, %v3582
        %v3584 = vpop.f32.mrb[0].mxu0
        %v3585 = vadd.f32 0.0, %v3584
        %3586 = vmatprep.mubr.bf16.mxu0 %v947
        %3587 = vmatmul.mubr.bf16.gmra.mrb[0].mxu0 %v946
        %v3588 = vpop.f32.mrb[0].mxu0
        %v3589 = vadd.f32 0.0, %v3588
        %v3590 = vpop.f32.mrb[0].mxu0
        %v3591 = vadd.f32 0.0, %v3590
        %v3592 = vpop.f32.mrb[0].mxu0
        %v3593 = vadd.f32 0.0, %v3592
        %v3594 = vpop.f32.mrb[0].mxu0
        %v3595 = vadd.f32 0.0, %v3594
        %3596 = vmatprep.mubr.bf16.mxu0 %v951
        %3597 = vmatmul.mubr.bf16.gmra.mrb[0].mxu0 %v950
        %v3598 = vpop.f32.mrb[0].mxu0
        %v3599 = vadd.f32 0.0, %v3598
        %v3600 = vpop.f32.mrb[0].mxu0
        %v3601 = vadd.f32 0.0, %v3600
        %v3602 = vpop.f32.mrb[0].mxu0
        %v3603 = vadd.f32 0.0, %v3602
        %v3604 = vpop.f32.mrb[0].mxu0
        %v3605 = vadd.f32 0.0, %v3604
        %3606 = vmatprep.mubr.bf16.mxu0 %v955
        %3607 = vmatmul.mubr.bf16.gmra.mrb[0].mxu0 %v954
        %v3608 = vpop.f32.mrb[0].mxu0
        %v3609 = vadd.f32 0.0, %v3608
        %v3610 = vpop.f32.mrb[0].mxu0
        %v3611 = vadd.f32 0.0, %v3610
        %v3612 = vpop.f32.mrb[0].mxu0
        %v3613 = vadd.f32 0.0, %v3612
        %v3614 = vpop.f32.mrb[0].mxu0
        %v3615 = vadd.f32 0.0, %v3614
        %3616 = vmatprep.mubr.bf16.mxu0 %v959
        %3617 = vmatmul.mubr.bf16.gmra.mrb[0].mxu0 %v958
        %v3618 = vpop.f32.mrb[0].mxu0
        %v3619 = vadd.f32 0.0, %v3618
        %v3620 = vpop.f32.mrb[0].mxu0
        %v3621 = vadd.f32 0.0, %v3620
        %v3622 = vpop.f32.mrb[0].mxu0
        %v3623 = vadd.f32 0.0, %v3622
        %v3624 = vpop.f32.mrb[0].mxu0
        %v3625 = vadd.f32 0.0, %v3624
        %3626 = vmatprep.mubr.bf16.mxu0 %v963
        %3627 = vmatmul.mubr.bf16.gmra.mrb[0].mxu0 %v962
        %v3628 = vpop.f32.mrb[0].mxu0
        %v3629 = vadd.f32 0.0, %v3628
        %v3630 = vpop.f32.mrb[0].mxu0
        %v3631 = vadd.f32 0.0, %v3630
        %v3632 = vpop.f32.mrb[0].mxu0
        %v3633 = vadd.f32 0.0, %v3632
        %v3634 = vpop.f32.mrb[0].mxu0
        %v3635 = vadd.f32 0.0, %v3634
        %3636 = vmatprep.mubr.bf16.mxu0 %v967
        %3637 = vmatmul.mubr.bf16.gmra.mrb[0].mxu0 %v966
        %v3638 = vpop.f32.mrb[0].mxu0
        %v3639 = vadd.f32 0.0, %v3638
        %v3640 = vpop.f32.mrb[0].mxu0
        %v3641 = vadd.f32 0.0, %v3640
        %v3642 = vpop.f32.mrb[0].mxu0
        %v3643 = vadd.f32 0.0, %v3642
        %v3644 = vpop.f32.mrb[0].mxu0
        %v3645 = vadd.f32 0.0, %v3644
        %3646 = vmatprep.mubr.bf16.mxu0 %v971
        %3647 = vmatmul.mubr.bf16.gmra.mrb[0].mxu0 %v970
        %v3648 = vpop.f32.mrb[0].mxu0
        %v3649 = vadd.f32 0.0, %v3648
        %v3650 = vpop.f32.mrb[0].mxu0
        %v3651 = vadd.f32 0.0, %v3650
        %v3652 = vpop.f32.mrb[0].mxu0
        %v3653 = vadd.f32 0.0, %v3652
        %v3654 = vpop.f32.mrb[0].mxu0
        %v3655 = vadd.f32 0.0, %v3654
        %3656 = vmatprep.mubr.bf16.mxu0 %v975
        %3657 = vmatmul.mubr.bf16.gmra.mrb[0].mxu0 %v974
        %v3658 = vpop.f32.mrb[0].mxu0
        %v3659 = vadd.f32 0.0, %v3658
        %v3660 = vpop.f32.mrb[0].mxu0
        %v3661 = vadd.f32 0.0, %v3660
        %v3662 = vpop.f32.mrb[0].mxu0
        %v3663 = vadd.f32 0.0, %v3662
        %v3664 = vpop.f32.mrb[0].mxu0
        %v3665 = vadd.f32 0.0, %v3664
        %3666 = vmatprep.mubr.bf16.mxu0 %v979
        %3667 = vmatmul.mubr.bf16.gmra.mrb[0].mxu0 %v978
        %v3668 = vpop.f32.mrb[0].mxu0
        %v3669 = vadd.f32 0.0, %v3668
        %v3670 = vpop.f32.mrb[0].mxu0
        %v3671 = vadd.f32 0.0, %v3670
        %v3672 = vpop.f32.mrb[0].mxu0
        %v3673 = vadd.f32 0.0, %v3672
        %v3674 = vpop.f32.mrb[0].mxu0
        %v3675 = vadd.f32 0.0, %v3674
        %3676 = vdwg.mxu0
        %3677 = vmatprep.subr.bf16.mxu0 %v1949
        %3678 = vmatpush1.bf16.msra.mxu0 %v1948
        %3679 = vmatprep.subr.bf16.mxu0 %v1957
        %3680 = vmatpush1.bf16.msra.mxu0 %v1956
        %3681 = vmatprep.subr.bf16.mxu0 %v1965
        %3682 = vmatpush1.bf16.msra.mxu0 %v1964
        %3683 = vmatprep.subr.bf16.mxu0 %v1973
        %3684 = vmatpush1.bf16.msra.mxu0 %v1972
        %3685 = vmatprep.subr.bf16.mxu0 %v1981
        %3686 = vmatpush1.bf16.msra.mxu0 %v1980
        %3687 = vmatprep.subr.bf16.mxu0 %v1989
        %3688 = vmatpush1.bf16.msra.mxu0 %v1988
        %3689 = vmatprep.subr.bf16.mxu0 %v1997
        %3690 = vmatpush1.bf16.msra.mxu0 %v1996
        %3691 = vmatprep.subr.bf16.mxu0 %v2005
        %3692 = vmatpush1.bf16.msra.mxu0 %v2004
        %3693 = vmatprep.subr.bf16.mxu0 %v2013
        %3694 = vmatpush1.bf16.msra.mxu0 %v2012
        %3695 = vmatprep.subr.bf16.mxu0 %v2021
        %3696 = vmatpush1.bf16.msra.mxu0 %v2020
        %3697 = vmatprep.subr.bf16.mxu0 %v2029
        %3698 = vmatpush1.bf16.msra.mxu0 %v2028
        %3699 = vmatprep.subr.bf16.mxu0 %v2037
        %3700 = vmatpush1.bf16.msra.mxu0 %v2036
        %3701 = vmatprep.subr.bf16.mxu0 %v2045
        %3702 = vmatpush1.bf16.msra.mxu0 %v2044
        %3703 = vmatprep.subr.bf16.mxu0 %v2053
        %3704 = vmatpush1.bf16.msra.mxu0 %v2052
        %3705 = vmatprep.subr.bf16.mxu0 %v2061
        %3706 = vmatpush1.bf16.msra.mxu0 %v2060
        %3707 = vmatprep.subr.bf16.mxu0 %v2069
        %3708 = vmatpush1.bf16.msra.mxu0 %v2068
        %3709 = vmatprep.mubr.bf16.mxu0 %v921
        %3710 = vmatmul.mubr.bf16.gmra.mrb[0].mxu0 %v920
        %v3711 = vpop.f32.mrb[0].mxu0
        %v3712 = vadd.f32 %v3519, %v3711
        %v3713 = vpop.f32.mrb[0].mxu0
        %v3714 = vadd.f32 %v3521, %v3713
        %v3715 = vpop.f32.mrb[0].mxu0
        %v3716 = vadd.f32 %v3523, %v3715
        %v3717 = vpop.f32.mrb[0].mxu0
        %v3718 = vadd.f32 %v3525, %v3717
        %3719 = vmatprep.mubr.bf16.mxu0 %v925
        %3720 = vmatmul.mubr.bf16.gmra.mrb[0].mxu0 %v924
        %v3721 = vpop.f32.mrb[0].mxu0
        %v3722 = vadd.f32 %v3529, %v3721
        %v3723 = vpop.f32.mrb[0].mxu0
        %v3724 = vadd.f32 %v3531, %v3723
        %v3725 = vpop.f32.mrb[0].mxu0
        %v3726 = vadd.f32 %v3533, %v3725
        %v3727 = vpop.f32.mrb[0].mxu0
        %v3728 = vadd.f32 %v3535, %v3727
        %3729 = vmatprep.mubr.bf16.mxu0 %v929
        %3730 = vmatmul.mubr.bf16.gmra.mrb[0].mxu0 %v928
        %v3731 = vpop.f32.mrb[0].mxu0
        %v3732 = vadd.f32 %v3539, %v3731
        %v3733 = vpop.f32.mrb[0].mxu0
        %v3734 = vadd.f32 %v3541, %v3733
        %v3735 = vpop.f32.mrb[0].mxu0
        %v3736 = vadd.f32 %v3543, %v3735
        %v3737 = vpop.f32.mrb[0].mxu0
        %v3738 = vadd.f32 %v3545, %v3737
        %3739 = vmatprep.mubr.bf16.mxu0 %v933
        %3740 = vmatmul.mubr.bf16.gmra.mrb[0].mxu0 %v932
        %v3741 = vpop.f32.mrb[0].mxu0
        %v3742 = vadd.f32 %v3549, %v3741
        %v3743 = vpop.f32.mrb[0].mxu0
        %v3744 = vadd.f32 %v3551, %v3743
        %v3745 = vpop.f32.mrb[0].mxu0
        %v3746 = vadd.f32 %v3553, %v3745
        %v3747 = vpop.f32.mrb[0].mxu0
        %v3748 = vadd.f32 %v3555, %v3747
        %3749 = vmatprep.mubr.bf16.mxu0 %v937
        %3750 = vmatmul.mubr.bf16.gmra.mrb[0].mxu0 %v936
        %v3751 = vpop.f32.mrb[0].mxu0
        %v3752 = vadd.f32 %v3559, %v3751
        %v3753 = vpop.f32.mrb[0].mxu0
        %v3754 = vadd.f32 %v3561, %v3753
        %v3755 = vpop.f32.mrb[0].mxu0
        %v3756 = vadd.f32 %v3563, %v3755
        %v3757 = vpop.f32.mrb[0].mxu0
        %v3758 = vadd.f32 %v3565, %v3757
        %3759 = vmatprep.mubr.bf16.mxu0 %v941
        %3760 = vmatmul.mubr.bf16.gmra.mrb[0].mxu0 %v940
        %v3761 = vpop.f32.mrb[0].mxu0
        %v3762 = vadd.f32 %v3569, %v3761
        %v3763 = vpop.f32.mrb[0].mxu0
        %v3764 = vadd.f32 %v3571, %v3763
        %v3765 = vpop.f32.mrb[0].mxu0
        %v3766 = vadd.f32 %v3573, %v3765
        %v3767 = vpop.f32.mrb[0].mxu0
        %v3768 = vadd.f32 %v3575, %v3767
        %3769 = vmatprep.mubr.bf16.mxu0 %v945
        %3770 = vmatmul.mubr.bf16.gmra.mrb[0].mxu0 %v944
        %v3771 = vpop.f32.mrb[0].mxu0
        %v3772 = vadd.f32 %v3579, %v3771
        %v3773 = vpop.f32.mrb[0].mxu0
        %v3774 = vadd.f32 %v3581, %v3773
        %v3775 = vpop.f32.mrb[0].mxu0
        %v3776 = vadd.f32 %v3583, %v3775
        %v3777 = vpop.f32.mrb[0].mxu0
        %v3778 = vadd.f32 %v3585, %v3777
        %3779 = vmatprep.mubr.bf16.mxu0 %v949
        %3780 = vmatmul.mubr.bf16.gmra.mrb[0].mxu0 %v948
        %v3781 = vpop.f32.mrb[0].mxu0
        %v3782 = vadd.f32 %v3589, %v3781
        %v3783 = vpop.f32.mrb[0].mxu0
        %v3784 = vadd.f32 %v3591, %v3783
        %v3785 = vpop.f32.mrb[0].mxu0
        %v3786 = vadd.f32 %v3593, %v3785
        %v3787 = vpop.f32.mrb[0].mxu0
        %v3788 = vadd.f32 %v3595, %v3787
        %3789 = vmatprep.mubr.bf16.mxu0 %v953
        %3790 = vmatmul.mubr.bf16.gmra.mrb[0].mxu0 %v952
        %v3791 = vpop.f32.mrb[0].mxu0
        %v3792 = vadd.f32 %v3599, %v3791
        %v3793 = vpop.f32.mrb[0].mxu0
        %v3794 = vadd.f32 %v3601, %v3793
        %v3795 = vpop.f32.mrb[0].mxu0
        %v3796 = vadd.f32 %v3603, %v3795
        %v3797 = vpop.f32.mrb[0].mxu0
        %v3798 = vadd.f32 %v3605, %v3797
        %3799 = vmatprep.mubr.bf16.mxu0 %v957
        %3800 = vmatmul.mubr.bf16.gmra.mrb[0].mxu0 %v956
        %v3801 = vpop.f32.mrb[0].mxu0
        %v3802 = vadd.f32 %v3609, %v3801
        %v3803 = vpop.f32.mrb[0].mxu0
        %v3804 = vadd.f32 %v3611, %v3803
        %v3805 = vpop.f32.mrb[0].mxu0
        %v3806 = vadd.f32 %v3613, %v3805
        %v3807 = vpop.f32.mrb[0].mxu0
        %v3808 = vadd.f32 %v3615, %v3807
        %3809 = vmatprep.mubr.bf16.mxu0 %v961
        %3810 = vmatmul.mubr.bf16.gmra.mrb[0].mxu0 %v960
        %v3811 = vpop.f32.mrb[0].mxu0
        %v3812 = vadd.f32 %v3619, %v3811
        %v3813 = vpop.f32.mrb[0].mxu0
        %v3814 = vadd.f32 %v3621, %v3813
        %v3815 = vpop.f32.mrb[0].mxu0
        %v3816 = vadd.f32 %v3623, %v3815
        %v3817 = vpop.f32.mrb[0].mxu0
        %v3818 = vadd.f32 %v3625, %v3817
        %3819 = vmatprep.mubr.bf16.mxu0 %v965
        %3820 = vmatmul.mubr.bf16.gmra.mrb[0].mxu0 %v964
        %v3821 = vpop.f32.mrb[0].mxu0
        %v3822 = vadd.f32 %v3629, %v3821
        %v3823 = vpop.f32.mrb[0].mxu0
        %v3824 = vadd.f32 %v3631, %v3823
        %v3825 = vpop.f32.mrb[0].mxu0
        %v3826 = vadd.f32 %v3633, %v3825
        %v3827 = vpop.f32.mrb[0].mxu0
        %v3828 = vadd.f32 %v3635, %v3827
        %3829 = vmatprep.mubr.bf16.mxu0 %v969
        %3830 = vmatmul.mubr.bf16.gmra.mrb[0].mxu0 %v968
        %v3831 = vpop.f32.mrb[0].mxu0
        %v3832 = vadd.f32 %v3639, %v3831
        %v3833 = vpop.f32.mrb[0].mxu0
        %v3834 = vadd.f32 %v3641, %v3833
        %v3835 = vpop.f32.mrb[0].mxu0
        %v3836 = vadd.f32 %v3643, %v3835
        %v3837 = vpop.f32.mrb[0].mxu0
        %v3838 = vadd.f32 %v3645, %v3837
        %3839 = vmatprep.mubr.bf16.mxu0 %v973
        %3840 = vmatmul.mubr.bf16.gmra.mrb[0].mxu0 %v972
        %v3841 = vpop.f32.mrb[0].mxu0
        %v3842 = vadd.f32 %v3649, %v3841
        %v3843 = vpop.f32.mrb[0].mxu0
        %v3844 = vadd.f32 %v3651, %v3843
        %v3845 = vpop.f32.mrb[0].mxu0
        %v3846 = vadd.f32 %v3653, %v3845
        %v3847 = vpop.f32.mrb[0].mxu0
        %v3848 = vadd.f32 %v3655, %v3847
        %3849 = vmatprep.mubr.bf16.mxu0 %v977
        %3850 = vmatmul.mubr.bf16.gmra.mrb[0].mxu0 %v976
        %v3851 = vpop.f32.mrb[0].mxu0
        %v3852 = vadd.f32 %v3659, %v3851
        %v3853 = vpop.f32.mrb[0].mxu0
        %v3854 = vadd.f32 %v3661, %v3853
        %v3855 = vpop.f32.mrb[0].mxu0
        %v3856 = vadd.f32 %v3663, %v3855
        %v3857 = vpop.f32.mrb[0].mxu0
        %v3858 = vadd.f32 %v3665, %v3857
        %3859 = vmatprep.mubr.bf16.mxu0 %v981
        %3860 = vmatmul.mubr.bf16.gmra.mrb[0].mxu0 %v980
        %v3861 = vpop.f32.mrb[0].mxu0
        %v3862 = vadd.f32 %v3669, %v3861
        %v3863 = vpop.f32.mrb[0].mxu0
        %v3864 = vadd.f32 %v3671, %v3863
        %v3865 = vpop.f32.mrb[0].mxu0
        %v3866 = vadd.f32 %v3673, %v3865
        %v3867 = vpop.f32.mrb[0].mxu0
        %v3868 = vadd.f32 %v3675, %v3867
        %3869 = vdwg.mxu0
        %v3870 = vadd.f32 %v2554, %v2558
        %v3871 = vadd.f32 %v3870, %v2564
        %v3872 = vadd.f32 %v3871, %v2568
        %v3873 = vadd.f32 %v3872, %v2574
        %v3874 = vadd.f32 %v3873, %v2578
        %v3875 = vadd.f32 %v3874, %v2584
        %v3876 = vadd.f32 %v3875, %v2588
        %v3877 = vadd.f32 %v3876, %v2594
        %v3878 = vadd.f32 %v3877, %v2598
        %v3879 = vadd.f32 %v3878, %v2604
        %v3880 = vadd.f32 %v3879, %v2608
        %v3881 = vadd.f32 %v3880, %v2614
        %v3882 = vadd.f32 %v3881, %v2618
        %v3883 = vadd.f32 %v3882, %v2624
        %v3884 = vadd.f32 %v3883, %v2628
        %v3885 = vadd.f32 %v3884, %v2634
        %v3886 = vadd.f32 %v3885, %v2638
        %v3887 = vadd.f32 %v3886, %v2644
        %v3888 = vadd.f32 %v3887, %v2648
        %v3889 = vadd.f32 %v3888, %v2654
        %v3890 = vadd.f32 %v3889, %v2658
        %v3891 = vadd.f32 %v3890, %v2664
        %v3892 = vadd.f32 %v3891, %v2668
        %v3893 = vadd.f32 %v3892, %v2674
        %v3894 = vadd.f32 %v3893, %v2678
        %v3895 = vadd.f32 %v3894, %v2684
        %v3896 = vadd.f32 %v3895, %v2688
        %v3897 = vadd.f32 %v3896, %v2694
        %v3898 = vadd.f32 %v3897, %v2698
        %v3899 = vadd.f32 %v3898, %v2704
        %v3900 = vadd.f32 %v3899, %v2708
        %v3901 = vrot.slane %v3900, 4
        %v3902 = vadd.f32 %v3900, %v3901
        %v3903 = vrot.slane %v3902, 2
        %v3904 = vadd.f32 %v3902, %v3903
        %v3905 = vrot.slane %v3904, 1
        %v3906 = vadd.f32 %v3904, %v3905
        %v3907 = vadd.f32 %v2556, %v2560
        %v3908 = vadd.f32 %v3907, %v2566
        %v3909 = vadd.f32 %v3908, %v2570
        %v3910 = vadd.f32 %v3909, %v2576
        %v3911 = vadd.f32 %v3910, %v2580
        %v3912 = vadd.f32 %v3911, %v2586
        %v3913 = vadd.f32 %v3912, %v2590
        %v3914 = vadd.f32 %v3913, %v2596
        %v3915 = vadd.f32 %v3914, %v2600
        %v3916 = vadd.f32 %v3915, %v2606
        %v3917 = vadd.f32 %v3916, %v2610
        %v3918 = vadd.f32 %v3917, %v2616
        %v3919 = vadd.f32 %v3918, %v2620
        %v3920 = vadd.f32 %v3919, %v2626
        %v3921 = vadd.f32 %v3920, %v2630
        %v3922 = vadd.f32 %v3921, %v2636
        %v3923 = vadd.f32 %v3922, %v2640
        %v3924 = vadd.f32 %v3923, %v2646
        %v3925 = vadd.f32 %v3924, %v2650
        %v3926 = vadd.f32 %v3925, %v2656
        %v3927 = vadd.f32 %v3926, %v2660
        %v3928 = vadd.f32 %v3927, %v2666
        %v3929 = vadd.f32 %v3928, %v2670
        %v3930 = vadd.f32 %v3929, %v2676
        %v3931 = vadd.f32 %v3930, %v2680
        %v3932 = vadd.f32 %v3931, %v2686
        %v3933 = vadd.f32 %v3932, %v2690
        %v3934 = vadd.f32 %v3933, %v2696
        %v3935 = vadd.f32 %v3934, %v2700
        %v3936 = vadd.f32 %v3935, %v2706
        %v3937 = vadd.f32 %v3936, %v2710
        %v3938 = vrot.slane %v3937, 4
        %v3939 = vadd.f32 %v3937, %v3938
        %v3940 = vrot.slane %v3939, 2
        %v3941 = vadd.f32 %v3939, %v3940
        %v3942 = vrot.slane %v3941, 1
        %v3943 = vadd.f32 %v3941, %v3942
        %v3944 = vadd.f32 %v2940, %v2944
        %v3945 = vadd.f32 %v3944, %v2950
        %v3946 = vadd.f32 %v3945, %v2954
        %v3947 = vadd.f32 %v3946, %v2960
        %v3948 = vadd.f32 %v3947, %v2964
        %v3949 = vadd.f32 %v3948, %v2970
        %v3950 = vadd.f32 %v3949, %v2974
        %v3951 = vadd.f32 %v3950, %v2980
        %v3952 = vadd.f32 %v3951, %v2984
        %v3953 = vadd.f32 %v3952, %v2990
        %v3954 = vadd.f32 %v3953, %v2994
        %v3955 = vadd.f32 %v3954, %v3000
        %v3956 = vadd.f32 %v3955, %v3004
        %v3957 = vadd.f32 %v3956, %v3010
        %v3958 = vadd.f32 %v3957, %v3014
        %v3959 = vadd.f32 %v3958, %v3020
        %v3960 = vadd.f32 %v3959, %v3024
        %v3961 = vadd.f32 %v3960, %v3030
        %v3962 = vadd.f32 %v3961, %v3034
        %v3963 = vadd.f32 %v3962, %v3040
        %v3964 = vadd.f32 %v3963, %v3044
        %v3965 = vadd.f32 %v3964, %v3050
        %v3966 = vadd.f32 %v3965, %v3054
        %v3967 = vadd.f32 %v3966, %v3060
        %v3968 = vadd.f32 %v3967, %v3064
        %v3969 = vadd.f32 %v3968, %v3070
        %v3970 = vadd.f32 %v3969, %v3074
        %v3971 = vadd.f32 %v3970, %v3080
        %v3972 = vadd.f32 %v3971, %v3084
        %v3973 = vadd.f32 %v3972, %v3090
        %v3974 = vadd.f32 %v3973, %v3094
        %v3975 = vrot.slane %v3974, 4
        %v3976 = vadd.f32 %v3974, %v3975
        %v3977 = vrot.slane %v3976, 2
        %v3978 = vadd.f32 %v3976, %v3977
        %v3979 = vrot.slane %v3978, 1
        %v3980 = vadd.f32 %v3978, %v3979
        %v3981 = vadd.f32 %v2942, %v2946
        %v3982 = vadd.f32 %v3981, %v2952
        %v3983 = vadd.f32 %v3982, %v2956
        %v3984 = vadd.f32 %v3983, %v2962
        %v3985 = vadd.f32 %v3984, %v2966
        %v3986 = vadd.f32 %v3985, %v2972
        %v3987 = vadd.f32 %v3986, %v2976
        %v3988 = vadd.f32 %v3987, %v2982
        %v3989 = vadd.f32 %v3988, %v2986
        %v3990 = vadd.f32 %v3989, %v2992
        %v3991 = vadd.f32 %v3990, %v2996
        %v3992 = vadd.f32 %v3991, %v3002
        %v3993 = vadd.f32 %v3992, %v3006
        %v3994 = vadd.f32 %v3993, %v3012
        %v3995 = vadd.f32 %v3994, %v3016
        %v3996 = vadd.f32 %v3995, %v3022
        %v3997 = vadd.f32 %v3996, %v3026
        %v3998 = vadd.f32 %v3997, %v3032
        %v3999 = vadd.f32 %v3998, %v3036
        %v4000 = vadd.f32 %v3999, %v3042
        %v4001 = vadd.f32 %v4000, %v3046
        %v4002 = vadd.f32 %v4001, %v3052
        %v4003 = vadd.f32 %v4002, %v3056
        %v4004 = vadd.f32 %v4003, %v3062
        %v4005 = vadd.f32 %v4004, %v3066
        %v4006 = vadd.f32 %v4005, %v3072
        %v4007 = vadd.f32 %v4006, %v3076
        %v4008 = vadd.f32 %v4007, %v3082
        %v4009 = vadd.f32 %v4008, %v3086
        %v4010 = vadd.f32 %v4009, %v3092
        %v4011 = vadd.f32 %v4010, %v3096
        %v4012 = vrot.slane %v4011, 4
        %v4013 = vadd.f32 %v4011, %v4012
        %v4014 = vrot.slane %v4013, 2
        %v4015 = vadd.f32 %v4013, %v4014
        %v4016 = vrot.slane %v4015, 1
        %v4017 = vadd.f32 %v4015, %v4016
        %v4018 = vadd.f32 %v3326, %v3330
        %v4019 = vadd.f32 %v4018, %v3336
        %v4020 = vadd.f32 %v4019, %v3340
        %v4021 = vadd.f32 %v4020, %v3346
        %v4022 = vadd.f32 %v4021, %v3350
        %v4023 = vadd.f32 %v4022, %v3356
        %v4024 = vadd.f32 %v4023, %v3360
        %v4025 = vadd.f32 %v4024, %v3366
        %v4026 = vadd.f32 %v4025, %v3370
        %v4027 = vadd.f32 %v4026, %v3376
        %v4028 = vadd.f32 %v4027, %v3380
        %v4029 = vadd.f32 %v4028, %v3386
        %v4030 = vadd.f32 %v4029, %v3390
        %v4031 = vadd.f32 %v4030, %v3396
        %v4032 = vadd.f32 %v4031, %v3400
        %v4033 = vadd.f32 %v4032, %v3406
        %v4034 = vadd.f32 %v4033, %v3410
        %v4035 = vadd.f32 %v4034, %v3416
        %v4036 = vadd.f32 %v4035, %v3420
        %v4037 = vadd.f32 %v4036, %v3426
        %v4038 = vadd.f32 %v4037, %v3430
        %v4039 = vadd.f32 %v4038, %v3436
        %v4040 = vadd.f32 %v4039, %v3440
        %v4041 = vadd.f32 %v4040, %v3446
        %v4042 = vadd.f32 %v4041, %v3450
        %v4043 = vadd.f32 %v4042, %v3456
        %v4044 = vadd.f32 %v4043, %v3460
        %v4045 = vadd.f32 %v4044, %v3466
        %v4046 = vadd.f32 %v4045, %v3470
        %v4047 = vadd.f32 %v4046, %v3476
        %v4048 = vadd.f32 %v4047, %v3480
        %v4049 = vrot.slane %v4048, 4
        %v4050 = vadd.f32 %v4048, %v4049
        %v4051 = vrot.slane %v4050, 2
        %v4052 = vadd.f32 %v4050, %v4051
        %v4053 = vrot.slane %v4052, 1
        %v4054 = vadd.f32 %v4052, %v4053
        %v4055 = vadd.f32 %v3328, %v3332
        %v4056 = vadd.f32 %v4055, %v3338
        %v4057 = vadd.f32 %v4056, %v3342
        %v4058 = vadd.f32 %v4057, %v3348
        %v4059 = vadd.f32 %v4058, %v3352
        %v4060 = vadd.f32 %v4059, %v3358
        %v4061 = vadd.f32 %v4060, %v3362
        %v4062 = vadd.f32 %v4061, %v3368
        %v4063 = vadd.f32 %v4062, %v3372
        %v4064 = vadd.f32 %v4063, %v3378
        %v4065 = vadd.f32 %v4064, %v3382
        %v4066 = vadd.f32 %v4065, %v3388
        %v4067 = vadd.f32 %v4066, %v3392
        %v4068 = vadd.f32 %v4067, %v3398
        %v4069 = vadd.f32 %v4068, %v3402
        %v4070 = vadd.f32 %v4069, %v3408
        %v4071 = vadd.f32 %v4070, %v3412
        %v4072 = vadd.f32 %v4071, %v3418
        %v4073 = vadd.f32 %v4072, %v3422
        %v4074 = vadd.f32 %v4073, %v3428
        %v4075 = vadd.f32 %v4074, %v3432
        %v4076 = vadd.f32 %v4075, %v3438
        %v4077 = vadd.f32 %v4076, %v3442
        %v4078 = vadd.f32 %v4077, %v3448
        %v4079 = vadd.f32 %v4078, %v3452
        %v4080 = vadd.f32 %v4079, %v3458
        %v4081 = vadd.f32 %v4080, %v3462
        %v4082 = vadd.f32 %v4081, %v3468
        %v4083 = vadd.f32 %v4082, %v3472
        %v4084 = vadd.f32 %v4083, %v3478
        %v4085 = vadd.f32 %v4084, %v3482
        %v4086 = vrot.slane %v4085, 4
        %v4087 = vadd.f32 %v4085, %v4086
        %v4088 = vrot.slane %v4087, 2
        %v4089 = vadd.f32 %v4087, %v4088
        %v4090 = vrot.slane %v4089, 1
        %v4091 = vadd.f32 %v4089, %v4090
        %v4092 = vadd.f32 %v3712, %v3716
        %v4093 = vadd.f32 %v4092, %v3722
        %v4094 = vadd.f32 %v4093, %v3726
        %v4095 = vadd.f32 %v4094, %v3732
        %v4096 = vadd.f32 %v4095, %v3736
        %v4097 = vadd.f32 %v4096, %v3742
        %v4098 = vadd.f32 %v4097, %v3746
        %v4099 = vadd.f32 %v4098, %v3752
        %v4100 = vadd.f32 %v4099, %v3756
        %v4101 = vadd.f32 %v4100, %v3762
        %v4102 = vadd.f32 %v4101, %v3766
        %v4103 = vadd.f32 %v4102, %v3772
        %v4104 = vadd.f32 %v4103, %v3776
        %v4105 = vadd.f32 %v4104, %v3782
        %v4106 = vadd.f32 %v4105, %v3786
        %v4107 = vadd.f32 %v4106, %v3792
        %v4108 = vadd.f32 %v4107, %v3796
        %v4109 = vadd.f32 %v4108, %v3802
        %v4110 = vadd.f32 %v4109, %v3806
        %v4111 = vadd.f32 %v4110, %v3812
        %v4112 = vadd.f32 %v4111, %v3816
        %v4113 = vadd.f32 %v4112, %v3822
        %v4114 = vadd.f32 %v4113, %v3826
        %v4115 = vadd.f32 %v4114, %v3832
        %v4116 = vadd.f32 %v4115, %v3836
        %v4117 = vadd.f32 %v4116, %v3842
        %v4118 = vadd.f32 %v4117, %v3846
        %v4119 = vadd.f32 %v4118, %v3852
        %v4120 = vadd.f32 %v4119, %v3856
        %v4121 = vadd.f32 %v4120, %v3862
        %v4122 = vadd.f32 %v4121, %v3866
        %v4123 = vrot.slane %v4122, 4
        %v4124 = vadd.f32 %v4122, %v4123
        %v4125 = vrot.slane %v4124, 2
        %v4126 = vadd.f32 %v4124, %v4125
        %v4127 = vrot.slane %v4126, 1
        %v4128 = vadd.f32 %v4126, %v4127
        %v4129 = vadd.f32 %v3714, %v3718
        %v4130 = vadd.f32 %v4129, %v3724
        %v4131 = vadd.f32 %v4130, %v3728
        %v4132 = vadd.f32 %v4131, %v3734
        %v4133 = vadd.f32 %v4132, %v3738
        %v4134 = vadd.f32 %v4133, %v3744
        %v4135 = vadd.f32 %v4134, %v3748
        %v4136 = vadd.f32 %v4135, %v3754
        %v4137 = vadd.f32 %v4136, %v3758
        %v4138 = vadd.f32 %v4137, %v3764
        %v4139 = vadd.f32 %v4138, %v3768
        %v4140 = vadd.f32 %v4139, %v3774
        %v4141 = vadd.f32 %v4140, %v3778
        %v4142 = vadd.f32 %v4141, %v3784
        %v4143 = vadd.f32 %v4142, %v3788
        %v4144 = vadd.f32 %v4143, %v3794
        %v4145 = vadd.f32 %v4144, %v3798
        %v4146 = vadd.f32 %v4145, %v3804
        %v4147 = vadd.f32 %v4146, %v3808
        %v4148 = vadd.f32 %v4147, %v3814
        %v4149 = vadd.f32 %v4148, %v3818
        %v4150 = vadd.f32 %v4149, %v3824
        %v4151 = vadd.f32 %v4150, %v3828
        %v4152 = vadd.f32 %v4151, %v3834
        %v4153 = vadd.f32 %v4152, %v3838
        %v4154 = vadd.f32 %v4153, %v3844
        %v4155 = vadd.f32 %v4154, %v3848
        %v4156 = vadd.f32 %v4155, %v3854
        %v4157 = vadd.f32 %v4156, %v3858
        %v4158 = vadd.f32 %v4157, %v3864
        %v4159 = vadd.f32 %v4158, %v3868
        %v4160 = vrot.slane %v4159, 4
        %v4161 = vadd.f32 %v4159, %v4160
        %v4162 = vrot.slane %v4161, 2
        %v4163 = vadd.f32 %v4161, %v4162
        %v4164 = vrot.slane %v4163, 1
        %v4165 = vadd.f32 %v4163, %v4164
        %v4166 = vmul.f32 %v3906, 0.00390625
        %v4167 = vmul.f32 %v3943, 0.00390625
        %v4168 = vmul.f32 %v3980, 0.00390625
        %v4169 = vmul.f32 %v4017, 0.00390625
        %v4170 = vmul.f32 %v4054, 0.00390625
        %v4171 = vmul.f32 %v4091, 0.00390625
        %v4172 = vmul.f32 %v4128, 0.00390625
        %v4173 = vmul.f32 %v4165, 0.00390625
        %v4174 = vsub.f32 %v2554, %v4166
        %v4175 = vsub.f32 %v2556, %v4167
        %v4176 = vsub.f32 %v2940, %v4168
        %v4177 = vsub.f32 %v2942, %v4169
        %v4178 = vsub.f32 %v3326, %v4170
        %v4179 = vsub.f32 %v3328, %v4171
        %v4180 = vsub.f32 %v3712, %v4172
        %v4181 = vsub.f32 %v3714, %v4173
        %v4182 = vsub.f32 %v2558, %v4166
        %v4183 = vsub.f32 %v2560, %v4167
        %v4184 = vsub.f32 %v2944, %v4168
        %v4185 = vsub.f32 %v2946, %v4169
        %v4186 = vsub.f32 %v3330, %v4170
        %v4187 = vsub.f32 %v3332, %v4171
        %v4188 = vsub.f32 %v3716, %v4172
        %v4189 = vsub.f32 %v3718, %v4173
        %v4190 = vsub.f32 %v2564, %v4166
        %v4191 = vsub.f32 %v2566, %v4167
        %v4192 = vsub.f32 %v2950, %v4168
        %v4193 = vsub.f32 %v2952, %v4169
        %v4194 = vsub.f32 %v3336, %v4170
        %v4195 = vsub.f32 %v3338, %v4171
        %v4196 = vsub.f32 %v3722, %v4172
        %v4197 = vsub.f32 %v3724, %v4173
        %v4198 = vsub.f32 %v2568, %v4166
        %v4199 = vsub.f32 %v2570, %v4167
        %v4200 = vsub.f32 %v2954, %v4168
        %v4201 = vsub.f32 %v2956, %v4169
        %v4202 = vsub.f32 %v3340, %v4170
        %v4203 = vsub.f32 %v3342, %v4171
        %v4204 = vsub.f32 %v3726, %v4172
        %v4205 = vsub.f32 %v3728, %v4173
        %v4206 = vsub.f32 %v2574, %v4166
        %v4207 = vsub.f32 %v2576, %v4167
        %v4208 = vsub.f32 %v2960, %v4168
        %v4209 = vsub.f32 %v2962, %v4169
        %v4210 = vsub.f32 %v3346, %v4170
        %v4211 = vsub.f32 %v3348, %v4171
        %v4212 = vsub.f32 %v3732, %v4172
        %v4213 = vsub.f32 %v3734, %v4173
        %v4214 = vsub.f32 %v2578, %v4166
        %v4215 = vsub.f32 %v2580, %v4167
        %v4216 = vsub.f32 %v2964, %v4168
        %v4217 = vsub.f32 %v2966, %v4169
        %v4218 = vsub.f32 %v3350, %v4170
        %v4219 = vsub.f32 %v3352, %v4171
        %v4220 = vsub.f32 %v3736, %v4172
        %v4221 = vsub.f32 %v3738, %v4173
        %v4222 = vsub.f32 %v2584, %v4166
        %v4223 = vsub.f32 %v2586, %v4167
        %v4224 = vsub.f32 %v2970, %v4168
        %v4225 = vsub.f32 %v2972, %v4169
        %v4226 = vsub.f32 %v3356, %v4170
        %v4227 = vsub.f32 %v3358, %v4171
        %v4228 = vsub.f32 %v3742, %v4172
        %v4229 = vsub.f32 %v3744, %v4173
        %v4230 = vsub.f32 %v2588, %v4166
        %v4231 = vsub.f32 %v2590, %v4167
        %v4232 = vsub.f32 %v2974, %v4168
        %v4233 = vsub.f32 %v2976, %v4169
        %v4234 = vsub.f32 %v3360, %v4170
        %v4235 = vsub.f32 %v3362, %v4171
        %v4236 = vsub.f32 %v3746, %v4172
        %v4237 = vsub.f32 %v3748, %v4173
        %v4238 = vsub.f32 %v2594, %v4166
        %v4239 = vsub.f32 %v2596, %v4167
        %v4240 = vsub.f32 %v2980, %v4168
        %v4241 = vsub.f32 %v2982, %v4169
        %v4242 = vsub.f32 %v3366, %v4170
        %v4243 = vsub.f32 %v3368, %v4171
        %v4244 = vsub.f32 %v3752, %v4172
        %v4245 = vsub.f32 %v3754, %v4173
        %v4246 = vsub.f32 %v2598, %v4166
        %v4247 = vsub.f32 %v2600, %v4167
        %v4248 = vsub.f32 %v2984, %v4168
        %v4249 = vsub.f32 %v2986, %v4169
        %v4250 = vsub.f32 %v3370, %v4170
        %v4251 = vsub.f32 %v3372, %v4171
        %v4252 = vsub.f32 %v3756, %v4172
        %v4253 = vsub.f32 %v3758, %v4173
        %v4254 = vsub.f32 %v2604, %v4166
        %v4255 = vsub.f32 %v2606, %v4167
        %v4256 = vsub.f32 %v2990, %v4168
        %v4257 = vsub.f32 %v2992, %v4169
        %v4258 = vsub.f32 %v3376, %v4170
        %v4259 = vsub.f32 %v3378, %v4171
        %v4260 = vsub.f32 %v3762, %v4172
        %v4261 = vsub.f32 %v3764, %v4173
        %v4262 = vsub.f32 %v2608, %v4166
        %v4263 = vsub.f32 %v2610, %v4167
        %v4264 = vsub.f32 %v2994, %v4168
        %v4265 = vsub.f32 %v2996, %v4169
        %v4266 = vsub.f32 %v3380, %v4170
        %v4267 = vsub.f32 %v3382, %v4171
        %v4268 = vsub.f32 %v3766, %v4172
        %v4269 = vsub.f32 %v3768, %v4173
        %v4270 = vsub.f32 %v2614, %v4166
        %v4271 = vsub.f32 %v2616, %v4167
        %v4272 = vsub.f32 %v3000, %v4168
        %v4273 = vsub.f32 %v3002, %v4169
        %v4274 = vsub.f32 %v3386, %v4170
        %v4275 = vsub.f32 %v3388, %v4171
        %v4276 = vsub.f32 %v3772, %v4172
        %v4277 = vsub.f32 %v3774, %v4173
        %v4278 = vsub.f32 %v2618, %v4166
        %v4279 = vsub.f32 %v2620, %v4167
        %v4280 = vsub.f32 %v3004, %v4168
        %v4281 = vsub.f32 %v3006, %v4169
        %v4282 = vsub.f32 %v3390, %v4170
        %v4283 = vsub.f32 %v3392, %v4171
        %v4284 = vsub.f32 %v3776, %v4172
        %v4285 = vsub.f32 %v3778, %v4173
        %v4286 = vsub.f32 %v2624, %v4166
        %v4287 = vsub.f32 %v2626, %v4167
        %v4288 = vsub.f32 %v3010, %v4168
        %v4289 = vsub.f32 %v3012, %v4169
        %v4290 = vsub.f32 %v3396, %v4170
        %v4291 = vsub.f32 %v3398, %v4171
        %v4292 = vsub.f32 %v3782, %v4172
        %v4293 = vsub.f32 %v3784, %v4173
        %v4294 = vsub.f32 %v2628, %v4166
        %v4295 = vsub.f32 %v2630, %v4167
        %v4296 = vsub.f32 %v3014, %v4168
        %v4297 = vsub.f32 %v3016, %v4169
        %v4298 = vsub.f32 %v3400, %v4170
        %v4299 = vsub.f32 %v3402, %v4171
        %v4300 = vsub.f32 %v3786, %v4172
        %v4301 = vsub.f32 %v3788, %v4173
        %v4302 = vsub.f32 %v2634, %v4166
        %v4303 = vsub.f32 %v2636, %v4167
        %v4304 = vsub.f32 %v3020, %v4168
        %v4305 = vsub.f32 %v3022, %v4169
        %v4306 = vsub.f32 %v3406, %v4170
        %v4307 = vsub.f32 %v3408, %v4171
        %v4308 = vsub.f32 %v3792, %v4172
        %v4309 = vsub.f32 %v3794, %v4173
        %v4310 = vsub.f32 %v2638, %v4166
        %v4311 = vsub.f32 %v2640, %v4167
        %v4312 = vsub.f32 %v3024, %v4168
        %v4313 = vsub.f32 %v3026, %v4169
        %v4314 = vsub.f32 %v3410, %v4170
        %v4315 = vsub.f32 %v3412, %v4171
        %v4316 = vsub.f32 %v3796, %v4172
        %v4317 = vsub.f32 %v3798, %v4173
        %v4318 = vsub.f32 %v2644, %v4166
        %v4319 = vsub.f32 %v2646, %v4167
        %v4320 = vsub.f32 %v3030, %v4168
        %v4321 = vsub.f32 %v3032, %v4169
        %v4322 = vsub.f32 %v3416, %v4170
        %v4323 = vsub.f32 %v3418, %v4171
        %v4324 = vsub.f32 %v3802, %v4172
        %v4325 = vsub.f32 %v3804, %v4173
        %v4326 = vsub.f32 %v2648, %v4166
        %v4327 = vsub.f32 %v2650, %v4167
        %v4328 = vsub.f32 %v3034, %v4168
        %v4329 = vsub.f32 %v3036, %v4169
        %v4330 = vsub.f32 %v3420, %v4170
        %v4331 = vsub.f32 %v3422, %v4171
        %v4332 = vsub.f32 %v3806, %v4172
        %v4333 = vsub.f32 %v3808, %v4173
        %v4334 = vsub.f32 %v2654, %v4166
        %v4335 = vsub.f32 %v2656, %v4167
        %v4336 = vsub.f32 %v3040, %v4168
        %v4337 = vsub.f32 %v3042, %v4169
        %v4338 = vsub.f32 %v3426, %v4170
        %v4339 = vsub.f32 %v3428, %v4171
        %v4340 = vsub.f32 %v3812, %v4172
        %v4341 = vsub.f32 %v3814, %v4173
        %v4342 = vsub.f32 %v2658, %v4166
        %v4343 = vsub.f32 %v2660, %v4167
        %v4344 = vsub.f32 %v3044, %v4168
        %v4345 = vsub.f32 %v3046, %v4169
        %v4346 = vsub.f32 %v3430, %v4170
        %v4347 = vsub.f32 %v3432, %v4171
        %v4348 = vsub.f32 %v3816, %v4172
        %v4349 = vsub.f32 %v3818, %v4173
        %v4350 = vsub.f32 %v2664, %v4166
        %v4351 = vsub.f32 %v2666, %v4167
        %v4352 = vsub.f32 %v3050, %v4168
        %v4353 = vsub.f32 %v3052, %v4169
        %v4354 = vsub.f32 %v3436, %v4170
        %v4355 = vsub.f32 %v3438, %v4171
        %v4356 = vsub.f32 %v3822, %v4172
        %v4357 = vsub.f32 %v3824, %v4173
        %v4358 = vsub.f32 %v2668, %v4166
        %v4359 = vsub.f32 %v2670, %v4167
        %v4360 = vsub.f32 %v3054, %v4168
        %v4361 = vsub.f32 %v3056, %v4169
        %v4362 = vsub.f32 %v3440, %v4170
        %v4363 = vsub.f32 %v3442, %v4171
        %v4364 = vsub.f32 %v3826, %v4172
        %v4365 = vsub.f32 %v3828, %v4173
        %v4366 = vsub.f32 %v2674, %v4166
        %v4367 = vsub.f32 %v2676, %v4167
        %v4368 = vsub.f32 %v3060, %v4168
        %v4369 = vsub.f32 %v3062, %v4169
        %v4370 = vsub.f32 %v3446, %v4170
        %v4371 = vsub.f32 %v3448, %v4171
        %v4372 = vsub.f32 %v3832, %v4172
        %v4373 = vsub.f32 %v3834, %v4173
        %v4374 = vsub.f32 %v2678, %v4166
        %v4375 = vsub.f32 %v2680, %v4167
        %v4376 = vsub.f32 %v3064, %v4168
        %v4377 = vsub.f32 %v3066, %v4169
        %v4378 = vsub.f32 %v3450, %v4170
        %v4379 = vsub.f32 %v3452, %v4171
        %v4380 = vsub.f32 %v3836, %v4172
        %v4381 = vsub.f32 %v3838, %v4173
        %v4382 = vsub.f32 %v2684, %v4166
        %v4383 = vsub.f32 %v2686, %v4167
        %v4384 = vsub.f32 %v3070, %v4168
        %v4385 = vsub.f32 %v3072, %v4169
        %v4386 = vsub.f32 %v3456, %v4170
        %v4387 = vsub.f32 %v3458, %v4171
        %v4388 = vsub.f32 %v3842, %v4172
        %v4389 = vsub.f32 %v3844, %v4173
        %v4390 = vsub.f32 %v2688, %v4166
        %v4391 = vsub.f32 %v2690, %v4167
        %v4392 = vsub.f32 %v3074, %v4168
        %v4393 = vsub.f32 %v3076, %v4169
        %v4394 = vsub.f32 %v3460, %v4170
        %v4395 = vsub.f32 %v3462, %v4171
        %v4396 = vsub.f32 %v3846, %v4172
        %v4397 = vsub.f32 %v3848, %v4173
        %v4398 = vsub.f32 %v2694, %v4166
        %v4399 = vsub.f32 %v2696, %v4167
        %v4400 = vsub.f32 %v3080, %v4168
        %v4401 = vsub.f32 %v3082, %v4169
        %v4402 = vsub.f32 %v3466, %v4170
        %v4403 = vsub.f32 %v3468, %v4171
        %v4404 = vsub.f32 %v3852, %v4172
        %v4405 = vsub.f32 %v3854, %v4173
        %v4406 = vsub.f32 %v2698, %v4166
        %v4407 = vsub.f32 %v2700, %v4167
        %v4408 = vsub.f32 %v3084, %v4168
        %v4409 = vsub.f32 %v3086, %v4169
        %v4410 = vsub.f32 %v3470, %v4170
        %v4411 = vsub.f32 %v3472, %v4171
        %v4412 = vsub.f32 %v3856, %v4172
        %v4413 = vsub.f32 %v3858, %v4173
        %v4414 = vsub.f32 %v2704, %v4166
        %v4415 = vsub.f32 %v2706, %v4167
        %v4416 = vsub.f32 %v3090, %v4168
        %v4417 = vsub.f32 %v3092, %v4169
        %v4418 = vsub.f32 %v3476, %v4170
        %v4419 = vsub.f32 %v3478, %v4171
        %v4420 = vsub.f32 %v3862, %v4172
        %v4421 = vsub.f32 %v3864, %v4173
        %v4422 = vsub.f32 %v2708, %v4166
        %v4423 = vsub.f32 %v2710, %v4167
        %v4424 = vsub.f32 %v3094, %v4168
        %v4425 = vsub.f32 %v3096, %v4169
        %v4426 = vsub.f32 %v3480, %v4170
        %v4427 = vsub.f32 %v3482, %v4171
        %v4428 = vsub.f32 %v3866, %v4172
        %v4429 = vsub.f32 %v3868, %v4173
        %v4430 = vmul.f32 %v4174, %v4174
        %v4431 = vmul.f32 %v4175, %v4175
        %v4432 = vmul.f32 %v4176, %v4176
        %v4433 = vmul.f32 %v4177, %v4177
        %v4434 = vmul.f32 %v4178, %v4178
        %v4435 = vmul.f32 %v4179, %v4179
        %v4436 = vmul.f32 %v4180, %v4180
        %v4437 = vmul.f32 %v4181, %v4181
        %v4438 = vmul.f32 %v4182, %v4182
        %v4439 = vmul.f32 %v4183, %v4183
        %v4440 = vmul.f32 %v4184, %v4184
        %v4441 = vmul.f32 %v4185, %v4185
        %v4442 = vmul.f32 %v4186, %v4186
        %v4443 = vmul.f32 %v4187, %v4187
        %v4444 = vmul.f32 %v4188, %v4188
        %v4445 = vmul.f32 %v4189, %v4189
        %v4446 = vmul.f32 %v4190, %v4190
        %v4447 = vmul.f32 %v4191, %v4191
        %v4448 = vmul.f32 %v4192, %v4192
        %v4449 = vmul.f32 %v4193, %v4193
        %v4450 = vmul.f32 %v4194, %v4194
        %v4451 = vmul.f32 %v4195, %v4195
        %v4452 = vmul.f32 %v4196, %v4196
        %v4453 = vmul.f32 %v4197, %v4197
        %v4454 = vmul.f32 %v4198, %v4198
        %v4455 = vmul.f32 %v4199, %v4199
        %v4456 = vmul.f32 %v4200, %v4200
        %v4457 = vmul.f32 %v4201, %v4201
        %v4458 = vmul.f32 %v4202, %v4202
        %v4459 = vmul.f32 %v4203, %v4203
        %v4460 = vmul.f32 %v4204, %v4204
        %v4461 = vmul.f32 %v4205, %v4205
        %v4462 = vmul.f32 %v4206, %v4206
        %v4463 = vmul.f32 %v4207, %v4207
        %v4464 = vmul.f32 %v4208, %v4208
        %v4465 = vmul.f32 %v4209, %v4209
        %v4466 = vmul.f32 %v4210, %v4210
        %v4467 = vmul.f32 %v4211, %v4211
        %v4468 = vmul.f32 %v4212, %v4212
        %v4469 = vmul.f32 %v4213, %v4213
        %v4470 = vmul.f32 %v4214, %v4214
        %v4471 = vmul.f32 %v4215, %v4215
        %v4472 = vmul.f32 %v4216, %v4216
        %v4473 = vmul.f32 %v4217, %v4217
        %v4474 = vmul.f32 %v4218, %v4218
        %v4475 = vmul.f32 %v4219, %v4219
        %v4476 = vmul.f32 %v4220, %v4220
        %v4477 = vmul.f32 %v4221, %v4221
        %v4478 = vmul.f32 %v4222, %v4222
        %v4479 = vmul.f32 %v4223, %v4223
        %v4480 = vmul.f32 %v4224, %v4224
        %v4481 = vmul.f32 %v4225, %v4225
        %v4482 = vmul.f32 %v4226, %v4226
        %v4483 = vmul.f32 %v4227, %v4227
        %v4484 = vmul.f32 %v4228, %v4228
        %v4485 = vmul.f32 %v4229, %v4229
        %v4486 = vmul.f32 %v4230, %v4230
        %v4487 = vmul.f32 %v4231, %v4231
        %v4488 = vmul.f32 %v4232, %v4232
        %v4489 = vmul.f32 %v4233, %v4233
        %v4490 = vmul.f32 %v4234, %v4234
        %v4491 = vmul.f32 %v4235, %v4235
        %v4492 = vmul.f32 %v4236, %v4236
        %v4493 = vmul.f32 %v4237, %v4237
        %v4494 = vmul.f32 %v4238, %v4238
        %v4495 = vmul.f32 %v4239, %v4239
        %v4496 = vmul.f32 %v4240, %v4240
        %v4497 = vmul.f32 %v4241, %v4241
        %v4498 = vmul.f32 %v4242, %v4242
        %v4499 = vmul.f32 %v4243, %v4243
        %v4500 = vmul.f32 %v4244, %v4244
        %v4501 = vmul.f32 %v4245, %v4245
        %v4502 = vmul.f32 %v4246, %v4246
        %v4503 = vmul.f32 %v4247, %v4247
        %v4504 = vmul.f32 %v4248, %v4248
        %v4505 = vmul.f32 %v4249, %v4249
        %v4506 = vmul.f32 %v4250, %v4250
        %v4507 = vmul.f32 %v4251, %v4251
        %v4508 = vmul.f32 %v4252, %v4252
        %v4509 = vmul.f32 %v4253, %v4253
        %v4510 = vmul.f32 %v4254, %v4254
        %v4511 = vmul.f32 %v4255, %v4255
        %v4512 = vmul.f32 %v4256, %v4256
        %v4513 = vmul.f32 %v4257, %v4257
        %v4514 = vmul.f32 %v4258, %v4258
        %v4515 = vmul.f32 %v4259, %v4259
        %v4516 = vmul.f32 %v4260, %v4260
        %v4517 = vmul.f32 %v4261, %v4261
        %v4518 = vmul.f32 %v4262, %v4262
        %v4519 = vmul.f32 %v4263, %v4263
        %v4520 = vmul.f32 %v4264, %v4264
        %v4521 = vmul.f32 %v4265, %v4265
        %v4522 = vmul.f32 %v4266, %v4266
        %v4523 = vmul.f32 %v4267, %v4267
        %v4524 = vmul.f32 %v4268, %v4268
        %v4525 = vmul.f32 %v4269, %v4269
        %v4526 = vmul.f32 %v4270, %v4270
        %v4527 = vmul.f32 %v4271, %v4271
        %v4528 = vmul.f32 %v4272, %v4272
        %v4529 = vmul.f32 %v4273, %v4273
        %v4530 = vmul.f32 %v4274, %v4274
        %v4531 = vmul.f32 %v4275, %v4275
        %v4532 = vmul.f32 %v4276, %v4276
        %v4533 = vmul.f32 %v4277, %v4277
        %v4534 = vmul.f32 %v4278, %v4278
        %v4535 = vmul.f32 %v4279, %v4279
        %v4536 = vmul.f32 %v4280, %v4280
        %v4537 = vmul.f32 %v4281, %v4281
        %v4538 = vmul.f32 %v4282, %v4282
        %v4539 = vmul.f32 %v4283, %v4283
        %v4540 = vmul.f32 %v4284, %v4284
        %v4541 = vmul.f32 %v4285, %v4285
        %v4542 = vmul.f32 %v4286, %v4286
        %v4543 = vmul.f32 %v4287, %v4287
        %v4544 = vmul.f32 %v4288, %v4288
        %v4545 = vmul.f32 %v4289, %v4289
        %v4546 = vmul.f32 %v4290, %v4290
        %v4547 = vmul.f32 %v4291, %v4291
        %v4548 = vmul.f32 %v4292, %v4292
        %v4549 = vmul.f32 %v4293, %v4293
        %v4550 = vmul.f32 %v4294, %v4294
        %v4551 = vmul.f32 %v4295, %v4295
        %v4552 = vmul.f32 %v4296, %v4296
        %v4553 = vmul.f32 %v4297, %v4297
        %v4554 = vmul.f32 %v4298, %v4298
        %v4555 = vmul.f32 %v4299, %v4299
        %v4556 = vmul.f32 %v4300, %v4300
        %v4557 = vmul.f32 %v4301, %v4301
        %v4558 = vmul.f32 %v4302, %v4302
        %v4559 = vmul.f32 %v4303, %v4303
        %v4560 = vmul.f32 %v4304, %v4304
        %v4561 = vmul.f32 %v4305, %v4305
        %v4562 = vmul.f32 %v4306, %v4306
        %v4563 = vmul.f32 %v4307, %v4307
        %v4564 = vmul.f32 %v4308, %v4308
        %v4565 = vmul.f32 %v4309, %v4309
        %v4566 = vmul.f32 %v4310, %v4310
        %v4567 = vmul.f32 %v4311, %v4311
        %v4568 = vmul.f32 %v4312, %v4312
        %v4569 = vmul.f32 %v4313, %v4313
        %v4570 = vmul.f32 %v4314, %v4314
        %v4571 = vmul.f32 %v4315, %v4315
        %v4572 = vmul.f32 %v4316, %v4316
        %v4573 = vmul.f32 %v4317, %v4317
        %v4574 = vmul.f32 %v4318, %v4318
        %v4575 = vmul.f32 %v4319, %v4319
        %v4576 = vmul.f32 %v4320, %v4320
        %v4577 = vmul.f32 %v4321, %v4321
        %v4578 = vmul.f32 %v4322, %v4322
        %v4579 = vmul.f32 %v4323, %v4323
        %v4580 = vmul.f32 %v4324, %v4324
        %v4581 = vmul.f32 %v4325, %v4325
        %v4582 = vmul.f32 %v4326, %v4326
        %v4583 = vmul.f32 %v4327, %v4327
        %v4584 = vmul.f32 %v4328, %v4328
        %v4585 = vmul.f32 %v4329, %v4329
        %v4586 = vmul.f32 %v4330, %v4330
        %v4587 = vmul.f32 %v4331, %v4331
        %v4588 = vmul.f32 %v4332, %v4332
        %v4589 = vmul.f32 %v4333, %v4333
        %v4590 = vmul.f32 %v4334, %v4334
        %v4591 = vmul.f32 %v4335, %v4335
        %v4592 = vmul.f32 %v4336, %v4336
        %v4593 = vmul.f32 %v4337, %v4337
        %v4594 = vmul.f32 %v4338, %v4338
        %v4595 = vmul.f32 %v4339, %v4339
        %v4596 = vmul.f32 %v4340, %v4340
        %v4597 = vmul.f32 %v4341, %v4341
        %v4598 = vmul.f32 %v4342, %v4342
        %v4599 = vmul.f32 %v4343, %v4343
        %v4600 = vmul.f32 %v4344, %v4344
        %v4601 = vmul.f32 %v4345, %v4345
        %v4602 = vmul.f32 %v4346, %v4346
        %v4603 = vmul.f32 %v4347, %v4347
        %v4604 = vmul.f32 %v4348, %v4348
        %v4605 = vmul.f32 %v4349, %v4349
        %v4606 = vmul.f32 %v4350, %v4350
        %v4607 = vmul.f32 %v4351, %v4351
        %v4608 = vmul.f32 %v4352, %v4352
        %v4609 = vmul.f32 %v4353, %v4353
        %v4610 = vmul.f32 %v4354, %v4354
        %v4611 = vmul.f32 %v4355, %v4355
        %v4612 = vmul.f32 %v4356, %v4356
        %v4613 = vmul.f32 %v4357, %v4357
        %v4614 = vmul.f32 %v4358, %v4358
        %v4615 = vmul.f32 %v4359, %v4359
        %v4616 = vmul.f32 %v4360, %v4360
        %v4617 = vmul.f32 %v4361, %v4361
        %v4618 = vmul.f32 %v4362, %v4362
        %v4619 = vmul.f32 %v4363, %v4363
        %v4620 = vmul.f32 %v4364, %v4364
        %v4621 = vmul.f32 %v4365, %v4365
        %v4622 = vmul.f32 %v4366, %v4366
        %v4623 = vmul.f32 %v4367, %v4367
        %v4624 = vmul.f32 %v4368, %v4368
        %v4625 = vmul.f32 %v4369, %v4369
        %v4626 = vmul.f32 %v4370, %v4370
        %v4627 = vmul.f32 %v4371, %v4371
        %v4628 = vmul.f32 %v4372, %v4372
        %v4629 = vmul.f32 %v4373, %v4373
        %v4630 = vmul.f32 %v4374, %v4374
        %v4631 = vmul.f32 %v4375, %v4375
        %v4632 = vmul.f32 %v4376, %v4376
        %v4633 = vmul.f32 %v4377, %v4377
        %v4634 = vmul.f32 %v4378, %v4378
        %v4635 = vmul.f32 %v4379, %v4379
        %v4636 = vmul.f32 %v4380, %v4380
        %v4637 = vmul.f32 %v4381, %v4381
        %v4638 = vmul.f32 %v4382, %v4382
        %v4639 = vmul.f32 %v4383, %v4383
        %v4640 = vmul.f32 %v4384, %v4384
        %v4641 = vmul.f32 %v4385, %v4385
        %v4642 = vmul.f32 %v4386, %v4386
        %v4643 = vmul.f32 %v4387, %v4387
        %v4644 = vmul.f32 %v4388, %v4388
        %v4645 = vmul.f32 %v4389, %v4389
        %v4646 = vmul.f32 %v4390, %v4390
        %v4647 = vmul.f32 %v4391, %v4391
        %v4648 = vmul.f32 %v4392, %v4392
        %v4649 = vmul.f32 %v4393, %v4393
        %v4650 = vmul.f32 %v4394, %v4394
        %v4651 = vmul.f32 %v4395, %v4395
        %v4652 = vmul.f32 %v4396, %v4396
        %v4653 = vmul.f32 %v4397, %v4397
        %v4654 = vmul.f32 %v4398, %v4398
        %v4655 = vmul.f32 %v4399, %v4399
        %v4656 = vmul.f32 %v4400, %v4400
        %v4657 = vmul.f32 %v4401, %v4401
        %v4658 = vmul.f32 %v4402, %v4402
        %v4659 = vmul.f32 %v4403, %v4403
        %v4660 = vmul.f32 %v4404, %v4404
        %v4661 = vmul.f32 %v4405, %v4405
        %v4662 = vmul.f32 %v4406, %v4406
        %v4663 = vmul.f32 %v4407, %v4407
        %v4664 = vmul.f32 %v4408, %v4408
        %v4665 = vmul.f32 %v4409, %v4409
        %v4666 = vmul.f32 %v4410, %v4410
        %v4667 = vmul.f32 %v4411, %v4411
        %v4668 = vmul.f32 %v4412, %v4412
        %v4669 = vmul.f32 %v4413, %v4413
        %v4670 = vmul.f32 %v4414, %v4414
        %v4671 = vmul.f32 %v4415, %v4415
        %v4672 = vmul.f32 %v4416, %v4416
        %v4673 = vmul.f32 %v4417, %v4417
        %v4674 = vmul.f32 %v4418, %v4418
        %v4675 = vmul.f32 %v4419, %v4419
        %v4676 = vmul.f32 %v4420, %v4420
        %v4677 = vmul.f32 %v4421, %v4421
        %v4678 = vmul.f32 %v4422, %v4422
        %v4679 = vmul.f32 %v4423, %v4423
        %v4680 = vmul.f32 %v4424, %v4424
        %v4681 = vmul.f32 %v4425, %v4425
        %v4682 = vmul.f32 %v4426, %v4426
        %v4683 = vmul.f32 %v4427, %v4427
        %v4684 = vmul.f32 %v4428, %v4428
        %v4685 = vmul.f32 %v4429, %v4429
        %v4686 = vadd.f32 %v4430, %v4438
        %v4687 = vadd.f32 %v4686, %v4446
        %v4688 = vadd.f32 %v4687, %v4454
        %v4689 = vadd.f32 %v4688, %v4462
        %v4690 = vadd.f32 %v4689, %v4470
        %v4691 = vadd.f32 %v4690, %v4478
        %v4692 = vadd.f32 %v4691, %v4486
        %v4693 = vadd.f32 %v4692, %v4494
        %v4694 = vadd.f32 %v4693, %v4502
        %v4695 = vadd.f32 %v4694, %v4510
        %v4696 = vadd.f32 %v4695, %v4518
        %v4697 = vadd.f32 %v4696, %v4526
        %v4698 = vadd.f32 %v4697, %v4534
        %v4699 = vadd.f32 %v4698, %v4542
        %v4700 = vadd.f32 %v4699, %v4550
        %v4701 = vadd.f32 %v4700, %v4558
        %v4702 = vadd.f32 %v4701, %v4566
        %v4703 = vadd.f32 %v4702, %v4574
        %v4704 = vadd.f32 %v4703, %v4582
        %v4705 = vadd.f32 %v4704, %v4590
        %v4706 = vadd.f32 %v4705, %v4598
        %v4707 = vadd.f32 %v4706, %v4606
        %v4708 = vadd.f32 %v4707, %v4614
        %v4709 = vadd.f32 %v4708, %v4622
        %v4710 = vadd.f32 %v4709, %v4630
        %v4711 = vadd.f32 %v4710, %v4638
        %v4712 = vadd.f32 %v4711, %v4646
        %v4713 = vadd.f32 %v4712, %v4654
        %v4714 = vadd.f32 %v4713, %v4662
        %v4715 = vadd.f32 %v4714, %v4670
        %v4716 = vadd.f32 %v4715, %v4678
        %v4717 = vrot.slane %v4716, 4
        %v4718 = vadd.f32 %v4716, %v4717
        %v4719 = vrot.slane %v4718, 2
        %v4720 = vadd.f32 %v4718, %v4719
        %v4721 = vrot.slane %v4720, 1
        %v4722 = vadd.f32 %v4720, %v4721
        %v4723 = vadd.f32 %v4431, %v4439
        %v4724 = vadd.f32 %v4723, %v4447
        %v4725 = vadd.f32 %v4724, %v4455
        %v4726 = vadd.f32 %v4725, %v4463
        %v4727 = vadd.f32 %v4726, %v4471
        %v4728 = vadd.f32 %v4727, %v4479
        %v4729 = vadd.f32 %v4728, %v4487
        %v4730 = vadd.f32 %v4729, %v4495
        %v4731 = vadd.f32 %v4730, %v4503
        %v4732 = vadd.f32 %v4731, %v4511
        %v4733 = vadd.f32 %v4732, %v4519
        %v4734 = vadd.f32 %v4733, %v4527
        %v4735 = vadd.f32 %v4734, %v4535
        %v4736 = vadd.f32 %v4735, %v4543
        %v4737 = vadd.f32 %v4736, %v4551
        %v4738 = vadd.f32 %v4737, %v4559
        %v4739 = vadd.f32 %v4738, %v4567
        %v4740 = vadd.f32 %v4739, %v4575
        %v4741 = vadd.f32 %v4740, %v4583
        %v4742 = vadd.f32 %v4741, %v4591
        %v4743 = vadd.f32 %v4742, %v4599
        %v4744 = vadd.f32 %v4743, %v4607
        %v4745 = vadd.f32 %v4744, %v4615
        %v4746 = vadd.f32 %v4745, %v4623
        %v4747 = vadd.f32 %v4746, %v4631
        %v4748 = vadd.f32 %v4747, %v4639
        %v4749 = vadd.f32 %v4748, %v4647
        %v4750 = vadd.f32 %v4749, %v4655
        %v4751 = vadd.f32 %v4750, %v4663
        %v4752 = vadd.f32 %v4751, %v4671
        %v4753 = vadd.f32 %v4752, %v4679
        %v4754 = vrot.slane %v4753, 4
        %v4755 = vadd.f32 %v4753, %v4754
        %v4756 = vrot.slane %v4755, 2
        %v4757 = vadd.f32 %v4755, %v4756
        %v4758 = vrot.slane %v4757, 1
        %v4759 = vadd.f32 %v4757, %v4758
        %v4760 = vadd.f32 %v4432, %v4440
        %v4761 = vadd.f32 %v4760, %v4448
        %v4762 = vadd.f32 %v4761, %v4456
        %v4763 = vadd.f32 %v4762, %v4464
        %v4764 = vadd.f32 %v4763, %v4472
        %v4765 = vadd.f32 %v4764, %v4480
        %v4766 = vadd.f32 %v4765, %v4488
        %v4767 = vadd.f32 %v4766, %v4496
        %v4768 = vadd.f32 %v4767, %v4504
        %v4769 = vadd.f32 %v4768, %v4512
        %v4770 = vadd.f32 %v4769, %v4520
        %v4771 = vadd.f32 %v4770, %v4528
        %v4772 = vadd.f32 %v4771, %v4536
        %v4773 = vadd.f32 %v4772, %v4544
        %v4774 = vadd.f32 %v4773, %v4552
        %v4775 = vadd.f32 %v4774, %v4560
        %v4776 = vadd.f32 %v4775, %v4568
        %v4777 = vadd.f32 %v4776, %v4576
        %v4778 = vadd.f32 %v4777, %v4584
        %v4779 = vadd.f32 %v4778, %v4592
        %v4780 = vadd.f32 %v4779, %v4600
        %v4781 = vadd.f32 %v4780, %v4608
        %v4782 = vadd.f32 %v4781, %v4616
        %v4783 = vadd.f32 %v4782, %v4624
        %v4784 = vadd.f32 %v4783, %v4632
        %v4785 = vadd.f32 %v4784, %v4640
        %v4786 = vadd.f32 %v4785, %v4648
        %v4787 = vadd.f32 %v4786, %v4656
        %v4788 = vadd.f32 %v4787, %v4664
        %v4789 = vadd.f32 %v4788, %v4672
        %v4790 = vadd.f32 %v4789, %v4680
        %v4791 = vrot.slane %v4790, 4
        %v4792 = vadd.f32 %v4790, %v4791
        %v4793 = vrot.slane %v4792, 2
        %v4794 = vadd.f32 %v4792, %v4793
        %v4795 = vrot.slane %v4794, 1
        %v4796 = vadd.f32 %v4794, %v4795
        %v4797 = vadd.f32 %v4433, %v4441
        %v4798 = vadd.f32 %v4797, %v4449
        %v4799 = vadd.f32 %v4798, %v4457
        %v4800 = vadd.f32 %v4799, %v4465
        %v4801 = vadd.f32 %v4800, %v4473
        %v4802 = vadd.f32 %v4801, %v4481
        %v4803 = vadd.f32 %v4802, %v4489
        %v4804 = vadd.f32 %v4803, %v4497
        %v4805 = vadd.f32 %v4804, %v4505
        %v4806 = vadd.f32 %v4805, %v4513
        %v4807 = vadd.f32 %v4806, %v4521
        %v4808 = vadd.f32 %v4807, %v4529
        %v4809 = vadd.f32 %v4808, %v4537
        %v4810 = vadd.f32 %v4809, %v4545
        %v4811 = vadd.f32 %v4810, %v4553
        %v4812 = vadd.f32 %v4811, %v4561
        %v4813 = vadd.f32 %v4812, %v4569
        %v4814 = vadd.f32 %v4813, %v4577
        %v4815 = vadd.f32 %v4814, %v4585
        %v4816 = vadd.f32 %v4815, %v4593
        %v4817 = vadd.f32 %v4816, %v4601
        %v4818 = vadd.f32 %v4817, %v4609
        %v4819 = vadd.f32 %v4818, %v4617
        %v4820 = vadd.f32 %v4819, %v4625
        %v4821 = vadd.f32 %v4820, %v4633
        %v4822 = vadd.f32 %v4821, %v4641
        %v4823 = vadd.f32 %v4822, %v4649
        %v4824 = vadd.f32 %v4823, %v4657
        %v4825 = vadd.f32 %v4824, %v4665
        %v4826 = vadd.f32 %v4825, %v4673
        %v4827 = vadd.f32 %v4826, %v4681
        %v4828 = vrot.slane %v4827, 4
        %v4829 = vadd.f32 %v4827, %v4828
        %v4830 = vrot.slane %v4829, 2
        %v4831 = vadd.f32 %v4829, %v4830
        %v4832 = vrot.slane %v4831, 1
        %v4833 = vadd.f32 %v4831, %v4832
        %v4834 = vadd.f32 %v4434, %v4442
        %v4835 = vadd.f32 %v4834, %v4450
        %v4836 = vadd.f32 %v4835, %v4458
        %v4837 = vadd.f32 %v4836, %v4466
        %v4838 = vadd.f32 %v4837, %v4474
        %v4839 = vadd.f32 %v4838, %v4482
        %v4840 = vadd.f32 %v4839, %v4490
        %v4841 = vadd.f32 %v4840, %v4498
        %v4842 = vadd.f32 %v4841, %v4506
        %v4843 = vadd.f32 %v4842, %v4514
        %v4844 = vadd.f32 %v4843, %v4522
        %v4845 = vadd.f32 %v4844, %v4530
        %v4846 = vadd.f32 %v4845, %v4538
        %v4847 = vadd.f32 %v4846, %v4546
        %v4848 = vadd.f32 %v4847, %v4554
        %v4849 = vadd.f32 %v4848, %v4562
        %v4850 = vadd.f32 %v4849, %v4570
        %v4851 = vadd.f32 %v4850, %v4578
        %v4852 = vadd.f32 %v4851, %v4586
        %v4853 = vadd.f32 %v4852, %v4594
        %v4854 = vadd.f32 %v4853, %v4602
        %v4855 = vadd.f32 %v4854, %v4610
        %v4856 = vadd.f32 %v4855, %v4618
        %v4857 = vadd.f32 %v4856, %v4626
        %v4858 = vadd.f32 %v4857, %v4634
        %v4859 = vadd.f32 %v4858, %v4642
        %v4860 = vadd.f32 %v4859, %v4650
        %v4861 = vadd.f32 %v4860, %v4658
        %v4862 = vadd.f32 %v4861, %v4666
        %v4863 = vadd.f32 %v4862, %v4674
        %v4864 = vadd.f32 %v4863, %v4682
        %v4865 = vrot.slane %v4864, 4
        %v4866 = vadd.f32 %v4864, %v4865
        %v4867 = vrot.slane %v4866, 2
        %v4868 = vadd.f32 %v4866, %v4867
        %v4869 = vrot.slane %v4868, 1
        %v4870 = vadd.f32 %v4868, %v4869
        %v4871 = vadd.f32 %v4435, %v4443
        %v4872 = vadd.f32 %v4871, %v4451
        %v4873 = vadd.f32 %v4872, %v4459
        %v4874 = vadd.f32 %v4873, %v4467
        %v4875 = vadd.f32 %v4874, %v4475
        %v4876 = vadd.f32 %v4875, %v4483
        %v4877 = vadd.f32 %v4876, %v4491
        %v4878 = vadd.f32 %v4877, %v4499
        %v4879 = vadd.f32 %v4878, %v4507
        %v4880 = vadd.f32 %v4879, %v4515
        %v4881 = vadd.f32 %v4880, %v4523
        %v4882 = vadd.f32 %v4881, %v4531
        %v4883 = vadd.f32 %v4882, %v4539
        %v4884 = vadd.f32 %v4883, %v4547
        %v4885 = vadd.f32 %v4884, %v4555
        %v4886 = vadd.f32 %v4885, %v4563
        %v4887 = vadd.f32 %v4886, %v4571
        %v4888 = vadd.f32 %v4887, %v4579
        %v4889 = vadd.f32 %v4888, %v4587
        %v4890 = vadd.f32 %v4889, %v4595
        %v4891 = vadd.f32 %v4890, %v4603
        %v4892 = vadd.f32 %v4891, %v4611
        %v4893 = vadd.f32 %v4892, %v4619
        %v4894 = vadd.f32 %v4893, %v4627
        %v4895 = vadd.f32 %v4894, %v4635
        %v4896 = vadd.f32 %v4895, %v4643
        %v4897 = vadd.f32 %v4896, %v4651
        %v4898 = vadd.f32 %v4897, %v4659
        %v4899 = vadd.f32 %v4898, %v4667
        %v4900 = vadd.f32 %v4899, %v4675
        %v4901 = vadd.f32 %v4900, %v4683
        %v4902 = vrot.slane %v4901, 4
        %v4903 = vadd.f32 %v4901, %v4902
        %v4904 = vrot.slane %v4903, 2
        %v4905 = vadd.f32 %v4903, %v4904
        %v4906 = vrot.slane %v4905, 1
        %v4907 = vadd.f32 %v4905, %v4906
        %v4908 = vadd.f32 %v4436, %v4444
        %v4909 = vadd.f32 %v4908, %v4452
        %v4910 = vadd.f32 %v4909, %v4460
        %v4911 = vadd.f32 %v4910, %v4468
        %v4912 = vadd.f32 %v4911, %v4476
        %v4913 = vadd.f32 %v4912, %v4484
        %v4914 = vadd.f32 %v4913, %v4492
        %v4915 = vadd.f32 %v4914, %v4500
        %v4916 = vadd.f32 %v4915, %v4508
        %v4917 = vadd.f32 %v4916, %v4516
        %v4918 = vadd.f32 %v4917, %v4524
        %v4919 = vadd.f32 %v4918, %v4532
        %v4920 = vadd.f32 %v4919, %v4540
        %v4921 = vadd.f32 %v4920, %v4548
        %v4922 = vadd.f32 %v4921, %v4556
        %v4923 = vadd.f32 %v4922, %v4564
        %v4924 = vadd.f32 %v4923, %v4572
        %v4925 = vadd.f32 %v4924, %v4580
        %v4926 = vadd.f32 %v4925, %v4588
        %v4927 = vadd.f32 %v4926, %v4596
        %v4928 = vadd.f32 %v4927, %v4604
        %v4929 = vadd.f32 %v4928, %v4612
        %v4930 = vadd.f32 %v4929, %v4620
        %v4931 = vadd.f32 %v4930, %v4628
        %v4932 = vadd.f32 %v4931, %v4636
        %v4933 = vadd.f32 %v4932, %v4644
        %v4934 = vadd.f32 %v4933, %v4652
        %v4935 = vadd.f32 %v4934, %v4660
        %v4936 = vadd.f32 %v4935, %v4668
        %v4937 = vadd.f32 %v4936, %v4676
        %v4938 = vadd.f32 %v4937, %v4684
        %v4939 = vrot.slane %v4938, 4
        %v4940 = vadd.f32 %v4938, %v4939
        %v4941 = vrot.slane %v4940, 2
        %v4942 = vadd.f32 %v4940, %v4941
        %v4943 = vrot.slane %v4942, 1
        %v4944 = vadd.f32 %v4942, %v4943
        %v4945 = vadd.f32 %v4437, %v4445
        %v4946 = vadd.f32 %v4945, %v4453
        %v4947 = vadd.f32 %v4946, %v4461
        %v4948 = vadd.f32 %v4947, %v4469
        %v4949 = vadd.f32 %v4948, %v4477
        %v4950 = vadd.f32 %v4949, %v4485
        %v4951 = vadd.f32 %v4950, %v4493
        %v4952 = vadd.f32 %v4951, %v4501
        %v4953 = vadd.f32 %v4952, %v4509
        %v4954 = vadd.f32 %v4953, %v4517
        %v4955 = vadd.f32 %v4954, %v4525
        %v4956 = vadd.f32 %v4955, %v4533
        %v4957 = vadd.f32 %v4956, %v4541
        %v4958 = vadd.f32 %v4957, %v4549
        %v4959 = vadd.f32 %v4958, %v4557
        %v4960 = vadd.f32 %v4959, %v4565
        %v4961 = vadd.f32 %v4960, %v4573
        %v4962 = vadd.f32 %v4961, %v4581
        %v4963 = vadd.f32 %v4962, %v4589
        %v4964 = vadd.f32 %v4963, %v4597
        %v4965 = vadd.f32 %v4964, %v4605
        %v4966 = vadd.f32 %v4965, %v4613
        %v4967 = vadd.f32 %v4966, %v4621
        %v4968 = vadd.f32 %v4967, %v4629
        %v4969 = vadd.f32 %v4968, %v4637
        %v4970 = vadd.f32 %v4969, %v4645
        %v4971 = vadd.f32 %v4970, %v4653
        %v4972 = vadd.f32 %v4971, %v4661
        %v4973 = vadd.f32 %v4972, %v4669
        %v4974 = vadd.f32 %v4973, %v4677
        %v4975 = vadd.f32 %v4974, %v4685
        %v4976 = vrot.slane %v4975, 4
        %v4977 = vadd.f32 %v4975, %v4976
        %v4978 = vrot.slane %v4977, 2
        %v4979 = vadd.f32 %v4977, %v4978
        %v4980 = vrot.slane %v4979, 1
        %v4981 = vadd.f32 %v4979, %v4980
        %v4982 = vmul.f32 %v4722, 0.00390625
        %v4983 = vmul.f32 %v4759, 0.00390625
        %v4984 = vmul.f32 %v4796, 0.00390625
        %v4985 = vmul.f32 %v4833, 0.00390625
        %v4986 = vmul.f32 %v4870, 0.00390625
        %v4987 = vmul.f32 %v4907, 0.00390625
        %v4988 = vmul.f32 %v4944, 0.00390625
        %v4989 = vmul.f32 %v4981, 0.00390625
        %s4990 = smul.u32 %s25, 1024
        %s4991 = sshra.s32 %s4990, 7
        %s4992 = sand.u32 %s4990, 127
        %s4993 = scalar_lea.vmem [#allocation6], %s4991
        %v4994 = vld [vmem:[%s4993] sm:$0xff]
        %s4995 = scalar_lea.vmem [#allocation8], %s4991
        %v4996 = vld [vmem:[%s4995] sm:$0xff]
        %v4997 = vadd.f32 %v4982, 1e-05
        %v4998 = vadd.f32 %v4983, 1e-05
        %v4999 = vadd.f32 %v4984, 1e-05
        %v5000 = vadd.f32 %v4985, 1e-05
        %v5001 = vadd.f32 %v4986, 1e-05
        %v5002 = vadd.f32 %v4987, 1e-05
        %v5003 = vadd.f32 %v4988, 1e-05
        %v5004 = vadd.f32 %v4989, 1e-05
        %v5005 = vrsqrt.pop %v4997
        %v5006 = vrsqrt.pop %v4998
        %v5007 = vrsqrt.pop %v4999
        %v5008 = vrsqrt.pop %v5000
        %v5009 = vrsqrt.pop %v5001
        %v5010 = vrsqrt.pop %v5002
        %v5011 = vrsqrt.pop %v5003
        %v5012 = vrsqrt.pop %v5004
        %v5021 = vcombine.low %v5005, %v5006
        %v5022 = vcombine.low %v5007, %v5008
        %v5023 = vcombine.low %v5009, %v5010
        %v5024 = vcombine.low %v5011, %v5012
        %v5026 = vunpack.c.l.s4 1966171168
        %v5027 = vunpack.c.0.s8 %v5026
        %v5028 = vlaneseq
        %v5029 = vshrl.u32 %v5028, 7
        %v5030 = vsub.s32 %v5027, %v5029
        %v5031 = vrot.slane %v5021, %v5030
        %v5033 = vunpack.c.l.s4 1966171168
        %v5034 = vunpack.c.0.s8 %v5033
        %v5035 = vlaneseq
        %v5036 = vshrl.u32 %v5035, 7
        %v5037 = vsub.s32 %v5034, %v5036
        %v5038 = vrot.slane %v5022, %v5037
        %v5040 = vunpack.c.l.s4 1966171168
        %v5041 = vunpack.c.0.s8 %v5040
        %v5042 = vlaneseq
        %v5043 = vshrl.u32 %v5042, 7
        %v5044 = vsub.s32 %v5041, %v5043
        %v5045 = vrot.slane %v5023, %v5044
        %v5047 = vunpack.c.l.s4 1966171168
        %v5048 = vunpack.c.0.s8 %v5047
        %v5049 = vlaneseq
        %v5050 = vshrl.u32 %v5049, 7
        %v5051 = vsub.s32 %v5048, %v5050
        %v5052 = vrot.slane %v5024, %v5051
        %v5053 = vcombine.low %v5031, %v5038
        %v5054 = vcombine.low %v5045, %v5052
        %v5056 = vunpack.c.l.s4 1966171168
        %v5057 = vunpack.c.0.s8 %v5056
        %v5058 = vlaneseq
        %v5059 = vshrl.u32 %v5058, 7
        %v5060 = vsub.s32 %v5057, %v5059
        %v5061 = vrot.slane %v5053, %v5060
        %v5063 = vunpack.c.l.s4 1966171168
        %v5064 = vunpack.c.0.s8 %v5063
        %v5065 = vlaneseq
        %v5066 = vshrl.u32 %v5065, 7
        %v5067 = vsub.s32 %v5064, %v5066
        %v5068 = vrot.slane %v5054, %v5067
        %v5069 = vcombine.low %v5061, %v5068
        %v5071 = vmul.f32 %v4994, %v5069
        %v5073 = vlaneseq
        %v5074 = vshrl.u32 %v5073, 7
        %v5075 = vsub.s32 0, %v5074
        %v5076 = vrot.slane %v5071, %v5075
        %v5077 = vlaneseq
        %v5078 = vshrl.u32 %v5077, 7
        %v5079 = vsub.s32 1, %v5078
        %v5080 = vrot.slane %v5071, %v5079
        %v5081 = vlaneseq
        %v5082 = vshrl.u32 %v5081, 7
        %v5083 = vsub.s32 2, %v5082
        %v5084 = vrot.slane %v5071, %v5083
        %v5085 = vlaneseq
        %v5086 = vshrl.u32 %v5085, 7
        %v5087 = vsub.s32 3, %v5086
        %v5088 = vrot.slane %v5071, %v5087
        %v5089 = vlaneseq
        %v5090 = vshrl.u32 %v5089, 7
        %v5091 = vsub.s32 4, %v5090
        %v5092 = vrot.slane %v5071, %v5091
        %v5093 = vlaneseq
        %v5094 = vshrl.u32 %v5093, 7
        %v5095 = vsub.s32 5, %v5094
        %v5096 = vrot.slane %v5071, %v5095
        %v5097 = vlaneseq
        %v5098 = vshrl.u32 %v5097, 7
        %v5099 = vsub.s32 6, %v5098
        %v5100 = vrot.slane %v5071, %v5099
        %v5101 = vlaneseq
        %v5102 = vshrl.u32 %v5101, 7
        %v5103 = vsub.s32 7, %v5102
        %v5104 = vrot.slane %v5071, %v5103
        %v5113 = vmul.f32 %v4174, %v5076
        %v5114 = vmul.f32 %v4175, %v5080
        %v5115 = vmul.f32 %v4176, %v5084
        %v5116 = vmul.f32 %v4177, %v5088
        %v5117 = vmul.f32 %v4178, %v5092
        %v5118 = vmul.f32 %v4179, %v5096
        %v5119 = vmul.f32 %v4180, %v5100
        %v5120 = vmul.f32 %v4181, %v5104
        %v5121 = vmul.f32 %v4182, %v5076
        %v5122 = vmul.f32 %v4183, %v5080
        %v5123 = vmul.f32 %v4184, %v5084
        %v5124 = vmul.f32 %v4185, %v5088
        %v5125 = vmul.f32 %v4186, %v5092
        %v5126 = vmul.f32 %v4187, %v5096
        %v5127 = vmul.f32 %v4188, %v5100
        %v5128 = vmul.f32 %v4189, %v5104
        %v5129 = vmul.f32 %v4190, %v5076
        %v5130 = vmul.f32 %v4191, %v5080
        %v5131 = vmul.f32 %v4192, %v5084
        %v5132 = vmul.f32 %v4193, %v5088
        %v5133 = vmul.f32 %v4194, %v5092
        %v5134 = vmul.f32 %v4195, %v5096
        %v5135 = vmul.f32 %v4196, %v5100
        %v5136 = vmul.f32 %v4197, %v5104
        %v5137 = vmul.f32 %v4198, %v5076
        %v5138 = vmul.f32 %v4199, %v5080
        %v5139 = vmul.f32 %v4200, %v5084
        %v5140 = vmul.f32 %v4201, %v5088
        %v5141 = vmul.f32 %v4202, %v5092
        %v5142 = vmul.f32 %v4203, %v5096
        %v5143 = vmul.f32 %v4204, %v5100
        %v5144 = vmul.f32 %v4205, %v5104
        %v5145 = vmul.f32 %v4206, %v5076
        %v5146 = vmul.f32 %v4207, %v5080
        %v5147 = vmul.f32 %v4208, %v5084
        %v5148 = vmul.f32 %v4209, %v5088
        %v5149 = vmul.f32 %v4210, %v5092
        %v5150 = vmul.f32 %v4211, %v5096
        %v5151 = vmul.f32 %v4212, %v5100
        %v5152 = vmul.f32 %v4213, %v5104
        %v5153 = vmul.f32 %v4214, %v5076
        %v5154 = vmul.f32 %v4215, %v5080
        %v5155 = vmul.f32 %v4216, %v5084
        %v5156 = vmul.f32 %v4217, %v5088
        %v5157 = vmul.f32 %v4218, %v5092
        %v5158 = vmul.f32 %v4219, %v5096
        %v5159 = vmul.f32 %v4220, %v5100
        %v5160 = vmul.f32 %v4221, %v5104
        %v5161 = vmul.f32 %v4222, %v5076
        %v5162 = vmul.f32 %v4223, %v5080
        %v5163 = vmul.f32 %v4224, %v5084
        %v5164 = vmul.f32 %v4225, %v5088
        %v5165 = vmul.f32 %v4226, %v5092
        %v5166 = vmul.f32 %v4227, %v5096
        %v5167 = vmul.f32 %v4228, %v5100
        %v5168 = vmul.f32 %v4229, %v5104
        %v5169 = vmul.f32 %v4230, %v5076
        %v5170 = vmul.f32 %v4231, %v5080
        %v5171 = vmul.f32 %v4232, %v5084
        %v5172 = vmul.f32 %v4233, %v5088
        %v5173 = vmul.f32 %v4234, %v5092
        %v5174 = vmul.f32 %v4235, %v5096
        %v5175 = vmul.f32 %v4236, %v5100
        %v5176 = vmul.f32 %v4237, %v5104
        %v5177 = vmul.f32 %v4238, %v5076
        %v5178 = vmul.f32 %v4239, %v5080
        %v5179 = vmul.f32 %v4240, %v5084
        %v5180 = vmul.f32 %v4241, %v5088
        %v5181 = vmul.f32 %v4242, %v5092
        %v5182 = vmul.f32 %v4243, %v5096
        %v5183 = vmul.f32 %v4244, %v5100
        %v5184 = vmul.f32 %v4245, %v5104
        %v5185 = vmul.f32 %v4246, %v5076
        %v5186 = vmul.f32 %v4247, %v5080
        %v5187 = vmul.f32 %v4248, %v5084
        %v5188 = vmul.f32 %v4249, %v5088
        %v5189 = vmul.f32 %v4250, %v5092
        %v5190 = vmul.f32 %v4251, %v5096
        %v5191 = vmul.f32 %v4252, %v5100
        %v5192 = vmul.f32 %v4253, %v5104
        %v5193 = vmul.f32 %v4254, %v5076
        %v5194 = vmul.f32 %v4255, %v5080
        %v5195 = vmul.f32 %v4256, %v5084
        %v5196 = vmul.f32 %v4257, %v5088
        %v5197 = vmul.f32 %v4258, %v5092
        %v5198 = vmul.f32 %v4259, %v5096
        %v5199 = vmul.f32 %v4260, %v5100
        %v5200 = vmul.f32 %v4261, %v5104
        %v5201 = vmul.f32 %v4262, %v5076
        %v5202 = vmul.f32 %v4263, %v5080
        %v5203 = vmul.f32 %v4264, %v5084
        %v5204 = vmul.f32 %v4265, %v5088
        %v5205 = vmul.f32 %v4266, %v5092
        %v5206 = vmul.f32 %v4267, %v5096
        %v5207 = vmul.f32 %v4268, %v5100
        %v5208 = vmul.f32 %v4269, %v5104
        %v5209 = vmul.f32 %v4270, %v5076
        %v5210 = vmul.f32 %v4271, %v5080
        %v5211 = vmul.f32 %v4272, %v5084
        %v5212 = vmul.f32 %v4273, %v5088
        %v5213 = vmul.f32 %v4274, %v5092
        %v5214 = vmul.f32 %v4275, %v5096
        %v5215 = vmul.f32 %v4276, %v5100
        %v5216 = vmul.f32 %v4277, %v5104
        %v5217 = vmul.f32 %v4278, %v5076
        %v5218 = vmul.f32 %v4279, %v5080
        %v5219 = vmul.f32 %v4280, %v5084
        %v5220 = vmul.f32 %v4281, %v5088
        %v5221 = vmul.f32 %v4282, %v5092
        %v5222 = vmul.f32 %v4283, %v5096
        %v5223 = vmul.f32 %v4284, %v5100
        %v5224 = vmul.f32 %v4285, %v5104
        %v5225 = vmul.f32 %v4286, %v5076
        %v5226 = vmul.f32 %v4287, %v5080
        %v5227 = vmul.f32 %v4288, %v5084
        %v5228 = vmul.f32 %v4289, %v5088
        %v5229 = vmul.f32 %v4290, %v5092
        %v5230 = vmul.f32 %v4291, %v5096
        %v5231 = vmul.f32 %v4292, %v5100
        %v5232 = vmul.f32 %v4293, %v5104
        %v5233 = vmul.f32 %v4294, %v5076
        %v5234 = vmul.f32 %v4295, %v5080
        %v5235 = vmul.f32 %v4296, %v5084
        %v5236 = vmul.f32 %v4297, %v5088
        %v5237 = vmul.f32 %v4298, %v5092
        %v5238 = vmul.f32 %v4299, %v5096
        %v5239 = vmul.f32 %v4300, %v5100
        %v5240 = vmul.f32 %v4301, %v5104
        %v5241 = vmul.f32 %v4302, %v5076
        %v5242 = vmul.f32 %v4303, %v5080
        %v5243 = vmul.f32 %v4304, %v5084
        %v5244 = vmul.f32 %v4305, %v5088
        %v5245 = vmul.f32 %v4306, %v5092
        %v5246 = vmul.f32 %v4307, %v5096
        %v5247 = vmul.f32 %v4308, %v5100
        %v5248 = vmul.f32 %v4309, %v5104
        %v5249 = vmul.f32 %v4310, %v5076
        %v5250 = vmul.f32 %v4311, %v5080
        %v5251 = vmul.f32 %v4312, %v5084
        %v5252 = vmul.f32 %v4313, %v5088
        %v5253 = vmul.f32 %v4314, %v5092
        %v5254 = vmul.f32 %v4315, %v5096
        %v5255 = vmul.f32 %v4316, %v5100
        %v5256 = vmul.f32 %v4317, %v5104
        %v5257 = vmul.f32 %v4318, %v5076
        %v5258 = vmul.f32 %v4319, %v5080
        %v5259 = vmul.f32 %v4320, %v5084
        %v5260 = vmul.f32 %v4321, %v5088
        %v5261 = vmul.f32 %v4322, %v5092
        %v5262 = vmul.f32 %v4323, %v5096
        %v5263 = vmul.f32 %v4324, %v5100
        %v5264 = vmul.f32 %v4325, %v5104
        %v5265 = vmul.f32 %v4326, %v5076
        %v5266 = vmul.f32 %v4327, %v5080
        %v5267 = vmul.f32 %v4328, %v5084
        %v5268 = vmul.f32 %v4329, %v5088
        %v5269 = vmul.f32 %v4330, %v5092
        %v5270 = vmul.f32 %v4331, %v5096
        %v5271 = vmul.f32 %v4332, %v5100
        %v5272 = vmul.f32 %v4333, %v5104
        %v5273 = vmul.f32 %v4334, %v5076
        %v5274 = vmul.f32 %v4335, %v5080
        %v5275 = vmul.f32 %v4336, %v5084
        %v5276 = vmul.f32 %v4337, %v5088
        %v5277 = vmul.f32 %v4338, %v5092
        %v5278 = vmul.f32 %v4339, %v5096
        %v5279 = vmul.f32 %v4340, %v5100
        %v5280 = vmul.f32 %v4341, %v5104
        %v5281 = vmul.f32 %v4342, %v5076
        %v5282 = vmul.f32 %v4343, %v5080
        %v5283 = vmul.f32 %v4344, %v5084
        %v5284 = vmul.f32 %v4345, %v5088
        %v5285 = vmul.f32 %v4346, %v5092
        %v5286 = vmul.f32 %v4347, %v5096
        %v5287 = vmul.f32 %v4348, %v5100
        %v5288 = vmul.f32 %v4349, %v5104
        %v5289 = vmul.f32 %v4350, %v5076
        %v5290 = vmul.f32 %v4351, %v5080
        %v5291 = vmul.f32 %v4352, %v5084
        %v5292 = vmul.f32 %v4353, %v5088
        %v5293 = vmul.f32 %v4354, %v5092
        %v5294 = vmul.f32 %v4355, %v5096
        %v5295 = vmul.f32 %v4356, %v5100
        %v5296 = vmul.f32 %v4357, %v5104
        %v5297 = vmul.f32 %v4358, %v5076
        %v5298 = vmul.f32 %v4359, %v5080
        %v5299 = vmul.f32 %v4360, %v5084
        %v5300 = vmul.f32 %v4361, %v5088
        %v5301 = vmul.f32 %v4362, %v5092
        %v5302 = vmul.f32 %v4363, %v5096
        %v5303 = vmul.f32 %v4364, %v5100
        %v5304 = vmul.f32 %v4365, %v5104
        %v5305 = vmul.f32 %v4366, %v5076
        %v5306 = vmul.f32 %v4367, %v5080
        %v5307 = vmul.f32 %v4368, %v5084
        %v5308 = vmul.f32 %v4369, %v5088
        %v5309 = vmul.f32 %v4370, %v5092
        %v5310 = vmul.f32 %v4371, %v5096
        %v5311 = vmul.f32 %v4372, %v5100
        %v5312 = vmul.f32 %v4373, %v5104
        %v5313 = vmul.f32 %v4374, %v5076
        %v5314 = vmul.f32 %v4375, %v5080
        %v5315 = vmul.f32 %v4376, %v5084
        %v5316 = vmul.f32 %v4377, %v5088
        %v5317 = vmul.f32 %v4378, %v5092
        %v5318 = vmul.f32 %v4379, %v5096
        %v5319 = vmul.f32 %v4380, %v5100
        %v5320 = vmul.f32 %v4381, %v5104
        %v5321 = vmul.f32 %v4382, %v5076
        %v5322 = vmul.f32 %v4383, %v5080
        %v5323 = vmul.f32 %v4384, %v5084
        %v5324 = vmul.f32 %v4385, %v5088
        %v5325 = vmul.f32 %v4386, %v5092
        %v5326 = vmul.f32 %v4387, %v5096
        %v5327 = vmul.f32 %v4388, %v5100
        %v5328 = vmul.f32 %v4389, %v5104
        %v5329 = vmul.f32 %v4390, %v5076
        %v5330 = vmul.f32 %v4391, %v5080
        %v5331 = vmul.f32 %v4392, %v5084
        %v5332 = vmul.f32 %v4393, %v5088
        %v5333 = vmul.f32 %v4394, %v5092
        %v5334 = vmul.f32 %v4395, %v5096
        %v5335 = vmul.f32 %v4396, %v5100
        %v5336 = vmul.f32 %v4397, %v5104
        %v5337 = vmul.f32 %v4398, %v5076
        %v5338 = vmul.f32 %v4399, %v5080
        %v5339 = vmul.f32 %v4400, %v5084
        %v5340 = vmul.f32 %v4401, %v5088
        %v5341 = vmul.f32 %v4402, %v5092
        %v5342 = vmul.f32 %v4403, %v5096
        %v5343 = vmul.f32 %v4404, %v5100
        %v5344 = vmul.f32 %v4405, %v5104
        %v5345 = vmul.f32 %v4406, %v5076
        %v5346 = vmul.f32 %v4407, %v5080
        %v5347 = vmul.f32 %v4408, %v5084
        %v5348 = vmul.f32 %v4409, %v5088
        %v5349 = vmul.f32 %v4410, %v5092
        %v5350 = vmul.f32 %v4411, %v5096
        %v5351 = vmul.f32 %v4412, %v5100
        %v5352 = vmul.f32 %v4413, %v5104
        %v5353 = vmul.f32 %v4414, %v5076
        %v5354 = vmul.f32 %v4415, %v5080
        %v5355 = vmul.f32 %v4416, %v5084
        %v5356 = vmul.f32 %v4417, %v5088
        %v5357 = vmul.f32 %v4418, %v5092
        %v5358 = vmul.f32 %v4419, %v5096
        %v5359 = vmul.f32 %v4420, %v5100
        %v5360 = vmul.f32 %v4421, %v5104
        %v5361 = vmul.f32 %v4422, %v5076
        %v5362 = vmul.f32 %v4423, %v5080
        %v5363 = vmul.f32 %v4424, %v5084
        %v5364 = vmul.f32 %v4425, %v5088
        %v5365 = vmul.f32 %v4426, %v5092
        %v5366 = vmul.f32 %v4427, %v5096
        %v5367 = vmul.f32 %v4428, %v5100
        %v5368 = vmul.f32 %v4429, %v5104
        %v5370 = vlaneseq
        %v5371 = vshrl.u32 %v5370, 7
        %v5372 = vsub.s32 0, %v5371
        %v5373 = vrot.slane %v4996, %v5372
        %v5374 = vlaneseq
        %v5375 = vshrl.u32 %v5374, 7
        %v5376 = vsub.s32 1, %v5375
        %v5377 = vrot.slane %v4996, %v5376
        %v5378 = vlaneseq
        %v5379 = vshrl.u32 %v5378, 7
        %v5380 = vsub.s32 2, %v5379
        %v5381 = vrot.slane %v4996, %v5380
        %v5382 = vlaneseq
        %v5383 = vshrl.u32 %v5382, 7
        %v5384 = vsub.s32 3, %v5383
        %v5385 = vrot.slane %v4996, %v5384
        %v5386 = vlaneseq
        %v5387 = vshrl.u32 %v5386, 7
        %v5388 = vsub.s32 4, %v5387
        %v5389 = vrot.slane %v4996, %v5388
        %v5390 = vlaneseq
        %v5391 = vshrl.u32 %v5390, 7
        %v5392 = vsub.s32 5, %v5391
        %v5393 = vrot.slane %v4996, %v5392
        %v5394 = vlaneseq
        %v5395 = vshrl.u32 %v5394, 7
        %v5396 = vsub.s32 6, %v5395
        %v5397 = vrot.slane %v4996, %v5396
        %v5398 = vlaneseq
        %v5399 = vshrl.u32 %v5398, 7
        %v5400 = vsub.s32 7, %v5399
        %v5401 = vrot.slane %v4996, %v5400
        %v5410 = vadd.f32 %v5113, %v5373
        %v5411 = vadd.f32 %v5114, %v5377
        %v5412 = vadd.f32 %v5115, %v5381
        %v5413 = vadd.f32 %v5116, %v5385
        %v5414 = vadd.f32 %v5117, %v5389
        %v5415 = vadd.f32 %v5118, %v5393
        %v5416 = vadd.f32 %v5119, %v5397
        %v5417 = vadd.f32 %v5120, %v5401
        %v5418 = vadd.f32 %v5121, %v5373
        %v5419 = vadd.f32 %v5122, %v5377
        %v5420 = vadd.f32 %v5123, %v5381
        %v5421 = vadd.f32 %v5124, %v5385
        %v5422 = vadd.f32 %v5125, %v5389
        %v5423 = vadd.f32 %v5126, %v5393
        %v5424 = vadd.f32 %v5127, %v5397
        %v5425 = vadd.f32 %v5128, %v5401
        %v5426 = vadd.f32 %v5129, %v5373
        %v5427 = vadd.f32 %v5130, %v5377
        %v5428 = vadd.f32 %v5131, %v5381
        %v5429 = vadd.f32 %v5132, %v5385
        %v5430 = vadd.f32 %v5133, %v5389
        %v5431 = vadd.f32 %v5134, %v5393
        %v5432 = vadd.f32 %v5135, %v5397
        %v5433 = vadd.f32 %v5136, %v5401
        %v5434 = vadd.f32 %v5137, %v5373
        %v5435 = vadd.f32 %v5138, %v5377
        %v5436 = vadd.f32 %v5139, %v5381
        %v5437 = vadd.f32 %v5140, %v5385
        %v5438 = vadd.f32 %v5141, %v5389
        %v5439 = vadd.f32 %v5142, %v5393
        %v5440 = vadd.f32 %v5143, %v5397
        %v5441 = vadd.f32 %v5144, %v5401
        %v5442 = vadd.f32 %v5145, %v5373
        %v5443 = vadd.f32 %v5146, %v5377
        %v5444 = vadd.f32 %v5147, %v5381
        %v5445 = vadd.f32 %v5148, %v5385
        %v5446 = vadd.f32 %v5149, %v5389
        %v5447 = vadd.f32 %v5150, %v5393
        %v5448 = vadd.f32 %v5151, %v5397
        %v5449 = vadd.f32 %v5152, %v5401
        %v5450 = vadd.f32 %v5153, %v5373
        %v5451 = vadd.f32 %v5154, %v5377
        %v5452 = vadd.f32 %v5155, %v5381
        %v5453 = vadd.f32 %v5156, %v5385
        %v5454 = vadd.f32 %v5157, %v5389
        %v5455 = vadd.f32 %v5158, %v5393
        %v5456 = vadd.f32 %v5159, %v5397
        %v5457 = vadd.f32 %v5160, %v5401
        %v5458 = vadd.f32 %v5161, %v5373
        %v5459 = vadd.f32 %v5162, %v5377
        %v5460 = vadd.f32 %v5163, %v5381
        %v5461 = vadd.f32 %v5164, %v5385
        %v5462 = vadd.f32 %v5165, %v5389
        %v5463 = vadd.f32 %v5166, %v5393
        %v5464 = vadd.f32 %v5167, %v5397
        %v5465 = vadd.f32 %v5168, %v5401
        %v5466 = vadd.f32 %v5169, %v5373
        %v5467 = vadd.f32 %v5170, %v5377
        %v5468 = vadd.f32 %v5171, %v5381
        %v5469 = vadd.f32 %v5172, %v5385
        %v5470 = vadd.f32 %v5173, %v5389
        %v5471 = vadd.f32 %v5174, %v5393
        %v5472 = vadd.f32 %v5175, %v5397
        %v5473 = vadd.f32 %v5176, %v5401
        %v5474 = vadd.f32 %v5177, %v5373
        %v5475 = vadd.f32 %v5178, %v5377
        %v5476 = vadd.f32 %v5179, %v5381
        %v5477 = vadd.f32 %v5180, %v5385
        %v5478 = vadd.f32 %v5181, %v5389
        %v5479 = vadd.f32 %v5182, %v5393
        %v5480 = vadd.f32 %v5183, %v5397
        %v5481 = vadd.f32 %v5184, %v5401
        %v5482 = vadd.f32 %v5185, %v5373
        %v5483 = vadd.f32 %v5186, %v5377
        %v5484 = vadd.f32 %v5187, %v5381
        %v5485 = vadd.f32 %v5188, %v5385
        %v5486 = vadd.f32 %v5189, %v5389
        %v5487 = vadd.f32 %v5190, %v5393
        %v5488 = vadd.f32 %v5191, %v5397
        %v5489 = vadd.f32 %v5192, %v5401
        %v5490 = vadd.f32 %v5193, %v5373
        %v5491 = vadd.f32 %v5194, %v5377
        %v5492 = vadd.f32 %v5195, %v5381
        %v5493 = vadd.f32 %v5196, %v5385
        %v5494 = vadd.f32 %v5197, %v5389
        %v5495 = vadd.f32 %v5198, %v5393
        %v5496 = vadd.f32 %v5199, %v5397
        %v5497 = vadd.f32 %v5200, %v5401
        %v5498 = vadd.f32 %v5201, %v5373
        %v5499 = vadd.f32 %v5202, %v5377
        %v5500 = vadd.f32 %v5203, %v5381
        %v5501 = vadd.f32 %v5204, %v5385
        %v5502 = vadd.f32 %v5205, %v5389
        %v5503 = vadd.f32 %v5206, %v5393
        %v5504 = vadd.f32 %v5207, %v5397
        %v5505 = vadd.f32 %v5208, %v5401
        %v5506 = vadd.f32 %v5209, %v5373
        %v5507 = vadd.f32 %v5210, %v5377
        %v5508 = vadd.f32 %v5211, %v5381
        %v5509 = vadd.f32 %v5212, %v5385
        %v5510 = vadd.f32 %v5213, %v5389
        %v5511 = vadd.f32 %v5214, %v5393
        %v5512 = vadd.f32 %v5215, %v5397
        %v5513 = vadd.f32 %v5216, %v5401
        %v5514 = vadd.f32 %v5217, %v5373
        %v5515 = vadd.f32 %v5218, %v5377
        %v5516 = vadd.f32 %v5219, %v5381
        %v5517 = vadd.f32 %v5220, %v5385
        %v5518 = vadd.f32 %v5221, %v5389
        %v5519 = vadd.f32 %v5222, %v5393
        %v5520 = vadd.f32 %v5223, %v5397
        %v5521 = vadd.f32 %v5224, %v5401
        %v5522 = vadd.f32 %v5225, %v5373
        %v5523 = vadd.f32 %v5226, %v5377
        %v5524 = vadd.f32 %v5227, %v5381
        %v5525 = vadd.f32 %v5228, %v5385
        %v5526 = vadd.f32 %v5229, %v5389
        %v5527 = vadd.f32 %v5230, %v5393
        %v5528 = vadd.f32 %v5231, %v5397
        %v5529 = vadd.f32 %v5232, %v5401
        %v5530 = vadd.f32 %v5233, %v5373
        %v5531 = vadd.f32 %v5234, %v5377
        %v5532 = vadd.f32 %v5235, %v5381
        %v5533 = vadd.f32 %v5236, %v5385
        %v5534 = vadd.f32 %v5237, %v5389
        %v5535 = vadd.f32 %v5238, %v5393
        %v5536 = vadd.f32 %v5239, %v5397
        %v5537 = vadd.f32 %v5240, %v5401
        %v5538 = vadd.f32 %v5241, %v5373
        %v5539 = vadd.f32 %v5242, %v5377
        %v5540 = vadd.f32 %v5243, %v5381
        %v5541 = vadd.f32 %v5244, %v5385
        %v5542 = vadd.f32 %v5245, %v5389
        %v5543 = vadd.f32 %v5246, %v5393
        %v5544 = vadd.f32 %v5247, %v5397
        %v5545 = vadd.f32 %v5248, %v5401
        %v5546 = vadd.f32 %v5249, %v5373
        %v5547 = vadd.f32 %v5250, %v5377
        %v5548 = vadd.f32 %v5251, %v5381
        %v5549 = vadd.f32 %v5252, %v5385
        %v5550 = vadd.f32 %v5253, %v5389
        %v5551 = vadd.f32 %v5254, %v5393
        %v5552 = vadd.f32 %v5255, %v5397
        %v5553 = vadd.f32 %v5256, %v5401
        %v5554 = vadd.f32 %v5257, %v5373
        %v5555 = vadd.f32 %v5258, %v5377
        %v5556 = vadd.f32 %v5259, %v5381
        %v5557 = vadd.f32 %v5260, %v5385
        %v5558 = vadd.f32 %v5261, %v5389
        %v5559 = vadd.f32 %v5262, %v5393
        %v5560 = vadd.f32 %v5263, %v5397
        %v5561 = vadd.f32 %v5264, %v5401
        %v5562 = vadd.f32 %v5265, %v5373
        %v5563 = vadd.f32 %v5266, %v5377
        %v5564 = vadd.f32 %v5267, %v5381
        %v5565 = vadd.f32 %v5268, %v5385
        %v5566 = vadd.f32 %v5269, %v5389
        %v5567 = vadd.f32 %v5270, %v5393
        %v5568 = vadd.f32 %v5271, %v5397
        %v5569 = vadd.f32 %v5272, %v5401
        %v5570 = vadd.f32 %v5273, %v5373
        %v5571 = vadd.f32 %v5274, %v5377
        %v5572 = vadd.f32 %v5275, %v5381
        %v5573 = vadd.f32 %v5276, %v5385
        %v5574 = vadd.f32 %v5277, %v5389
        %v5575 = vadd.f32 %v5278, %v5393
        %v5576 = vadd.f32 %v5279, %v5397
        %v5577 = vadd.f32 %v5280, %v5401
        %v5578 = vadd.f32 %v5281, %v5373
        %v5579 = vadd.f32 %v5282, %v5377
        %v5580 = vadd.f32 %v5283, %v5381
        %v5581 = vadd.f32 %v5284, %v5385
        %v5582 = vadd.f32 %v5285, %v5389
        %v5583 = vadd.f32 %v5286, %v5393
        %v5584 = vadd.f32 %v5287, %v5397
        %v5585 = vadd.f32 %v5288, %v5401
        %v5586 = vadd.f32 %v5289, %v5373
        %v5587 = vadd.f32 %v5290, %v5377
        %v5588 = vadd.f32 %v5291, %v5381
        %v5589 = vadd.f32 %v5292, %v5385
        %v5590 = vadd.f32 %v5293, %v5389
        %v5591 = vadd.f32 %v5294, %v5393
        %v5592 = vadd.f32 %v5295, %v5397
        %v5593 = vadd.f32 %v5296, %v5401
        %v5594 = vadd.f32 %v5297, %v5373
        %v5595 = vadd.f32 %v5298, %v5377
        %v5596 = vadd.f32 %v5299, %v5381
        %v5597 = vadd.f32 %v5300, %v5385
        %v5598 = vadd.f32 %v5301, %v5389
        %v5599 = vadd.f32 %v5302, %v5393
        %v5600 = vadd.f32 %v5303, %v5397
        %v5601 = vadd.f32 %v5304, %v5401
        %v5602 = vadd.f32 %v5305, %v5373
        %v5603 = vadd.f32 %v5306, %v5377
        %v5604 = vadd.f32 %v5307, %v5381
        %v5605 = vadd.f32 %v5308, %v5385
        %v5606 = vadd.f32 %v5309, %v5389
        %v5607 = vadd.f32 %v5310, %v5393
        %v5608 = vadd.f32 %v5311, %v5397
        %v5609 = vadd.f32 %v5312, %v5401
        %v5610 = vadd.f32 %v5313, %v5373
        %v5611 = vadd.f32 %v5314, %v5377
        %v5612 = vadd.f32 %v5315, %v5381
        %v5613 = vadd.f32 %v5316, %v5385
        %v5614 = vadd.f32 %v5317, %v5389
        %v5615 = vadd.f32 %v5318, %v5393
        %v5616 = vadd.f32 %v5319, %v5397
        %v5617 = vadd.f32 %v5320, %v5401
        %v5618 = vadd.f32 %v5321, %v5373
        %v5619 = vadd.f32 %v5322, %v5377
        %v5620 = vadd.f32 %v5323, %v5381
        %v5621 = vadd.f32 %v5324, %v5385
        %v5622 = vadd.f32 %v5325, %v5389
        %v5623 = vadd.f32 %v5326, %v5393
        %v5624 = vadd.f32 %v5327, %v5397
        %v5625 = vadd.f32 %v5328, %v5401
        %v5626 = vadd.f32 %v5329, %v5373
        %v5627 = vadd.f32 %v5330, %v5377
        %v5628 = vadd.f32 %v5331, %v5381
        %v5629 = vadd.f32 %v5332, %v5385
        %v5630 = vadd.f32 %v5333, %v5389
        %v5631 = vadd.f32 %v5334, %v5393
        %v5632 = vadd.f32 %v5335, %v5397
        %v5633 = vadd.f32 %v5336, %v5401
        %v5634 = vadd.f32 %v5337, %v5373
        %v5635 = vadd.f32 %v5338, %v5377
        %v5636 = vadd.f32 %v5339, %v5381
        %v5637 = vadd.f32 %v5340, %v5385
        %v5638 = vadd.f32 %v5341, %v5389
        %v5639 = vadd.f32 %v5342, %v5393
        %v5640 = vadd.f32 %v5343, %v5397
        %v5641 = vadd.f32 %v5344, %v5401
        %v5642 = vadd.f32 %v5345, %v5373
        %v5643 = vadd.f32 %v5346, %v5377
        %v5644 = vadd.f32 %v5347, %v5381
        %v5645 = vadd.f32 %v5348, %v5385
        %v5646 = vadd.f32 %v5349, %v5389
        %v5647 = vadd.f32 %v5350, %v5393
        %v5648 = vadd.f32 %v5351, %v5397
        %v5649 = vadd.f32 %v5352, %v5401
        %v5650 = vadd.f32 %v5353, %v5373
        %v5651 = vadd.f32 %v5354, %v5377
        %v5652 = vadd.f32 %v5355, %v5381
        %v5653 = vadd.f32 %v5356, %v5385
        %v5654 = vadd.f32 %v5357, %v5389
        %v5655 = vadd.f32 %v5358, %v5393
        %v5656 = vadd.f32 %v5359, %v5397
        %v5657 = vadd.f32 %v5360, %v5401
        %v5658 = vadd.f32 %v5361, %v5373
        %v5659 = vadd.f32 %v5362, %v5377
        %v5660 = vadd.f32 %v5363, %v5381
        %v5661 = vadd.f32 %v5364, %v5385
        %v5662 = vadd.f32 %v5365, %v5389
        %v5663 = vadd.f32 %v5366, %v5393
        %v5664 = vadd.f32 %v5367, %v5397
        %v5665 = vadd.f32 %v5368, %v5401
        %v5666 = vmax.f32 %v5410, 0.0
        %v5667 = vmax.f32 %v5411, 0.0
        %v5668 = vmax.f32 %v5412, 0.0
        %v5669 = vmax.f32 %v5413, 0.0
        %v5670 = vmax.f32 %v5414, 0.0
        %v5671 = vmax.f32 %v5415, 0.0
        %v5672 = vmax.f32 %v5416, 0.0
        %v5673 = vmax.f32 %v5417, 0.0
        %v5674 = vmax.f32 %v5418, 0.0
        %v5675 = vmax.f32 %v5419, 0.0
        %v5676 = vmax.f32 %v5420, 0.0
        %v5677 = vmax.f32 %v5421, 0.0
        %v5678 = vmax.f32 %v5422, 0.0
        %v5679 = vmax.f32 %v5423, 0.0
        %v5680 = vmax.f32 %v5424, 0.0
        %v5681 = vmax.f32 %v5425, 0.0
        %v5682 = vmax.f32 %v5426, 0.0
        %v5683 = vmax.f32 %v5427, 0.0
        %v5684 = vmax.f32 %v5428, 0.0
        %v5685 = vmax.f32 %v5429, 0.0
        %v5686 = vmax.f32 %v5430, 0.0
        %v5687 = vmax.f32 %v5431, 0.0
        %v5688 = vmax.f32 %v5432, 0.0
        %v5689 = vmax.f32 %v5433, 0.0
        %v5690 = vmax.f32 %v5434, 0.0
        %v5691 = vmax.f32 %v5435, 0.0
        %v5692 = vmax.f32 %v5436, 0.0
        %v5693 = vmax.f32 %v5437, 0.0
        %v5694 = vmax.f32 %v5438, 0.0
        %v5695 = vmax.f32 %v5439, 0.0
        %v5696 = vmax.f32 %v5440, 0.0
        %v5697 = vmax.f32 %v5441, 0.0
        %v5698 = vmax.f32 %v5442, 0.0
        %v5699 = vmax.f32 %v5443, 0.0
        %v5700 = vmax.f32 %v5444, 0.0
        %v5701 = vmax.f32 %v5445, 0.0
        %v5702 = vmax.f32 %v5446, 0.0
        %v5703 = vmax.f32 %v5447, 0.0
        %v5704 = vmax.f32 %v5448, 0.0
        %v5705 = vmax.f32 %v5449, 0.0
        %v5706 = vmax.f32 %v5450, 0.0
        %v5707 = vmax.f32 %v5451, 0.0
        %v5708 = vmax.f32 %v5452, 0.0
        %v5709 = vmax.f32 %v5453, 0.0
        %v5710 = vmax.f32 %v5454, 0.0
        %v5711 = vmax.f32 %v5455, 0.0
        %v5712 = vmax.f32 %v5456, 0.0
        %v5713 = vmax.f32 %v5457, 0.0
        %v5714 = vmax.f32 %v5458, 0.0
        %v5715 = vmax.f32 %v5459, 0.0
        %v5716 = vmax.f32 %v5460, 0.0
        %v5717 = vmax.f32 %v5461, 0.0
        %v5718 = vmax.f32 %v5462, 0.0
        %v5719 = vmax.f32 %v5463, 0.0
        %v5720 = vmax.f32 %v5464, 0.0
        %v5721 = vmax.f32 %v5465, 0.0
        %v5722 = vmax.f32 %v5466, 0.0
        %v5723 = vmax.f32 %v5467, 0.0
        %v5724 = vmax.f32 %v5468, 0.0
        %v5725 = vmax.f32 %v5469, 0.0
        %v5726 = vmax.f32 %v5470, 0.0
        %v5727 = vmax.f32 %v5471, 0.0
        %v5728 = vmax.f32 %v5472, 0.0
        %v5729 = vmax.f32 %v5473, 0.0
        %v5730 = vmax.f32 %v5474, 0.0
        %v5731 = vmax.f32 %v5475, 0.0
        %v5732 = vmax.f32 %v5476, 0.0
        %v5733 = vmax.f32 %v5477, 0.0
        %v5734 = vmax.f32 %v5478, 0.0
        %v5735 = vmax.f32 %v5479, 0.0
        %v5736 = vmax.f32 %v5480, 0.0
        %v5737 = vmax.f32 %v5481, 0.0
        %v5738 = vmax.f32 %v5482, 0.0
        %v5739 = vmax.f32 %v5483, 0.0
        %v5740 = vmax.f32 %v5484, 0.0
        %v5741 = vmax.f32 %v5485, 0.0
        %v5742 = vmax.f32 %v5486, 0.0
        %v5743 = vmax.f32 %v5487, 0.0
        %v5744 = vmax.f32 %v5488, 0.0
        %v5745 = vmax.f32 %v5489, 0.0
        %v5746 = vmax.f32 %v5490, 0.0
        %v5747 = vmax.f32 %v5491, 0.0
        %v5748 = vmax.f32 %v5492, 0.0
        %v5749 = vmax.f32 %v5493, 0.0
        %v5750 = vmax.f32 %v5494, 0.0
        %v5751 = vmax.f32 %v5495, 0.0
        %v5752 = vmax.f32 %v5496, 0.0
        %v5753 = vmax.f32 %v5497, 0.0
        %v5754 = vmax.f32 %v5498, 0.0
        %v5755 = vmax.f32 %v5499, 0.0
        %v5756 = vmax.f32 %v5500, 0.0
        %v5757 = vmax.f32 %v5501, 0.0
        %v5758 = vmax.f32 %v5502, 0.0
        %v5759 = vmax.f32 %v5503, 0.0
        %v5760 = vmax.f32 %v5504, 0.0
        %v5761 = vmax.f32 %v5505, 0.0
        %v5762 = vmax.f32 %v5506, 0.0
        %v5763 = vmax.f32 %v5507, 0.0
        %v5764 = vmax.f32 %v5508, 0.0
        %v5765 = vmax.f32 %v5509, 0.0
        %v5766 = vmax.f32 %v5510, 0.0
        %v5767 = vmax.f32 %v5511, 0.0
        %v5768 = vmax.f32 %v5512, 0.0
        %v5769 = vmax.f32 %v5513, 0.0
        %v5770 = vmax.f32 %v5514, 0.0
        %v5771 = vmax.f32 %v5515, 0.0
        %v5772 = vmax.f32 %v5516, 0.0
        %v5773 = vmax.f32 %v5517, 0.0
        %v5774 = vmax.f32 %v5518, 0.0
        %v5775 = vmax.f32 %v5519, 0.0
        %v5776 = vmax.f32 %v5520, 0.0
        %v5777 = vmax.f32 %v5521, 0.0
        %v5778 = vmax.f32 %v5522, 0.0
        %v5779 = vmax.f32 %v5523, 0.0
        %v5780 = vmax.f32 %v5524, 0.0
        %v5781 = vmax.f32 %v5525, 0.0
        %v5782 = vmax.f32 %v5526, 0.0
        %v5783 = vmax.f32 %v5527, 0.0
        %v5784 = vmax.f32 %v5528, 0.0
        %v5785 = vmax.f32 %v5529, 0.0
        %v5786 = vmax.f32 %v5530, 0.0
        %v5787 = vmax.f32 %v5531, 0.0
        %v5788 = vmax.f32 %v5532, 0.0
        %v5789 = vmax.f32 %v5533, 0.0
        %v5790 = vmax.f32 %v5534, 0.0
        %v5791 = vmax.f32 %v5535, 0.0
        %v5792 = vmax.f32 %v5536, 0.0
        %v5793 = vmax.f32 %v5537, 0.0
        %v5794 = vmax.f32 %v5538, 0.0
        %v5795 = vmax.f32 %v5539, 0.0
        %v5796 = vmax.f32 %v5540, 0.0
        %v5797 = vmax.f32 %v5541, 0.0
        %v5798 = vmax.f32 %v5542, 0.0
        %v5799 = vmax.f32 %v5543, 0.0
        %v5800 = vmax.f32 %v5544, 0.0
        %v5801 = vmax.f32 %v5545, 0.0
        %v5802 = vmax.f32 %v5546, 0.0
        %v5803 = vmax.f32 %v5547, 0.0
        %v5804 = vmax.f32 %v5548, 0.0
        %v5805 = vmax.f32 %v5549, 0.0
        %v5806 = vmax.f32 %v5550, 0.0
        %v5807 = vmax.f32 %v5551, 0.0
        %v5808 = vmax.f32 %v5552, 0.0
        %v5809 = vmax.f32 %v5553, 0.0
        %v5810 = vmax.f32 %v5554, 0.0
        %v5811 = vmax.f32 %v5555, 0.0
        %v5812 = vmax.f32 %v5556, 0.0
        %v5813 = vmax.f32 %v5557, 0.0
        %v5814 = vmax.f32 %v5558, 0.0
        %v5815 = vmax.f32 %v5559, 0.0
        %v5816 = vmax.f32 %v5560, 0.0
        %v5817 = vmax.f32 %v5561, 0.0
        %v5818 = vmax.f32 %v5562, 0.0
        %v5819 = vmax.f32 %v5563, 0.0
        %v5820 = vmax.f32 %v5564, 0.0
        %v5821 = vmax.f32 %v5565, 0.0
        %v5822 = vmax.f32 %v5566, 0.0
        %v5823 = vmax.f32 %v5567, 0.0
        %v5824 = vmax.f32 %v5568, 0.0
        %v5825 = vmax.f32 %v5569, 0.0
        %v5826 = vmax.f32 %v5570, 0.0
        %v5827 = vmax.f32 %v5571, 0.0
        %v5828 = vmax.f32 %v5572, 0.0
        %v5829 = vmax.f32 %v5573, 0.0
        %v5830 = vmax.f32 %v5574, 0.0
        %v5831 = vmax.f32 %v5575, 0.0
        %v5832 = vmax.f32 %v5576, 0.0
        %v5833 = vmax.f32 %v5577, 0.0
        %v5834 = vmax.f32 %v5578, 0.0
        %v5835 = vmax.f32 %v5579, 0.0
        %v5836 = vmax.f32 %v5580, 0.0
        %v5837 = vmax.f32 %v5581, 0.0
        %v5838 = vmax.f32 %v5582, 0.0
        %v5839 = vmax.f32 %v5583, 0.0
        %v5840 = vmax.f32 %v5584, 0.0
        %v5841 = vmax.f32 %v5585, 0.0
        %v5842 = vmax.f32 %v5586, 0.0
        %v5843 = vmax.f32 %v5587, 0.0
        %v5844 = vmax.f32 %v5588, 0.0
        %v5845 = vmax.f32 %v5589, 0.0
        %v5846 = vmax.f32 %v5590, 0.0
        %v5847 = vmax.f32 %v5591, 0.0
        %v5848 = vmax.f32 %v5592, 0.0
        %v5849 = vmax.f32 %v5593, 0.0
        %v5850 = vmax.f32 %v5594, 0.0
        %v5851 = vmax.f32 %v5595, 0.0
        %v5852 = vmax.f32 %v5596, 0.0
        %v5853 = vmax.f32 %v5597, 0.0
        %v5854 = vmax.f32 %v5598, 0.0
        %v5855 = vmax.f32 %v5599, 0.0
        %v5856 = vmax.f32 %v5600, 0.0
        %v5857 = vmax.f32 %v5601, 0.0
        %v5858 = vmax.f32 %v5602, 0.0
        %v5859 = vmax.f32 %v5603, 0.0
        %v5860 = vmax.f32 %v5604, 0.0
        %v5861 = vmax.f32 %v5605, 0.0
        %v5862 = vmax.f32 %v5606, 0.0
        %v5863 = vmax.f32 %v5607, 0.0
        %v5864 = vmax.f32 %v5608, 0.0
        %v5865 = vmax.f32 %v5609, 0.0
        %v5866 = vmax.f32 %v5610, 0.0
        %v5867 = vmax.f32 %v5611, 0.0
        %v5868 = vmax.f32 %v5612, 0.0
        %v5869 = vmax.f32 %v5613, 0.0
        %v5870 = vmax.f32 %v5614, 0.0
        %v5871 = vmax.f32 %v5615, 0.0
        %v5872 = vmax.f32 %v5616, 0.0
        %v5873 = vmax.f32 %v5617, 0.0
        %v5874 = vmax.f32 %v5618, 0.0
        %v5875 = vmax.f32 %v5619, 0.0
        %v5876 = vmax.f32 %v5620, 0.0
        %v5877 = vmax.f32 %v5621, 0.0
        %v5878 = vmax.f32 %v5622, 0.0
        %v5879 = vmax.f32 %v5623, 0.0
        %v5880 = vmax.f32 %v5624, 0.0
        %v5881 = vmax.f32 %v5625, 0.0
        %v5882 = vmax.f32 %v5626, 0.0
        %v5883 = vmax.f32 %v5627, 0.0
        %v5884 = vmax.f32 %v5628, 0.0
        %v5885 = vmax.f32 %v5629, 0.0
        %v5886 = vmax.f32 %v5630, 0.0
        %v5887 = vmax.f32 %v5631, 0.0
        %v5888 = vmax.f32 %v5632, 0.0
        %v5889 = vmax.f32 %v5633, 0.0
        %v5890 = vmax.f32 %v5634, 0.0
        %v5891 = vmax.f32 %v5635, 0.0
        %v5892 = vmax.f32 %v5636, 0.0
        %v5893 = vmax.f32 %v5637, 0.0
        %v5894 = vmax.f32 %v5638, 0.0
        %v5895 = vmax.f32 %v5639, 0.0
        %v5896 = vmax.f32 %v5640, 0.0
        %v5897 = vmax.f32 %v5641, 0.0
        %v5898 = vmax.f32 %v5642, 0.0
        %v5899 = vmax.f32 %v5643, 0.0
        %v5900 = vmax.f32 %v5644, 0.0
        %v5901 = vmax.f32 %v5645, 0.0
        %v5902 = vmax.f32 %v5646, 0.0
        %v5903 = vmax.f32 %v5647, 0.0
        %v5904 = vmax.f32 %v5648, 0.0
        %v5905 = vmax.f32 %v5649, 0.0
        %v5906 = vmax.f32 %v5650, 0.0
        %v5907 = vmax.f32 %v5651, 0.0
        %v5908 = vmax.f32 %v5652, 0.0
        %v5909 = vmax.f32 %v5653, 0.0
        %v5910 = vmax.f32 %v5654, 0.0
        %v5911 = vmax.f32 %v5655, 0.0
        %v5912 = vmax.f32 %v5656, 0.0
        %v5913 = vmax.f32 %v5657, 0.0
        %v5914 = vmax.f32 %v5658, 0.0
        %v5915 = vmax.f32 %v5659, 0.0
        %v5916 = vmax.f32 %v5660, 0.0
        %v5917 = vmax.f32 %v5661, 0.0
        %v5918 = vmax.f32 %v5662, 0.0
        %v5919 = vmax.f32 %v5663, 0.0
        %v5920 = vmax.f32 %v5664, 0.0
        %v5921 = vmax.f32 %v5665, 0.0
        %v5922 = vld [vmem:[#allocation2] sm:$0xff]
        %v5923 = vld [vmem:[#allocation2 + $0x8] sm:$0xff]
        %v5924 = vld [vmem:[#allocation2 + $0x10] sm:$0xff]
        %v5925 = vld [vmem:[#allocation2 + $0x18] sm:$0xff]
        %v5926 = vld [vmem:[#allocation2 + $0x20] sm:$0xff]
        %v5927 = vld [vmem:[#allocation2 + $0x28] sm:$0xff]
        %v5928 = vld [vmem:[#allocation2 + $0x30] sm:$0xff]
        %v5929 = vld [vmem:[#allocation2 + $0x38] sm:$0xff]
        %v5930 = vld [vmem:[#allocation2 + $0x40] sm:$0xff]
        %v5931 = vld [vmem:[#allocation2 + $0x48] sm:$0xff]
        %v5932 = vld [vmem:[#allocation2 + $0x50] sm:$0xff]
        %v5933 = vld [vmem:[#allocation2 + $0x58] sm:$0xff]
        %v5934 = vld [vmem:[#allocation2 + $0x60] sm:$0xff]
        %v5935 = vld [vmem:[#allocation2 + $0x68] sm:$0xff]
        %v5936 = vld [vmem:[#allocation2 + $0x70] sm:$0xff]
        %v5937 = vld [vmem:[#allocation2 + $0x78] sm:$0xff]
        %v5938 = vld [vmem:[#allocation2 + $0x80] sm:$0xff]
        %v5939 = vld [vmem:[#allocation2 + $0x88] sm:$0xff]
        %v5940 = vld [vmem:[#allocation2 + $0x90] sm:$0xff]
        %v5941 = vld [vmem:[#allocation2 + $0x98] sm:$0xff]
        %v5942 = vld [vmem:[#allocation2 + $0xa0] sm:$0xff]
        %v5943 = vld [vmem:[#allocation2 + $0xa8] sm:$0xff]
        %v5944 = vld [vmem:[#allocation2 + $0xb0] sm:$0xff]
        %v5945 = vld [vmem:[#allocation2 + $0xb8] sm:$0xff]
        %v5946 = vld [vmem:[#allocation2 + $0xc0] sm:$0xff]
        %v5947 = vld [vmem:[#allocation2 + $0xc8] sm:$0xff]
        %v5948 = vld [vmem:[#allocation2 + $0xd0] sm:$0xff]
        %v5949 = vld [vmem:[#allocation2 + $0xd8] sm:$0xff]
        %v5950 = vld [vmem:[#allocation2 + $0xe0] sm:$0xff]
        %v5951 = vld [vmem:[#allocation2 + $0xe8] sm:$0xff]
        %v5952 = vld [vmem:[#allocation2 + $0xf0] sm:$0xff]
        %v5953 = vld [vmem:[#allocation2 + $0xf8] sm:$0xff]
        %v5954 = vld [vmem:[#allocation2 + $0x100] sm:$0xff]
        %v5955 = vld [vmem:[#allocation2 + $0x108] sm:$0xff]
        %v5956 = vld [vmem:[#allocation2 + $0x110] sm:$0xff]
        %v5957 = vld [vmem:[#allocation2 + $0x118] sm:$0xff]
        %v5958 = vld [vmem:[#allocation2 + $0x120] sm:$0xff]
        %v5959 = vld [vmem:[#allocation2 + $0x128] sm:$0xff]
        %v5960 = vld [vmem:[#allocation2 + $0x130] sm:$0xff]
        %v5961 = vld [vmem:[#allocation2 + $0x138] sm:$0xff]
        %v5962 = vld [vmem:[#allocation2 + $0x140] sm:$0xff]
        %v5963 = vld [vmem:[#allocation2 + $0x148] sm:$0xff]
        %v5964 = vld [vmem:[#allocation2 + $0x150] sm:$0xff]
        %v5965 = vld [vmem:[#allocation2 + $0x158] sm:$0xff]
        %v5966 = vld [vmem:[#allocation2 + $0x160] sm:$0xff]
        %v5967 = vld [vmem:[#allocation2 + $0x168] sm:$0xff]
        %v5968 = vld [vmem:[#allocation2 + $0x170] sm:$0xff]
        %v5969 = vld [vmem:[#allocation2 + $0x178] sm:$0xff]
        %v5970 = vld [vmem:[#allocation2 + $0x180] sm:$0xff]
        %v5971 = vld [vmem:[#allocation2 + $0x188] sm:$0xff]
        %v5972 = vld [vmem:[#allocation2 + $0x190] sm:$0xff]
        %v5973 = vld [vmem:[#allocation2 + $0x198] sm:$0xff]
        %v5974 = vld [vmem:[#allocation2 + $0x1a0] sm:$0xff]
        %v5975 = vld [vmem:[#allocation2 + $0x1a8] sm:$0xff]
        %v5976 = vld [vmem:[#allocation2 + $0x1b0] sm:$0xff]
        %v5977 = vld [vmem:[#allocation2 + $0x1b8] sm:$0xff]
        %v5978 = vld [vmem:[#allocation2 + $0x1c0] sm:$0xff]
        %v5979 = vld [vmem:[#allocation2 + $0x1c8] sm:$0xff]
        %v5980 = vld [vmem:[#allocation2 + $0x1d0] sm:$0xff]
        %v5981 = vld [vmem:[#allocation2 + $0x1d8] sm:$0xff]
        %v5982 = vld [vmem:[#allocation2 + $0x1e0] sm:$0xff]
        %v5983 = vld [vmem:[#allocation2 + $0x1e8] sm:$0xff]
        %v5984 = vld [vmem:[#allocation2 + $0x1f0] sm:$0xff]
        %v5985 = vld [vmem:[#allocation2 + $0x1f8] sm:$0xff]
        %v5986 = vpack.c.bf16 %v5674, %v5666
        %v5987 = vpack.c.bf16 %v5675, %v5667
        %v5988 = vpack.c.bf16 %v5676, %v5668
        %v5989 = vpack.c.bf16 %v5677, %v5669
        %v5990 = vpack.c.bf16 %v5678, %v5670
        %v5991 = vpack.c.bf16 %v5679, %v5671
        %v5992 = vpack.c.bf16 %v5680, %v5672
        %v5993 = vpack.c.bf16 %v5681, %v5673
        %v5994 = vpack.c.bf16 %v5690, %v5682
        %v5995 = vpack.c.bf16 %v5691, %v5683
        %v5996 = vpack.c.bf16 %v5692, %v5684
        %v5997 = vpack.c.bf16 %v5693, %v5685
        %v5998 = vpack.c.bf16 %v5694, %v5686
        %v5999 = vpack.c.bf16 %v5695, %v5687
        %v6000 = vpack.c.bf16 %v5696, %v5688
        %v6001 = vpack.c.bf16 %v5697, %v5689
        %v6002 = vpack.c.bf16 %v5706, %v5698
        %v6003 = vpack.c.bf16 %v5707, %v5699
        %v6004 = vpack.c.bf16 %v5708, %v5700
        %v6005 = vpack.c.bf16 %v5709, %v5701
        %v6006 = vpack.c.bf16 %v5710, %v5702
        %v6007 = vpack.c.bf16 %v5711, %v5703
        %v6008 = vpack.c.bf16 %v5712, %v5704
        %v6009 = vpack.c.bf16 %v5713, %v5705
        %v6010 = vpack.c.bf16 %v5722, %v5714
        %v6011 = vpack.c.bf16 %v5723, %v5715
        %v6012 = vpack.c.bf16 %v5724, %v5716
        %v6013 = vpack.c.bf16 %v5725, %v5717
        %v6014 = vpack.c.bf16 %v5726, %v5718
        %v6015 = vpack.c.bf16 %v5727, %v5719
        %v6016 = vpack.c.bf16 %v5728, %v5720
        %v6017 = vpack.c.bf16 %v5729, %v5721
        %v6018 = vpack.c.bf16 %v5738, %v5730
        %v6019 = vpack.c.bf16 %v5739, %v5731
        %v6020 = vpack.c.bf16 %v5740, %v5732
        %v6021 = vpack.c.bf16 %v5741, %v5733
        %v6022 = vpack.c.bf16 %v5742, %v5734
        %v6023 = vpack.c.bf16 %v5743, %v5735
        %v6024 = vpack.c.bf16 %v5744, %v5736
        %v6025 = vpack.c.bf16 %v5745, %v5737
        %v6026 = vpack.c.bf16 %v5754, %v5746
        %v6027 = vpack.c.bf16 %v5755, %v5747
        %v6028 = vpack.c.bf16 %v5756, %v5748
        %v6029 = vpack.c.bf16 %v5757, %v5749
        %v6030 = vpack.c.bf16 %v5758, %v5750
        %v6031 = vpack.c.bf16 %v5759, %v5751
        %v6032 = vpack.c.bf16 %v5760, %v5752
        %v6033 = vpack.c.bf16 %v5761, %v5753
        %v6034 = vpack.c.bf16 %v5770, %v5762
        %v6035 = vpack.c.bf16 %v5771, %v5763
        %v6036 = vpack.c.bf16 %v5772, %v5764
        %v6037 = vpack.c.bf16 %v5773, %v5765
        %v6038 = vpack.c.bf16 %v5774, %v5766
        %v6039 = vpack.c.bf16 %v5775, %v5767
        %v6040 = vpack.c.bf16 %v5776, %v5768
        %v6041 = vpack.c.bf16 %v5777, %v5769
        %v6042 = vpack.c.bf16 %v5786, %v5778
        %v6043 = vpack.c.bf16 %v5787, %v5779
        %v6044 = vpack.c.bf16 %v5788, %v5780
        %v6045 = vpack.c.bf16 %v5789, %v5781
        %v6046 = vpack.c.bf16 %v5790, %v5782
        %v6047 = vpack.c.bf16 %v5791, %v5783
        %v6048 = vpack.c.bf16 %v5792, %v5784
        %v6049 = vpack.c.bf16 %v5793, %v5785
        %v6050 = vpack.c.bf16 %v5802, %v5794
        %v6051 = vpack.c.bf16 %v5803, %v5795
        %v6052 = vpack.c.bf16 %v5804, %v5796
        %v6053 = vpack.c.bf16 %v5805, %v5797
        %v6054 = vpack.c.bf16 %v5806, %v5798
        %v6055 = vpack.c.bf16 %v5807, %v5799
        %v6056 = vpack.c.bf16 %v5808, %v5800
        %v6057 = vpack.c.bf16 %v5809, %v5801
        %v6058 = vpack.c.bf16 %v5818, %v5810
        %v6059 = vpack.c.bf16 %v5819, %v5811
        %v6060 = vpack.c.bf16 %v5820, %v5812
        %v6061 = vpack.c.bf16 %v5821, %v5813
        %v6062 = vpack.c.bf16 %v5822, %v5814
        %v6063 = vpack.c.bf16 %v5823, %v5815
        %v6064 = vpack.c.bf16 %v5824, %v5816
        %v6065 = vpack.c.bf16 %v5825, %v5817
        %v6066 = vpack.c.bf16 %v5834, %v5826
        %v6067 = vpack.c.bf16 %v5835, %v5827
        %v6068 = vpack.c.bf16 %v5836, %v5828
        %v6069 = vpack.c.bf16 %v5837, %v5829
        %v6070 = vpack.c.bf16 %v5838, %v5830
        %v6071 = vpack.c.bf16 %v5839, %v5831
        %v6072 = vpack.c.bf16 %v5840, %v5832
        %v6073 = vpack.c.bf16 %v5841, %v5833
        %v6074 = vpack.c.bf16 %v5850, %v5842
        %v6075 = vpack.c.bf16 %v5851, %v5843
        %v6076 = vpack.c.bf16 %v5852, %v5844
        %v6077 = vpack.c.bf16 %v5853, %v5845
        %v6078 = vpack.c.bf16 %v5854, %v5846
        %v6079 = vpack.c.bf16 %v5855, %v5847
        %v6080 = vpack.c.bf16 %v5856, %v5848
        %v6081 = vpack.c.bf16 %v5857, %v5849
        %v6082 = vpack.c.bf16 %v5866, %v5858
        %v6083 = vpack.c.bf16 %v5867, %v5859
        %v6084 = vpack.c.bf16 %v5868, %v5860
        %v6085 = vpack.c.bf16 %v5869, %v5861
        %v6086 = vpack.c.bf16 %v5870, %v5862
        %v6087 = vpack.c.bf16 %v5871, %v5863
        %v6088 = vpack.c.bf16 %v5872, %v5864
        %v6089 = vpack.c.bf16 %v5873, %v5865
        %v6090 = vpack.c.bf16 %v5882, %v5874
        %v6091 = vpack.c.bf16 %v5883, %v5875
        %v6092 = vpack.c.bf16 %v5884, %v5876
        %v6093 = vpack.c.bf16 %v5885, %v5877
        %v6094 = vpack.c.bf16 %v5886, %v5878
        %v6095 = vpack.c.bf16 %v5887, %v5879
        %v6096 = vpack.c.bf16 %v5888, %v5880
        %v6097 = vpack.c.bf16 %v5889, %v5881
        %v6098 = vpack.c.bf16 %v5898, %v5890
        %v6099 = vpack.c.bf16 %v5899, %v5891
        %v6100 = vpack.c.bf16 %v5900, %v5892
        %v6101 = vpack.c.bf16 %v5901, %v5893
        %v6102 = vpack.c.bf16 %v5902, %v5894
        %v6103 = vpack.c.bf16 %v5903, %v5895
        %v6104 = vpack.c.bf16 %v5904, %v5896
        %v6105 = vpack.c.bf16 %v5905, %v5897
        %v6106 = vpack.c.bf16 %v5914, %v5906
        %v6107 = vpack.c.bf16 %v5915, %v5907
        %v6108 = vpack.c.bf16 %v5916, %v5908
        %v6109 = vpack.c.bf16 %v5917, %v5909
        %v6110 = vpack.c.bf16 %v5918, %v5910
        %v6111 = vpack.c.bf16 %v5919, %v5911
        %v6112 = vpack.c.bf16 %v5920, %v5912
        %v6113 = vpack.c.bf16 %v5921, %v5913
        %v6114 = vld [vmem:[%s303] sm:$0xff]
        %v6115 = vld [vmem:[%s303 + $0x8] sm:$0xff]
        %v6116 = vld [vmem:[%s303 + $0x10] sm:$0xff]
        %v6117 = vld [vmem:[%s303 + $0x18] sm:$0xff]
        %v6118 = vld [vmem:[%s303 + $0x20] sm:$0xff]
        %v6119 = vld [vmem:[%s303 + $0x28] sm:$0xff]
        %v6120 = vld [vmem:[%s303 + $0x30] sm:$0xff]
        %v6121 = vld [vmem:[%s303 + $0x38] sm:$0xff]
        %v6122 = vld [vmem:[%s303 + $0x40] sm:$0xff]
        %v6123 = vld [vmem:[%s303 + $0x48] sm:$0xff]
        %v6124 = vld [vmem:[%s303 + $0x50] sm:$0xff]
        %v6125 = vld [vmem:[%s303 + $0x58] sm:$0xff]
        %v6126 = vld [vmem:[%s303 + $0x60] sm:$0xff]
        %v6127 = vld [vmem:[%s303 + $0x68] sm:$0xff]
        %v6128 = vld [vmem:[%s303 + $0x70] sm:$0xff]
        %v6129 = vld [vmem:[%s303 + $0x78] sm:$0xff]
        %v6130 = vld [vmem:[%s303 + $0x80] sm:$0xff]
        %v6131 = vld [vmem:[%s303 + $0x88] sm:$0xff]
        %v6132 = vld [vmem:[%s303 + $0x90] sm:$0xff]
        %v6133 = vld [vmem:[%s303 + $0x98] sm:$0xff]
        %v6134 = vld [vmem:[%s303 + $0xa0] sm:$0xff]
        %v6135 = vld [vmem:[%s303 + $0xa8] sm:$0xff]
        %v6136 = vld [vmem:[%s303 + $0xb0] sm:$0xff]
        %v6137 = vld [vmem:[%s303 + $0xb8] sm:$0xff]
        %v6138 = vld [vmem:[%s303 + $0xc0] sm:$0xff]
        %v6139 = vld [vmem:[%s303 + $0xc8] sm:$0xff]
        %v6140 = vld [vmem:[%s303 + $0xd0] sm:$0xff]
        %v6141 = vld [vmem:[%s303 + $0xd8] sm:$0xff]
        %v6142 = vld [vmem:[%s303 + $0xe0] sm:$0xff]
        %v6143 = vld [vmem:[%s303 + $0xe8] sm:$0xff]
        %v6144 = vld [vmem:[%s303 + $0xf0] sm:$0xff]
        %v6145 = vld [vmem:[%s303 + $0xf8] sm:$0xff]
        %v6146 = vld [vmem:[%s303 + $0x100] sm:$0xff]
        %v6147 = vld [vmem:[%s303 + $0x108] sm:$0xff]
        %v6148 = vld [vmem:[%s303 + $0x110] sm:$0xff]
        %v6149 = vld [vmem:[%s303 + $0x118] sm:$0xff]
        %v6150 = vld [vmem:[%s303 + $0x120] sm:$0xff]
        %v6151 = vld [vmem:[%s303 + $0x128] sm:$0xff]
        %v6152 = vld [vmem:[%s303 + $0x130] sm:$0xff]
        %v6153 = vld [vmem:[%s303 + $0x138] sm:$0xff]
        %v6154 = vld [vmem:[%s303 + $0x140] sm:$0xff]
        %v6155 = vld [vmem:[%s303 + $0x148] sm:$0xff]
        %v6156 = vld [vmem:[%s303 + $0x150] sm:$0xff]
        %v6157 = vld [vmem:[%s303 + $0x158] sm:$0xff]
        %v6158 = vld [vmem:[%s303 + $0x160] sm:$0xff]
        %v6159 = vld [vmem:[%s303 + $0x168] sm:$0xff]
        %v6160 = vld [vmem:[%s303 + $0x170] sm:$0xff]
        %v6161 = vld [vmem:[%s303 + $0x178] sm:$0xff]
        %v6162 = vld [vmem:[%s303 + $0x180] sm:$0xff]
        %v6163 = vld [vmem:[%s303 + $0x188] sm:$0xff]
        %v6164 = vld [vmem:[%s303 + $0x190] sm:$0xff]
        %v6165 = vld [vmem:[%s303 + $0x198] sm:$0xff]
        %v6166 = vld [vmem:[%s303 + $0x1a0] sm:$0xff]
        %v6167 = vld [vmem:[%s303 + $0x1a8] sm:$0xff]
        %v6168 = vld [vmem:[%s303 + $0x1b0] sm:$0xff]
        %v6169 = vld [vmem:[%s303 + $0x1b8] sm:$0xff]
        %v6170 = vld [vmem:[%s303 + $0x1c0] sm:$0xff]
        %v6171 = vld [vmem:[%s303 + $0x1c8] sm:$0xff]
        %v6172 = vld [vmem:[%s303 + $0x1d0] sm:$0xff]
        %v6173 = vld [vmem:[%s303 + $0x1d8] sm:$0xff]
        %v6174 = vld [vmem:[%s303 + $0x1e0] sm:$0xff]
        %v6175 = vld [vmem:[%s303 + $0x1e8] sm:$0xff]
        %v6176 = vld [vmem:[%s303 + $0x1f0] sm:$0xff]
        %v6177 = vld [vmem:[%s303 + $0x1f8] sm:$0xff]
        %v6178 = vld [vmem:[%s303 + $0x200] sm:$0xff]
        %v6179 = vld [vmem:[%s303 + $0x208] sm:$0xff]
        %v6180 = vld [vmem:[%s303 + $0x210] sm:$0xff]
        %v6181 = vld [vmem:[%s303 + $0x218] sm:$0xff]
        %v6182 = vld [vmem:[%s303 + $0x220] sm:$0xff]
        %v6183 = vld [vmem:[%s303 + $0x228] sm:$0xff]
        %v6184 = vld [vmem:[%s303 + $0x230] sm:$0xff]
        %v6185 = vld [vmem:[%s303 + $0x238] sm:$0xff]
        %v6186 = vld [vmem:[%s303 + $0x240] sm:$0xff]
        %v6187 = vld [vmem:[%s303 + $0x248] sm:$0xff]
        %v6188 = vld [vmem:[%s303 + $0x250] sm:$0xff]
        %v6189 = vld [vmem:[%s303 + $0x258] sm:$0xff]
        %v6190 = vld [vmem:[%s303 + $0x260] sm:$0xff]
        %v6191 = vld [vmem:[%s303 + $0x268] sm:$0xff]
        %v6192 = vld [vmem:[%s303 + $0x270] sm:$0xff]
        %v6193 = vld [vmem:[%s303 + $0x278] sm:$0xff]
        %v6194 = vld [vmem:[%s303 + $0x280] sm:$0xff]
        %v6195 = vld [vmem:[%s303 + $0x288] sm:$0xff]
        %v6196 = vld [vmem:[%s303 + $0x290] sm:$0xff]
        %v6197 = vld [vmem:[%s303 + $0x298] sm:$0xff]
        %v6198 = vld [vmem:[%s303 + $0x2a0] sm:$0xff]
        %v6199 = vld [vmem:[%s303 + $0x2a8] sm:$0xff]
        %v6200 = vld [vmem:[%s303 + $0x2b0] sm:$0xff]
        %v6201 = vld [vmem:[%s303 + $0x2b8] sm:$0xff]
        %v6202 = vld [vmem:[%s303 + $0x2c0] sm:$0xff]
        %v6203 = vld [vmem:[%s303 + $0x2c8] sm:$0xff]
        %v6204 = vld [vmem:[%s303 + $0x2d0] sm:$0xff]
        %v6205 = vld [vmem:[%s303 + $0x2d8] sm:$0xff]
        %v6206 = vld [vmem:[%s303 + $0x2e0] sm:$0xff]
        %v6207 = vld [vmem:[%s303 + $0x2e8] sm:$0xff]
        %v6208 = vld [vmem:[%s303 + $0x2f0] sm:$0xff]
        %v6209 = vld [vmem:[%s303 + $0x2f8] sm:$0xff]
        %v6210 = vld [vmem:[%s303 + $0x300] sm:$0xff]
        %v6211 = vld [vmem:[%s303 + $0x308] sm:$0xff]
        %v6212 = vld [vmem:[%s303 + $0x310] sm:$0xff]
        %v6213 = vld [vmem:[%s303 + $0x318] sm:$0xff]
        %v6214 = vld [vmem:[%s303 + $0x320] sm:$0xff]
        %v6215 = vld [vmem:[%s303 + $0x328] sm:$0xff]
        %v6216 = vld [vmem:[%s303 + $0x330] sm:$0xff]
        %v6217 = vld [vmem:[%s303 + $0x338] sm:$0xff]
        %v6218 = vld [vmem:[%s303 + $0x340] sm:$0xff]
        %v6219 = vld [vmem:[%s303 + $0x348] sm:$0xff]
        %v6220 = vld [vmem:[%s303 + $0x350] sm:$0xff]
        %v6221 = vld [vmem:[%s303 + $0x358] sm:$0xff]
        %v6222 = vld [vmem:[%s303 + $0x360] sm:$0xff]
        %v6223 = vld [vmem:[%s303 + $0x368] sm:$0xff]
        %v6224 = vld [vmem:[%s303 + $0x370] sm:$0xff]
        %v6225 = vld [vmem:[%s303 + $0x378] sm:$0xff]
        %v6226 = vld [vmem:[%s303 + $0x380] sm:$0xff]
        %v6227 = vld [vmem:[%s303 + $0x388] sm:$0xff]
        %v6228 = vld [vmem:[%s303 + $0x390] sm:$0xff]
        %v6229 = vld [vmem:[%s303 + $0x398] sm:$0xff]
        %v6230 = vld [vmem:[%s303 + $0x3a0] sm:$0xff]
        %v6231 = vld [vmem:[%s303 + $0x3a8] sm:$0xff]
        %v6232 = vld [vmem:[%s303 + $0x3b0] sm:$0xff]
        %v6233 = vld [vmem:[%s303 + $0x3b8] sm:$0xff]
        %v6234 = vld [vmem:[%s303 + $0x3c0] sm:$0xff]
        %v6235 = vld [vmem:[%s303 + $0x3c8] sm:$0xff]
        %v6236 = vld [vmem:[%s303 + $0x3d0] sm:$0xff]
        %v6237 = vld [vmem:[%s303 + $0x3d8] sm:$0xff]
        %v6238 = vld [vmem:[%s303 + $0x3e0] sm:$0xff]
        %v6239 = vld [vmem:[%s303 + $0x3e8] sm:$0xff]
        %v6240 = vld [vmem:[%s303 + $0x3f0] sm:$0xff]
        %v6241 = vld [vmem:[%s303 + $0x3f8] sm:$0xff]
        %v6370 = vunpack.c.l.b16 %v6114
        %v6371 = vunpack.c.h.b16 %v6114
        %v6372 = vunpack.c.l.b16 %v6115
        %v6373 = vunpack.c.h.b16 %v6115
        %v6374 = vunpack.c.l.b16 %v6116
        %v6375 = vunpack.c.h.b16 %v6116
        %v6376 = vunpack.c.l.b16 %v6117
        %v6377 = vunpack.c.h.b16 %v6117
        %v6378 = vunpack.c.l.b16 %v6118
        %v6379 = vunpack.c.h.b16 %v6118
        %v6380 = vunpack.c.l.b16 %v6119
        %v6381 = vunpack.c.h.b16 %v6119
        %v6382 = vunpack.c.l.b16 %v6120
        %v6383 = vunpack.c.h.b16 %v6120
        %v6384 = vunpack.c.l.b16 %v6121
        %v6385 = vunpack.c.h.b16 %v6121
        %v6386 = vunpack.c.l.b16 %v6122
        %v6387 = vunpack.c.h.b16 %v6122
        %v6388 = vunpack.c.l.b16 %v6123
        %v6389 = vunpack.c.h.b16 %v6123
        %v6390 = vunpack.c.l.b16 %v6124
        %v6391 = vunpack.c.h.b16 %v6124
        %v6392 = vunpack.c.l.b16 %v6125
        %v6393 = vunpack.c.h.b16 %v6125
        %v6394 = vunpack.c.l.b16 %v6126
        %v6395 = vunpack.c.h.b16 %v6126
        %v6396 = vunpack.c.l.b16 %v6127
        %v6397 = vunpack.c.h.b16 %v6127
        %v6398 = vunpack.c.l.b16 %v6128
        %v6399 = vunpack.c.h.b16 %v6128
        %v6400 = vunpack.c.l.b16 %v6129
        %v6401 = vunpack.c.h.b16 %v6129
        %v6402 = vunpack.c.l.b16 %v6130
        %v6403 = vunpack.c.h.b16 %v6130
        %v6404 = vunpack.c.l.b16 %v6131
        %v6405 = vunpack.c.h.b16 %v6131
        %v6406 = vunpack.c.l.b16 %v6132
        %v6407 = vunpack.c.h.b16 %v6132
        %v6408 = vunpack.c.l.b16 %v6133
        %v6409 = vunpack.c.h.b16 %v6133
        %v6410 = vunpack.c.l.b16 %v6134
        %v6411 = vunpack.c.h.b16 %v6134
        %v6412 = vunpack.c.l.b16 %v6135
        %v6413 = vunpack.c.h.b16 %v6135
        %v6414 = vunpack.c.l.b16 %v6136
        %v6415 = vunpack.c.h.b16 %v6136
        %v6416 = vunpack.c.l.b16 %v6137
        %v6417 = vunpack.c.h.b16 %v6137
        %v6418 = vunpack.c.l.b16 %v6138
        %v6419 = vunpack.c.h.b16 %v6138
        %v6420 = vunpack.c.l.b16 %v6139
        %v6421 = vunpack.c.h.b16 %v6139
        %v6422 = vunpack.c.l.b16 %v6140
        %v6423 = vunpack.c.h.b16 %v6140
        %v6424 = vunpack.c.l.b16 %v6141
        %v6425 = vunpack.c.h.b16 %v6141
        %v6426 = vunpack.c.l.b16 %v6142
        %v6427 = vunpack.c.h.b16 %v6142
        %v6428 = vunpack.c.l.b16 %v6143
        %v6429 = vunpack.c.h.b16 %v6143
        %v6430 = vunpack.c.l.b16 %v6144
        %v6431 = vunpack.c.h.b16 %v6144
        %v6432 = vunpack.c.l.b16 %v6145
        %v6433 = vunpack.c.h.b16 %v6145
        %v6434 = vunpack.c.l.b16 %v6146
        %v6435 = vunpack.c.h.b16 %v6146
        %v6436 = vunpack.c.l.b16 %v6147
        %v6437 = vunpack.c.h.b16 %v6147
        %v6438 = vunpack.c.l.b16 %v6148
        %v6439 = vunpack.c.h.b16 %v6148
        %v6440 = vunpack.c.l.b16 %v6149
        %v6441 = vunpack.c.h.b16 %v6149
        %v6442 = vunpack.c.l.b16 %v6150
        %v6443 = vunpack.c.h.b16 %v6150
        %v6444 = vunpack.c.l.b16 %v6151
        %v6445 = vunpack.c.h.b16 %v6151
        %v6446 = vunpack.c.l.b16 %v6152
        %v6447 = vunpack.c.h.b16 %v6152
        %v6448 = vunpack.c.l.b16 %v6153
        %v6449 = vunpack.c.h.b16 %v6153
        %v6450 = vunpack.c.l.b16 %v6154
        %v6451 = vunpack.c.h.b16 %v6154
        %v6452 = vunpack.c.l.b16 %v6155
        %v6453 = vunpack.c.h.b16 %v6155
        %v6454 = vunpack.c.l.b16 %v6156
        %v6455 = vunpack.c.h.b16 %v6156
        %v6456 = vunpack.c.l.b16 %v6157
        %v6457 = vunpack.c.h.b16 %v6157
        %v6458 = vunpack.c.l.b16 %v6158
        %v6459 = vunpack.c.h.b16 %v6158
        %v6460 = vunpack.c.l.b16 %v6159
        %v6461 = vunpack.c.h.b16 %v6159
        %v6462 = vunpack.c.l.b16 %v6160
        %v6463 = vunpack.c.h.b16 %v6160
        %v6464 = vunpack.c.l.b16 %v6161
        %v6465 = vunpack.c.h.b16 %v6161
        %v6466 = vunpack.c.l.b16 %v6162
        %v6467 = vunpack.c.h.b16 %v6162
        %v6468 = vunpack.c.l.b16 %v6163
        %v6469 = vunpack.c.h.b16 %v6163
        %v6470 = vunpack.c.l.b16 %v6164
        %v6471 = vunpack.c.h.b16 %v6164
        %v6472 = vunpack.c.l.b16 %v6165
        %v6473 = vunpack.c.h.b16 %v6165
        %v6474 = vunpack.c.l.b16 %v6166
        %v6475 = vunpack.c.h.b16 %v6166
        %v6476 = vunpack.c.l.b16 %v6167
        %v6477 = vunpack.c.h.b16 %v6167
        %v6478 = vunpack.c.l.b16 %v6168
        %v6479 = vunpack.c.h.b16 %v6168
        %v6480 = vunpack.c.l.b16 %v6169
        %v6481 = vunpack.c.h.b16 %v6169
        %v6482 = vunpack.c.l.b16 %v6170
        %v6483 = vunpack.c.h.b16 %v6170
        %v6484 = vunpack.c.l.b16 %v6171
        %v6485 = vunpack.c.h.b16 %v6171
        %v6486 = vunpack.c.l.b16 %v6172
        %v6487 = vunpack.c.h.b16 %v6172
        %v6488 = vunpack.c.l.b16 %v6173
        %v6489 = vunpack.c.h.b16 %v6173
        %v6490 = vunpack.c.l.b16 %v6174
        %v6491 = vunpack.c.h.b16 %v6174
        %v6492 = vunpack.c.l.b16 %v6175
        %v6493 = vunpack.c.h.b16 %v6175
        %v6494 = vunpack.c.l.b16 %v6176
        %v6495 = vunpack.c.h.b16 %v6176
        %v6496 = vunpack.c.l.b16 %v6177
        %v6497 = vunpack.c.h.b16 %v6177
        %v6498 = vunpack.c.l.b16 %v6178
        %v6499 = vunpack.c.h.b16 %v6178
        %v6500 = vunpack.c.l.b16 %v6179
        %v6501 = vunpack.c.h.b16 %v6179
        %v6502 = vunpack.c.l.b16 %v6180
        %v6503 = vunpack.c.h.b16 %v6180
        %v6504 = vunpack.c.l.b16 %v6181
        %v6505 = vunpack.c.h.b16 %v6181
        %v6506 = vunpack.c.l.b16 %v6182
        %v6507 = vunpack.c.h.b16 %v6182
        %v6508 = vunpack.c.l.b16 %v6183
        %v6509 = vunpack.c.h.b16 %v6183
        %v6510 = vunpack.c.l.b16 %v6184
        %v6511 = vunpack.c.h.b16 %v6184
        %v6512 = vunpack.c.l.b16 %v6185
        %v6513 = vunpack.c.h.b16 %v6185
        %v6514 = vunpack.c.l.b16 %v6186
        %v6515 = vunpack.c.h.b16 %v6186
        %v6516 = vunpack.c.l.b16 %v6187
        %v6517 = vunpack.c.h.b16 %v6187
        %v6518 = vunpack.c.l.b16 %v6188
        %v6519 = vunpack.c.h.b16 %v6188
        %v6520 = vunpack.c.l.b16 %v6189
        %v6521 = vunpack.c.h.b16 %v6189
        %v6522 = vunpack.c.l.b16 %v6190
        %v6523 = vunpack.c.h.b16 %v6190
        %v6524 = vunpack.c.l.b16 %v6191
        %v6525 = vunpack.c.h.b16 %v6191
        %v6526 = vunpack.c.l.b16 %v6192
        %v6527 = vunpack.c.h.b16 %v6192
        %v6528 = vunpack.c.l.b16 %v6193
        %v6529 = vunpack.c.h.b16 %v6193
        %v6530 = vunpack.c.l.b16 %v6194
        %v6531 = vunpack.c.h.b16 %v6194
        %v6532 = vunpack.c.l.b16 %v6195
        %v6533 = vunpack.c.h.b16 %v6195
        %v6534 = vunpack.c.l.b16 %v6196
        %v6535 = vunpack.c.h.b16 %v6196
        %v6536 = vunpack.c.l.b16 %v6197
        %v6537 = vunpack.c.h.b16 %v6197
        %v6538 = vunpack.c.l.b16 %v6198
        %v6539 = vunpack.c.h.b16 %v6198
        %v6540 = vunpack.c.l.b16 %v6199
        %v6541 = vunpack.c.h.b16 %v6199
        %v6542 = vunpack.c.l.b16 %v6200
        %v6543 = vunpack.c.h.b16 %v6200
        %v6544 = vunpack.c.l.b16 %v6201
        %v6545 = vunpack.c.h.b16 %v6201
        %v6546 = vunpack.c.l.b16 %v6202
        %v6547 = vunpack.c.h.b16 %v6202
        %v6548 = vunpack.c.l.b16 %v6203
        %v6549 = vunpack.c.h.b16 %v6203
        %v6550 = vunpack.c.l.b16 %v6204
        %v6551 = vunpack.c.h.b16 %v6204
        %v6552 = vunpack.c.l.b16 %v6205
        %v6553 = vunpack.c.h.b16 %v6205
        %v6554 = vunpack.c.l.b16 %v6206
        %v6555 = vunpack.c.h.b16 %v6206
        %v6556 = vunpack.c.l.b16 %v6207
        %v6557 = vunpack.c.h.b16 %v6207
        %v6558 = vunpack.c.l.b16 %v6208
        %v6559 = vunpack.c.h.b16 %v6208
        %v6560 = vunpack.c.l.b16 %v6209
        %v6561 = vunpack.c.h.b16 %v6209
        %v6562 = vunpack.c.l.b16 %v6210
        %v6563 = vunpack.c.h.b16 %v6210
        %v6564 = vunpack.c.l.b16 %v6211
        %v6565 = vunpack.c.h.b16 %v6211
        %v6566 = vunpack.c.l.b16 %v6212
        %v6567 = vunpack.c.h.b16 %v6212
        %v6568 = vunpack.c.l.b16 %v6213
        %v6569 = vunpack.c.h.b16 %v6213
        %v6570 = vunpack.c.l.b16 %v6214
        %v6571 = vunpack.c.h.b16 %v6214
        %v6572 = vunpack.c.l.b16 %v6215
        %v6573 = vunpack.c.h.b16 %v6215
        %v6574 = vunpack.c.l.b16 %v6216
        %v6575 = vunpack.c.h.b16 %v6216
        %v6576 = vunpack.c.l.b16 %v6217
        %v6577 = vunpack.c.h.b16 %v6217
        %v6578 = vunpack.c.l.b16 %v6218
        %v6579 = vunpack.c.h.b16 %v6218
        %v6580 = vunpack.c.l.b16 %v6219
        %v6581 = vunpack.c.h.b16 %v6219
        %v6582 = vunpack.c.l.b16 %v6220
        %v6583 = vunpack.c.h.b16 %v6220
        %v6584 = vunpack.c.l.b16 %v6221
        %v6585 = vunpack.c.h.b16 %v6221
        %v6586 = vunpack.c.l.b16 %v6222
        %v6587 = vunpack.c.h.b16 %v6222
        %v6588 = vunpack.c.l.b16 %v6223
        %v6589 = vunpack.c.h.b16 %v6223
        %v6590 = vunpack.c.l.b16 %v6224
        %v6591 = vunpack.c.h.b16 %v6224
        %v6592 = vunpack.c.l.b16 %v6225
        %v6593 = vunpack.c.h.b16 %v6225
        %v6594 = vunpack.c.l.b16 %v6226
        %v6595 = vunpack.c.h.b16 %v6226
        %v6596 = vunpack.c.l.b16 %v6227
        %v6597 = vunpack.c.h.b16 %v6227
        %v6598 = vunpack.c.l.b16 %v6228
        %v6599 = vunpack.c.h.b16 %v6228
        %v6600 = vunpack.c.l.b16 %v6229
        %v6601 = vunpack.c.h.b16 %v6229
        %v6602 = vunpack.c.l.b16 %v6230
        %v6603 = vunpack.c.h.b16 %v6230
        %v6604 = vunpack.c.l.b16 %v6231
        %v6605 = vunpack.c.h.b16 %v6231
        %v6606 = vunpack.c.l.b16 %v6232
        %v6607 = vunpack.c.h.b16 %v6232
        %v6608 = vunpack.c.l.b16 %v6233
        %v6609 = vunpack.c.h.b16 %v6233
        %v6610 = vunpack.c.l.b16 %v6234
        %v6611 = vunpack.c.h.b16 %v6234
        %v6612 = vunpack.c.l.b16 %v6235
        %v6613 = vunpack.c.h.b16 %v6235
        %v6614 = vunpack.c.l.b16 %v6236
        %v6615 = vunpack.c.h.b16 %v6236
        %v6616 = vunpack.c.l.b16 %v6237
        %v6617 = vunpack.c.h.b16 %v6237
        %v6618 = vunpack.c.l.b16 %v6238
        %v6619 = vunpack.c.h.b16 %v6238
        %v6620 = vunpack.c.l.b16 %v6239
        %v6621 = vunpack.c.h.b16 %v6239
        %v6622 = vunpack.c.l.b16 %v6240
        %v6623 = vunpack.c.h.b16 %v6240
        %v6624 = vunpack.c.l.b16 %v6241
        %v6625 = vunpack.c.h.b16 %v6241
        %v6626 = vpack.c.b16 %v6372, %v6370
        %v6627 = vpack.c.b16 %v6373, %v6371
        %v6628 = vpack.c.b16 %v6376, %v6374
        %v6629 = vpack.c.b16 %v6377, %v6375
        %v6630 = vpack.c.b16 %v6380, %v6378
        %v6631 = vpack.c.b16 %v6381, %v6379
        %v6632 = vpack.c.b16 %v6384, %v6382
        %v6633 = vpack.c.b16 %v6385, %v6383
        %v6634 = vpack.c.b16 %v6388, %v6386
        %v6635 = vpack.c.b16 %v6389, %v6387
        %v6636 = vpack.c.b16 %v6392, %v6390
        %v6637 = vpack.c.b16 %v6393, %v6391
        %v6638 = vpack.c.b16 %v6396, %v6394
        %v6639 = vpack.c.b16 %v6397, %v6395
        %v6640 = vpack.c.b16 %v6400, %v6398
        %v6641 = vpack.c.b16 %v6401, %v6399
        %v6642 = vpack.c.b16 %v6404, %v6402
        %v6643 = vpack.c.b16 %v6405, %v6403
        %v6644 = vpack.c.b16 %v6408, %v6406
        %v6645 = vpack.c.b16 %v6409, %v6407
        %v6646 = vpack.c.b16 %v6412, %v6410
        %v6647 = vpack.c.b16 %v6413, %v6411
        %v6648 = vpack.c.b16 %v6416, %v6414
        %v6649 = vpack.c.b16 %v6417, %v6415
        %v6650 = vpack.c.b16 %v6420, %v6418
        %v6651 = vpack.c.b16 %v6421, %v6419
        %v6652 = vpack.c.b16 %v6424, %v6422
        %v6653 = vpack.c.b16 %v6425, %v6423
        %v6654 = vpack.c.b16 %v6428, %v6426
        %v6655 = vpack.c.b16 %v6429, %v6427
        %v6656 = vpack.c.b16 %v6432, %v6430
        %v6657 = vpack.c.b16 %v6433, %v6431
        %v6658 = vpack.c.b16 %v6436, %v6434
        %v6659 = vpack.c.b16 %v6437, %v6435
        %v6660 = vpack.c.b16 %v6440, %v6438
        %v6661 = vpack.c.b16 %v6441, %v6439
        %v6662 = vpack.c.b16 %v6444, %v6442
        %v6663 = vpack.c.b16 %v6445, %v6443
        %v6664 = vpack.c.b16 %v6448, %v6446
        %v6665 = vpack.c.b16 %v6449, %v6447
        %v6666 = vpack.c.b16 %v6452, %v6450
        %v6667 = vpack.c.b16 %v6453, %v6451
        %v6668 = vpack.c.b16 %v6456, %v6454
        %v6669 = vpack.c.b16 %v6457, %v6455
        %v6670 = vpack.c.b16 %v6460, %v6458
        %v6671 = vpack.c.b16 %v6461, %v6459
        %v6672 = vpack.c.b16 %v6464, %v6462
        %v6673 = vpack.c.b16 %v6465, %v6463
        %v6674 = vpack.c.b16 %v6468, %v6466
        %v6675 = vpack.c.b16 %v6469, %v6467
        %v6676 = vpack.c.b16 %v6472, %v6470
        %v6677 = vpack.c.b16 %v6473, %v6471
        %v6678 = vpack.c.b16 %v6476, %v6474
        %v6679 = vpack.c.b16 %v6477, %v6475
        %v6680 = vpack.c.b16 %v6480, %v6478
        %v6681 = vpack.c.b16 %v6481, %v6479
        %v6682 = vpack.c.b16 %v6484, %v6482
        %v6683 = vpack.c.b16 %v6485, %v6483
        %v6684 = vpack.c.b16 %v6488, %v6486
        %v6685 = vpack.c.b16 %v6489, %v6487
        %v6686 = vpack.c.b16 %v6492, %v6490
        %v6687 = vpack.c.b16 %v6493, %v6491
        %v6688 = vpack.c.b16 %v6496, %v6494
        %v6689 = vpack.c.b16 %v6497, %v6495
        %v6690 = vpack.c.b16 %v6500, %v6498
        %v6691 = vpack.c.b16 %v6501, %v6499
        %v6692 = vpack.c.b16 %v6504, %v6502
        %v6693 = vpack.c.b16 %v6505, %v6503
        %v6694 = vpack.c.b16 %v6508, %v6506
        %v6695 = vpack.c.b16 %v6509, %v6507
        %v6696 = vpack.c.b16 %v6512, %v6510
        %v6697 = vpack.c.b16 %v6513, %v6511
        %v6698 = vpack.c.b16 %v6516, %v6514
        %v6699 = vpack.c.b16 %v6517, %v6515
        %v6700 = vpack.c.b16 %v6520, %v6518
        %v6701 = vpack.c.b16 %v6521, %v6519
        %v6702 = vpack.c.b16 %v6524, %v6522
        %v6703 = vpack.c.b16 %v6525, %v6523
        %v6704 = vpack.c.b16 %v6528, %v6526
        %v6705 = vpack.c.b16 %v6529, %v6527
        %v6706 = vpack.c.b16 %v6532, %v6530
        %v6707 = vpack.c.b16 %v6533, %v6531
        %v6708 = vpack.c.b16 %v6536, %v6534
        %v6709 = vpack.c.b16 %v6537, %v6535
        %v6710 = vpack.c.b16 %v6540, %v6538
        %v6711 = vpack.c.b16 %v6541, %v6539
        %v6712 = vpack.c.b16 %v6544, %v6542
        %v6713 = vpack.c.b16 %v6545, %v6543
        %v6714 = vpack.c.b16 %v6548, %v6546
        %v6715 = vpack.c.b16 %v6549, %v6547
        %v6716 = vpack.c.b16 %v6552, %v6550
        %v6717 = vpack.c.b16 %v6553, %v6551
        %v6718 = vpack.c.b16 %v6556, %v6554
        %v6719 = vpack.c.b16 %v6557, %v6555
        %v6720 = vpack.c.b16 %v6560, %v6558
        %v6721 = vpack.c.b16 %v6561, %v6559
        %v6722 = vpack.c.b16 %v6564, %v6562
        %v6723 = vpack.c.b16 %v6565, %v6563
        %v6724 = vpack.c.b16 %v6568, %v6566
        %v6725 = vpack.c.b16 %v6569, %v6567
        %v6726 = vpack.c.b16 %v6572, %v6570
        %v6727 = vpack.c.b16 %v6573, %v6571
        %v6728 = vpack.c.b16 %v6576, %v6574
        %v6729 = vpack.c.b16 %v6577, %v6575
        %v6730 = vpack.c.b16 %v6580, %v6578
        %v6731 = vpack.c.b16 %v6581, %v6579
        %v6732 = vpack.c.b16 %v6584, %v6582
        %v6733 = vpack.c.b16 %v6585, %v6583
        %v6734 = vpack.c.b16 %v6588, %v6586
        %v6735 = vpack.c.b16 %v6589, %v6587
        %v6736 = vpack.c.b16 %v6592, %v6590
        %v6737 = vpack.c.b16 %v6593, %v6591
        %v6738 = vpack.c.b16 %v6596, %v6594
        %v6739 = vpack.c.b16 %v6597, %v6595
        %v6740 = vpack.c.b16 %v6600, %v6598
        %v6741 = vpack.c.b16 %v6601, %v6599
        %v6742 = vpack.c.b16 %v6604, %v6602
        %v6743 = vpack.c.b16 %v6605, %v6603
        %v6744 = vpack.c.b16 %v6608, %v6606
        %v6745 = vpack.c.b16 %v6609, %v6607
        %v6746 = vpack.c.b16 %v6612, %v6610
        %v6747 = vpack.c.b16 %v6613, %v6611
        %v6748 = vpack.c.b16 %v6616, %v6614
        %v6749 = vpack.c.b16 %v6617, %v6615
        %v6750 = vpack.c.b16 %v6620, %v6618
        %v6751 = vpack.c.b16 %v6621, %v6619
        %v6752 = vpack.c.b16 %v6624, %v6622
        %v6753 = vpack.c.b16 %v6625, %v6623
        %6882 = vmatprep.subr.bf16.mxu0 %v6627
        %6883 = vmatpush1.bf16.msra.mxu0 %v6626
        %6884 = vmatprep.subr.bf16.mxu0 %v6629
        %6885 = vmatpush1.bf16.msra.mxu0 %v6628
        %6886 = vmatprep.subr.bf16.mxu0 %v6631
        %6887 = vmatpush1.bf16.msra.mxu0 %v6630
        %6888 = vmatprep.subr.bf16.mxu0 %v6633
        %6889 = vmatpush1.bf16.msra.mxu0 %v6632
        %6890 = vmatprep.subr.bf16.mxu0 %v6635
        %6891 = vmatpush1.bf16.msra.mxu0 %v6634
        %6892 = vmatprep.subr.bf16.mxu0 %v6637
        %6893 = vmatpush1.bf16.msra.mxu0 %v6636
        %6894 = vmatprep.subr.bf16.mxu0 %v6639
        %6895 = vmatpush1.bf16.msra.mxu0 %v6638
        %6896 = vmatprep.subr.bf16.mxu0 %v6641
        %6897 = vmatpush1.bf16.msra.mxu0 %v6640
        %6898 = vmatprep.subr.bf16.mxu0 %v6643
        %6899 = vmatpush1.bf16.msra.mxu0 %v6642
        %6900 = vmatprep.subr.bf16.mxu0 %v6645
        %6901 = vmatpush1.bf16.msra.mxu0 %v6644
        %6902 = vmatprep.subr.bf16.mxu0 %v6647
        %6903 = vmatpush1.bf16.msra.mxu0 %v6646
        %6904 = vmatprep.subr.bf16.mxu0 %v6649
        %6905 = vmatpush1.bf16.msra.mxu0 %v6648
        %6906 = vmatprep.subr.bf16.mxu0 %v6651
        %6907 = vmatpush1.bf16.msra.mxu0 %v6650
        %6908 = vmatprep.subr.bf16.mxu0 %v6653
        %6909 = vmatpush1.bf16.msra.mxu0 %v6652
        %6910 = vmatprep.subr.bf16.mxu0 %v6655
        %6911 = vmatpush1.bf16.msra.mxu0 %v6654
        %6912 = vmatprep.subr.bf16.mxu0 %v6657
        %6913 = vmatpush1.bf16.msra.mxu0 %v6656
        %6914 = vmatprep.mubr.bf16.mxu0 %v5987
        %6915 = vmatmul.mubr.bf16.gmra.mrb[0].mxu0 %v5986
        %v6916 = vpop.f32.mrb[0].mxu0
        %v6917 = vadd.f32 0.0, %v6916
        %v6918 = vpop.f32.mrb[0].mxu0
        %v6919 = vadd.f32 0.0, %v6918
        %v6920 = vpop.f32.mrb[0].mxu0
        %v6921 = vadd.f32 0.0, %v6920
        %v6922 = vpop.f32.mrb[0].mxu0
        %v6923 = vadd.f32 0.0, %v6922
        %6924 = vmatprep.mubr.bf16.mxu0 %v5995
        %6925 = vmatmul.mubr.bf16.gmra.mrb[0].mxu0 %v5994
        %v6926 = vpop.f32.mrb[0].mxu0
        %v6927 = vadd.f32 0.0, %v6926
        %v6928 = vpop.f32.mrb[0].mxu0
        %v6929 = vadd.f32 0.0, %v6928
        %v6930 = vpop.f32.mrb[0].mxu0
        %v6931 = vadd.f32 0.0, %v6930
        %v6932 = vpop.f32.mrb[0].mxu0
        %v6933 = vadd.f32 0.0, %v6932
        %6934 = vmatprep.mubr.bf16.mxu0 %v6003
        %6935 = vmatmul.mubr.bf16.gmra.mrb[0].mxu0 %v6002
        %v6936 = vpop.f32.mrb[0].mxu0
        %v6937 = vadd.f32 0.0, %v6936
        %v6938 = vpop.f32.mrb[0].mxu0
        %v6939 = vadd.f32 0.0, %v6938
        %v6940 = vpop.f32.mrb[0].mxu0
        %v6941 = vadd.f32 0.0, %v6940
        %v6942 = vpop.f32.mrb[0].mxu0
        %v6943 = vadd.f32 0.0, %v6942
        %6944 = vmatprep.mubr.bf16.mxu0 %v6011
        %6945 = vmatmul.mubr.bf16.gmra.mrb[0].mxu0 %v6010
        %v6946 = vpop.f32.mrb[0].mxu0
        %v6947 = vadd.f32 0.0, %v6946
        %v6948 = vpop.f32.mrb[0].mxu0
        %v6949 = vadd.f32 0.0, %v6948
        %v6950 = vpop.f32.mrb[0].mxu0
        %v6951 = vadd.f32 0.0, %v6950
        %v6952 = vpop.f32.mrb[0].mxu0
        %v6953 = vadd.f32 0.0, %v6952
        %6954 = vmatprep.mubr.bf16.mxu0 %v6019
        %6955 = vmatmul.mubr.bf16.gmra.mrb[0].mxu0 %v6018
        %v6956 = vpop.f32.mrb[0].mxu0
        %v6957 = vadd.f32 0.0, %v6956
        %v6958 = vpop.f32.mrb[0].mxu0
        %v6959 = vadd.f32 0.0, %v6958
        %v6960 = vpop.f32.mrb[0].mxu0
        %v6961 = vadd.f32 0.0, %v6960
        %v6962 = vpop.f32.mrb[0].mxu0
        %v6963 = vadd.f32 0.0, %v6962
        %6964 = vmatprep.mubr.bf16.mxu0 %v6027
        %6965 = vmatmul.mubr.bf16.gmra.mrb[0].mxu0 %v6026
        %v6966 = vpop.f32.mrb[0].mxu0
        %v6967 = vadd.f32 0.0, %v6966
        %v6968 = vpop.f32.mrb[0].mxu0
        %v6969 = vadd.f32 0.0, %v6968
        %v6970 = vpop.f32.mrb[0].mxu0
        %v6971 = vadd.f32 0.0, %v6970
        %v6972 = vpop.f32.mrb[0].mxu0
        %v6973 = vadd.f32 0.0, %v6972
        %6974 = vmatprep.mubr.bf16.mxu0 %v6035
        %6975 = vmatmul.mubr.bf16.gmra.mrb[0].mxu0 %v6034
        %v6976 = vpop.f32.mrb[0].mxu0
        %v6977 = vadd.f32 0.0, %v6976
        %v6978 = vpop.f32.mrb[0].mxu0
        %v6979 = vadd.f32 0.0, %v6978
        %v6980 = vpop.f32.mrb[0].mxu0
        %v6981 = vadd.f32 0.0, %v6980
        %v6982 = vpop.f32.mrb[0].mxu0
        %v6983 = vadd.f32 0.0, %v6982
        %6984 = vmatprep.mubr.bf16.mxu0 %v6043
        %6985 = vmatmul.mubr.bf16.gmra.mrb[0].mxu0 %v6042
        %v6986 = vpop.f32.mrb[0].mxu0
        %v6987 = vadd.f32 0.0, %v6986
        %v6988 = vpop.f32.mrb[0].mxu0
        %v6989 = vadd.f32 0.0, %v6988
        %v6990 = vpop.f32.mrb[0].mxu0
        %v6991 = vadd.f32 0.0, %v6990
        %v6992 = vpop.f32.mrb[0].mxu0
        %v6993 = vadd.f32 0.0, %v6992
        %6994 = vmatprep.mubr.bf16.mxu0 %v6051
        %6995 = vmatmul.mubr.bf16.gmra.mrb[0].mxu0 %v6050
        %v6996 = vpop.f32.mrb[0].mxu0
        %v6997 = vadd.f32 0.0, %v6996
        %v6998 = vpop.f32.mrb[0].mxu0
        %v6999 = vadd.f32 0.0, %v6998
        %v7000 = vpop.f32.mrb[0].mxu0
        %v7001 = vadd.f32 0.0, %v7000
        %v7002 = vpop.f32.mrb[0].mxu0
        %v7003 = vadd.f32 0.0, %v7002
        %7004 = vmatprep.mubr.bf16.mxu0 %v6059
        %7005 = vmatmul.mubr.bf16.gmra.mrb[0].mxu0 %v6058
        %v7006 = vpop.f32.mrb[0].mxu0
        %v7007 = vadd.f32 0.0, %v7006
        %v7008 = vpop.f32.mrb[0].mxu0
        %v7009 = vadd.f32 0.0, %v7008
        %v7010 = vpop.f32.mrb[0].mxu0
        %v7011 = vadd.f32 0.0, %v7010
        %v7012 = vpop.f32.mrb[0].mxu0
        %v7013 = vadd.f32 0.0, %v7012
        %7014 = vmatprep.mubr.bf16.mxu0 %v6067
        %7015 = vmatmul.mubr.bf16.gmra.mrb[0].mxu0 %v6066
        %v7016 = vpop.f32.mrb[0].mxu0
        %v7017 = vadd.f32 0.0, %v7016
        %v7018 = vpop.f32.mrb[0].mxu0
        %v7019 = vadd.f32 0.0, %v7018
        %v7020 = vpop.f32.mrb[0].mxu0
        %v7021 = vadd.f32 0.0, %v7020
        %v7022 = vpop.f32.mrb[0].mxu0
        %v7023 = vadd.f32 0.0, %v7022
        %7024 = vmatprep.mubr.bf16.mxu0 %v6075
        %7025 = vmatmul.mubr.bf16.gmra.mrb[0].mxu0 %v6074
        %v7026 = vpop.f32.mrb[0].mxu0
        %v7027 = vadd.f32 0.0, %v7026
        %v7028 = vpop.f32.mrb[0].mxu0
        %v7029 = vadd.f32 0.0, %v7028
        %v7030 = vpop.f32.mrb[0].mxu0
        %v7031 = vadd.f32 0.0, %v7030
        %v7032 = vpop.f32.mrb[0].mxu0
        %v7033 = vadd.f32 0.0, %v7032
        %7034 = vmatprep.mubr.bf16.mxu0 %v6083
        %7035 = vmatmul.mubr.bf16.gmra.mrb[0].mxu0 %v6082
        %v7036 = vpop.f32.mrb[0].mxu0
        %v7037 = vadd.f32 0.0, %v7036
        %v7038 = vpop.f32.mrb[0].mxu0
        %v7039 = vadd.f32 0.0, %v7038
        %v7040 = vpop.f32.mrb[0].mxu0
        %v7041 = vadd.f32 0.0, %v7040
        %v7042 = vpop.f32.mrb[0].mxu0
        %v7043 = vadd.f32 0.0, %v7042
        %7044 = vmatprep.mubr.bf16.mxu0 %v6091
        %7045 = vmatmul.mubr.bf16.gmra.mrb[0].mxu0 %v6090
        %v7046 = vpop.f32.mrb[0].mxu0
        %v7047 = vadd.f32 0.0, %v7046
        %v7048 = vpop.f32.mrb[0].mxu0
        %v7049 = vadd.f32 0.0, %v7048
        %v7050 = vpop.f32.mrb[0].mxu0
        %v7051 = vadd.f32 0.0, %v7050
        %v7052 = vpop.f32.mrb[0].mxu0
        %v7053 = vadd.f32 0.0, %v7052
        %7054 = vmatprep.mubr.bf16.mxu0 %v6099
        %7055 = vmatmul.mubr.bf16.gmra.mrb[0].mxu0 %v6098
        %v7056 = vpop.f32.mrb[0].mxu0
        %v7057 = vadd.f32 0.0, %v7056
        %v7058 = vpop.f32.mrb[0].mxu0
        %v7059 = vadd.f32 0.0, %v7058
        %v7060 = vpop.f32.mrb[0].mxu0
        %v7061 = vadd.f32 0.0, %v7060
        %v7062 = vpop.f32.mrb[0].mxu0
        %v7063 = vadd.f32 0.0, %v7062
        %7064 = vmatprep.mubr.bf16.mxu0 %v6107
        %7065 = vmatmul.mubr.bf16.gmra.mrb[0].mxu0 %v6106
        %v7066 = vpop.f32.mrb[0].mxu0
        %v7067 = vadd.f32 0.0, %v7066
        %v7068 = vpop.f32.mrb[0].mxu0
        %v7069 = vadd.f32 0.0, %v7068
        %v7070 = vpop.f32.mrb[0].mxu0
        %v7071 = vadd.f32 0.0, %v7070
        %v7072 = vpop.f32.mrb[0].mxu0
        %v7073 = vadd.f32 0.0, %v7072
        %7074 = vdwg.mxu0
        %7075 = vmatprep.subr.bf16.mxu0 %v6659
        %7076 = vmatpush1.bf16.msra.mxu0 %v6658
        %7077 = vmatprep.subr.bf16.mxu0 %v6661
        %7078 = vmatpush1.bf16.msra.mxu0 %v6660
        %7079 = vmatprep.subr.bf16.mxu0 %v6663
        %7080 = vmatpush1.bf16.msra.mxu0 %v6662
        %7081 = vmatprep.subr.bf16.mxu0 %v6665
        %7082 = vmatpush1.bf16.msra.mxu0 %v6664
        %7083 = vmatprep.subr.bf16.mxu0 %v6667
        %7084 = vmatpush1.bf16.msra.mxu0 %v6666
        %7085 = vmatprep.subr.bf16.mxu0 %v6669
        %7086 = vmatpush1.bf16.msra.mxu0 %v6668
        %7087 = vmatprep.subr.bf16.mxu0 %v6671
        %7088 = vmatpush1.bf16.msra.mxu0 %v6670
        %7089 = vmatprep.subr.bf16.mxu0 %v6673
        %7090 = vmatpush1.bf16.msra.mxu0 %v6672
        %7091 = vmatprep.subr.bf16.mxu0 %v6675
        %7092 = vmatpush1.bf16.msra.mxu0 %v6674
        %7093 = vmatprep.subr.bf16.mxu0 %v6677
        %7094 = vmatpush1.bf16.msra.mxu0 %v6676
        %7095 = vmatprep.subr.bf16.mxu0 %v6679
        %7096 = vmatpush1.bf16.msra.mxu0 %v6678
        %7097 = vmatprep.subr.bf16.mxu0 %v6681
        %7098 = vmatpush1.bf16.msra.mxu0 %v6680
        %7099 = vmatprep.subr.bf16.mxu0 %v6683
        %7100 = vmatpush1.bf16.msra.mxu0 %v6682
        %7101 = vmatprep.subr.bf16.mxu0 %v6685
        %7102 = vmatpush1.bf16.msra.mxu0 %v6684
        %7103 = vmatprep.subr.bf16.mxu0 %v6687
        %7104 = vmatpush1.bf16.msra.mxu0 %v6686
        %7105 = vmatprep.subr.bf16.mxu0 %v6689
        %7106 = vmatpush1.bf16.msra.mxu0 %v6688
        %7107 = vmatprep.mubr.bf16.mxu0 %v5989
        %7108 = vmatmul.mubr.bf16.gmra.mrb[0].mxu0 %v5988
        %v7109 = vpop.f32.mrb[0].mxu0
        %v7110 = vadd.f32 %v6917, %v7109
        %v7111 = vpop.f32.mrb[0].mxu0
        %v7112 = vadd.f32 %v6919, %v7111
        %v7113 = vpop.f32.mrb[0].mxu0
        %v7114 = vadd.f32 %v6921, %v7113
        %v7115 = vpop.f32.mrb[0].mxu0
        %v7116 = vadd.f32 %v6923, %v7115
        %7117 = vmatprep.mubr.bf16.mxu0 %v5997
        %7118 = vmatmul.mubr.bf16.gmra.mrb[0].mxu0 %v5996
        %v7119 = vpop.f32.mrb[0].mxu0
        %v7120 = vadd.f32 %v6927, %v7119
        %v7121 = vpop.f32.mrb[0].mxu0
        %v7122 = vadd.f32 %v6929, %v7121
        %v7123 = vpop.f32.mrb[0].mxu0
        %v7124 = vadd.f32 %v6931, %v7123
        %v7125 = vpop.f32.mrb[0].mxu0
        %v7126 = vadd.f32 %v6933, %v7125
        %7127 = vmatprep.mubr.bf16.mxu0 %v6005
        %7128 = vmatmul.mubr.bf16.gmra.mrb[0].mxu0 %v6004
        %v7129 = vpop.f32.mrb[0].mxu0
        %v7130 = vadd.f32 %v6937, %v7129
        %v7131 = vpop.f32.mrb[0].mxu0
        %v7132 = vadd.f32 %v6939, %v7131
        %v7133 = vpop.f32.mrb[0].mxu0
        %v7134 = vadd.f32 %v6941, %v7133
        %v7135 = vpop.f32.mrb[0].mxu0
        %v7136 = vadd.f32 %v6943, %v7135
        %7137 = vmatprep.mubr.bf16.mxu0 %v6013
        %7138 = vmatmul.mubr.bf16.gmra.mrb[0].mxu0 %v6012
        %v7139 = vpop.f32.mrb[0].mxu0
        %v7140 = vadd.f32 %v6947, %v7139
        %v7141 = vpop.f32.mrb[0].mxu0
        %v7142 = vadd.f32 %v6949, %v7141
        %v7143 = vpop.f32.mrb[0].mxu0
        %v7144 = vadd.f32 %v6951, %v7143
        %v7145 = vpop.f32.mrb[0].mxu0
        %v7146 = vadd.f32 %v6953, %v7145
        %7147 = vmatprep.mubr.bf16.mxu0 %v6021
        %7148 = vmatmul.mubr.bf16.gmra.mrb[0].mxu0 %v6020
        %v7149 = vpop.f32.mrb[0].mxu0
        %v7150 = vadd.f32 %v6957, %v7149
        %v7151 = vpop.f32.mrb[0].mxu0
        %v7152 = vadd.f32 %v6959, %v7151
        %v7153 = vpop.f32.mrb[0].mxu0
        %v7154 = vadd.f32 %v6961, %v7153
        %v7155 = vpop.f32.mrb[0].mxu0
        %v7156 = vadd.f32 %v6963, %v7155
        %7157 = vmatprep.mubr.bf16.mxu0 %v6029
        %7158 = vmatmul.mubr.bf16.gmra.mrb[0].mxu0 %v6028
        %v7159 = vpop.f32.mrb[0].mxu0
        %v7160 = vadd.f32 %v6967, %v7159
        %v7161 = vpop.f32.mrb[0].mxu0
        %v7162 = vadd.f32 %v6969, %v7161
        %v7163 = vpop.f32.mrb[0].mxu0
        %v7164 = vadd.f32 %v6971, %v7163
        %v7165 = vpop.f32.mrb[0].mxu0
        %v7166 = vadd.f32 %v6973, %v7165
        %7167 = vmatprep.mubr.bf16.mxu0 %v6037
        %7168 = vmatmul.mubr.bf16.gmra.mrb[0].mxu0 %v6036
        %v7169 = vpop.f32.mrb[0].mxu0
        %v7170 = vadd.f32 %v6977, %v7169
        %v7171 = vpop.f32.mrb[0].mxu0
        %v7172 = vadd.f32 %v6979, %v7171
        %v7173 = vpop.f32.mrb[0].mxu0
        %v7174 = vadd.f32 %v6981, %v7173
        %v7175 = vpop.f32.mrb[0].mxu0
        %v7176 = vadd.f32 %v6983, %v7175
        %7177 = vmatprep.mubr.bf16.mxu0 %v6045
        %7178 = vmatmul.mubr.bf16.gmra.mrb[0].mxu0 %v6044
        %v7179 = vpop.f32.mrb[0].mxu0
        %v7180 = vadd.f32 %v6987, %v7179
        %v7181 = vpop.f32.mrb[0].mxu0
        %v7182 = vadd.f32 %v6989, %v7181
        %v7183 = vpop.f32.mrb[0].mxu0
        %v7184 = vadd.f32 %v6991, %v7183
        %v7185 = vpop.f32.mrb[0].mxu0
        %v7186 = vadd.f32 %v6993, %v7185
        %7187 = vmatprep.mubr.bf16.mxu0 %v6053
        %7188 = vmatmul.mubr.bf16.gmra.mrb[0].mxu0 %v6052
        %v7189 = vpop.f32.mrb[0].mxu0
        %v7190 = vadd.f32 %v6997, %v7189
        %v7191 = vpop.f32.mrb[0].mxu0
        %v7192 = vadd.f32 %v6999, %v7191
        %v7193 = vpop.f32.mrb[0].mxu0
        %v7194 = vadd.f32 %v7001, %v7193
        %v7195 = vpop.f32.mrb[0].mxu0
        %v7196 = vadd.f32 %v7003, %v7195
        %7197 = vmatprep.mubr.bf16.mxu0 %v6061
        %7198 = vmatmul.mubr.bf16.gmra.mrb[0].mxu0 %v6060
        %v7199 = vpop.f32.mrb[0].mxu0
        %v7200 = vadd.f32 %v7007, %v7199
        %v7201 = vpop.f32.mrb[0].mxu0
        %v7202 = vadd.f32 %v7009, %v7201
        %v7203 = vpop.f32.mrb[0].mxu0
        %v7204 = vadd.f32 %v7011, %v7203
        %v7205 = vpop.f32.mrb[0].mxu0
        %v7206 = vadd.f32 %v7013, %v7205
        %7207 = vmatprep.mubr.bf16.mxu0 %v6069
        %7208 = vmatmul.mubr.bf16.gmra.mrb[0].mxu0 %v6068
        %v7209 = vpop.f32.mrb[0].mxu0
        %v7210 = vadd.f32 %v7017, %v7209
        %v7211 = vpop.f32.mrb[0].mxu0
        %v7212 = vadd.f32 %v7019, %v7211
        %v7213 = vpop.f32.mrb[0].mxu0
        %v7214 = vadd.f32 %v7021, %v7213
        %v7215 = vpop.f32.mrb[0].mxu0
        %v7216 = vadd.f32 %v7023, %v7215
        %7217 = vmatprep.mubr.bf16.mxu0 %v6077
        %7218 = vmatmul.mubr.bf16.gmra.mrb[0].mxu0 %v6076
        %v7219 = vpop.f32.mrb[0].mxu0
        %v7220 = vadd.f32 %v7027, %v7219
        %v7221 = vpop.f32.mrb[0].mxu0
        %v7222 = vadd.f32 %v7029, %v7221
        %v7223 = vpop.f32.mrb[0].mxu0
        %v7224 = vadd.f32 %v7031, %v7223
        %v7225 = vpop.f32.mrb[0].mxu0
        %v7226 = vadd.f32 %v7033, %v7225
        %7227 = vmatprep.mubr.bf16.mxu0 %v6085
        %7228 = vmatmul.mubr.bf16.gmra.mrb[0].mxu0 %v6084
        %v7229 = vpop.f32.mrb[0].mxu0
        %v7230 = vadd.f32 %v7037, %v7229
        %v7231 = vpop.f32.mrb[0].mxu0
        %v7232 = vadd.f32 %v7039, %v7231
        %v7233 = vpop.f32.mrb[0].mxu0
        %v7234 = vadd.f32 %v7041, %v7233
        %v7235 = vpop.f32.mrb[0].mxu0
        %v7236 = vadd.f32 %v7043, %v7235
        %7237 = vmatprep.mubr.bf16.mxu0 %v6093
        %7238 = vmatmul.mubr.bf16.gmra.mrb[0].mxu0 %v6092
        %v7239 = vpop.f32.mrb[0].mxu0
        %v7240 = vadd.f32 %v7047, %v7239
        %v7241 = vpop.f32.mrb[0].mxu0
        %v7242 = vadd.f32 %v7049, %v7241
        %v7243 = vpop.f32.mrb[0].mxu0
        %v7244 = vadd.f32 %v7051, %v7243
        %v7245 = vpop.f32.mrb[0].mxu0
        %v7246 = vadd.f32 %v7053, %v7245
        %7247 = vmatprep.mubr.bf16.mxu0 %v6101
        %7248 = vmatmul.mubr.bf16.gmra.mrb[0].mxu0 %v6100
        %v7249 = vpop.f32.mrb[0].mxu0
        %v7250 = vadd.f32 %v7057, %v7249
        %v7251 = vpop.f32.mrb[0].mxu0
        %v7252 = vadd.f32 %v7059, %v7251
        %v7253 = vpop.f32.mrb[0].mxu0
        %v7254 = vadd.f32 %v7061, %v7253
        %v7255 = vpop.f32.mrb[0].mxu0
        %v7256 = vadd.f32 %v7063, %v7255
        %7257 = vmatprep.mubr.bf16.mxu0 %v6109
        %7258 = vmatmul.mubr.bf16.gmra.mrb[0].mxu0 %v6108
        %v7259 = vpop.f32.mrb[0].mxu0
        %v7260 = vadd.f32 %v7067, %v7259
        %v7261 = vpop.f32.mrb[0].mxu0
        %v7262 = vadd.f32 %v7069, %v7261
        %v7263 = vpop.f32.mrb[0].mxu0
        %v7264 = vadd.f32 %v7071, %v7263
        %v7265 = vpop.f32.mrb[0].mxu0
        %v7266 = vadd.f32 %v7073, %v7265
        %7267 = vdwg.mxu0
        %7268 = vmatprep.subr.bf16.mxu0 %v6691
        %7269 = vmatpush1.bf16.msra.mxu0 %v6690
        %7270 = vmatprep.subr.bf16.mxu0 %v6693
        %7271 = vmatpush1.bf16.msra.mxu0 %v6692
        %7272 = vmatprep.subr.bf16.mxu0 %v6695
        %7273 = vmatpush1.bf16.msra.mxu0 %v6694
        %7274 = vmatprep.subr.bf16.mxu0 %v6697
        %7275 = vmatpush1.bf16.msra.mxu0 %v6696
        %7276 = vmatprep.subr.bf16.mxu0 %v6699
        %7277 = vmatpush1.bf16.msra.mxu0 %v6698
        %7278 = vmatprep.subr.bf16.mxu0 %v6701
        %7279 = vmatpush1.bf16.msra.mxu0 %v6700
        %7280 = vmatprep.subr.bf16.mxu0 %v6703
        %7281 = vmatpush1.bf16.msra.mxu0 %v6702
        %7282 = vmatprep.subr.bf16.mxu0 %v6705
        %7283 = vmatpush1.bf16.msra.mxu0 %v6704
        %7284 = vmatprep.subr.bf16.mxu0 %v6707
        %7285 = vmatpush1.bf16.msra.mxu0 %v6706
        %7286 = vmatprep.subr.bf16.mxu0 %v6709
        %7287 = vmatpush1.bf16.msra.mxu0 %v6708
        %7288 = vmatprep.subr.bf16.mxu0 %v6711
        %7289 = vmatpush1.bf16.msra.mxu0 %v6710
        %7290 = vmatprep.subr.bf16.mxu0 %v6713
        %7291 = vmatpush1.bf16.msra.mxu0 %v6712
        %7292 = vmatprep.subr.bf16.mxu0 %v6715
        %7293 = vmatpush1.bf16.msra.mxu0 %v6714
        %7294 = vmatprep.subr.bf16.mxu0 %v6717
        %7295 = vmatpush1.bf16.msra.mxu0 %v6716
        %7296 = vmatprep.subr.bf16.mxu0 %v6719
        %7297 = vmatpush1.bf16.msra.mxu0 %v6718
        %7298 = vmatprep.subr.bf16.mxu0 %v6721
        %7299 = vmatpush1.bf16.msra.mxu0 %v6720
        %7300 = vmatprep.mubr.bf16.mxu0 %v5991
        %7301 = vmatmul.mubr.bf16.gmra.mrb[0].mxu0 %v5990
        %v7302 = vpop.f32.mrb[0].mxu0
        %v7303 = vadd.f32 %v7110, %v7302
        %v7304 = vpop.f32.mrb[0].mxu0
        %v7305 = vadd.f32 %v7112, %v7304
        %v7306 = vpop.f32.mrb[0].mxu0
        %v7307 = vadd.f32 %v7114, %v7306
        %v7308 = vpop.f32.mrb[0].mxu0
        %v7309 = vadd.f32 %v7116, %v7308
        %7310 = vmatprep.mubr.bf16.mxu0 %v5999
        %7311 = vmatmul.mubr.bf16.gmra.mrb[0].mxu0 %v5998
        %v7312 = vpop.f32.mrb[0].mxu0
        %v7313 = vadd.f32 %v7120, %v7312
        %v7314 = vpop.f32.mrb[0].mxu0
        %v7315 = vadd.f32 %v7122, %v7314
        %v7316 = vpop.f32.mrb[0].mxu0
        %v7317 = vadd.f32 %v7124, %v7316
        %v7318 = vpop.f32.mrb[0].mxu0
        %v7319 = vadd.f32 %v7126, %v7318
        %7320 = vmatprep.mubr.bf16.mxu0 %v6007
        %7321 = vmatmul.mubr.bf16.gmra.mrb[0].mxu0 %v6006
        %v7322 = vpop.f32.mrb[0].mxu0
        %v7323 = vadd.f32 %v7130, %v7322
        %v7324 = vpop.f32.mrb[0].mxu0
        %v7325 = vadd.f32 %v7132, %v7324
        %v7326 = vpop.f32.mrb[0].mxu0
        %v7327 = vadd.f32 %v7134, %v7326
        %v7328 = vpop.f32.mrb[0].mxu0
        %v7329 = vadd.f32 %v7136, %v7328
        %7330 = vmatprep.mubr.bf16.mxu0 %v6015
        %7331 = vmatmul.mubr.bf16.gmra.mrb[0].mxu0 %v6014
        %v7332 = vpop.f32.mrb[0].mxu0
        %v7333 = vadd.f32 %v7140, %v7332
        %v7334 = vpop.f32.mrb[0].mxu0
        %v7335 = vadd.f32 %v7142, %v7334
        %v7336 = vpop.f32.mrb[0].mxu0
        %v7337 = vadd.f32 %v7144, %v7336
        %v7338 = vpop.f32.mrb[0].mxu0
        %v7339 = vadd.f32 %v7146, %v7338
        %7340 = vmatprep.mubr.bf16.mxu0 %v6023
        %7341 = vmatmul.mubr.bf16.gmra.mrb[0].mxu0 %v6022
        %v7342 = vpop.f32.mrb[0].mxu0
        %v7343 = vadd.f32 %v7150, %v7342
        %v7344 = vpop.f32.mrb[0].mxu0
        %v7345 = vadd.f32 %v7152, %v7344
        %v7346 = vpop.f32.mrb[0].mxu0
        %v7347 = vadd.f32 %v7154, %v7346
        %v7348 = vpop.f32.mrb[0].mxu0
        %v7349 = vadd.f32 %v7156, %v7348
        %7350 = vmatprep.mubr.bf16.mxu0 %v6031
        %7351 = vmatmul.mubr.bf16.gmra.mrb[0].mxu0 %v6030
        %v7352 = vpop.f32.mrb[0].mxu0
        %v7353 = vadd.f32 %v7160, %v7352
        %v7354 = vpop.f32.mrb[0].mxu0
        %v7355 = vadd.f32 %v7162, %v7354
        %v7356 = vpop.f32.mrb[0].mxu0
        %v7357 = vadd.f32 %v7164, %v7356
        %v7358 = vpop.f32.mrb[0].mxu0
        %v7359 = vadd.f32 %v7166, %v7358
        %7360 = vmatprep.mubr.bf16.mxu0 %v6039
        %7361 = vmatmul.mubr.bf16.gmra.mrb[0].mxu0 %v6038
        %v7362 = vpop.f32.mrb[0].mxu0
        %v7363 = vadd.f32 %v7170, %v7362
        %v7364 = vpop.f32.mrb[0].mxu0
        %v7365 = vadd.f32 %v7172, %v7364
        %v7366 = vpop.f32.mrb[0].mxu0
        %v7367 = vadd.f32 %v7174, %v7366
        %v7368 = vpop.f32.mrb[0].mxu0
        %v7369 = vadd.f32 %v7176, %v7368
        %7370 = vmatprep.mubr.bf16.mxu0 %v6047
        %7371 = vmatmul.mubr.bf16.gmra.mrb[0].mxu0 %v6046
        %v7372 = vpop.f32.mrb[0].mxu0
        %v7373 = vadd.f32 %v7180, %v7372
        %v7374 = vpop.f32.mrb[0].mxu0
        %v7375 = vadd.f32 %v7182, %v7374
        %v7376 = vpop.f32.mrb[0].mxu0
        %v7377 = vadd.f32 %v7184, %v7376
        %v7378 = vpop.f32.mrb[0].mxu0
        %v7379 = vadd.f32 %v7186, %v7378
        %7380 = vmatprep.mubr.bf16.mxu0 %v6055
        %7381 = vmatmul.mubr.bf16.gmra.mrb[0].mxu0 %v6054
        %v7382 = vpop.f32.mrb[0].mxu0
        %v7383 = vadd.f32 %v7190, %v7382
        %v7384 = vpop.f32.mrb[0].mxu0
        %v7385 = vadd.f32 %v7192, %v7384
        %v7386 = vpop.f32.mrb[0].mxu0
        %v7387 = vadd.f32 %v7194, %v7386
        %v7388 = vpop.f32.mrb[0].mxu0
        %v7389 = vadd.f32 %v7196, %v7388
        %7390 = vmatprep.mubr.bf16.mxu0 %v6063
        %7391 = vmatmul.mubr.bf16.gmra.mrb[0].mxu0 %v6062
        %v7392 = vpop.f32.mrb[0].mxu0
        %v7393 = vadd.f32 %v7200, %v7392
        %v7394 = vpop.f32.mrb[0].mxu0
        %v7395 = vadd.f32 %v7202, %v7394
        %v7396 = vpop.f32.mrb[0].mxu0
        %v7397 = vadd.f32 %v7204, %v7396
        %v7398 = vpop.f32.mrb[0].mxu0
        %v7399 = vadd.f32 %v7206, %v7398
        %7400 = vmatprep.mubr.bf16.mxu0 %v6071
        %7401 = vmatmul.mubr.bf16.gmra.mrb[0].mxu0 %v6070
        %v7402 = vpop.f32.mrb[0].mxu0
        %v7403 = vadd.f32 %v7210, %v7402
        %v7404 = vpop.f32.mrb[0].mxu0
        %v7405 = vadd.f32 %v7212, %v7404
        %v7406 = vpop.f32.mrb[0].mxu0
        %v7407 = vadd.f32 %v7214, %v7406
        %v7408 = vpop.f32.mrb[0].mxu0
        %v7409 = vadd.f32 %v7216, %v7408
        %7410 = vmatprep.mubr.bf16.mxu0 %v6079
        %7411 = vmatmul.mubr.bf16.gmra.mrb[0].mxu0 %v6078
        %v7412 = vpop.f32.mrb[0].mxu0
        %v7413 = vadd.f32 %v7220, %v7412
        %v7414 = vpop.f32.mrb[0].mxu0
        %v7415 = vadd.f32 %v7222, %v7414
        %v7416 = vpop.f32.mrb[0].mxu0
        %v7417 = vadd.f32 %v7224, %v7416
        %v7418 = vpop.f32.mrb[0].mxu0
        %v7419 = vadd.f32 %v7226, %v7418
        %7420 = vmatprep.mubr.bf16.mxu0 %v6087
        %7421 = vmatmul.mubr.bf16.gmra.mrb[0].mxu0 %v6086
        %v7422 = vpop.f32.mrb[0].mxu0
        %v7423 = vadd.f32 %v7230, %v7422
        %v7424 = vpop.f32.mrb[0].mxu0
        %v7425 = vadd.f32 %v7232, %v7424
        %v7426 = vpop.f32.mrb[0].mxu0
        %v7427 = vadd.f32 %v7234, %v7426
        %v7428 = vpop.f32.mrb[0].mxu0
        %v7429 = vadd.f32 %v7236, %v7428
        %7430 = vmatprep.mubr.bf16.mxu0 %v6095
        %7431 = vmatmul.mubr.bf16.gmra.mrb[0].mxu0 %v6094
        %v7432 = vpop.f32.mrb[0].mxu0
        %v7433 = vadd.f32 %v7240, %v7432
        %v7434 = vpop.f32.mrb[0].mxu0
        %v7435 = vadd.f32 %v7242, %v7434
        %v7436 = vpop.f32.mrb[0].mxu0
        %v7437 = vadd.f32 %v7244, %v7436
        %v7438 = vpop.f32.mrb[0].mxu0
        %v7439 = vadd.f32 %v7246, %v7438
        %7440 = vmatprep.mubr.bf16.mxu0 %v6103
        %7441 = vmatmul.mubr.bf16.gmra.mrb[0].mxu0 %v6102
        %v7442 = vpop.f32.mrb[0].mxu0
        %v7443 = vadd.f32 %v7250, %v7442
        %v7444 = vpop.f32.mrb[0].mxu0
        %v7445 = vadd.f32 %v7252, %v7444
        %v7446 = vpop.f32.mrb[0].mxu0
        %v7447 = vadd.f32 %v7254, %v7446
        %v7448 = vpop.f32.mrb[0].mxu0
        %v7449 = vadd.f32 %v7256, %v7448
        %7450 = vmatprep.mubr.bf16.mxu0 %v6111
        %7451 = vmatmul.mubr.bf16.gmra.mrb[0].mxu0 %v6110
        %v7452 = vpop.f32.mrb[0].mxu0
        %v7453 = vadd.f32 %v7260, %v7452
        %v7454 = vpop.f32.mrb[0].mxu0
        %v7455 = vadd.f32 %v7262, %v7454
        %v7456 = vpop.f32.mrb[0].mxu0
        %v7457 = vadd.f32 %v7264, %v7456
        %v7458 = vpop.f32.mrb[0].mxu0
        %v7459 = vadd.f32 %v7266, %v7458
        %7460 = vdwg.mxu0
        %7461 = vmatprep.subr.bf16.mxu0 %v6723
        %7462 = vmatpush1.bf16.msra.mxu0 %v6722
        %7463 = vmatprep.subr.bf16.mxu0 %v6725
        %7464 = vmatpush1.bf16.msra.mxu0 %v6724
        %7465 = vmatprep.subr.bf16.mxu0 %v6727
        %7466 = vmatpush1.bf16.msra.mxu0 %v6726
        %7467 = vmatprep.subr.bf16.mxu0 %v6729
        %7468 = vmatpush1.bf16.msra.mxu0 %v6728
        %7469 = vmatprep.subr.bf16.mxu0 %v6731
        %7470 = vmatpush1.bf16.msra.mxu0 %v6730
        %7471 = vmatprep.subr.bf16.mxu0 %v6733
        %7472 = vmatpush1.bf16.msra.mxu0 %v6732
        %7473 = vmatprep.subr.bf16.mxu0 %v6735
        %7474 = vmatpush1.bf16.msra.mxu0 %v6734
        %7475 = vmatprep.subr.bf16.mxu0 %v6737
        %7476 = vmatpush1.bf16.msra.mxu0 %v6736
        %7477 = vmatprep.subr.bf16.mxu0 %v6739
        %7478 = vmatpush1.bf16.msra.mxu0 %v6738
        %7479 = vmatprep.subr.bf16.mxu0 %v6741
        %7480 = vmatpush1.bf16.msra.mxu0 %v6740
        %7481 = vmatprep.subr.bf16.mxu0 %v6743
        %7482 = vmatpush1.bf16.msra.mxu0 %v6742
        %7483 = vmatprep.subr.bf16.mxu0 %v6745
        %7484 = vmatpush1.bf16.msra.mxu0 %v6744
        %7485 = vmatprep.subr.bf16.mxu0 %v6747
        %7486 = vmatpush1.bf16.msra.mxu0 %v6746
        %7487 = vmatprep.subr.bf16.mxu0 %v6749
        %7488 = vmatpush1.bf16.msra.mxu0 %v6748
        %7489 = vmatprep.subr.bf16.mxu0 %v6751
        %7490 = vmatpush1.bf16.msra.mxu0 %v6750
        %7491 = vmatprep.subr.bf16.mxu0 %v6753
        %7492 = vmatpush1.bf16.msra.mxu0 %v6752
        %7493 = vmatprep.mubr.bf16.mxu0 %v5993
        %7494 = vmatmul.mubr.bf16.gmra.mrb[0].mxu0 %v5992
        %v7495 = vpop.f32.mrb[0].mxu0
        %v7496 = vadd.f32 %v7303, %v7495
        %v7497 = vpop.f32.mrb[0].mxu0
        %v7498 = vadd.f32 %v7305, %v7497
        %v7499 = vpop.f32.mrb[0].mxu0
        %v7500 = vadd.f32 %v7307, %v7499
        %v7501 = vpop.f32.mrb[0].mxu0
        %v7502 = vadd.f32 %v7309, %v7501
        %7503 = vmatprep.mubr.bf16.mxu0 %v6001
        %7504 = vmatmul.mubr.bf16.gmra.mrb[0].mxu0 %v6000
        %v7505 = vpop.f32.mrb[0].mxu0
        %v7506 = vadd.f32 %v7313, %v7505
        %v7507 = vpop.f32.mrb[0].mxu0
        %v7508 = vadd.f32 %v7315, %v7507
        %v7509 = vpop.f32.mrb[0].mxu0
        %v7510 = vadd.f32 %v7317, %v7509
        %v7511 = vpop.f32.mrb[0].mxu0
        %v7512 = vadd.f32 %v7319, %v7511
        %7513 = vmatprep.mubr.bf16.mxu0 %v6009
        %7514 = vmatmul.mubr.bf16.gmra.mrb[0].mxu0 %v6008
        %v7515 = vpop.f32.mrb[0].mxu0
        %v7516 = vadd.f32 %v7323, %v7515
        %v7517 = vpop.f32.mrb[0].mxu0
        %v7518 = vadd.f32 %v7325, %v7517
        %v7519 = vpop.f32.mrb[0].mxu0
        %v7520 = vadd.f32 %v7327, %v7519
        %v7521 = vpop.f32.mrb[0].mxu0
        %v7522 = vadd.f32 %v7329, %v7521
        %7523 = vmatprep.mubr.bf16.mxu0 %v6017
        %7524 = vmatmul.mubr.bf16.gmra.mrb[0].mxu0 %v6016
        %v7525 = vpop.f32.mrb[0].mxu0
        %v7526 = vadd.f32 %v7333, %v7525
        %v7527 = vpop.f32.mrb[0].mxu0
        %v7528 = vadd.f32 %v7335, %v7527
        %v7529 = vpop.f32.mrb[0].mxu0
        %v7530 = vadd.f32 %v7337, %v7529
        %v7531 = vpop.f32.mrb[0].mxu0
        %v7532 = vadd.f32 %v7339, %v7531
        %7533 = vmatprep.mubr.bf16.mxu0 %v6025
        %7534 = vmatmul.mubr.bf16.gmra.mrb[0].mxu0 %v6024
        %v7535 = vpop.f32.mrb[0].mxu0
        %v7536 = vadd.f32 %v7343, %v7535
        %v7537 = vpop.f32.mrb[0].mxu0
        %v7538 = vadd.f32 %v7345, %v7537
        %v7539 = vpop.f32.mrb[0].mxu0
        %v7540 = vadd.f32 %v7347, %v7539
        %v7541 = vpop.f32.mrb[0].mxu0
        %v7542 = vadd.f32 %v7349, %v7541
        %7543 = vmatprep.mubr.bf16.mxu0 %v6033
        %7544 = vmatmul.mubr.bf16.gmra.mrb[0].mxu0 %v6032
        %v7545 = vpop.f32.mrb[0].mxu0
        %v7546 = vadd.f32 %v7353, %v7545
        %v7547 = vpop.f32.mrb[0].mxu0
        %v7548 = vadd.f32 %v7355, %v7547
        %v7549 = vpop.f32.mrb[0].mxu0
        %v7550 = vadd.f32 %v7357, %v7549
        %v7551 = vpop.f32.mrb[0].mxu0
        %v7552 = vadd.f32 %v7359, %v7551
        %7553 = vmatprep.mubr.bf16.mxu0 %v6041
        %7554 = vmatmul.mubr.bf16.gmra.mrb[0].mxu0 %v6040
        %v7555 = vpop.f32.mrb[0].mxu0
        %v7556 = vadd.f32 %v7363, %v7555
        %v7557 = vpop.f32.mrb[0].mxu0
        %v7558 = vadd.f32 %v7365, %v7557
        %v7559 = vpop.f32.mrb[0].mxu0
        %v7560 = vadd.f32 %v7367, %v7559
        %v7561 = vpop.f32.mrb[0].mxu0
        %v7562 = vadd.f32 %v7369, %v7561
        %7563 = vmatprep.mubr.bf16.mxu0 %v6049
        %7564 = vmatmul.mubr.bf16.gmra.mrb[0].mxu0 %v6048
        %v7565 = vpop.f32.mrb[0].mxu0
        %v7566 = vadd.f32 %v7373, %v7565
        %v7567 = vpop.f32.mrb[0].mxu0
        %v7568 = vadd.f32 %v7375, %v7567
        %v7569 = vpop.f32.mrb[0].mxu0
        %v7570 = vadd.f32 %v7377, %v7569
        %v7571 = vpop.f32.mrb[0].mxu0
        %v7572 = vadd.f32 %v7379, %v7571
        %7573 = vmatprep.mubr.bf16.mxu0 %v6057
        %7574 = vmatmul.mubr.bf16.gmra.mrb[0].mxu0 %v6056
        %v7575 = vpop.f32.mrb[0].mxu0
        %v7576 = vadd.f32 %v7383, %v7575
        %v7577 = vpop.f32.mrb[0].mxu0
        %v7578 = vadd.f32 %v7385, %v7577
        %v7579 = vpop.f32.mrb[0].mxu0
        %v7580 = vadd.f32 %v7387, %v7579
        %v7581 = vpop.f32.mrb[0].mxu0
        %v7582 = vadd.f32 %v7389, %v7581
        %7583 = vmatprep.mubr.bf16.mxu0 %v6065
        %7584 = vmatmul.mubr.bf16.gmra.mrb[0].mxu0 %v6064
        %v7585 = vpop.f32.mrb[0].mxu0
        %v7586 = vadd.f32 %v7393, %v7585
        %v7587 = vpop.f32.mrb[0].mxu0
        %v7588 = vadd.f32 %v7395, %v7587
        %v7589 = vpop.f32.mrb[0].mxu0
        %v7590 = vadd.f32 %v7397, %v7589
        %v7591 = vpop.f32.mrb[0].mxu0
        %v7592 = vadd.f32 %v7399, %v7591
        %7593 = vmatprep.mubr.bf16.mxu0 %v6073
        %7594 = vmatmul.mubr.bf16.gmra.mrb[0].mxu0 %v6072
        %v7595 = vpop.f32.mrb[0].mxu0
        %v7596 = vadd.f32 %v7403, %v7595
        %v7597 = vpop.f32.mrb[0].mxu0
        %v7598 = vadd.f32 %v7405, %v7597
        %v7599 = vpop.f32.mrb[0].mxu0
        %v7600 = vadd.f32 %v7407, %v7599
        %v7601 = vpop.f32.mrb[0].mxu0
        %v7602 = vadd.f32 %v7409, %v7601
        %7603 = vmatprep.mubr.bf16.mxu0 %v6081
        %7604 = vmatmul.mubr.bf16.gmra.mrb[0].mxu0 %v6080
        %v7605 = vpop.f32.mrb[0].mxu0
        %v7606 = vadd.f32 %v7413, %v7605
        %v7607 = vpop.f32.mrb[0].mxu0
        %v7608 = vadd.f32 %v7415, %v7607
        %v7609 = vpop.f32.mrb[0].mxu0
        %v7610 = vadd.f32 %v7417, %v7609
        %v7611 = vpop.f32.mrb[0].mxu0
        %v7612 = vadd.f32 %v7419, %v7611
        %7613 = vmatprep.mubr.bf16.mxu0 %v6089
        %7614 = vmatmul.mubr.bf16.gmra.mrb[0].mxu0 %v6088
        %v7615 = vpop.f32.mrb[0].mxu0
        %v7616 = vadd.f32 %v7423, %v7615
        %v7617 = vpop.f32.mrb[0].mxu0
        %v7618 = vadd.f32 %v7425, %v7617
        %v7619 = vpop.f32.mrb[0].mxu0
        %v7620 = vadd.f32 %v7427, %v7619
        %v7621 = vpop.f32.mrb[0].mxu0
        %v7622 = vadd.f32 %v7429, %v7621
        %7623 = vmatprep.mubr.bf16.mxu0 %v6097
        %7624 = vmatmul.mubr.bf16.gmra.mrb[0].mxu0 %v6096
        %v7625 = vpop.f32.mrb[0].mxu0
        %v7626 = vadd.f32 %v7433, %v7625
        %v7627 = vpop.f32.mrb[0].mxu0
        %v7628 = vadd.f32 %v7435, %v7627
        %v7629 = vpop.f32.mrb[0].mxu0
        %v7630 = vadd.f32 %v7437, %v7629
        %v7631 = vpop.f32.mrb[0].mxu0
        %v7632 = vadd.f32 %v7439, %v7631
        %7633 = vmatprep.mubr.bf16.mxu0 %v6105
        %7634 = vmatmul.mubr.bf16.gmra.mrb[0].mxu0 %v6104
        %v7635 = vpop.f32.mrb[0].mxu0
        %v7636 = vadd.f32 %v7443, %v7635
        %v7637 = vpop.f32.mrb[0].mxu0
        %v7638 = vadd.f32 %v7445, %v7637
        %v7639 = vpop.f32.mrb[0].mxu0
        %v7640 = vadd.f32 %v7447, %v7639
        %v7641 = vpop.f32.mrb[0].mxu0
        %v7642 = vadd.f32 %v7449, %v7641
        %7643 = vmatprep.mubr.bf16.mxu0 %v6113
        %7644 = vmatmul.mubr.bf16.gmra.mrb[0].mxu0 %v6112
        %v7645 = vpop.f32.mrb[0].mxu0
        %v7646 = vadd.f32 %v7453, %v7645
        %v7647 = vpop.f32.mrb[0].mxu0
        %v7648 = vadd.f32 %v7455, %v7647
        %v7649 = vpop.f32.mrb[0].mxu0
        %v7650 = vadd.f32 %v7457, %v7649
        %v7651 = vpop.f32.mrb[0].mxu0
        %v7652 = vadd.f32 %v7459, %v7651
        %7653 = vdwg.mxu0
        %v7654 = vadd.f32 %v5922, %v7496
        %v7655 = vadd.f32 %v5923, %v7498
        %v7656 = vadd.f32 %v5924, %v7500
        %v7657 = vadd.f32 %v5925, %v7502
        %v7658 = vadd.f32 %v5926, %v7506
        %v7659 = vadd.f32 %v5927, %v7508
        %v7660 = vadd.f32 %v5928, %v7510
        %v7661 = vadd.f32 %v5929, %v7512
        %v7662 = vadd.f32 %v5930, %v7516
        %v7663 = vadd.f32 %v5931, %v7518
        %v7664 = vadd.f32 %v5932, %v7520
        %v7665 = vadd.f32 %v5933, %v7522
        %v7666 = vadd.f32 %v5934, %v7526
        %v7667 = vadd.f32 %v5935, %v7528
        %v7668 = vadd.f32 %v5936, %v7530
        %v7669 = vadd.f32 %v5937, %v7532
        %v7670 = vadd.f32 %v5938, %v7536
        %v7671 = vadd.f32 %v5939, %v7538
        %v7672 = vadd.f32 %v5940, %v7540
        %v7673 = vadd.f32 %v5941, %v7542
        %v7674 = vadd.f32 %v5942, %v7546
        %v7675 = vadd.f32 %v5943, %v7548
        %v7676 = vadd.f32 %v5944, %v7550
        %v7677 = vadd.f32 %v5945, %v7552
        %v7678 = vadd.f32 %v5946, %v7556
        %v7679 = vadd.f32 %v5947, %v7558
        %v7680 = vadd.f32 %v5948, %v7560
        %v7681 = vadd.f32 %v5949, %v7562
        %v7682 = vadd.f32 %v5950, %v7566
        %v7683 = vadd.f32 %v5951, %v7568
        %v7684 = vadd.f32 %v5952, %v7570
        %v7685 = vadd.f32 %v5953, %v7572
        %v7686 = vadd.f32 %v5954, %v7576
        %v7687 = vadd.f32 %v5955, %v7578
        %v7688 = vadd.f32 %v5956, %v7580
        %v7689 = vadd.f32 %v5957, %v7582
        %v7690 = vadd.f32 %v5958, %v7586
        %v7691 = vadd.f32 %v5959, %v7588
        %v7692 = vadd.f32 %v5960, %v7590
        %v7693 = vadd.f32 %v5961, %v7592
        %v7694 = vadd.f32 %v5962, %v7596
        %v7695 = vadd.f32 %v5963, %v7598
        %v7696 = vadd.f32 %v5964, %v7600
        %v7697 = vadd.f32 %v5965, %v7602
        %v7698 = vadd.f32 %v5966, %v7606
        %v7699 = vadd.f32 %v5967, %v7608
        %v7700 = vadd.f32 %v5968, %v7610
        %v7701 = vadd.f32 %v5969, %v7612
        %v7702 = vadd.f32 %v5970, %v7616
        %v7703 = vadd.f32 %v5971, %v7618
        %v7704 = vadd.f32 %v5972, %v7620
        %v7705 = vadd.f32 %v5973, %v7622
        %v7706 = vadd.f32 %v5974, %v7626
        %v7707 = vadd.f32 %v5975, %v7628
        %v7708 = vadd.f32 %v5976, %v7630
        %v7709 = vadd.f32 %v5977, %v7632
        %v7710 = vadd.f32 %v5978, %v7636
        %v7711 = vadd.f32 %v5979, %v7638
        %v7712 = vadd.f32 %v5980, %v7640
        %v7713 = vadd.f32 %v5981, %v7642
        %v7714 = vadd.f32 %v5982, %v7646
        %v7715 = vadd.f32 %v5983, %v7648
        %v7716 = vadd.f32 %v5984, %v7650
        %v7717 = vadd.f32 %v5985, %v7652
        %7718 = vst [vmem:[#allocation2] sm:$0xff] %v7654
        %7719 = vst [vmem:[#allocation2 + $0x8] sm:$0xff] %v7655
        %7720 = vst [vmem:[#allocation2 + $0x10] sm:$0xff] %v7656
        %7721 = vst [vmem:[#allocation2 + $0x18] sm:$0xff] %v7657
        %7722 = vst [vmem:[#allocation2 + $0x20] sm:$0xff] %v7658
        %7723 = vst [vmem:[#allocation2 + $0x28] sm:$0xff] %v7659
        %7724 = vst [vmem:[#allocation2 + $0x30] sm:$0xff] %v7660
        %7725 = vst [vmem:[#allocation2 + $0x38] sm:$0xff] %v7661
        %7726 = vst [vmem:[#allocation2 + $0x40] sm:$0xff] %v7662
        %7727 = vst [vmem:[#allocation2 + $0x48] sm:$0xff] %v7663
        %7728 = vst [vmem:[#allocation2 + $0x50] sm:$0xff] %v7664
        %7729 = vst [vmem:[#allocation2 + $0x58] sm:$0xff] %v7665
        %7730 = vst [vmem:[#allocation2 + $0x60] sm:$0xff] %v7666
        %7731 = vst [vmem:[#allocation2 + $0x68] sm:$0xff] %v7667
        %7732 = vst [vmem:[#allocation2 + $0x70] sm:$0xff] %v7668
        %7733 = vst [vmem:[#allocation2 + $0x78] sm:$0xff] %v7669
        %7734 = vst [vmem:[#allocation2 + $0x80] sm:$0xff] %v7670
        %7735 = vst [vmem:[#allocation2 + $0x88] sm:$0xff] %v7671
        %7736 = vst [vmem:[#allocation2 + $0x90] sm:$0xff] %v7672
        %7737 = vst [vmem:[#allocation2 + $0x98] sm:$0xff] %v7673
        %7738 = vst [vmem:[#allocation2 + $0xa0] sm:$0xff] %v7674
        %7739 = vst [vmem:[#allocation2 + $0xa8] sm:$0xff] %v7675
        %7740 = vst [vmem:[#allocation2 + $0xb0] sm:$0xff] %v7676
        %7741 = vst [vmem:[#allocation2 + $0xb8] sm:$0xff] %v7677
        %7742 = vst [vmem:[#allocation2 + $0xc0] sm:$0xff] %v7678
        %7743 = vst [vmem:[#allocation2 + $0xc8] sm:$0xff] %v7679
        %7744 = vst [vmem:[#allocation2 + $0xd0] sm:$0xff] %v7680
        %7745 = vst [vmem:[#allocation2 + $0xd8] sm:$0xff] %v7681
        %7746 = vst [vmem:[#allocation2 + $0xe0] sm:$0xff] %v7682
        %7747 = vst [vmem:[#allocation2 + $0xe8] sm:$0xff] %v7683
        %7748 = vst [vmem:[#allocation2 + $0xf0] sm:$0xff] %v7684
        %7749 = vst [vmem:[#allocation2 + $0xf8] sm:$0xff] %v7685
        %7750 = vst [vmem:[#allocation2 + $0x100] sm:$0xff] %v7686
        %7751 = vst [vmem:[#allocation2 + $0x108] sm:$0xff] %v7687
        %7752 = vst [vmem:[#allocation2 + $0x110] sm:$0xff] %v7688
        %7753 = vst [vmem:[#allocation2 + $0x118] sm:$0xff] %v7689
        %7754 = vst [vmem:[#allocation2 + $0x120] sm:$0xff] %v7690
        %7755 = vst [vmem:[#allocation2 + $0x128] sm:$0xff] %v7691
        %7756 = vst [vmem:[#allocation2 + $0x130] sm:$0xff] %v7692
        %7757 = vst [vmem:[#allocation2 + $0x138] sm:$0xff] %v7693
        %7758 = vst [vmem:[#allocation2 + $0x140] sm:$0xff] %v7694
        %7759 = vst [vmem:[#allocation2 + $0x148] sm:$0xff] %v7695
        %7760 = vst [vmem:[#allocation2 + $0x150] sm:$0xff] %v7696
        %7761 = vst [vmem:[#allocation2 + $0x158] sm:$0xff] %v7697
        %7762 = vst [vmem:[#allocation2 + $0x160] sm:$0xff] %v7698
        %7763 = vst [vmem:[#allocation2 + $0x168] sm:$0xff] %v7699
        %7764 = vst [vmem:[#allocation2 + $0x170] sm:$0xff] %v7700
        %7765 = vst [vmem:[#allocation2 + $0x178] sm:$0xff] %v7701
        %7766 = vst [vmem:[#allocation2 + $0x180] sm:$0xff] %v7702
        %7767 = vst [vmem:[#allocation2 + $0x188] sm:$0xff] %v7703
        %7768 = vst [vmem:[#allocation2 + $0x190] sm:$0xff] %v7704
        %7769 = vst [vmem:[#allocation2 + $0x198] sm:$0xff] %v7705
        %7770 = vst [vmem:[#allocation2 + $0x1a0] sm:$0xff] %v7706
        %7771 = vst [vmem:[#allocation2 + $0x1a8] sm:$0xff] %v7707
        %7772 = vst [vmem:[#allocation2 + $0x1b0] sm:$0xff] %v7708
        %7773 = vst [vmem:[#allocation2 + $0x1b8] sm:$0xff] %v7709
        %7774 = vst [vmem:[#allocation2 + $0x1c0] sm:$0xff] %v7710
        %7775 = vst [vmem:[#allocation2 + $0x1c8] sm:$0xff] %v7711
        %7776 = vst [vmem:[#allocation2 + $0x1d0] sm:$0xff] %v7712
        %7777 = vst [vmem:[#allocation2 + $0x1d8] sm:$0xff] %v7713
        %7778 = vst [vmem:[#allocation2 + $0x1e0] sm:$0xff] %v7714
        %7779 = vst [vmem:[#allocation2 + $0x1e8] sm:$0xff] %v7715
        %7780 = vst [vmem:[#allocation2 + $0x1f0] sm:$0xff] %v7716
        %7781 = vst [vmem:[#allocation2 + $0x1f8] sm:$0xff] %v7717
        %p7782 = scmp.eq.s32.totalorder %s25, 1
        // Predicated region
        $region69: #{mlp_forward.1} parent=43 // pred_check
          %p7783 = pneg %p7782
        $region70: #{mlp_forward.1} parent=43 // pred_check_branch
          %7785 = sbr.rel (%p7783) target = $region72
        $region71: #{mlp_forward.1} parent=43 // pred_region
          %v7786 = vld [vmem:[#allocation2] sm:$0xff]
          %v7787 = vld [vmem:[#allocation2 + $0x8] sm:$0xff]
          %v7788 = vld [vmem:[#allocation2 + $0x10] sm:$0xff]
          %v7789 = vld [vmem:[#allocation2 + $0x18] sm:$0xff]
          %v7790 = vld [vmem:[#allocation2 + $0x20] sm:$0xff]
          %v7791 = vld [vmem:[#allocation2 + $0x28] sm:$0xff]
          %v7792 = vld [vmem:[#allocation2 + $0x30] sm:$0xff]
          %v7793 = vld [vmem:[#allocation2 + $0x38] sm:$0xff]
          %v7794 = vld [vmem:[#allocation2 + $0x40] sm:$0xff]
          %v7795 = vld [vmem:[#allocation2 + $0x48] sm:$0xff]
          %v7796 = vld [vmem:[#allocation2 + $0x50] sm:$0xff]
          %v7797 = vld [vmem:[#allocation2 + $0x58] sm:$0xff]
          %v7798 = vld [vmem:[#allocation2 + $0x60] sm:$0xff]
          %v7799 = vld [vmem:[#allocation2 + $0x68] sm:$0xff]
          %v7800 = vld [vmem:[#allocation2 + $0x70] sm:$0xff]
          %v7801 = vld [vmem:[#allocation2 + $0x78] sm:$0xff]
          %v7802 = vld [vmem:[#allocation2 + $0x80] sm:$0xff]
          %v7803 = vld [vmem:[#allocation2 + $0x88] sm:$0xff]
          %v7804 = vld [vmem:[#allocation2 + $0x90] sm:$0xff]
          %v7805 = vld [vmem:[#allocation2 + $0x98] sm:$0xff]
          %v7806 = vld [vmem:[#allocation2 + $0xa0] sm:$0xff]
          %v7807 = vld [vmem:[#allocation2 + $0xa8] sm:$0xff]
          %v7808 = vld [vmem:[#allocation2 + $0xb0] sm:$0xff]
          %v7809 = vld [vmem:[#allocation2 + $0xb8] sm:$0xff]
          %v7810 = vld [vmem:[#allocation2 + $0xc0] sm:$0xff]
          %v7811 = vld [vmem:[#allocation2 + $0xc8] sm:$0xff]
          %v7812 = vld [vmem:[#allocation2 + $0xd0] sm:$0xff]
          %v7813 = vld [vmem:[#allocation2 + $0xd8] sm:$0xff]
          %v7814 = vld [vmem:[#allocation2 + $0xe0] sm:$0xff]
          %v7815 = vld [vmem:[#allocation2 + $0xe8] sm:$0xff]
          %v7816 = vld [vmem:[#allocation2 + $0xf0] sm:$0xff]
          %v7817 = vld [vmem:[#allocation2 + $0xf8] sm:$0xff]
          %v7818 = vld [vmem:[#allocation2 + $0x100] sm:$0xff]
          %v7819 = vld [vmem:[#allocation2 + $0x108] sm:$0xff]
          %v7820 = vld [vmem:[#allocation2 + $0x110] sm:$0xff]
          %v7821 = vld [vmem:[#allocation2 + $0x118] sm:$0xff]
          %v7822 = vld [vmem:[#allocation2 + $0x120] sm:$0xff]
          %v7823 = vld [vmem:[#allocation2 + $0x128] sm:$0xff]
          %v7824 = vld [vmem:[#allocation2 + $0x130] sm:$0xff]
          %v7825 = vld [vmem:[#allocation2 + $0x138] sm:$0xff]
          %v7826 = vld [vmem:[#allocation2 + $0x140] sm:$0xff]
          %v7827 = vld [vmem:[#allocation2 + $0x148] sm:$0xff]
          %v7828 = vld [vmem:[#allocation2 + $0x150] sm:$0xff]
          %v7829 = vld [vmem:[#allocation2 + $0x158] sm:$0xff]
          %v7830 = vld [vmem:[#allocation2 + $0x160] sm:$0xff]
          %v7831 = vld [vmem:[#allocation2 + $0x168] sm:$0xff]
          %v7832 = vld [vmem:[#allocation2 + $0x170] sm:$0xff]
          %v7833 = vld [vmem:[#allocation2 + $0x178] sm:$0xff]
          %v7834 = vld [vmem:[#allocation2 + $0x180] sm:$0xff]
          %v7835 = vld [vmem:[#allocation2 + $0x188] sm:$0xff]
          %v7836 = vld [vmem:[#allocation2 + $0x190] sm:$0xff]
          %v7837 = vld [vmem:[#allocation2 + $0x198] sm:$0xff]
          %v7838 = vld [vmem:[#allocation2 + $0x1a0] sm:$0xff]
          %v7839 = vld [vmem:[#allocation2 + $0x1a8] sm:$0xff]
          %v7840 = vld [vmem:[#allocation2 + $0x1b0] sm:$0xff]
          %v7841 = vld [vmem:[#allocation2 + $0x1b8] sm:$0xff]
          %v7842 = vld [vmem:[#allocation2 + $0x1c0] sm:$0xff]
          %v7843 = vld [vmem:[#allocation2 + $0x1c8] sm:$0xff]
          %v7844 = vld [vmem:[#allocation2 + $0x1d0] sm:$0xff]
          %v7845 = vld [vmem:[#allocation2 + $0x1d8] sm:$0xff]
          %v7846 = vld [vmem:[#allocation2 + $0x1e0] sm:$0xff]
          %v7847 = vld [vmem:[#allocation2 + $0x1e8] sm:$0xff]
          %v7848 = vld [vmem:[#allocation2 + $0x1f0] sm:$0xff]
          %v7849 = vld [vmem:[#allocation2 + $0x1f8] sm:$0xff]
          %v7850 = vld [vmem:[#allocation11] sm:$0x3]
          %v7852 = vlaneseq
          %v7853 = vshrl.u32 %v7852, 7
          %v7854 = vsub.s32 0, %v7853
          %v7855 = vrot.slane %v7850, %v7854
          %v7856 = vlaneseq
          %v7857 = vshrl.u32 %v7856, 7
          %v7858 = vsub.s32 1, %v7857
          %v7859 = vrot.slane %v7850, %v7858
          %v7862 = vadd.f32 %v7786, %v7855
          %v7863 = vadd.f32 %v7787, %v7859
          %v7864 = vadd.f32 %v7788, %v7855
          %v7865 = vadd.f32 %v7789, %v7859
          %v7866 = vadd.f32 %v7790, %v7855
          %v7867 = vadd.f32 %v7791, %v7859
          %v7868 = vadd.f32 %v7792, %v7855
          %v7869 = vadd.f32 %v7793, %v7859
          %v7870 = vadd.f32 %v7794, %v7855
          %v7871 = vadd.f32 %v7795, %v7859
          %v7872 = vadd.f32 %v7796, %v7855
          %v7873 = vadd.f32 %v7797, %v7859
          %v7874 = vadd.f32 %v7798, %v7855
          %v7875 = vadd.f32 %v7799, %v7859
          %v7876 = vadd.f32 %v7800, %v7855
          %v7877 = vadd.f32 %v7801, %v7859
          %v7878 = vadd.f32 %v7802, %v7855
          %v7879 = vadd.f32 %v7803, %v7859
          %v7880 = vadd.f32 %v7804, %v7855
          %v7881 = vadd.f32 %v7805, %v7859
          %v7882 = vadd.f32 %v7806, %v7855
          %v7883 = vadd.f32 %v7807, %v7859
          %v7884 = vadd.f32 %v7808, %v7855
          %v7885 = vadd.f32 %v7809, %v7859
          %v7886 = vadd.f32 %v7810, %v7855
          %v7887 = vadd.f32 %v7811, %v7859
          %v7888 = vadd.f32 %v7812, %v7855
          %v7889 = vadd.f32 %v7813, %v7859
          %v7890 = vadd.f32 %v7814, %v7855
          %v7891 = vadd.f32 %v7815, %v7859
          %v7892 = vadd.f32 %v7816, %v7855
          %v7893 = vadd.f32 %v7817, %v7859
          %v7894 = vadd.f32 %v7818, %v7855
          %v7895 = vadd.f32 %v7819, %v7859
          %v7896 = vadd.f32 %v7820, %v7855
          %v7897 = vadd.f32 %v7821, %v7859
          %v7898 = vadd.f32 %v7822, %v7855
          %v7899 = vadd.f32 %v7823, %v7859
          %v7900 = vadd.f32 %v7824, %v7855
          %v7901 = vadd.f32 %v7825, %v7859
          %v7902 = vadd.f32 %v7826, %v7855
          %v7903 = vadd.f32 %v7827, %v7859
          %v7904 = vadd.f32 %v7828, %v7855
          %v7905 = vadd.f32 %v7829, %v7859
          %v7906 = vadd.f32 %v7830, %v7855
          %v7907 = vadd.f32 %v7831, %v7859
          %v7908 = vadd.f32 %v7832, %v7855
          %v7909 = vadd.f32 %v7833, %v7859
          %v7910 = vadd.f32 %v7834, %v7855
          %v7911 = vadd.f32 %v7835, %v7859
          %v7912 = vadd.f32 %v7836, %v7855
          %v7913 = vadd.f32 %v7837, %v7859
          %v7914 = vadd.f32 %v7838, %v7855
          %v7915 = vadd.f32 %v7839, %v7859
          %v7916 = vadd.f32 %v7840, %v7855
          %v7917 = vadd.f32 %v7841, %v7859
          %v7918 = vadd.f32 %v7842, %v7855
          %v7919 = vadd.f32 %v7843, %v7859
          %v7920 = vadd.f32 %v7844, %v7855
          %v7921 = vadd.f32 %v7845, %v7859
          %v7922 = vadd.f32 %v7846, %v7855
          %v7923 = vadd.f32 %v7847, %v7859
          %v7924 = vadd.f32 %v7848, %v7855
          %v7925 = vadd.f32 %v7849, %v7859
          %7926 = vst [vmem:[#allocation12] sm:$0xff] %v7862
          %7927 = vst [vmem:[#allocation12 + $0x8] sm:$0xff] %v7863
          %7928 = vst [vmem:[#allocation12 + $0x10] sm:$0xff] %v7864
          %7929 = vst [vmem:[#allocation12 + $0x18] sm:$0xff] %v7865
          %7930 = vst [vmem:[#allocation12 + $0x20] sm:$0xff] %v7866
          %7931 = vst [vmem:[#allocation12 + $0x28] sm:$0xff] %v7867
          %7932 = vst [vmem:[#allocation12 + $0x30] sm:$0xff] %v7868
          %7933 = vst [vmem:[#allocation12 + $0x38] sm:$0xff] %v7869
          %7934 = vst [vmem:[#allocation12 + $0x40] sm:$0xff] %v7870
          %7935 = vst [vmem:[#allocation12 + $0x48] sm:$0xff] %v7871
          %7936 = vst [vmem:[#allocation12 + $0x50] sm:$0xff] %v7872
          %7937 = vst [vmem:[#allocation12 + $0x58] sm:$0xff] %v7873
          %7938 = vst [vmem:[#allocation12 + $0x60] sm:$0xff] %v7874
          %7939 = vst [vmem:[#allocation12 + $0x68] sm:$0xff] %v7875
          %7940 = vst [vmem:[#allocation12 + $0x70] sm:$0xff] %v7876
          %7941 = vst [vmem:[#allocation12 + $0x78] sm:$0xff] %v7877
          %7942 = vst [vmem:[#allocation12 + $0x80] sm:$0xff] %v7878
          %7943 = vst [vmem:[#allocation12 + $0x88] sm:$0xff] %v7879
          %7944 = vst [vmem:[#allocation12 + $0x90] sm:$0xff] %v7880
          %7945 = vst [vmem:[#allocation12 + $0x98] sm:$0xff] %v7881
          %7946 = vst [vmem:[#allocation12 + $0xa0] sm:$0xff] %v7882
          %7947 = vst [vmem:[#allocation12 + $0xa8] sm:$0xff] %v7883
          %7948 = vst [vmem:[#allocation12 + $0xb0] sm:$0xff] %v7884
          %7949 = vst [vmem:[#allocation12 + $0xb8] sm:$0xff] %v7885
          %7950 = vst [vmem:[#allocation12 + $0xc0] sm:$0xff] %v7886
          %7951 = vst [vmem:[#allocation12 + $0xc8] sm:$0xff] %v7887
          %7952 = vst [vmem:[#allocation12 + $0xd0] sm:$0xff] %v7888
          %7953 = vst [vmem:[#allocation12 + $0xd8] sm:$0xff] %v7889
          %7954 = vst [vmem:[#allocation12 + $0xe0] sm:$0xff] %v7890
          %7955 = vst [vmem:[#allocation12 + $0xe8] sm:$0xff] %v7891
          %7956 = vst [vmem:[#allocation12 + $0xf0] sm:$0xff] %v7892
          %7957 = vst [vmem:[#allocation12 + $0xf8] sm:$0xff] %v7893
          %7958 = vst [vmem:[#allocation12 + $0x100] sm:$0xff] %v7894
          %7959 = vst [vmem:[#allocation12 + $0x108] sm:$0xff] %v7895
          %7960 = vst [vmem:[#allocation12 + $0x110] sm:$0xff] %v7896
          %7961 = vst [vmem:[#allocation12 + $0x118] sm:$0xff] %v7897
          %7962 = vst [vmem:[#allocation12 + $0x120] sm:$0xff] %v7898
          %7963 = vst [vmem:[#allocation12 + $0x128] sm:$0xff] %v7899
          %7964 = vst [vmem:[#allocation12 + $0x130] sm:$0xff] %v7900
          %7965 = vst [vmem:[#allocation12 + $0x138] sm:$0xff] %v7901
          %7966 = vst [vmem:[#allocation12 + $0x140] sm:$0xff] %v7902
          %7967 = vst [vmem:[#allocation12 + $0x148] sm:$0xff] %v7903
          %7968 = vst [vmem:[#allocation12 + $0x150] sm:$0xff] %v7904
          %7969 = vst [vmem:[#allocation12 + $0x158] sm:$0xff] %v7905
          %7970 = vst [vmem:[#allocation12 + $0x160] sm:$0xff] %v7906
          %7971 = vst [vmem:[#allocation12 + $0x168] sm:$0xff] %v7907
          %7972 = vst [vmem:[#allocation12 + $0x170] sm:$0xff] %v7908
          %7973 = vst [vmem:[#allocation12 + $0x178] sm:$0xff] %v7909
          %7974 = vst [vmem:[#allocation12 + $0x180] sm:$0xff] %v7910
          %7975 = vst [vmem:[#allocation12 + $0x188] sm:$0xff] %v7911
          %7976 = vst [vmem:[#allocation12 + $0x190] sm:$0xff] %v7912
          %7977 = vst [vmem:[#allocation12 + $0x198] sm:$0xff] %v7913
          %7978 = vst [vmem:[#allocation12 + $0x1a0] sm:$0xff] %v7914
          %7979 = vst [vmem:[#allocation12 + $0x1a8] sm:$0xff] %v7915
          %7980 = vst [vmem:[#allocation12 + $0x1b0] sm:$0xff] %v7916
          %7981 = vst [vmem:[#allocation12 + $0x1b8] sm:$0xff] %v7917
          %7982 = vst [vmem:[#allocation12 + $0x1c0] sm:$0xff] %v7918
          %7983 = vst [vmem:[#allocation12 + $0x1c8] sm:$0xff] %v7919
          %7984 = vst [vmem:[#allocation12 + $0x1d0] sm:$0xff] %v7920
          %7985 = vst [vmem:[#allocation12 + $0x1d8] sm:$0xff] %v7921
          %7986 = vst [vmem:[#allocation12 + $0x1e0] sm:$0xff] %v7922
          %7987 = vst [vmem:[#allocation12 + $0x1e8] sm:$0xff] %v7923
          %7988 = vst [vmem:[#allocation12 + $0x1f0] sm:$0xff] %v7924
          %7989 = vst [vmem:[#allocation12 + $0x1f8] sm:$0xff] %v7925
        $region72: #{mlp_forward.1} parent=43 // pred_fallthru
          _
        // Predicated region
        $region73: #{mlp_forward.1} parent=43 // pred_check
          %p7990 = pneg %p174
        $region74: #{mlp_forward.1} parent=43 // pred_check_branch
          %7992 = sbr.rel (%p7990) target = $region76
        $region75: #{mlp_forward.1} parent=43 // pred_region
          %s7994 = ssub.s32 8192, 8192
          %7995 = vsyncadd [#allocation5], %s7994
          %s7996 = sshll.u32 [#allocation12], 4
          %s7997 = int_to_ptr.vmem [resolvable:$true] %s7996
          %8002 = dma.vmem_to_hbm [thread:$0]  %s7997, 8192, %s6, [#allocation5], 256, 256, 16
        $region76: #{mlp_forward.1} parent=43 // pred_fallthru
          _
        // Predicated region
        $region77: #{mlp_forward.1} parent=43 // pred_check
          %p8003 = pneg %p174
        $region78: #{mlp_forward.1} parent=43 // pred_check_branch
          %8005 = sbr.rel (%p8003) target = $region80
        $region79: #{mlp_forward.1} parent=43 // pred_region
          %8006 = dma.done [#allocation5], 8192
        $region80: #{mlp_forward.1} parent=43 // pred_fallthru
          _
      $region44: #{mlp_forward.1} parent=5 // pred_fallthru
        _
      %p8007 = scmp.le.s32.totalorder 2, %s20
      // Predicated region
      $region81: #{mlp_forward.1} parent=5 // pred_check
        %p8008 = pneg %p8007
      $region82: #{mlp_forward.1} parent=5 // pred_check_branch
        %8010 = sbr.rel (%p8008) target = $region84
      $region83: #{mlp_forward.1} parent=5 // pred_region
        %s8011 = ssub.s32 %s20, 2
      $region84: #{mlp_forward.1} parent=5 // pred_fallthru
        _
    $region6: #{mlp_forward.1} parent=1 // loop_footer
      %s24 = sadd.s32 1, %s20
    $region7: #{mlp_forward.1} parent=1 // loop_footer_branch
      %19 = sbr.rel target = $region3
    $region8: #{mlp_forward.1} parent=1 // loop_exit
      _
    %8012 = vsyncpa [#allocation4], 1
    %s8013 = scalar_lea.sflag [#allocation4], 1
    %8014 = vsyncpa %s8013, 1
    %8015 = vsyncpa [#allocation7], 1
    %8016 = vsyncpa [#allocation10], 1
    %s8017 = scalar_lea.sflag [#allocation10], 1
    %8018 = vsyncpa %s8017, 1
    %8019 = vsyncpa [#allocation5], 1
    %s8020 = scalar_lea.sflag [#allocation5], 1
    %8021 = vsyncpa %s8020, 1

</llo_original>
